<compile_context>
chip_gen: v5e
topology: v5e:2x2
jax: 0.10.0
libtpu: 0.0.40
codegen_flags: <defaults>
</compile_context>

<pallas_src>
import functools
from typing import NamedTuple

import jax
import jax.numpy as jnp
from jax import lax
from jax.experimental import pallas as pl
from jax.experimental.pallas import tpu as pltpu

EPS = 1e-12            # F.normalize eps
LEAKY_SLOPE = 0.01     # nn.LeakyReLU default


class Config(NamedTuple):
    temperature: float = 16.0
    num: int = 3            # top-k prompts
    meta_class: int = 10
    way: int = 5


def vmem():
    return pl.BlockSpec(memory_space=pltpu.MemorySpace.VMEM)


def _l2norm(x):
    # F.normalize(x, p=2, dim=-1): x / max(||x||, eps), computed in f32
    return x / jnp.maximum(jnp.sqrt(jnp.sum(x * x, axis=-1, keepdims=True)), EPS)


# --------------------------------------------------------------------------- kernels
def _adj_gcn_logits_kernel(x_ref, w1, b1, w2, b2, w3, b3, w4, b4, w5r, b5,
                           wg, bg, fcn_ref, out_ref, logits_ref,
                           *, n, residual, temperature):
    """Fused: MLP adjacency + masked softmax + GraphConvolution + cosine logits."""
    x = x_ref[...]                                                      # (N, Fin)
    xn = _l2norm(x)

    # ---- pairwise features, fully in VMEM ------------------------------------
    # One-hot selection matrices built from 2-D iotas (no int div/mod needed):
    #   ri[k] = xn[k // n], rj[k] = xn[k % n]  for flattened pair index k = i*n + j.
    nn_ = n * n
    k_ids = lax.broadcasted_iota(jnp.int32, (nn_, n), 0)
    m_ids = lax.broadcasted_iota(jnp.int32, (nn_, n), 1)
    k_f = k_ids.astype(jnp.float32)
    m_f = m_ids.astype(jnp.float32)
    sel_i = ((k_ids >= m_ids * n) & (k_ids < m_ids * n + n)).astype(jnp.float32)
    i_val = jnp.sum(sel_i * m_f, axis=-1, keepdims=True)                # i = k // n (exact)
    sel_j = (k_f - i_val * float(n) == m_f).astype(jnp.float32)         # one-hot(j = k % n)

    ri = jnp.dot(sel_i, xn, preferred_element_type=jnp.float32)         # (NN, Fin)
    rj = jnp.dot(sel_j, xn, preferred_element_type=jnp.float32)
    h = ri * rj                                                         # xn[i] * xn[j]

    # ---- 1x1-conv MLP chain (eval-mode BN folded into w/b), LeakyReLU --------
    def layer(h, w_ref, b_ref):
        y = jnp.dot(h, w_ref[...], preferred_element_type=jnp.float32) + b_ref[...]
        return jnp.where(y >= 0, y, LEAKY_SLOPE * y)

    h = layer(h, w1, b1)
    h = layer(h, w2, b2)
    h = layer(h, w3, b3)
    h = layer(h, w4, b4)
    # conv_last (C->1): VPU multiply + lane reduce instead of a degenerate matmul.
    col = jnp.sum(h * w5r[...], axis=-1, keepdims=True)                 # (NN, 1)

    # Scatter back to the (N, N) matrix: matrix[i, j] = col[i*n + j] + b5
    mT = lax.broadcasted_iota(jnp.int32, (n, nn_), 0)
    kT = lax.broadcasted_iota(jnp.int32, (n, nn_), 1)
    sel_i_t = ((kT >= mT * n) & (kT < mT * n + n)).astype(jnp.float32)  # == sel_i.T
    matrix = jnp.dot(sel_i_t, col * sel_j,
                     preferred_element_type=jnp.float32) + b5[...]      # (N, N)

    # ---- softmax(matrix * (1 - I), -1) + I ------------------------------------
    # NOTE: the zeroed diagonal still participates in the softmax (matches PyTorch).
    eye = (lax.broadcasted_iota(jnp.int32, (n, n), 0)
           == lax.broadcasted_iota(jnp.int32, (n, n), 1)).astype(jnp.float32)
    mm = matrix * (1.0 - eye)
    mm = mm - jnp.max(mm, axis=-1, keepdims=True)
    e = jnp.exp(mm)
    adj = e / jnp.sum(e, axis=-1, keepdims=True) + eye

    # ---- GraphConvolution: relu(adj @ (X @ W) + b) (+ X if residual) ---------
    xw = jnp.dot(x, wg[...], preferred_element_type=jnp.float32)
    g = jnp.dot(adj, xw, preferred_element_type=jnp.float32) + bg[...]
    g = jnp.maximum(g, 0.0)
    if residual:
        g = g + x
    out_ref[...] = g

    # ---- get_logits: temperature * cos-sim against pre-normalized fc ---------
    gn = _l2norm(g)
    logits_ref[...] = temperature * lax.dot_general(
        gn, fcn_ref[...], (((1,), (1,)), ((), ())),
        preferred_element_type=jnp.float32)


def _prompt_logits_kernel(f_ref, lw_ref, pn_ref, o_ref, *, temperature):
    """Fused: no-bias linear (x @ W.T) + cosine logits vs pre-normalized prompt bank."""
    fp = lax.dot_general(f_ref[...], lw_ref[...], (((1,), (1,)), ((), ())),
                         preferred_element_type=jnp.float32)
    fpn = _l2norm(fp)
    o_ref[...] = temperature * lax.dot_general(
        fpn, pn_ref[...], (((1,), (1,)), ((), ())),
        preferred_element_type=jnp.float32)


# --------------------------------------------------------------------------- wrappers
def adj_gcn_logits(x, mlp, gcn_w, gcn_b, fc_n, *, residual, temperature):
    n = x.shape[0]
    plist = [mlp[k] for k in ("w1", "b1", "w2", "b2", "w3", "b3", "w4", "b4", "w5r", "b5")]
    kern = functools.partial(_adj_gcn_logits_kernel, n=n, residual=residual,
                             temperature=float(temperature))
    return pl.pallas_call(
        kern,
        in_specs=[vmem()] * (1 + len(plist) + 3),
        out_specs=(vmem(), vmem()),
        out_shape=(jax.ShapeDtypeStruct((n, gcn_w.shape[1]), jnp.float32),
                   jax.ShapeDtypeStruct((n, fc_n.shape[0]), jnp.float32)),
    )(x, *plist, gcn_w, gcn_b, fc_n)


def prompt_logits(feature, linear_w, prompt_n, temperature):
    return pl.pallas_call(
        functools.partial(_prompt_logits_kernel, temperature=float(temperature)),
        in_specs=[vmem()] * 3,
        out_specs=vmem(),
        out_shape=jax.ShapeDtypeStruct((feature.shape[0], prompt_n.shape[0]), jnp.float32),
    )(feature, linear_w, prompt_n)


def class_means(feats, labels, class_values):
    # Static-shape replacement for torch.unique + boolean-mask grouping.
    # Assumes every class in `class_values` appears at least once (standard FSCIL setup).
    onehot = (labels[None, :] == class_values[:, None]).astype(jnp.float32)
    counts = jnp.maximum(jnp.sum(onehot, axis=1, keepdims=True), 1.0)
    return (onehot @ feats) / counts


def cross_entropy(logits, labels):
    logp = jax.nn.log_softmax(logits, axis=-1)
    return -jnp.mean(jnp.take_along_axis(logp, labels.astype(jnp.int32)[:, None], axis=1))


# --------------------------------------------------------------------------- MYNET pieces
def pro_gcn(x, buffer_features, x_label, buffer_label, params, cfg, fc_n, prompt_n, session):
    # TODO(synk): torch.unique is replaced with the static class sets (buffer covers base
    # classes 0..meta_class-1; x_label covers the `way` classes of this session).
    class_list = jnp.arange(cfg.meta_class, dtype=jnp.int32)
    proto_fc = class_means(buffer_features, buffer_label, class_list)
    offset = cfg.meta_class + cfg.way * (session - 1)
    x_label_list = offset + jnp.arange(cfg.way, dtype=jnp.int32)
    x_proto = class_means(x, x_label, x_label_list)

    feature = jnp.concatenate([x, x_proto, proto_fc], axis=0)
    p_logits = prompt_logits(feature, params["linear_w"], prompt_n, cfg.temperature)
    _, topk_index = lax.top_k(p_logits, cfg.num)
    pro_feature = params["prompt"][topk_index].reshape(feature.shape[0], -1)
    feature = jnp.concatenate([pro_feature, feature], axis=-1)

    feature_out, logits = adj_gcn_logits(
        feature, params["mlp2"], params["proto_gcn_w"], params["proto_gcn_b"], fc_n,
        residual=False, temperature=cfg.temperature)

    train_label = jnp.concatenate([x_label, x_label_list, class_list], axis=0)
    loss = cross_entropy(logits, train_label)
    return logits[: x.shape[0]], loss, logits, feature_out


def mynet_forward(train_data, train_label, session, params, cfg):
    """One adaptation step of MYNET.forward (forward compute of one epoch)."""
    # get_feature(): resnet encoder is external; train_data is its feature map [B, F, H, W].
    # TODO(synk): resnet18/resnet20 backbone not part of the given module snippet.
    b, c = train_data.shape[:2]
    few_data = jnp.mean(train_data.reshape(b, c, -1), axis=-1)   # adaptive_avg_pool2d(1)

    # Hoist weight normalization: fc / prompt are normalized once per forward.
    fc_n = _l2norm(params["fc_w"])
    prompt_n = _l2norm(params["prompt"])

    data = jnp.concatenate([few_data, params["buffer"]], axis=0)
    # ins_gcn + get_logits(data_features, fc) in one fused kernel.
    data_features, logits = adj_gcn_logits(
        data, params["mlp1"], params["instance_gcn_w"], params["instance_gcn_b"], fc_n,
        residual=True, temperature=cfg.temperature)

    nf = few_data.shape[0]
    sample_feature = data_features[:nf]
    buffer_feature = data_features[nf:]
    buffer_label = params["buffer_label"]

    _, _pro_loss, pro_logits, _feature = pro_gcn(
        sample_feature, buffer_feature, train_label, buffer_label,
        params, cfg, fc_n, prompt_n, session)

    # TODO(synk): Buffer.updata_buffer(data, logits, label) buffer-update policy and the
    # SGD step / in-place fc.weight copy are training-state side effects; omitted.
    # old_fc/new_fc slice+concat reconstructs fc.weight exactly (no-op) and the pro-GCN
    # logits already are cos_logits(feature, fc.weight), so few_logits is just a slice.
    few_logits = pro_logits[:nf]
    loss = cross_entropy(few_logits, train_label)
    return loss, few_logits, data_features, logits


# --------------------------------------------------------------------------- params
def init_params(key, *, F=64, num_classes=16, prompt_num=10, prompt_feature=8,
                num=3, buffer_size=20, hidden=16, meta_class=10):
    keys = iter(jax.random.split(key, 32))

    def u(shape, scale):
        return jax.random.uniform(next(keys), shape, jnp.float32, -scale, scale)

    def mlp_params(in_dim):
        ratio = [2, 2, 1, 1]
        chans = [in_dim, hidden * ratio[0], hidden * ratio[1], hidden * ratio[2],
                 hidden * ratio[3]]
        # eval-mode BatchNorm folded into the conv: mean=0, var=1, gamma=1, beta=0,
        # eps=1e-5 -> scale = 1/sqrt(1+eps), shift = 0.
        bn_scale = float(1.0 / jnp.sqrt(1.0 + 1e-5))
        p = {}
        for li in range(4):
            cin, cout = chans[li], chans[li + 1]
            p[f"w{li + 1}"] = u((cin, cout), 1.0 / (cin ** 0.5)) * bn_scale
            p[f"b{li + 1}"] = jnp.zeros((1, cout), jnp.float32)
        p["w5r"] = u((1, chans[4]), 1.0 / (chans[4] ** 0.5))   # conv_last weight (row)
        p["b5"] = u((1, 1), 1.0 / (chans[4] ** 0.5))           # conv_last bias
        return p

    in_pro = F + num * prompt_feature
    return {
        "mlp1": mlp_params(F),
        "mlp2": mlp_params(in_pro),
        "instance_gcn_w": u((F, F), 1.0 / (F ** 0.5)),
        "instance_gcn_b": u((1, F), 1.0 / (F ** 0.5)),
        "proto_gcn_w": u((in_pro, F), 1.0 / (F ** 0.5)),
        "proto_gcn_b": u((1, F), 1.0 / (F ** 0.5)),
        "fc_w": u((num_classes, F), 1.0 / (F ** 0.5)),          # nn.Linear(F, num_classes)
        "linear_w": u((prompt_feature, F), 1.0 / (F ** 0.5)),   # nn.Linear(F, prompt_feature)
        "prompt": jax.random.normal(next(keys), (prompt_num, prompt_feature), jnp.float32),
        "buffer": jax.random.normal(next(keys), (buffer_size, F), jnp.float32),
        "buffer_label": jnp.arange(buffer_size, dtype=jnp.int32) % meta_class,
    }


if __name__ == "__main__":
    key = jax.random.PRNGKey(0)
    pkey, dkey = jax.random.split(key)
    cfg = Config(temperature=16.0, num=3, meta_class=10, way=5)
    params = init_params(pkey, F=64, num_classes=16, prompt_num=10, prompt_feature=8,
                         num=cfg.num, buffer_size=20, hidden=16, meta_class=cfg.meta_class)

    # 5 novel-class samples, encoder feature maps [B, F=64, 4, 4], session-1 classes 10..14.
    B, F, H, W = 5, 64, 4, 4
    train_data = jax.random.normal(dkey, (B, F, H, W), jnp.float32)
    train_label = jnp.array([10, 11, 12, 13, 14], dtype=jnp.int32)

    fwd = jax.jit(mynet_forward, static_argnames=("session", "cfg"))
    outs = fwd(train_data, train_label, session=1, params=params, cfg=cfg)
    jax.block_until_ready(outs)
    print("KERNEL_OK")
</pallas_src>

<mosaic_0001>
module attributes {stable_mosaic.version = 11 : i64} {
  func.func @_adj_gcn_logits_kernel(%arg0: memref<25x64xf32, #tpu.memory_space<vmem>>, %arg1: memref<64x32xf32, #tpu.memory_space<vmem>>, %arg2: memref<1x32xf32, #tpu.memory_space<vmem>>, %arg3: memref<32x32xf32, #tpu.memory_space<vmem>>, %arg4: memref<1x32xf32, #tpu.memory_space<vmem>>, %arg5: memref<32x16xf32, #tpu.memory_space<vmem>>, %arg6: memref<1x16xf32, #tpu.memory_space<vmem>>, %arg7: memref<16x16xf32, #tpu.memory_space<vmem>>, %arg8: memref<1x16xf32, #tpu.memory_space<vmem>>, %arg9: memref<1x16xf32, #tpu.memory_space<vmem>>, %arg10: memref<1x1xf32, #tpu.memory_space<vmem>>, %arg11: memref<64x64xf32, #tpu.memory_space<vmem>>, %arg12: memref<1x64xf32, #tpu.memory_space<vmem>>, %arg13: memref<16x64xf32, #tpu.memory_space<vmem>>, %arg14: memref<25x64xf32, #tpu.memory_space<vmem>>, %arg15: memref<25x16xf32, #tpu.memory_space<vmem>>) attributes {dimension_semantics = [], scalar_prefetch = 0 : i64, scratch_operands = 0 : i64, tpu.core_type = #tpu.core_type<tc>} {
    %c0 = arith.constant 0 : index
    %c0_0 = arith.constant 0 : index
    %0 = vector.load %arg0[%c0, %c0_0] : memref<25x64xf32, #tpu.memory_space<vmem>>, vector<25x64xf32>
    %1 = arith.mulf %0, %0 : vector<25x64xf32>
    %cst = arith.constant dense<0.000000e+00> : vector<25xf32>
    %2 = vector.multi_reduction <add>, %1, %cst [1] : vector<25x64xf32> to vector<25xf32>
    %3 = vector.shape_cast %2 : vector<25xf32> to vector<25x1xf32>
    %4 = math.sqrt %3 : vector<25x1xf32>
    %cst_1 = arith.constant 9.99999996E-13 : f32
    %5 = vector.broadcast %cst_1 : f32 to vector<25x1xf32>
    %6 = arith.maximumf %4, %5 : vector<25x1xf32>
    %7 = vector.broadcast %6 : vector<25x1xf32> to vector<25x64xf32>
    %8 = arith.divf %0, %7 : vector<25x64xf32>
    %9 = tpu.iota {dimensions = array<i32: 0>} : vector<625x25xi32>
    %10 = tpu.iota {dimensions = array<i32: 1>} : vector<625x25xi32>
    %11 = arith.sitofp %9 : vector<625x25xi32> to vector<625x25xf32>
    %12 = arith.sitofp %10 : vector<625x25xi32> to vector<625x25xf32>
    %c25_i32 = arith.constant 25 : i32
    %13 = vector.broadcast %c25_i32 : i32 to vector<625x25xi32>
    %14 = arith.muli %10, %13 : vector<625x25xi32>
    %15 = arith.cmpi sge, %9, %14 : vector<625x25xi32>
    %c25_i32_2 = arith.constant 25 : i32
    %16 = vector.broadcast %c25_i32_2 : i32 to vector<625x25xi32>
    %17 = arith.muli %10, %16 : vector<625x25xi32>
    %c25_i32_3 = arith.constant 25 : i32
    %18 = vector.broadcast %c25_i32_3 : i32 to vector<625x25xi32>
    %19 = arith.addi %17, %18 : vector<625x25xi32>
    %20 = arith.cmpi slt, %9, %19 : vector<625x25xi32>
    %21 = arith.andi %15, %20 : vector<625x25xi1>
    %22 = arith.extui %21 : vector<625x25xi1> to vector<625x25xi32>
    %23 = arith.sitofp %22 : vector<625x25xi32> to vector<625x25xf32>
    %24 = arith.mulf %23, %12 : vector<625x25xf32>
    %cst_4 = arith.constant dense<0.000000e+00> : vector<625xf32>
    %25 = vector.multi_reduction <add>, %24, %cst_4 [1] : vector<625x25xf32> to vector<625xf32>
    %26 = vector.shape_cast %25 : vector<625xf32> to vector<625x1xf32>
    %cst_5 = arith.constant 2.500000e+01 : f32
    %27 = vector.broadcast %cst_5 : f32 to vector<625x1xf32>
    %28 = arith.mulf %26, %27 : vector<625x1xf32>
    %29 = vector.broadcast %28 : vector<625x1xf32> to vector<625x25xf32>
    %30 = arith.subf %11, %29 : vector<625x25xf32>
    %31 = arith.cmpf oeq, %30, %12 : vector<625x25xf32>
    %32 = arith.extui %31 : vector<625x25xi1> to vector<625x25xi32>
    %33 = arith.sitofp %32 : vector<625x25xi32> to vector<625x25xf32>
    %cst_6 = arith.constant dense<0.000000e+00> : vector<625x64xf32>
    %34 = tpu.matmul %23, %8, %cst_6 {dimension_numbers = #tpu.dot_dimension_numbers<[1], [0], [0], [1], [0, 0, 1, 1], [], []>} : vector<625x25xf32>, vector<25x64xf32>, vector<625x64xf32> -> vector<625x64xf32>
    %cst_7 = arith.constant dense<0.000000e+00> : vector<625x64xf32>
    %35 = tpu.matmul %33, %8, %cst_7 {dimension_numbers = #tpu.dot_dimension_numbers<[1], [0], [0], [1], [0, 0, 1, 1], [], []>} : vector<625x25xf32>, vector<25x64xf32>, vector<625x64xf32> -> vector<625x64xf32>
    %36 = arith.mulf %34, %35 : vector<625x64xf32>
    %c0_8 = arith.constant 0 : index
    %c0_9 = arith.constant 0 : index
    %37 = vector.load %arg1[%c0_8, %c0_9] : memref<64x32xf32, #tpu.memory_space<vmem>>, vector<64x32xf32>
    %cst_10 = arith.constant dense<0.000000e+00> : vector<625x32xf32>
    %38 = tpu.matmul %36, %37, %cst_10 {dimension_numbers = #tpu.dot_dimension_numbers<[1], [0], [0], [1], [0, 0, 1, 1], [], []>} : vector<625x64xf32>, vector<64x32xf32>, vector<625x32xf32> -> vector<625x32xf32>
    %c0_11 = arith.constant 0 : index
    %c0_12 = arith.constant 0 : index
    %39 = vector.load %arg2[%c0_11, %c0_12] : memref<1x32xf32, #tpu.memory_space<vmem>>, vector<1x32xf32>
    %40 = vector.broadcast %39 : vector<1x32xf32> to vector<625x32xf32>
    %41 = arith.addf %38, %40 : vector<625x32xf32>
    %cst_13 = arith.constant 0.000000e+00 : f32
    %42 = vector.broadcast %cst_13 : f32 to vector<625x32xf32>
    %43 = arith.cmpf oge, %41, %42 : vector<625x32xf32>
    %cst_14 = arith.constant 0.00999999977 : f32
    %44 = vector.broadcast %cst_14 : f32 to vector<625x32xf32>
    %45 = arith.mulf %44, %41 : vector<625x32xf32>
    %46 = arith.select %43, %41, %45 : vector<625x32xi1>, vector<625x32xf32>
    %c0_15 = arith.constant 0 : index
    %c0_16 = arith.constant 0 : index
    %47 = vector.load %arg3[%c0_15, %c0_16] : memref<32x32xf32, #tpu.memory_space<vmem>>, vector<32x32xf32>
    %cst_17 = arith.constant dense<0.000000e+00> : vector<625x32xf32>
    %48 = tpu.matmul %46, %47, %cst_17 {dimension_numbers = #tpu.dot_dimension_numbers<[1], [0], [0], [1], [0, 0, 1, 1], [], []>} : vector<625x32xf32>, vector<32x32xf32>, vector<625x32xf32> -> vector<625x32xf32>
    %c0_18 = arith.constant 0 : index
    %c0_19 = arith.constant 0 : index
    %49 = vector.load %arg4[%c0_18, %c0_19] : memref<1x32xf32, #tpu.memory_space<vmem>>, vector<1x32xf32>
    %50 = vector.broadcast %49 : vector<1x32xf32> to vector<625x32xf32>
    %51 = arith.addf %48, %50 : vector<625x32xf32>
    %cst_20 = arith.constant 0.000000e+00 : f32
    %52 = vector.broadcast %cst_20 : f32 to vector<625x32xf32>
    %53 = arith.cmpf oge, %51, %52 : vector<625x32xf32>
    %cst_21 = arith.constant 0.00999999977 : f32
    %54 = vector.broadcast %cst_21 : f32 to vector<625x32xf32>
    %55 = arith.mulf %54, %51 : vector<625x32xf32>
    %56 = arith.select %53, %51, %55 : vector<625x32xi1>, vector<625x32xf32>
    %c0_22 = arith.constant 0 : index
    %c0_23 = arith.constant 0 : index
    %57 = vector.load %arg5[%c0_22, %c0_23] : memref<32x16xf32, #tpu.memory_space<vmem>>, vector<32x16xf32>
    %cst_24 = arith.constant dense<0.000000e+00> : vector<625x16xf32>
    %58 = tpu.matmul %56, %57, %cst_24 {dimension_numbers = #tpu.dot_dimension_numbers<[1], [0], [0], [1], [0, 0, 1, 1], [], []>} : vector<625x32xf32>, vector<32x16xf32>, vector<625x16xf32> -> vector<625x16xf32>
    %c0_25 = arith.constant 0 : index
    %c0_26 = arith.constant 0 : index
    %59 = vector.load %arg6[%c0_25, %c0_26] : memref<1x16xf32, #tpu.memory_space<vmem>>, vector<1x16xf32>
    %60 = vector.broadcast %59 : vector<1x16xf32> to vector<625x16xf32>
    %61 = arith.addf %58, %60 : vector<625x16xf32>
    %cst_27 = arith.constant 0.000000e+00 : f32
    %62 = vector.broadcast %cst_27 : f32 to vector<625x16xf32>
    %63 = arith.cmpf oge, %61, %62 : vector<625x16xf32>
    %cst_28 = arith.constant 0.00999999977 : f32
    %64 = vector.broadcast %cst_28 : f32 to vector<625x16xf32>
    %65 = arith.mulf %64, %61 : vector<625x16xf32>
    %66 = arith.select %63, %61, %65 : vector<625x16xi1>, vector<625x16xf32>
    %c0_29 = arith.constant 0 : index
    %c0_30 = arith.constant 0 : index
    %67 = vector.load %arg7[%c0_29, %c0_30] : memref<16x16xf32, #tpu.memory_space<vmem>>, vector<16x16xf32>
    %cst_31 = arith.constant dense<0.000000e+00> : vector<625x16xf32>
    %68 = tpu.matmul %66, %67, %cst_31 {dimension_numbers = #tpu.dot_dimension_numbers<[1], [0], [0], [1], [0, 0, 1, 1], [], []>} : vector<625x16xf32>, vector<16x16xf32>, vector<625x16xf32> -> vector<625x16xf32>
    %c0_32 = arith.constant 0 : index
    %c0_33 = arith.constant 0 : index
    %69 = vector.load %arg8[%c0_32, %c0_33] : memref<1x16xf32, #tpu.memory_space<vmem>>, vector<1x16xf32>
    %70 = vector.broadcast %69 : vector<1x16xf32> to vector<625x16xf32>
    %71 = arith.addf %68, %70 : vector<625x16xf32>
    %cst_34 = arith.constant 0.000000e+00 : f32
    %72 = vector.broadcast %cst_34 : f32 to vector<625x16xf32>
    %73 = arith.cmpf oge, %71, %72 : vector<625x16xf32>
    %cst_35 = arith.constant 0.00999999977 : f32
    %74 = vector.broadcast %cst_35 : f32 to vector<625x16xf32>
    %75 = arith.mulf %74, %71 : vector<625x16xf32>
    %76 = arith.select %73, %71, %75 : vector<625x16xi1>, vector<625x16xf32>
    %c0_36 = arith.constant 0 : index
    %c0_37 = arith.constant 0 : index
    %77 = vector.load %arg9[%c0_36, %c0_37] : memref<1x16xf32, #tpu.memory_space<vmem>>, vector<1x16xf32>
    %78 = vector.broadcast %77 : vector<1x16xf32> to vector<625x16xf32>
    %79 = arith.mulf %76, %78 : vector<625x16xf32>
    %cst_38 = arith.constant dense<0.000000e+00> : vector<625xf32>
    %80 = vector.multi_reduction <add>, %79, %cst_38 [1] : vector<625x16xf32> to vector<625xf32>
    %81 = vector.shape_cast %80 : vector<625xf32> to vector<625x1xf32>
    %82 = tpu.iota {dimensions = array<i32: 0>} : vector<25x625xi32>
    %83 = tpu.iota {dimensions = array<i32: 1>} : vector<25x625xi32>
    %c25_i32_39 = arith.constant 25 : i32
    %84 = vector.broadcast %c25_i32_39 : i32 to vector<25x625xi32>
    %85 = arith.muli %82, %84 : vector<25x625xi32>
    %86 = arith.cmpi sge, %83, %85 : vector<25x625xi32>
    %c25_i32_40 = arith.constant 25 : i32
    %87 = vector.broadcast %c25_i32_40 : i32 to vector<25x625xi32>
    %88 = arith.muli %82, %87 : vector<25x625xi32>
    %c25_i32_41 = arith.constant 25 : i32
    %89 = vector.broadcast %c25_i32_41 : i32 to vector<25x625xi32>
    %90 = arith.addi %88, %89 : vector<25x625xi32>
    %91 = arith.cmpi slt, %83, %90 : vector<25x625xi32>
    %92 = arith.andi %86, %91 : vector<25x625xi1>
    %93 = arith.extui %92 : vector<25x625xi1> to vector<25x625xi32>
    %94 = arith.sitofp %93 : vector<25x625xi32> to vector<25x625xf32>
    %95 = vector.broadcast %81 : vector<625x1xf32> to vector<625x25xf32>
    %96 = arith.mulf %95, %33 : vector<625x25xf32>
    %cst_42 = arith.constant dense<0.000000e+00> : vector<25x25xf32>
    %97 = tpu.matmul %94, %96, %cst_42 {dimension_numbers = #tpu.dot_dimension_numbers<[1], [0], [0], [1], [0, 0, 1, 1], [], []>} : vector<25x625xf32>, vector<625x25xf32>, vector<25x25xf32> -> vector<25x25xf32>
    %c0_43 = arith.constant 0 : index
    %c0_44 = arith.constant 0 : index
    %98 = vector.load %arg10[%c0_43, %c0_44] : memref<1x1xf32, #tpu.memory_space<vmem>>, vector<1x1xf32>
    %99 = vector.broadcast %98 : vector<1x1xf32> to vector<25x25xf32>
    %100 = arith.addf %97, %99 : vector<25x25xf32>
    %101 = tpu.iota {dimensions = array<i32: 0>} : vector<25x25xi32>
    %102 = tpu.iota {dimensions = array<i32: 1>} : vector<25x25xi32>
    %103 = arith.cmpi eq, %101, %102 : vector<25x25xi32>
    %104 = arith.extui %103 : vector<25x25xi1> to vector<25x25xi32>
    %105 = arith.sitofp %104 : vector<25x25xi32> to vector<25x25xf32>
    %cst_45 = arith.constant 1.000000e+00 : f32
    %106 = vector.broadcast %cst_45 : f32 to vector<25x25xf32>
    %107 = arith.subf %106, %105 : vector<25x25xf32>
    %108 = arith.mulf %100, %107 : vector<25x25xf32>
    %cst_46 = arith.constant dense<0xFF800000> : vector<25xf32>
    %109 = vector.multi_reduction <maximumf>, %108, %cst_46 [1] : vector<25x25xf32> to vector<25xf32>
    %110 = vector.shape_cast %109 : vector<25xf32> to vector<25x1xf32>
    %111 = vector.broadcast %110 : vector<25x1xf32> to vector<25x25xf32>
    %112 = arith.subf %108, %111 : vector<25x25xf32>
    %113 = math.exp %112 : vector<25x25xf32>
    %cst_47 = arith.constant dense<0.000000e+00> : vector<25xf32>
    %114 = vector.multi_reduction <add>, %113, %cst_47 [1] : vector<25x25xf32> to vector<25xf32>
    %115 = vector.shape_cast %114 : vector<25xf32> to vector<25x1xf32>
    %116 = vector.broadcast %115 : vector<25x1xf32> to vector<25x25xf32>
    %117 = arith.divf %113, %116 : vector<25x25xf32>
    %118 = arith.addf %117, %105 : vector<25x25xf32>
    %c0_48 = arith.constant 0 : index
    %c0_49 = arith.constant 0 : index
    %119 = vector.load %arg11[%c0_48, %c0_49] : memref<64x64xf32, #tpu.memory_space<vmem>>, vector<64x64xf32>
    %cst_50 = arith.constant dense<0.000000e+00> : vector<25x64xf32>
    %120 = tpu.matmul %0, %119, %cst_50 {dimension_numbers = #tpu.dot_dimension_numbers<[1], [0], [0], [1], [0, 0, 1, 1], [], []>} : vector<25x64xf32>, vector<64x64xf32>, vector<25x64xf32> -> vector<25x64xf32>
    %cst_51 = arith.constant dense<0.000000e+00> : vector<25x64xf32>
    %121 = tpu.matmul %118, %120, %cst_51 {dimension_numbers = #tpu.dot_dimension_numbers<[1], [0], [0], [1], [0, 0, 1, 1], [], []>} : vector<25x25xf32>, vector<25x64xf32>, vector<25x64xf32> -> vector<25x64xf32>
    %c0_52 = arith.constant 0 : index
    %c0_53 = arith.constant 0 : index
    %122 = vector.load %arg12[%c0_52, %c0_53] : memref<1x64xf32, #tpu.memory_space<vmem>>, vector<1x64xf32>
    %123 = vector.broadcast %122 : vector<1x64xf32> to vector<25x64xf32>
    %124 = arith.addf %121, %123 : vector<25x64xf32>
    %cst_54 = arith.constant 0.000000e+00 : f32
    %125 = vector.broadcast %cst_54 : f32 to vector<25x64xf32>
    %126 = arith.maximumf %124, %125 : vector<25x64xf32>
    %127 = arith.addf %126, %0 : vector<25x64xf32>
    %c0_55 = arith.constant 0 : index
    %c0_56 = arith.constant 0 : index
    %128 = vector.load %arg14[%c0_55, %c0_56] : memref<25x64xf32, #tpu.memory_space<vmem>>, vector<25x64xf32>
    tpu.vector_store %arg14[%c0_55, %c0_56], %127 {strides = array<i32>} : memref<25x64xf32, #tpu.memory_space<vmem>>, vector<25x64xf32>,
    %129 = arith.mulf %127, %127 : vector<25x64xf32>
    %cst_57 = arith.constant dense<0.000000e+00> : vector<25xf32>
    %130 = vector.multi_reduction <add>, %129, %cst_57 [1] : vector<25x64xf32> to vector<25xf32>
    %131 = vector.shape_cast %130 : vector<25xf32> to vector<25x1xf32>
    %132 = math.sqrt %131 : vector<25x1xf32>
    %cst_58 = arith.constant 9.99999996E-13 : f32
    %133 = vector.broadcast %cst_58 : f32 to vector<25x1xf32>
    %134 = arith.maximumf %132, %133 : vector<25x1xf32>
    %135 = vector.broadcast %134 : vector<25x1xf32> to vector<25x64xf32>
    %136 = arith.divf %127, %135 : vector<25x64xf32>
    %c0_59 = arith.constant 0 : index
    %c0_60 = arith.constant 0 : index
    %137 = vector.load %arg13[%c0_59, %c0_60] : memref<16x64xf32, #tpu.memory_space<vmem>>, vector<16x64xf32>
    %cst_61 = arith.constant dense<0.000000e+00> : vector<25x16xf32>
    %138 = tpu.matmul %136, %137, %cst_61 {dimension_numbers = #tpu.dot_dimension_numbers<[1], [1], [0], [0], [0, 0, 1, 0], [], []>} : vector<25x64xf32>, vector<16x64xf32>, vector<25x16xf32> -> vector<25x16xf32>
    %cst_62 = arith.constant 1.600000e+01 : f32
    %139 = vector.broadcast %cst_62 : f32 to vector<25x16xf32>
    %140 = arith.mulf %139, %138 : vector<25x16xf32>
    %c0_63 = arith.constant 0 : index
    %c0_64 = arith.constant 0 : index
    %141 = vector.load %arg15[%c0_63, %c0_64] : memref<25x16xf32, #tpu.memory_space<vmem>>, vector<25x16xf32>
    tpu.vector_store %arg15[%c0_63, %c0_64], %140 {strides = array<i32>} : memref<25x16xf32, #tpu.memory_space<vmem>>, vector<25x16xf32>,
    return
  }
}

module attributes {stable_mosaic.version = 11 : i64} {
  func.func @_prompt_logits_kernel(%arg0: memref<20x64xf32, #tpu.memory_space<vmem>>, %arg1: memref<8x64xf32, #tpu.memory_space<vmem>>, %arg2: memref<10x8xf32, #tpu.memory_space<vmem>>, %arg3: memref<20x10xf32, #tpu.memory_space<vmem>>) attributes {dimension_semantics = [], scalar_prefetch = 0 : i64, scratch_operands = 0 : i64, tpu.core_type = #tpu.core_type<tc>} {
    %c0 = arith.constant 0 : index
    %c0_0 = arith.constant 0 : index
    %0 = vector.load %arg0[%c0, %c0_0] : memref<20x64xf32, #tpu.memory_space<vmem>>, vector<20x64xf32>
    %c0_1 = arith.constant 0 : index
    %c0_2 = arith.constant 0 : index
    %1 = vector.load %arg1[%c0_1, %c0_2] : memref<8x64xf32, #tpu.memory_space<vmem>>, vector<8x64xf32>
    %cst = arith.constant dense<0.000000e+00> : vector<20x8xf32>
    %2 = tpu.matmul %0, %1, %cst {dimension_numbers = #tpu.dot_dimension_numbers<[1], [1], [0], [0], [0, 0, 1, 0], [], []>} : vector<20x64xf32>, vector<8x64xf32>, vector<20x8xf32> -> vector<20x8xf32>
    %3 = arith.mulf %2, %2 : vector<20x8xf32>
    %cst_3 = arith.constant dense<0.000000e+00> : vector<20xf32>
    %4 = vector.multi_reduction <add>, %3, %cst_3 [1] : vector<20x8xf32> to vector<20xf32>
    %5 = vector.shape_cast %4 : vector<20xf32> to vector<20x1xf32>
    %6 = math.sqrt %5 : vector<20x1xf32>
    %cst_4 = arith.constant 9.99999996E-13 : f32
    %7 = vector.broadcast %cst_4 : f32 to vector<20x1xf32>
    %8 = arith.maximumf %6, %7 : vector<20x1xf32>
    %9 = vector.broadcast %8 : vector<20x1xf32> to vector<20x8xf32>
    %10 = arith.divf %2, %9 : vector<20x8xf32>
    %c0_5 = arith.constant 0 : index
    %c0_6 = arith.constant 0 : index
    %11 = vector.load %arg2[%c0_5, %c0_6] : memref<10x8xf32, #tpu.memory_space<vmem>>, vector<10x8xf32>
    %cst_7 = arith.constant dense<0.000000e+00> : vector<20x10xf32>
    %12 = tpu.matmul %10, %11, %cst_7 {dimension_numbers = #tpu.dot_dimension_numbers<[1], [1], [0], [0], [0, 0, 1, 0], [], []>} : vector<20x8xf32>, vector<10x8xf32>, vector<20x10xf32> -> vector<20x10xf32>
    %cst_8 = arith.constant 1.600000e+01 : f32
    %13 = vector.broadcast %cst_8 : f32 to vector<20x10xf32>
    %14 = arith.mulf %13, %12 : vector<20x10xf32>
    %c0_9 = arith.constant 0 : index
    %c0_10 = arith.constant 0 : index
    %15 = vector.load %arg3[%c0_9, %c0_10] : memref<20x10xf32, #tpu.memory_space<vmem>>, vector<20x10xf32>
    tpu.vector_store %arg3[%c0_9, %c0_10], %14 {strides = array<i32>} : memref<20x10xf32, #tpu.memory_space<vmem>>, vector<20x10xf32>,
    return
  }
}

module attributes {stable_mosaic.version = 11 : i64} {
  func.func @_adj_gcn_logits_kernel(%arg0: memref<20x88xf32, #tpu.memory_space<vmem>>, %arg1: memref<88x32xf32, #tpu.memory_space<vmem>>, %arg2: memref<1x32xf32, #tpu.memory_space<vmem>>, %arg3: memref<32x32xf32, #tpu.memory_space<vmem>>, %arg4: memref<1x32xf32, #tpu.memory_space<vmem>>, %arg5: memref<32x16xf32, #tpu.memory_space<vmem>>, %arg6: memref<1x16xf32, #tpu.memory_space<vmem>>, %arg7: memref<16x16xf32, #tpu.memory_space<vmem>>, %arg8: memref<1x16xf32, #tpu.memory_space<vmem>>, %arg9: memref<1x16xf32, #tpu.memory_space<vmem>>, %arg10: memref<1x1xf32, #tpu.memory_space<vmem>>, %arg11: memref<88x64xf32, #tpu.memory_space<vmem>>, %arg12: memref<1x64xf32, #tpu.memory_space<vmem>>, %arg13: memref<16x64xf32, #tpu.memory_space<vmem>>, %arg14: memref<20x64xf32, #tpu.memory_space<vmem>>, %arg15: memref<20x16xf32, #tpu.memory_space<vmem>>) attributes {dimension_semantics = [], scalar_prefetch = 0 : i64, scratch_operands = 0 : i64, tpu.core_type = #tpu.core_type<tc>} {
    %c0 = arith.constant 0 : index
    %c0_0 = arith.constant 0 : index
    %0 = vector.load %arg0[%c0, %c0_0] : memref<20x88xf32, #tpu.memory_space<vmem>>, vector<20x88xf32>
    %1 = arith.mulf %0, %0 : vector<20x88xf32>
    %cst = arith.constant dense<0.000000e+00> : vector<20xf32>
    %2 = vector.multi_reduction <add>, %1, %cst [1] : vector<20x88xf32> to vector<20xf32>
    %3 = vector.shape_cast %2 : vector<20xf32> to vector<20x1xf32>
    %4 = math.sqrt %3 : vector<20x1xf32>
    %cst_1 = arith.constant 9.99999996E-13 : f32
    %5 = vector.broadcast %cst_1 : f32 to vector<20x1xf32>
    %6 = arith.maximumf %4, %5 : vector<20x1xf32>
    %7 = vector.broadcast %6 : vector<20x1xf32> to vector<20x88xf32>
    %8 = arith.divf %0, %7 : vector<20x88xf32>
    %9 = tpu.iota {dimensions = array<i32: 0>} : vector<400x20xi32>
    %10 = tpu.iota {dimensions = array<i32: 1>} : vector<400x20xi32>
    %11 = arith.sitofp %9 : vector<400x20xi32> to vector<400x20xf32>
    %12 = arith.sitofp %10 : vector<400x20xi32> to vector<400x20xf32>
    %c20_i32 = arith.constant 20 : i32
    %13 = vector.broadcast %c20_i32 : i32 to vector<400x20xi32>
    %14 = arith.muli %10, %13 : vector<400x20xi32>
    %15 = arith.cmpi sge, %9, %14 : vector<400x20xi32>
    %c20_i32_2 = arith.constant 20 : i32
    %16 = vector.broadcast %c20_i32_2 : i32 to vector<400x20xi32>
    %17 = arith.muli %10, %16 : vector<400x20xi32>
    %c20_i32_3 = arith.constant 20 : i32
    %18 = vector.broadcast %c20_i32_3 : i32 to vector<400x20xi32>
    %19 = arith.addi %17, %18 : vector<400x20xi32>
    %20 = arith.cmpi slt, %9, %19 : vector<400x20xi32>
    %21 = arith.andi %15, %20 : vector<400x20xi1>
    %22 = arith.extui %21 : vector<400x20xi1> to vector<400x20xi32>
    %23 = arith.sitofp %22 : vector<400x20xi32> to vector<400x20xf32>
    %24 = arith.mulf %23, %12 : vector<400x20xf32>
    %cst_4 = arith.constant dense<0.000000e+00> : vector<400xf32>
    %25 = vector.multi_reduction <add>, %24, %cst_4 [1] : vector<400x20xf32> to vector<400xf32>
    %26 = vector.shape_cast %25 : vector<400xf32> to vector<400x1xf32>
    %cst_5 = arith.constant 2.000000e+01 : f32
    %27 = vector.broadcast %cst_5 : f32 to vector<400x1xf32>
    %28 = arith.mulf %26, %27 : vector<400x1xf32>
    %29 = vector.broadcast %28 : vector<400x1xf32> to vector<400x20xf32>
    %30 = arith.subf %11, %29 : vector<400x20xf32>
    %31 = arith.cmpf oeq, %30, %12 : vector<400x20xf32>
    %32 = arith.extui %31 : vector<400x20xi1> to vector<400x20xi32>
    %33 = arith.sitofp %32 : vector<400x20xi32> to vector<400x20xf32>
    %cst_6 = arith.constant dense<0.000000e+00> : vector<400x88xf32>
    %34 = tpu.matmul %23, %8, %cst_6 {dimension_numbers = #tpu.dot_dimension_numbers<[1], [0], [0], [1], [0, 0, 1, 1], [], []>} : vector<400x20xf32>, vector<20x88xf32>, vector<400x88xf32> -> vector<400x88xf32>
    %cst_7 = arith.constant dense<0.000000e+00> : vector<400x88xf32>
    %35 = tpu.matmul %33, %8, %cst_7 {dimension_numbers = #tpu.dot_dimension_numbers<[1], [0], [0], [1], [0, 0, 1, 1], [], []>} : vector<400x20xf32>, vector<20x88xf32>, vector<400x88xf32> -> vector<400x88xf32>
    %36 = arith.mulf %34, %35 : vector<400x88xf32>
    %c0_8 = arith.constant 0 : index
    %c0_9 = arith.constant 0 : index
    %37 = vector.load %arg1[%c0_8, %c0_9] : memref<88x32xf32, #tpu.memory_space<vmem>>, vector<88x32xf32>
    %cst_10 = arith.constant dense<0.000000e+00> : vector<400x32xf32>
    %38 = tpu.matmul %36, %37, %cst_10 {dimension_numbers = #tpu.dot_dimension_numbers<[1], [0], [0], [1], [0, 0, 1, 1], [], []>} : vector<400x88xf32>, vector<88x32xf32>, vector<400x32xf32> -> vector<400x32xf32>
    %c0_11 = arith.constant 0 : index
    %c0_12 = arith.constant 0 : index
    %39 = vector.load %arg2[%c0_11, %c0_12] : memref<1x32xf32, #tpu.memory_space<vmem>>, vector<1x32xf32>
    %40 = vector.broadcast %39 : vector<1x32xf32> to vector<400x32xf32>
    %41 = arith.addf %38, %40 : vector<400x32xf32>
    %cst_13 = arith.constant 0.000000e+00 : f32
    %42 = vector.broadcast %cst_13 : f32 to vector<400x32xf32>
    %43 = arith.cmpf oge, %41, %42 : vector<400x32xf32>
    %cst_14 = arith.constant 0.00999999977 : f32
    %44 = vector.broadcast %cst_14 : f32 to vector<400x32xf32>
    %45 = arith.mulf %44, %41 : vector<400x32xf32>
    %46 = arith.select %43, %41, %45 : vector<400x32xi1>, vector<400x32xf32>
    %c0_15 = arith.constant 0 : index
    %c0_16 = arith.constant 0 : index
    %47 = vector.load %arg3[%c0_15, %c0_16] : memref<32x32xf32, #tpu.memory_space<vmem>>, vector<32x32xf32>
    %cst_17 = arith.constant dense<0.000000e+00> : vector<400x32xf32>
    %48 = tpu.matmul %46, %47, %cst_17 {dimension_numbers = #tpu.dot_dimension_numbers<[1], [0], [0], [1], [0, 0, 1, 1], [], []>} : vector<400x32xf32>, vector<32x32xf32>, vector<400x32xf32> -> vector<400x32xf32>
    %c0_18 = arith.constant 0 : index
    %c0_19 = arith.constant 0 : index
    %49 = vector.load %arg4[%c0_18, %c0_19] : memref<1x32xf32, #tpu.memory_space<vmem>>, vector<1x32xf32>
    %50 = vector.broadcast %49 : vector<1x32xf32> to vector<400x32xf32>
    %51 = arith.addf %48, %50 : vector<400x32xf32>
    %cst_20 = arith.constant 0.000000e+00 : f32
    %52 = vector.broadcast %cst_20 : f32 to vector<400x32xf32>
    %53 = arith.cmpf oge, %51, %52 : vector<400x32xf32>
    %cst_21 = arith.constant 0.00999999977 : f32
    %54 = vector.broadcast %cst_21 : f32 to vector<400x32xf32>
    %55 = arith.mulf %54, %51 : vector<400x32xf32>
    %56 = arith.select %53, %51, %55 : vector<400x32xi1>, vector<400x32xf32>
    %c0_22 = arith.constant 0 : index
    %c0_23 = arith.constant 0 : index
    %57 = vector.load %arg5[%c0_22, %c0_23] : memref<32x16xf32, #tpu.memory_space<vmem>>, vector<32x16xf32>
    %cst_24 = arith.constant dense<0.000000e+00> : vector<400x16xf32>
    %58 = tpu.matmul %56, %57, %cst_24 {dimension_numbers = #tpu.dot_dimension_numbers<[1], [0], [0], [1], [0, 0, 1, 1], [], []>} : vector<400x32xf32>, vector<32x16xf32>, vector<400x16xf32> -> vector<400x16xf32>
    %c0_25 = arith.constant 0 : index
    %c0_26 = arith.constant 0 : index
    %59 = vector.load %arg6[%c0_25, %c0_26] : memref<1x16xf32, #tpu.memory_space<vmem>>, vector<1x16xf32>
    %60 = vector.broadcast %59 : vector<1x16xf32> to vector<400x16xf32>
    %61 = arith.addf %58, %60 : vector<400x16xf32>
    %cst_27 = arith.constant 0.000000e+00 : f32
    %62 = vector.broadcast %cst_27 : f32 to vector<400x16xf32>
    %63 = arith.cmpf oge, %61, %62 : vector<400x16xf32>
    %cst_28 = arith.constant 0.00999999977 : f32
    %64 = vector.broadcast %cst_28 : f32 to vector<400x16xf32>
    %65 = arith.mulf %64, %61 : vector<400x16xf32>
    %66 = arith.select %63, %61, %65 : vector<400x16xi1>, vector<400x16xf32>
    %c0_29 = arith.constant 0 : index
    %c0_30 = arith.constant 0 : index
    %67 = vector.load %arg7[%c0_29, %c0_30] : memref<16x16xf32, #tpu.memory_space<vmem>>, vector<16x16xf32>
    %cst_31 = arith.constant dense<0.000000e+00> : vector<400x16xf32>
    %68 = tpu.matmul %66, %67, %cst_31 {dimension_numbers = #tpu.dot_dimension_numbers<[1], [0], [0], [1], [0, 0, 1, 1], [], []>} : vector<400x16xf32>, vector<16x16xf32>, vector<400x16xf32> -> vector<400x16xf32>
    %c0_32 = arith.constant 0 : index
    %c0_33 = arith.constant 0 : index
    %69 = vector.load %arg8[%c0_32, %c0_33] : memref<1x16xf32, #tpu.memory_space<vmem>>, vector<1x16xf32>
    %70 = vector.broadcast %69 : vector<1x16xf32> to vector<400x16xf32>
    %71 = arith.addf %68, %70 : vector<400x16xf32>
    %cst_34 = arith.constant 0.000000e+00 : f32
    %72 = vector.broadcast %cst_34 : f32 to vector<400x16xf32>
    %73 = arith.cmpf oge, %71, %72 : vector<400x16xf32>
    %cst_35 = arith.constant 0.00999999977 : f32
    %74 = vector.broadcast %cst_35 : f32 to vector<400x16xf32>
    %75 = arith.mulf %74, %71 : vector<400x16xf32>
    %76 = arith.select %73, %71, %75 : vector<400x16xi1>, vector<400x16xf32>
    %c0_36 = arith.constant 0 : index
    %c0_37 = arith.constant 0 : index
    %77 = vector.load %arg9[%c0_36, %c0_37] : memref<1x16xf32, #tpu.memory_space<vmem>>, vector<1x16xf32>
    %78 = vector.broadcast %77 : vector<1x16xf32> to vector<400x16xf32>
    %79 = arith.mulf %76, %78 : vector<400x16xf32>
    %cst_38 = arith.constant dense<0.000000e+00> : vector<400xf32>
    %80 = vector.multi_reduction <add>, %79, %cst_38 [1] : vector<400x16xf32> to vector<400xf32>
    %81 = vector.shape_cast %80 : vector<400xf32> to vector<400x1xf32>
    %82 = tpu.iota {dimensions = array<i32: 0>} : vector<20x400xi32>
    %83 = tpu.iota {dimensions = array<i32: 1>} : vector<20x400xi32>
    %c20_i32_39 = arith.constant 20 : i32
    %84 = vector.broadcast %c20_i32_39 : i32 to vector<20x400xi32>
    %85 = arith.muli %82, %84 : vector<20x400xi32>
    %86 = arith.cmpi sge, %83, %85 : vector<20x400xi32>
    %c20_i32_40 = arith.constant 20 : i32
    %87 = vector.broadcast %c20_i32_40 : i32 to vector<20x400xi32>
    %88 = arith.muli %82, %87 : vector<20x400xi32>
    %c20_i32_41 = arith.constant 20 : i32
    %89 = vector.broadcast %c20_i32_41 : i32 to vector<20x400xi32>
    %90 = arith.addi %88, %89 : vector<20x400xi32>
    %91 = arith.cmpi slt, %83, %90 : vector<20x400xi32>
    %92 = arith.andi %86, %91 : vector<20x400xi1>
    %93 = arith.extui %92 : vector<20x400xi1> to vector<20x400xi32>
    %94 = arith.sitofp %93 : vector<20x400xi32> to vector<20x400xf32>
    %95 = vector.broadcast %81 : vector<400x1xf32> to vector<400x20xf32>
    %96 = arith.mulf %95, %33 : vector<400x20xf32>
    %cst_42 = arith.constant dense<0.000000e+00> : vector<20x20xf32>
    %97 = tpu.matmul %94, %96, %cst_42 {dimension_numbers = #tpu.dot_dimension_numbers<[1], [0], [0], [1], [0, 0, 1, 1], [], []>} : vector<20x400xf32>, vector<400x20xf32>, vector<20x20xf32> -> vector<20x20xf32>
    %c0_43 = arith.constant 0 : index
    %c0_44 = arith.constant 0 : index
    %98 = vector.load %arg10[%c0_43, %c0_44] : memref<1x1xf32, #tpu.memory_space<vmem>>, vector<1x1xf32>
    %99 = vector.broadcast %98 : vector<1x1xf32> to vector<20x20xf32>
    %100 = arith.addf %97, %99 : vector<20x20xf32>
    %101 = tpu.iota {dimensions = array<i32: 0>} : vector<20x20xi32>
    %102 = tpu.iota {dimensions = array<i32: 1>} : vector<20x20xi32>
    %103 = arith.cmpi eq, %101, %102 : vector<20x20xi32>
    %104 = arith.extui %103 : vector<20x20xi1> to vector<20x20xi32>
    %105 = arith.sitofp %104 : vector<20x20xi32> to vector<20x20xf32>
    %cst_45 = arith.constant 1.000000e+00 : f32
    %106 = vector.broadcast %cst_45 : f32 to vector<20x20xf32>
    %107 = arith.subf %106, %105 : vector<20x20xf32>
    %108 = arith.mulf %100, %107 : vector<20x20xf32>
    %cst_46 = arith.constant dense<0xFF800000> : vector<20xf32>
    %109 = vector.multi_reduction <maximumf>, %108, %cst_46 [1] : vector<20x20xf32> to vector<20xf32>
    %110 = vector.shape_cast %109 : vector<20xf32> to vector<20x1xf32>
    %111 = vector.broadcast %110 : vector<20x1xf32> to vector<20x20xf32>
    %112 = arith.subf %108, %111 : vector<20x20xf32>
    %113 = math.exp %112 : vector<20x20xf32>
    %cst_47 = arith.constant dense<0.000000e+00> : vector<20xf32>
    %114 = vector.multi_reduction <add>, %113, %cst_47 [1] : vector<20x20xf32> to vector<20xf32>
    %115 = vector.shape_cast %114 : vector<20xf32> to vector<20x1xf32>
    %116 = vector.broadcast %115 : vector<20x1xf32> to vector<20x20xf32>
    %117 = arith.divf %113, %116 : vector<20x20xf32>
    %118 = arith.addf %117, %105 : vector<20x20xf32>
    %c0_48 = arith.constant 0 : index
    %c0_49 = arith.constant 0 : index
    %119 = vector.load %arg11[%c0_48, %c0_49] : memref<88x64xf32, #tpu.memory_space<vmem>>, vector<88x64xf32>
    %cst_50 = arith.constant dense<0.000000e+00> : vector<20x64xf32>
    %120 = tpu.matmul %0, %119, %cst_50 {dimension_numbers = #tpu.dot_dimension_numbers<[1], [0], [0], [1], [0, 0, 1, 1], [], []>} : vector<20x88xf32>, vector<88x64xf32>, vector<20x64xf32> -> vector<20x64xf32>
    %cst_51 = arith.constant dense<0.000000e+00> : vector<20x64xf32>
    %121 = tpu.matmul %118, %120, %cst_51 {dimension_numbers = #tpu.dot_dimension_numbers<[1], [0], [0], [1], [0, 0, 1, 1], [], []>} : vector<20x20xf32>, vector<20x64xf32>, vector<20x64xf32> -> vector<20x64xf32>
    %c0_52 = arith.constant 0 : index
    %c0_53 = arith.constant 0 : index
    %122 = vector.load %arg12[%c0_52, %c0_53] : memref<1x64xf32, #tpu.memory_space<vmem>>, vector<1x64xf32>
    %123 = vector.broadcast %122 : vector<1x64xf32> to vector<20x64xf32>
    %124 = arith.addf %121, %123 : vector<20x64xf32>
    %cst_54 = arith.constant 0.000000e+00 : f32
    %125 = vector.broadcast %cst_54 : f32 to vector<20x64xf32>
    %126 = arith.maximumf %124, %125 : vector<20x64xf32>
    %c0_55 = arith.constant 0 : index
    %c0_56 = arith.constant 0 : index
    %127 = vector.load %arg14[%c0_55, %c0_56] : memref<20x64xf32, #tpu.memory_space<vmem>>, vector<20x64xf32>
    tpu.vector_store %arg14[%c0_55, %c0_56], %126 {strides = array<i32>} : memref<20x64xf32, #tpu.memory_space<vmem>>, vector<20x64xf32>,
    %128 = arith.mulf %126, %126 : vector<20x64xf32>
    %cst_57 = arith.constant dense<0.000000e+00> : vector<20xf32>
    %129 = vector.multi_reduction <add>, %128, %cst_57 [1] : vector<20x64xf32> to vector<20xf32>
    %130 = vector.shape_cast %129 : vector<20xf32> to vector<20x1xf32>
    %131 = math.sqrt %130 : vector<20x1xf32>
    %cst_58 = arith.constant 9.99999996E-13 : f32
    %132 = vector.broadcast %cst_58 : f32 to vector<20x1xf32>
    %133 = arith.maximumf %131, %132 : vector<20x1xf32>
    %134 = vector.broadcast %133 : vector<20x1xf32> to vector<20x64xf32>
    %135 = arith.divf %126, %134 : vector<20x64xf32>
    %c0_59 = arith.constant 0 : index
    %c0_60 = arith.constant 0 : index
    %136 = vector.load %arg13[%c0_59, %c0_60] : memref<16x64xf32, #tpu.memory_space<vmem>>, vector<16x64xf32>
    %cst_61 = arith.constant dense<0.000000e+00> : vector<20x16xf32>
    %137 = tpu.matmul %135, %136, %cst_61 {dimension_numbers = #tpu.dot_dimension_numbers<[1], [1], [0], [0], [0, 0, 1, 0], [], []>} : vector<20x64xf32>, vector<16x64xf32>, vector<20x16xf32> -> vector<20x16xf32>
    %cst_62 = arith.constant 1.600000e+01 : f32
    %138 = vector.broadcast %cst_62 : f32 to vector<20x16xf32>
    %139 = arith.mulf %138, %137 : vector<20x16xf32>
    %c0_63 = arith.constant 0 : index
    %c0_64 = arith.constant 0 : index
    %140 = vector.load %arg15[%c0_63, %c0_64] : memref<20x16xf32, #tpu.memory_space<vmem>>, vector<20x16xf32>
    tpu.vector_store %arg15[%c0_63, %c0_64], %139 {strides = array<i32>} : memref<20x16xf32, #tpu.memory_space<vmem>>, vector<20x16xf32>,
    return
  }
}

</mosaic_0001>

<llo_original>
// kernel: mynet_forward.4
$region0: #{mynet_forward.4}
  #allocation0 [shape = 'u32[]', space=smem, size = 0x4, offset = 0x4, fixed_abs, tag = 'smem constant byte address 0x4 - core index']
  #allocation1 [shape = 'u32[72,128]{1,0:T(1,128)}', space=vmem, size = 0x9000, scoped, tag = 'internal scratch']
  %s0 = inlined_call_operand.vmem [shape: f32[20,64], index: 0, kind: input, shape index: {}]
  %s1 = inlined_call_operand.vmem [shape: f32[8,64], index: 1, kind: input, shape index: {}]
  %s2 = inlined_call_operand.vmem [shape: f32[10,8], index: 2, kind: input, shape index: {}]
  %s3 = inlined_call_operand.vmem [shape: f32[20,10], index: 3, kind: output, shape index: {}]
  %s4 = sld [smem:[#allocation0]]
  $region22: #{mynet_forward.4} parent=0
    _
  %s6 = ssub.s32 1, %s4
  %s7 = scalar_select 0, %s6, %s4
  // Predicated region
  $region2: #{mynet_forward.4} parent=0 // pred_check
    _
  $region3: #{mynet_forward.4} parent=0 // pred_check_branch
    %9 = sbr.rel (0) target = $region5
  $region4: #{mynet_forward.4} parent=0 // pred_region
    _
  $region5: #{mynet_forward.4} parent=0 // pred_fallthru
    _
  // Predicated region
  $region6: #{mynet_forward.4} parent=0 // pred_check
    _
  $region7: #{mynet_forward.4} parent=0 // pred_check_branch
    %11 = sbr.rel (0) target = $region9
  $region8: #{mynet_forward.4} parent=0 // pred_region
    _
  $region9: #{mynet_forward.4} parent=0 // pred_fallthru
    _
  // Predicated region
  $region10: #{mynet_forward.4} parent=0 // pred_check
    _
  $region11: #{mynet_forward.4} parent=0 // pred_check_branch
    %13 = sbr.rel (0) target = $region13
  $region12: #{mynet_forward.4} parent=0 // pred_region
    _
  $region13: #{mynet_forward.4} parent=0 // pred_fallthru
    _
  %v14 = vld [vmem:[%s0] sm:$0xff]
  %v15 = vld [vmem:[%s0 + $0x8] sm:$0xff]
  %v16 = vld [vmem:[%s0 + $0x10] sm:$0xf]
  %v17 = vld [vmem:[%s1] sm:$0xff]
  %vm18 = vcmask 523264
  %v20 = vsel %vm18, %v14, 0
  %v23 = vsel %vm18, %v15, 0
  %v26 = vsel %vm18, %v16, 0
  %v29 = vsel %vm18, %v17, 0
  %31 = vmatpush.xpose.msra.mxu0 0.0
  %32 = vmatpush.xpose.msra.mxu0 0.0
  %33 = vmatpush.xpose.msra.mxu0 0.0
  %34 = vmatpush.xpose.msra.mxu0 0.0
  %35 = vmatpush.xpose.msra.mxu0 0.0
  %36 = vmatpush.xpose.msra.mxu0 0.0
  %37 = vmatpush.xpose.msra.mxu0 0.0
  %38 = vmatpush.xpose.msra.mxu0 0.0
  %39 = vmatpush.xpose.msra.mxu0 0.0
  %40 = vmatpush.xpose.msra.mxu0 0.0
  %41 = vmatpush.xpose.msra.mxu0 0.0
  %42 = vmatpush.xpose.msra.mxu0 0.0
  %43 = vmatpush.xpose.msra.mxu0 0.0
  %44 = vmatpush.xpose.msra.mxu0 0.0
  %45 = vmatpush.xpose.msra.mxu0 0.0
  %46 = vmatpush.xpose.msra.mxu0 %v29
  %47 = vmatmul.f32.gmra.mxu0 %v20
  %v48 = vpop.f32.mrf.mxu0
  %v49 = vadd.f32 0.0, %v48
  %50 = vmatmul.f32.gmra.mxu0 %v23
  %v51 = vpop.f32.mrf.mxu0
  %v52 = vadd.f32 0.0, %v51
  %53 = vmatmul.f32.gmra.mxu0 %v26
  %v54 = vpop.f32.mrf.mxu0
  %v55 = vadd.f32 0.0, %v54
  %56 = vdwg.mxu0
  %v57 = vmul.f32 %v49, %v49
  %v58 = vmul.f32 %v52, %v52
  %v59 = vmul.f32 %v55, %v55
  %vm60 = vcmask 64512
  %v61 = vsel %vm60, %v57, 0.0
  %62 = vadd.xlane.f32.xlu0 %v61
  %v63 = vpop.xlane.xlu0 %62
  %v64 = vsel %vm60, %v58, 0.0
  %65 = vadd.xlane.f32.xlu0 %v64
  %v66 = vpop.xlane.xlu0 %65
  %vm67 = vcmask 60416
  %v68 = vsel %vm67, %v59, 0.0
  %69 = vadd.xlane.f32.xlu0 %v68
  %v70 = vpop.xlane.xlu0 %69
  %v71 = vrsqrt.pop %v63
  %v72 = vmul.f32 %v71, %v63
  %v73 = vmul.f32 %v72, %v71
  %v74 = vmul.f32 0.5, %v73
  %v75 = vsub.f32 1.5, %v74
  %v76 = vmul.f32 %v71, %v75
  %v77 = vmul.f32 %v63, %v76
  %vm78 = vcmp.eq.f32.partialorder %v63, inf
  %v79 = vsel %vm78, %v63, %v77
  %vm80 = vcmp.eq.f32.partialorder %v63, 0.0
  %v81 = vand.u32 %v63, 2147483648
  %v82 = vsel %vm80, %v81, %v79
  %v83 = vrsqrt.pop %v66
  %v84 = vmul.f32 %v83, %v66
  %v85 = vmul.f32 %v84, %v83
  %v86 = vmul.f32 0.5, %v85
  %v87 = vsub.f32 1.5, %v86
  %v88 = vmul.f32 %v83, %v87
  %v89 = vmul.f32 %v66, %v88
  %vm90 = vcmp.eq.f32.partialorder %v66, inf
  %v91 = vsel %vm90, %v66, %v89
  %vm92 = vcmp.eq.f32.partialorder %v66, 0.0
  %v93 = vand.u32 %v66, 2147483648
  %v94 = vsel %vm92, %v93, %v91
  %v95 = vrsqrt.pop %v70
  %v96 = vmul.f32 %v95, %v70
  %v97 = vmul.f32 %v96, %v95
  %v98 = vmul.f32 0.5, %v97
  %v99 = vsub.f32 1.5, %v98
  %v100 = vmul.f32 %v95, %v99
  %v101 = vmul.f32 %v70, %v100
  %vm102 = vcmp.eq.f32.partialorder %v70, inf
  %v103 = vsel %vm102, %v70, %v101
  %vm104 = vcmp.eq.f32.partialorder %v70, 0.0
  %v105 = vand.u32 %v70, 2147483648
  %v106 = vsel %vm104, %v105, %v103
  %v107 = vmax.f32 %v82, 1e-12
  %v108 = vmax.f32 %v94, 1e-12
  %v109 = vmax.f32 %v106, 1e-12
  %v110 = vrcp.pop %v107
  %v111 = vmul.f32 %v107, %v110
  %v112 = vsub.f32 1.0, %v111
  %v113 = vmul.f32 %v110, %v112
  %v114 = vadd.f32 %v110, %v113
  %vm115 = vweird.f32 %v107
  %vm116 = vweird.f32 %v110
  %vm117 = vmor %vm115, %vm116
  %v118 = vsel %vm117, %v110, %v114
  %v119 = vand.u32 2147483647, %v107
  %vm120 = vcmp.eq.f32.partialorder %v119, 8.507059e+37
  %v121 = vand.u32 %v107, 2147483648
  %v122 = vor.u32 1.1754944e-38, %v121
  %v123 = vsel %vm120, %v122, %v118
  %v124 = vmul.f32 %v49, %v123
  %v125 = vrcp.pop %v108
  %v126 = vmul.f32 %v108, %v125
  %v127 = vsub.f32 1.0, %v126
  %v128 = vmul.f32 %v125, %v127
  %v129 = vadd.f32 %v125, %v128
  %vm130 = vweird.f32 %v108
  %vm131 = vweird.f32 %v125
  %vm132 = vmor %vm130, %vm131
  %v133 = vsel %vm132, %v125, %v129
  %v134 = vand.u32 2147483647, %v108
  %vm135 = vcmp.eq.f32.partialorder %v134, 8.507059e+37
  %v136 = vand.u32 %v108, 2147483648
  %v137 = vor.u32 1.1754944e-38, %v136
  %v138 = vsel %vm135, %v137, %v133
  %v139 = vmul.f32 %v52, %v138
  %v140 = vrcp.pop %v109
  %v141 = vmul.f32 %v109, %v140
  %v142 = vsub.f32 1.0, %v141
  %v143 = vmul.f32 %v140, %v142
  %v144 = vadd.f32 %v140, %v143
  %vm145 = vweird.f32 %v109
  %vm146 = vweird.f32 %v140
  %vm147 = vmor %vm145, %vm146
  %v148 = vsel %vm147, %v140, %v144
  %v149 = vand.u32 2147483647, %v109
  %vm150 = vcmp.eq.f32.partialorder %v149, 8.507059e+37
  %v151 = vand.u32 %v109, 2147483648
  %v152 = vor.u32 1.1754944e-38, %v151
  %v153 = vsel %vm150, %v152, %v148
  %v154 = vmul.f32 %v55, %v153
  %v155 = vld [vmem:[%s2] sm:$0xff]
  %v156 = vld [vmem:[%s2 + $0x8] sm:$0x3]
  %v158 = vsel %vm60, %v124, 0
  %v161 = vsel %vm60, %v139, 0
  %v164 = vsel %vm60, %v154, 0
  %v167 = vsel %vm60, %v155, 0
  %v170 = vsel %vm60, %v156, 0
  %172 = vmatpush.xpose.msra.mxu0 0.0
  %173 = vmatpush.xpose.msra.mxu0 0.0
  %174 = vmatpush.xpose.msra.mxu0 0.0
  %175 = vmatpush.xpose.msra.mxu0 0.0
  %176 = vmatpush.xpose.msra.mxu0 0.0
  %177 = vmatpush.xpose.msra.mxu0 0.0
  %178 = vmatpush.xpose.msra.mxu0 0.0
  %179 = vmatpush.xpose.msra.mxu0 0.0
  %180 = vmatpush.xpose.msra.mxu0 0.0
  %181 = vmatpush.xpose.msra.mxu0 0.0
  %182 = vmatpush.xpose.msra.mxu0 0.0
  %183 = vmatpush.xpose.msra.mxu0 0.0
  %184 = vmatpush.xpose.msra.mxu0 0.0
  %185 = vmatpush.xpose.msra.mxu0 0.0
  %186 = vmatpush.xpose.msra.mxu0 %v170
  %187 = vmatpush.xpose.msra.mxu0 %v167
  %188 = vmatmul.f32.gmra.mxu0 %v158
  %v189 = vpop.f32.mrf.mxu0
  %v190 = vadd.f32 0.0, %v189
  %191 = vmatmul.f32.gmra.mxu0 %v161
  %v192 = vpop.f32.mrf.mxu0
  %v193 = vadd.f32 0.0, %v192
  %194 = vmatmul.f32.gmra.mxu0 %v164
  %v195 = vpop.f32.mrf.mxu0
  %v196 = vadd.f32 0.0, %v195
  %197 = vdwg.mxu0
  %v198 = vmul.f32 %v190, 16.0
  %v199 = vmul.f32 %v193, 16.0
  %v200 = vmul.f32 %v196, 16.0
  %vm201 = vcmask 80896
  %202 = vst.msk [vmem:[%s3] sm:$0xff] %vm201, %v198
  %203 = vst.msk [vmem:[%s3 + $0x8] sm:$0xff] %vm201, %v199
  %vm204 = vcmask 76800
  %205 = vst.msk [vmem:[%s3 + $0x10] sm:$0xf] %vm204, %v200
  // Predicated region
  $region14: #{mynet_forward.4} parent=0 // pred_check
    _
  $region15: #{mynet_forward.4} parent=0 // pred_check_branch
    %207 = sbr.rel (0) target = $region17
  $region16: #{mynet_forward.4} parent=0 // pred_region
    _
  $region17: #{mynet_forward.4} parent=0 // pred_fallthru
    _
  // Predicated region
  $region18: #{mynet_forward.4} parent=0 // pred_check
    _
  $region19: #{mynet_forward.4} parent=0 // pred_check_branch
    %209 = sbr.rel (0) target = $region21
  $region20: #{mynet_forward.4} parent=0 // pred_region
    _
  $region21: #{mynet_forward.4} parent=0 // pred_fallthru
    _

// kernel: mynet_forward.5
$region0: #{mynet_forward.5}
  #allocation0 [shape = 'u32[]', space=smem, size = 0x4, offset = 0x4, fixed_abs, tag = 'smem constant byte address 0x4 - core index']
  #allocation1 [shape = 'u32[72,128]{1,0:T(1,128)}', space=vmem, size = 0x9000, scoped, tag = 'internal scratch']
  #allocation2 [shape = 'f32[1,1]{1,0:T(1,128)S(1)}', space=vmem, size = 0x200, scoped, tag = 'scoped memory for mynet_forward.5']
  %s0 = inlined_call_operand.vmem [shape: f32[20,88], index: 0, kind: input, shape index: {}]
  %s1 = inlined_call_operand.vmem [shape: f32[88,32], index: 1, kind: input, shape index: {}]
  %s2 = inlined_call_operand.vmem [shape: f32[1,32], index: 2, kind: input, shape index: {}]
  %s3 = inlined_call_operand.vmem [shape: f32[32,32], index: 3, kind: input, shape index: {}]
  %s4 = inlined_call_operand.vmem [shape: f32[1,32], index: 4, kind: input, shape index: {}]
  %s5 = inlined_call_operand.vmem [shape: f32[32,16], index: 5, kind: input, shape index: {}]
  %s6 = inlined_call_operand.vmem [shape: f32[1,16], index: 6, kind: input, shape index: {}]
  %s7 = inlined_call_operand.vmem [shape: f32[16,16], index: 7, kind: input, shape index: {}]
  %s8 = inlined_call_operand.vmem [shape: f32[1,16], index: 8, kind: input, shape index: {}]
  %s9 = inlined_call_operand.vmem [shape: f32[1,16], index: 9, kind: input, shape index: {}]
  %s10 = inlined_call_operand.<no memory space> [shape: f32[1,1], index: 10, kind: input, shape index: {}]
  %s11 = inlined_call_operand.vmem [shape: f32[88,64], index: 11, kind: input, shape index: {}]
  %s12 = inlined_call_operand.vmem [shape: f32[1,64], index: 12, kind: input, shape index: {}]
  %s13 = inlined_call_operand.vmem [shape: f32[16,64], index: 13, kind: input, shape index: {}]
  %s14 = inlined_call_operand.hbm [shape: f32[20,64], index: 14, kind: output, shape index: {0}]
  %s15 = inlined_call_operand.vmem [shape: f32[20,16], index: 15, kind: output, shape index: {1}]
  %16 = xla_tuple %s14, %s15
  %s17 = sld [smem:[#allocation0]]
  $region74: #{mynet_forward.5} parent=0
    _
  %s19 = ssub.s32 1, %s17
  %s20 = scalar_select 0, %s19, %s17
  %v21 = vstv %s10
  %22 = vst [vmem:[#allocation2] sm:$0x1] %v21
  $region1: #{mynet_forward.5} parent=0
    #allocation3 [shape = 'u8[12288]{0}', space=vmem, size = 0x3000, scoped, tag = 'output window, operand 0, single buffered']
    #allocation4 [shape = 's32[1]{0}', space=sflag, size = 0x4, scoped, tag = 'scoped memory for mynet_forward.5']
    %23 = vsyncpa [#allocation4], 0
    // Predicated region
    $region2: #{mynet_forward.5} parent=1 // pred_check
      _
    $region3: #{mynet_forward.5} parent=1 // pred_check_branch
      %25 = sbr.rel (0) target = $region5
    $region4: #{mynet_forward.5} parent=1 // pred_region
      _
    $region5: #{mynet_forward.5} parent=1 // pred_fallthru
      _
    // Predicated region
    $region6: #{mynet_forward.5} parent=1 // pred_check
      _
    $region7: #{mynet_forward.5} parent=1 // pred_check_branch
      %27 = sbr.rel (0) target = $region9
    $region8: #{mynet_forward.5} parent=1 // pred_region
      _
    $region9: #{mynet_forward.5} parent=1 // pred_fallthru
      _
    // Predicated region
    $region10: #{mynet_forward.5} parent=1 // pred_check
      _
    $region11: #{mynet_forward.5} parent=1 // pred_check_branch
      %29 = sbr.rel (0) target = $region13
    $region12: #{mynet_forward.5} parent=1 // pred_region
      _
    $region13: #{mynet_forward.5} parent=1 // pred_fallthru
      _
    // Predicated region
    $region14: #{mynet_forward.5} parent=1 // pred_check
      _
    $region15: #{mynet_forward.5} parent=1 // pred_check_branch
      %31 = sbr.rel (0) target = $region17
    $region16: #{mynet_forward.5} parent=1 // pred_region
      _
    $region17: #{mynet_forward.5} parent=1 // pred_fallthru
      _
    // Predicated region
    $region18: #{mynet_forward.5} parent=1 // pred_check
      _
    $region19: #{mynet_forward.5} parent=1 // pred_check_branch
      %33 = sbr.rel (0) target = $region21
    $region20: #{mynet_forward.5} parent=1 // pred_region
      _
    $region21: #{mynet_forward.5} parent=1 // pred_fallthru
      _
    // Predicated region
    $region22: #{mynet_forward.5} parent=1 // pred_check
      _
    $region23: #{mynet_forward.5} parent=1 // pred_check_branch
      %35 = sbr.rel (0) target = $region25
    $region24: #{mynet_forward.5} parent=1 // pred_region
      _
    $region25: #{mynet_forward.5} parent=1 // pred_fallthru
      _
    // Predicated region
    $region26: #{mynet_forward.5} parent=1 // pred_check
      _
    $region27: #{mynet_forward.5} parent=1 // pred_check_branch
      %37 = sbr.rel (0) target = $region29
    $region28: #{mynet_forward.5} parent=1 // pred_region
      _
    $region29: #{mynet_forward.5} parent=1 // pred_fallthru
      _
    // Predicated region
    $region30: #{mynet_forward.5} parent=1 // pred_check
      _
    $region31: #{mynet_forward.5} parent=1 // pred_check_branch
      %39 = sbr.rel (0) target = $region33
    $region32: #{mynet_forward.5} parent=1 // pred_region
      _
    $region33: #{mynet_forward.5} parent=1 // pred_fallthru
      _
    // Predicated region
    $region34: #{mynet_forward.5} parent=1 // pred_check
      _
    $region35: #{mynet_forward.5} parent=1 // pred_check_branch
      %41 = sbr.rel (0) target = $region37
    $region36: #{mynet_forward.5} parent=1 // pred_region
      _
    $region37: #{mynet_forward.5} parent=1 // pred_fallthru
      _
    // Predicated region
    $region38: #{mynet_forward.5} parent=1 // pred_check
      _
    $region39: #{mynet_forward.5} parent=1 // pred_check_branch
      %43 = sbr.rel (0) target = $region41
    $region40: #{mynet_forward.5} parent=1 // pred_region
      _
    $region41: #{mynet_forward.5} parent=1 // pred_fallthru
      _
    // Predicated region
    $region42: #{mynet_forward.5} parent=1 // pred_check
      _
    $region43: #{mynet_forward.5} parent=1 // pred_check_branch
      %45 = sbr.rel (0) target = $region45
    $region44: #{mynet_forward.5} parent=1 // pred_region
      _
    $region45: #{mynet_forward.5} parent=1 // pred_fallthru
      _
    // Predicated region
    $region46: #{mynet_forward.5} parent=1 // pred_check
      _
    $region47: #{mynet_forward.5} parent=1 // pred_check_branch
      %47 = sbr.rel (0) target = $region49
    $region48: #{mynet_forward.5} parent=1 // pred_region
      _
    $region49: #{mynet_forward.5} parent=1 // pred_fallthru
      _
    // Predicated region
    $region50: #{mynet_forward.5} parent=1 // pred_check
      _
    $region51: #{mynet_forward.5} parent=1 // pred_check_branch
      %49 = sbr.rel (0) target = $region53
    $region52: #{mynet_forward.5} parent=1 // pred_region
      _
    $region53: #{mynet_forward.5} parent=1 // pred_fallthru
      _
    // Predicated region
    $region54: #{mynet_forward.5} parent=1 // pred_check
      _
    $region55: #{mynet_forward.5} parent=1 // pred_check_branch
      %51 = sbr.rel (0) target = $region57
    $region56: #{mynet_forward.5} parent=1 // pred_region
      _
    $region57: #{mynet_forward.5} parent=1 // pred_fallthru
      _
    %v52 = vld [vmem:[%s0] sm:$0xff]
    %v53 = vld [vmem:[%s0 + $0x8] sm:$0xff]
    %v54 = vld [vmem:[%s0 + $0x10] sm:$0xf]
    %v55 = vmul.f32 %v52, %v52
    %v56 = vmul.f32 %v53, %v53
    %v57 = vmul.f32 %v54, %v54
    %vm58 = vcmask 719872
    %v59 = vsel %vm58, %v55, 0.0
    %60 = vadd.xlane.f32.xlu0 %v59
    %v61 = vpop.xlane.xlu0 %60
    %v62 = vsel %vm58, %v56, 0.0
    %63 = vadd.xlane.f32.xlu0 %v62
    %v64 = vpop.xlane.xlu0 %63
    %vm65 = vcmask 715776
    %v66 = vsel %vm65, %v57, 0.0
    %67 = vadd.xlane.f32.xlu0 %v66
    %v68 = vpop.xlane.xlu0 %67
    %v69 = vrsqrt.pop %v61
    %v70 = vmul.f32 %v69, %v61
    %v71 = vmul.f32 %v70, %v69
    %v72 = vmul.f32 0.5, %v71
    %v73 = vsub.f32 1.5, %v72
    %v74 = vmul.f32 %v69, %v73
    %v75 = vmul.f32 %v61, %v74
    %vm76 = vcmp.eq.f32.partialorder %v61, inf
    %v77 = vsel %vm76, %v61, %v75
    %vm78 = vcmp.eq.f32.partialorder %v61, 0.0
    %v79 = vand.u32 %v61, 2147483648
    %v80 = vsel %vm78, %v79, %v77
    %v81 = vrsqrt.pop %v64
    %v82 = vmul.f32 %v81, %v64
    %v83 = vmul.f32 %v82, %v81
    %v84 = vmul.f32 0.5, %v83
    %v85 = vsub.f32 1.5, %v84
    %v86 = vmul.f32 %v81, %v85
    %v87 = vmul.f32 %v64, %v86
    %vm88 = vcmp.eq.f32.partialorder %v64, inf
    %v89 = vsel %vm88, %v64, %v87
    %vm90 = vcmp.eq.f32.partialorder %v64, 0.0
    %v91 = vand.u32 %v64, 2147483648
    %v92 = vsel %vm90, %v91, %v89
    %v93 = vrsqrt.pop %v68
    %v94 = vmul.f32 %v93, %v68
    %v95 = vmul.f32 %v94, %v93
    %v96 = vmul.f32 0.5, %v95
    %v97 = vsub.f32 1.5, %v96
    %v98 = vmul.f32 %v93, %v97
    %v99 = vmul.f32 %v68, %v98
    %vm100 = vcmp.eq.f32.partialorder %v68, inf
    %v101 = vsel %vm100, %v68, %v99
    %vm102 = vcmp.eq.f32.partialorder %v68, 0.0
    %v103 = vand.u32 %v68, 2147483648
    %v104 = vsel %vm102, %v103, %v101
    %v105 = vmax.f32 %v80, 1e-12
    %v106 = vmax.f32 %v92, 1e-12
    %v107 = vmax.f32 %v104, 1e-12
    %v108 = vrcp.pop %v105
    %v109 = vmul.f32 %v105, %v108
    %v110 = vsub.f32 1.0, %v109
    %v111 = vmul.f32 %v108, %v110
    %v112 = vadd.f32 %v108, %v111
    %vm113 = vweird.f32 %v105
    %vm114 = vweird.f32 %v108
    %vm115 = vmor %vm113, %vm114
    %v116 = vsel %vm115, %v108, %v112
    %v117 = vand.u32 2147483647, %v105
    %vm118 = vcmp.eq.f32.partialorder %v117, 8.507059e+37
    %v119 = vand.u32 %v105, 2147483648
    %v120 = vor.u32 1.1754944e-38, %v119
    %v121 = vsel %vm118, %v120, %v116
    %v122 = vmul.f32 %v52, %v121
    %v123 = vrcp.pop %v106
    %v124 = vmul.f32 %v106, %v123
    %v125 = vsub.f32 1.0, %v124
    %v126 = vmul.f32 %v123, %v125
    %v127 = vadd.f32 %v123, %v126
    %vm128 = vweird.f32 %v106
    %vm129 = vweird.f32 %v123
    %vm130 = vmor %vm128, %vm129
    %v131 = vsel %vm130, %v123, %v127
    %v132 = vand.u32 2147483647, %v106
    %vm133 = vcmp.eq.f32.partialorder %v132, 8.507059e+37
    %v134 = vand.u32 %v106, 2147483648
    %v135 = vor.u32 1.1754944e-38, %v134
    %v136 = vsel %vm133, %v135, %v131
    %v137 = vmul.f32 %v53, %v136
    %v138 = vrcp.pop %v107
    %v139 = vmul.f32 %v107, %v138
    %v140 = vsub.f32 1.0, %v139
    %v141 = vmul.f32 %v138, %v140
    %v142 = vadd.f32 %v138, %v141
    %vm143 = vweird.f32 %v107
    %vm144 = vweird.f32 %v138
    %vm145 = vmor %vm143, %vm144
    %v146 = vsel %vm145, %v138, %v142
    %v147 = vand.u32 2147483647, %v107
    %vm148 = vcmp.eq.f32.partialorder %v147, 8.507059e+37
    %v149 = vand.u32 %v107, 2147483648
    %v150 = vor.u32 1.1754944e-38, %v149
    %v151 = vsel %vm148, %v150, %v146
    %v152 = vmul.f32 %v54, %v151
    %v153 = vlaneseq
    %v154 = vshrl.u32 %v153, 7
    %v155 = vadd.s32 %v154, 8
    %v156 = vadd.s32 %v154, 16
    %v157 = vadd.s32 %v154, 24
    %v158 = vadd.s32 %v154, 32
    %v159 = vadd.s32 %v154, 40
    %v160 = vadd.s32 %v154, 48
    %v161 = vadd.s32 %v154, 56
    %v162 = vadd.s32 %v154, 64
    %v163 = vadd.s32 %v154, 72
    %v164 = vadd.s32 %v154, 80
    %v165 = vadd.s32 %v154, 88
    %v166 = vadd.s32 %v154, 96
    %v167 = vadd.s32 %v154, 104
    %v168 = vadd.s32 %v154, 112
    %v169 = vadd.s32 %v154, 120
    %v170 = vadd.s32 %v154, 128
    %v171 = vadd.s32 %v154, 136
    %v172 = vadd.s32 %v154, 144
    %v173 = vadd.s32 %v154, 152
    %v174 = vadd.s32 %v154, 160
    %v175 = vadd.s32 %v154, 168
    %v176 = vadd.s32 %v154, 176
    %v177 = vadd.s32 %v154, 184
    %v178 = vadd.s32 %v154, 192
    %v179 = vadd.s32 %v154, 200
    %v180 = vadd.s32 %v154, 208
    %v181 = vadd.s32 %v154, 216
    %v182 = vadd.s32 %v154, 224
    %v183 = vadd.s32 %v154, 232
    %v184 = vadd.s32 %v154, 240
    %v185 = vadd.s32 %v154, 248
    %v186 = vadd.s32 %v154, 256
    %v187 = vadd.s32 %v154, 264
    %v188 = vadd.s32 %v154, 272
    %v189 = vadd.s32 %v154, 280
    %v190 = vadd.s32 %v154, 288
    %v191 = vadd.s32 %v154, 296
    %v192 = vadd.s32 %v154, 304
    %v193 = vadd.s32 %v154, 312
    %v194 = vadd.s32 %v154, 320
    %v195 = vadd.s32 %v154, 328
    %v196 = vadd.s32 %v154, 336
    %v197 = vadd.s32 %v154, 344
    %v198 = vadd.s32 %v154, 352
    %v199 = vadd.s32 %v154, 360
    %v200 = vadd.s32 %v154, 368
    %v201 = vadd.s32 %v154, 376
    %v202 = vadd.s32 %v154, 384
    %v203 = vadd.s32 %v154, 392
    %v204 = vlaneseq
    %v205 = vand.u32 %v204, 127
    %v206 = vcvt.s32.f32 %v154
    %v207 = vcvt.s32.f32 %v155
    %v208 = vcvt.s32.f32 %v156
    %v209 = vcvt.s32.f32 %v157
    %v210 = vcvt.s32.f32 %v158
    %v211 = vcvt.s32.f32 %v159
    %v212 = vcvt.s32.f32 %v160
    %v213 = vcvt.s32.f32 %v161
    %v214 = vcvt.s32.f32 %v162
    %v215 = vcvt.s32.f32 %v163
    %v216 = vcvt.s32.f32 %v164
    %v217 = vcvt.s32.f32 %v165
    %v218 = vcvt.s32.f32 %v166
    %v219 = vcvt.s32.f32 %v167
    %v220 = vcvt.s32.f32 %v168
    %v221 = vcvt.s32.f32 %v169
    %v222 = vcvt.s32.f32 %v170
    %v223 = vcvt.s32.f32 %v171
    %v224 = vcvt.s32.f32 %v172
    %v225 = vcvt.s32.f32 %v173
    %v226 = vcvt.s32.f32 %v174
    %v227 = vcvt.s32.f32 %v175
    %v228 = vcvt.s32.f32 %v176
    %v229 = vcvt.s32.f32 %v177
    %v230 = vcvt.s32.f32 %v178
    %v231 = vcvt.s32.f32 %v179
    %v232 = vcvt.s32.f32 %v180
    %v233 = vcvt.s32.f32 %v181
    %v234 = vcvt.s32.f32 %v182
    %v235 = vcvt.s32.f32 %v183
    %v236 = vcvt.s32.f32 %v184
    %v237 = vcvt.s32.f32 %v185
    %v238 = vcvt.s32.f32 %v186
    %v239 = vcvt.s32.f32 %v187
    %v240 = vcvt.s32.f32 %v188
    %v241 = vcvt.s32.f32 %v189
    %v242 = vcvt.s32.f32 %v190
    %v243 = vcvt.s32.f32 %v191
    %v244 = vcvt.s32.f32 %v192
    %v245 = vcvt.s32.f32 %v193
    %v246 = vcvt.s32.f32 %v194
    %v247 = vcvt.s32.f32 %v195
    %v248 = vcvt.s32.f32 %v196
    %v249 = vcvt.s32.f32 %v197
    %v250 = vcvt.s32.f32 %v198
    %v251 = vcvt.s32.f32 %v199
    %v252 = vcvt.s32.f32 %v200
    %v253 = vcvt.s32.f32 %v201
    %v254 = vcvt.s32.f32 %v202
    %v255 = vcvt.s32.f32 %v203
    %v256 = vcvt.s32.f32 %v205
    %v257 = vmul.u32 %v205, 20
    %vm258 = vcmp.ge.s32.totalorder %v154, %v257
    %vm259 = vcmp.ge.s32.totalorder %v155, %v257
    %vm260 = vcmp.ge.s32.totalorder %v156, %v257
    %vm261 = vcmp.ge.s32.totalorder %v157, %v257
    %vm262 = vcmp.ge.s32.totalorder %v158, %v257
    %vm263 = vcmp.ge.s32.totalorder %v159, %v257
    %vm264 = vcmp.ge.s32.totalorder %v160, %v257
    %vm265 = vcmp.ge.s32.totalorder %v161, %v257
    %vm266 = vcmp.ge.s32.totalorder %v162, %v257
    %vm267 = vcmp.ge.s32.totalorder %v163, %v257
    %vm268 = vcmp.ge.s32.totalorder %v164, %v257
    %vm269 = vcmp.ge.s32.totalorder %v165, %v257
    %vm270 = vcmp.ge.s32.totalorder %v166, %v257
    %vm271 = vcmp.ge.s32.totalorder %v167, %v257
    %vm272 = vcmp.ge.s32.totalorder %v168, %v257
    %vm273 = vcmp.ge.s32.totalorder %v169, %v257
    %vm274 = vcmp.ge.s32.totalorder %v170, %v257
    %vm275 = vcmp.ge.s32.totalorder %v171, %v257
    %vm276 = vcmp.ge.s32.totalorder %v172, %v257
    %vm277 = vcmp.ge.s32.totalorder %v173, %v257
    %vm278 = vcmp.ge.s32.totalorder %v174, %v257
    %vm279 = vcmp.ge.s32.totalorder %v175, %v257
    %vm280 = vcmp.ge.s32.totalorder %v176, %v257
    %vm281 = vcmp.ge.s32.totalorder %v177, %v257
    %vm282 = vcmp.ge.s32.totalorder %v178, %v257
    %vm283 = vcmp.ge.s32.totalorder %v179, %v257
    %vm284 = vcmp.ge.s32.totalorder %v180, %v257
    %vm285 = vcmp.ge.s32.totalorder %v181, %v257
    %vm286 = vcmp.ge.s32.totalorder %v182, %v257
    %vm287 = vcmp.ge.s32.totalorder %v183, %v257
    %vm288 = vcmp.ge.s32.totalorder %v184, %v257
    %vm289 = vcmp.ge.s32.totalorder %v185, %v257
    %vm290 = vcmp.ge.s32.totalorder %v186, %v257
    %vm291 = vcmp.ge.s32.totalorder %v187, %v257
    %vm292 = vcmp.ge.s32.totalorder %v188, %v257
    %vm293 = vcmp.ge.s32.totalorder %v189, %v257
    %vm294 = vcmp.ge.s32.totalorder %v190, %v257
    %vm295 = vcmp.ge.s32.totalorder %v191, %v257
    %vm296 = vcmp.ge.s32.totalorder %v192, %v257
    %vm297 = vcmp.ge.s32.totalorder %v193, %v257
    %vm298 = vcmp.ge.s32.totalorder %v194, %v257
    %vm299 = vcmp.ge.s32.totalorder %v195, %v257
    %vm300 = vcmp.ge.s32.totalorder %v196, %v257
    %vm301 = vcmp.ge.s32.totalorder %v197, %v257
    %vm302 = vcmp.ge.s32.totalorder %v198, %v257
    %vm303 = vcmp.ge.s32.totalorder %v199, %v257
    %vm304 = vcmp.ge.s32.totalorder %v200, %v257
    %vm305 = vcmp.ge.s32.totalorder %v201, %v257
    %vm306 = vcmp.ge.s32.totalorder %v202, %v257
    %vm307 = vcmp.ge.s32.totalorder %v203, %v257
    %v308 = vadd.s32 %v257, 20
    %vm309 = vcmp.lt.s32.totalorder %v154, %v308
    %vm310 = vcmp.lt.s32.totalorder %v155, %v308
    %vm311 = vcmp.lt.s32.totalorder %v156, %v308
    %vm312 = vcmp.lt.s32.totalorder %v157, %v308
    %vm313 = vcmp.lt.s32.totalorder %v158, %v308
    %vm314 = vcmp.lt.s32.totalorder %v159, %v308
    %vm315 = vcmp.lt.s32.totalorder %v160, %v308
    %vm316 = vcmp.lt.s32.totalorder %v161, %v308
    %vm317 = vcmp.lt.s32.totalorder %v162, %v308
    %vm318 = vcmp.lt.s32.totalorder %v163, %v308
    %vm319 = vcmp.lt.s32.totalorder %v164, %v308
    %vm320 = vcmp.lt.s32.totalorder %v165, %v308
    %vm321 = vcmp.lt.s32.totalorder %v166, %v308
    %vm322 = vcmp.lt.s32.totalorder %v167, %v308
    %vm323 = vcmp.lt.s32.totalorder %v168, %v308
    %vm324 = vcmp.lt.s32.totalorder %v169, %v308
    %vm325 = vcmp.lt.s32.totalorder %v170, %v308
    %vm326 = vcmp.lt.s32.totalorder %v171, %v308
    %vm327 = vcmp.lt.s32.totalorder %v172, %v308
    %vm328 = vcmp.lt.s32.totalorder %v173, %v308
    %vm329 = vcmp.lt.s32.totalorder %v174, %v308
    %vm330 = vcmp.lt.s32.totalorder %v175, %v308
    %vm331 = vcmp.lt.s32.totalorder %v176, %v308
    %vm332 = vcmp.lt.s32.totalorder %v177, %v308
    %vm333 = vcmp.lt.s32.totalorder %v178, %v308
    %vm334 = vcmp.lt.s32.totalorder %v179, %v308
    %vm335 = vcmp.lt.s32.totalorder %v180, %v308
    %vm336 = vcmp.lt.s32.totalorder %v181, %v308
    %vm337 = vcmp.lt.s32.totalorder %v182, %v308
    %vm338 = vcmp.lt.s32.totalorder %v183, %v308
    %vm339 = vcmp.lt.s32.totalorder %v184, %v308
    %vm340 = vcmp.lt.s32.totalorder %v185, %v308
    %vm341 = vcmp.lt.s32.totalorder %v186, %v308
    %vm342 = vcmp.lt.s32.totalorder %v187, %v308
    %vm343 = vcmp.lt.s32.totalorder %v188, %v308
    %vm344 = vcmp.lt.s32.totalorder %v189, %v308
    %vm345 = vcmp.lt.s32.totalorder %v190, %v308
    %vm346 = vcmp.lt.s32.totalorder %v191, %v308
    %vm347 = vcmp.lt.s32.totalorder %v192, %v308
    %vm348 = vcmp.lt.s32.totalorder %v193, %v308
    %vm349 = vcmp.lt.s32.totalorder %v194, %v308
    %vm350 = vcmp.lt.s32.totalorder %v195, %v308
    %vm351 = vcmp.lt.s32.totalorder %v196, %v308
    %vm352 = vcmp.lt.s32.totalorder %v197, %v308
    %vm353 = vcmp.lt.s32.totalorder %v198, %v308
    %vm354 = vcmp.lt.s32.totalorder %v199, %v308
    %vm355 = vcmp.lt.s32.totalorder %v200, %v308
    %vm356 = vcmp.lt.s32.totalorder %v201, %v308
    %vm357 = vcmp.lt.s32.totalorder %v202, %v308
    %vm358 = vcmp.lt.s32.totalorder %v203, %v308
    %vm359 = vmand %vm258, %vm309
    %vm360 = vmand %vm259, %vm310
    %vm361 = vmand %vm260, %vm311
    %vm362 = vmand %vm261, %vm312
    %vm363 = vmand %vm262, %vm313
    %vm364 = vmand %vm263, %vm314
    %vm365 = vmand %vm264, %vm315
    %vm366 = vmand %vm265, %vm316
    %vm367 = vmand %vm266, %vm317
    %vm368 = vmand %vm267, %vm318
    %vm369 = vmand %vm268, %vm319
    %vm370 = vmand %vm269, %vm320
    %vm371 = vmand %vm270, %vm321
    %vm372 = vmand %vm271, %vm322
    %vm373 = vmand %vm272, %vm323
    %vm374 = vmand %vm273, %vm324
    %vm375 = vmand %vm274, %vm325
    %vm376 = vmand %vm275, %vm326
    %vm377 = vmand %vm276, %vm327
    %vm378 = vmand %vm277, %vm328
    %vm379 = vmand %vm278, %vm329
    %vm380 = vmand %vm279, %vm330
    %vm381 = vmand %vm280, %vm331
    %vm382 = vmand %vm281, %vm332
    %vm383 = vmand %vm282, %vm333
    %vm384 = vmand %vm283, %vm334
    %vm385 = vmand %vm284, %vm335
    %vm386 = vmand %vm285, %vm336
    %vm387 = vmand %vm286, %vm337
    %vm388 = vmand %vm287, %vm338
    %vm389 = vmand %vm288, %vm339
    %vm390 = vmand %vm289, %vm340
    %vm391 = vmand %vm290, %vm341
    %vm392 = vmand %vm291, %vm342
    %vm393 = vmand %vm292, %vm343
    %vm394 = vmand %vm293, %vm344
    %vm395 = vmand %vm294, %vm345
    %vm396 = vmand %vm295, %vm346
    %vm397 = vmand %vm296, %vm347
    %vm398 = vmand %vm297, %vm348
    %vm399 = vmand %vm298, %vm349
    %vm400 = vmand %vm299, %vm350
    %vm401 = vmand %vm300, %vm351
    %vm402 = vmand %vm301, %vm352
    %vm403 = vmand %vm302, %vm353
    %vm404 = vmand %vm303, %vm354
    %vm405 = vmand %vm304, %vm355
    %vm406 = vmand %vm305, %vm356
    %vm407 = vmand %vm306, %vm357
    %vm408 = vmand %vm307, %vm358
    %v409 = vsel %vm359, 1, 0
    %v410 = vsel %vm360, 1, 0
    %v411 = vsel %vm361, 1, 0
    %v412 = vsel %vm362, 1, 0
    %v413 = vsel %vm363, 1, 0
    %v414 = vsel %vm364, 1, 0
    %v415 = vsel %vm365, 1, 0
    %v416 = vsel %vm366, 1, 0
    %v417 = vsel %vm367, 1, 0
    %v418 = vsel %vm368, 1, 0
    %v419 = vsel %vm369, 1, 0
    %v420 = vsel %vm370, 1, 0
    %v421 = vsel %vm371, 1, 0
    %v422 = vsel %vm372, 1, 0
    %v423 = vsel %vm373, 1, 0
    %v424 = vsel %vm374, 1, 0
    %v425 = vsel %vm375, 1, 0
    %v426 = vsel %vm376, 1, 0
    %v427 = vsel %vm377, 1, 0
    %v428 = vsel %vm378, 1, 0
    %v429 = vsel %vm379, 1, 0
    %v430 = vsel %vm380, 1, 0
    %v431 = vsel %vm381, 1, 0
    %v432 = vsel %vm382, 1, 0
    %v433 = vsel %vm383, 1, 0
    %v434 = vsel %vm384, 1, 0
    %v435 = vsel %vm385, 1, 0
    %v436 = vsel %vm386, 1, 0
    %v437 = vsel %vm387, 1, 0
    %v438 = vsel %vm388, 1, 0
    %v439 = vsel %vm389, 1, 0
    %v440 = vsel %vm390, 1, 0
    %v441 = vsel %vm391, 1, 0
    %v442 = vsel %vm392, 1, 0
    %v443 = vsel %vm393, 1, 0
    %v444 = vsel %vm394, 1, 0
    %v445 = vsel %vm395, 1, 0
    %v446 = vsel %vm396, 1, 0
    %v447 = vsel %vm397, 1, 0
    %v448 = vsel %vm398, 1, 0
    %v449 = vsel %vm399, 1, 0
    %v450 = vsel %vm400, 1, 0
    %v451 = vsel %vm401, 1, 0
    %v452 = vsel %vm402, 1, 0
    %v453 = vsel %vm403, 1, 0
    %v454 = vsel %vm404, 1, 0
    %v455 = vsel %vm405, 1, 0
    %v456 = vsel %vm406, 1, 0
    %v457 = vsel %vm407, 1, 0
    %v458 = vsel %vm408, 1, 0
    %v459 = vcvt.s32.f32 %v409
    %v460 = vcvt.s32.f32 %v410
    %v461 = vcvt.s32.f32 %v411
    %v462 = vcvt.s32.f32 %v412
    %v463 = vcvt.s32.f32 %v413
    %v464 = vcvt.s32.f32 %v414
    %v465 = vcvt.s32.f32 %v415
    %v466 = vcvt.s32.f32 %v416
    %v467 = vcvt.s32.f32 %v417
    %v468 = vcvt.s32.f32 %v418
    %v469 = vcvt.s32.f32 %v419
    %v470 = vcvt.s32.f32 %v420
    %v471 = vcvt.s32.f32 %v421
    %v472 = vcvt.s32.f32 %v422
    %v473 = vcvt.s32.f32 %v423
    %v474 = vcvt.s32.f32 %v424
    %v475 = vcvt.s32.f32 %v425
    %v476 = vcvt.s32.f32 %v426
    %v477 = vcvt.s32.f32 %v427
    %v478 = vcvt.s32.f32 %v428
    %v479 = vcvt.s32.f32 %v429
    %v480 = vcvt.s32.f32 %v430
    %v481 = vcvt.s32.f32 %v431
    %v482 = vcvt.s32.f32 %v432
    %v483 = vcvt.s32.f32 %v433
    %v484 = vcvt.s32.f32 %v434
    %v485 = vcvt.s32.f32 %v435
    %v486 = vcvt.s32.f32 %v436
    %v487 = vcvt.s32.f32 %v437
    %v488 = vcvt.s32.f32 %v438
    %v489 = vcvt.s32.f32 %v439
    %v490 = vcvt.s32.f32 %v440
    %v491 = vcvt.s32.f32 %v441
    %v492 = vcvt.s32.f32 %v442
    %v493 = vcvt.s32.f32 %v443
    %v494 = vcvt.s32.f32 %v444
    %v495 = vcvt.s32.f32 %v445
    %v496 = vcvt.s32.f32 %v446
    %v497 = vcvt.s32.f32 %v447
    %v498 = vcvt.s32.f32 %v448
    %v499 = vcvt.s32.f32 %v449
    %v500 = vcvt.s32.f32 %v450
    %v501 = vcvt.s32.f32 %v451
    %v502 = vcvt.s32.f32 %v452
    %v503 = vcvt.s32.f32 %v453
    %v504 = vcvt.s32.f32 %v454
    %v505 = vcvt.s32.f32 %v455
    %v506 = vcvt.s32.f32 %v456
    %v507 = vcvt.s32.f32 %v457
    %v508 = vcvt.s32.f32 %v458
    %v509 = vmul.f32 %v459, %v256
    %v510 = vmul.f32 %v460, %v256
    %v511 = vmul.f32 %v461, %v256
    %v512 = vmul.f32 %v462, %v256
    %v513 = vmul.f32 %v463, %v256
    %v514 = vmul.f32 %v464, %v256
    %v515 = vmul.f32 %v465, %v256
    %v516 = vmul.f32 %v466, %v256
    %v517 = vmul.f32 %v467, %v256
    %v518 = vmul.f32 %v468, %v256
    %v519 = vmul.f32 %v469, %v256
    %v520 = vmul.f32 %v470, %v256
    %v521 = vmul.f32 %v471, %v256
    %v522 = vmul.f32 %v472, %v256
    %v523 = vmul.f32 %v473, %v256
    %v524 = vmul.f32 %v474, %v256
    %v525 = vmul.f32 %v475, %v256
    %v526 = vmul.f32 %v476, %v256
    %v527 = vmul.f32 %v477, %v256
    %v528 = vmul.f32 %v478, %v256
    %v529 = vmul.f32 %v479, %v256
    %v530 = vmul.f32 %v480, %v256
    %v531 = vmul.f32 %v481, %v256
    %v532 = vmul.f32 %v482, %v256
    %v533 = vmul.f32 %v483, %v256
    %v534 = vmul.f32 %v484, %v256
    %v535 = vmul.f32 %v485, %v256
    %v536 = vmul.f32 %v486, %v256
    %v537 = vmul.f32 %v487, %v256
    %v538 = vmul.f32 %v488, %v256
    %v539 = vmul.f32 %v489, %v256
    %v540 = vmul.f32 %v490, %v256
    %v541 = vmul.f32 %v491, %v256
    %v542 = vmul.f32 %v492, %v256
    %v543 = vmul.f32 %v493, %v256
    %v544 = vmul.f32 %v494, %v256
    %v545 = vmul.f32 %v495, %v256
    %v546 = vmul.f32 %v496, %v256
    %v547 = vmul.f32 %v497, %v256
    %v548 = vmul.f32 %v498, %v256
    %v549 = vmul.f32 %v499, %v256
    %v550 = vmul.f32 %v500, %v256
    %v551 = vmul.f32 %v501, %v256
    %v552 = vmul.f32 %v502, %v256
    %v553 = vmul.f32 %v503, %v256
    %v554 = vmul.f32 %v504, %v256
    %v555 = vmul.f32 %v505, %v256
    %v556 = vmul.f32 %v506, %v256
    %v557 = vmul.f32 %v507, %v256
    %v558 = vmul.f32 %v508, %v256
    %vm559 = vcmask 162816
    %v560 = vsel %vm559, %v509, 0.0
    %561 = vadd.xlane.f32.xlu0 %v560
    %v562 = vpop.xlane.xlu0 %561
    %v563 = vsel %vm559, %v510, 0.0
    %564 = vadd.xlane.f32.xlu0 %v563
    %v565 = vpop.xlane.xlu0 %564
    %v566 = vsel %vm559, %v511, 0.0
    %567 = vadd.xlane.f32.xlu0 %v566
    %v568 = vpop.xlane.xlu0 %567
    %v569 = vsel %vm559, %v512, 0.0
    %570 = vadd.xlane.f32.xlu0 %v569
    %v571 = vpop.xlane.xlu0 %570
    %v572 = vsel %vm559, %v513, 0.0
    %573 = vadd.xlane.f32.xlu0 %v572
    %v574 = vpop.xlane.xlu0 %573
    %v575 = vsel %vm559, %v514, 0.0
    %576 = vadd.xlane.f32.xlu0 %v575
    %v577 = vpop.xlane.xlu0 %576
    %v578 = vsel %vm559, %v515, 0.0
    %579 = vadd.xlane.f32.xlu0 %v578
    %v580 = vpop.xlane.xlu0 %579
    %v581 = vsel %vm559, %v516, 0.0
    %582 = vadd.xlane.f32.xlu0 %v581
    %v583 = vpop.xlane.xlu0 %582
    %v584 = vsel %vm559, %v517, 0.0
    %585 = vadd.xlane.f32.xlu0 %v584
    %v586 = vpop.xlane.xlu0 %585
    %v587 = vsel %vm559, %v518, 0.0
    %588 = vadd.xlane.f32.xlu0 %v587
    %v589 = vpop.xlane.xlu0 %588
    %v590 = vsel %vm559, %v519, 0.0
    %591 = vadd.xlane.f32.xlu0 %v590
    %v592 = vpop.xlane.xlu0 %591
    %v593 = vsel %vm559, %v520, 0.0
    %594 = vadd.xlane.f32.xlu0 %v593
    %v595 = vpop.xlane.xlu0 %594
    %v596 = vsel %vm559, %v521, 0.0
    %597 = vadd.xlane.f32.xlu0 %v596
    %v598 = vpop.xlane.xlu0 %597
    %v599 = vsel %vm559, %v522, 0.0
    %600 = vadd.xlane.f32.xlu0 %v599
    %v601 = vpop.xlane.xlu0 %600
    %v602 = vsel %vm559, %v523, 0.0
    %603 = vadd.xlane.f32.xlu0 %v602
    %v604 = vpop.xlane.xlu0 %603
    %v605 = vsel %vm559, %v524, 0.0
    %606 = vadd.xlane.f32.xlu0 %v605
    %v607 = vpop.xlane.xlu0 %606
    %v608 = vsel %vm559, %v525, 0.0
    %609 = vadd.xlane.f32.xlu0 %v608
    %v610 = vpop.xlane.xlu0 %609
    %v611 = vsel %vm559, %v526, 0.0
    %612 = vadd.xlane.f32.xlu0 %v611
    %v613 = vpop.xlane.xlu0 %612
    %v614 = vsel %vm559, %v527, 0.0
    %615 = vadd.xlane.f32.xlu0 %v614
    %v616 = vpop.xlane.xlu0 %615
    %v617 = vsel %vm559, %v528, 0.0
    %618 = vadd.xlane.f32.xlu0 %v617
    %v619 = vpop.xlane.xlu0 %618
    %v620 = vsel %vm559, %v529, 0.0
    %621 = vadd.xlane.f32.xlu0 %v620
    %v622 = vpop.xlane.xlu0 %621
    %v623 = vsel %vm559, %v530, 0.0
    %624 = vadd.xlane.f32.xlu0 %v623
    %v625 = vpop.xlane.xlu0 %624
    %v626 = vsel %vm559, %v531, 0.0
    %627 = vadd.xlane.f32.xlu0 %v626
    %v628 = vpop.xlane.xlu0 %627
    %v629 = vsel %vm559, %v532, 0.0
    %630 = vadd.xlane.f32.xlu0 %v629
    %v631 = vpop.xlane.xlu0 %630
    %v632 = vsel %vm559, %v533, 0.0
    %633 = vadd.xlane.f32.xlu0 %v632
    %v634 = vpop.xlane.xlu0 %633
    %v635 = vsel %vm559, %v534, 0.0
    %636 = vadd.xlane.f32.xlu0 %v635
    %v637 = vpop.xlane.xlu0 %636
    %v638 = vsel %vm559, %v535, 0.0
    %639 = vadd.xlane.f32.xlu0 %v638
    %v640 = vpop.xlane.xlu0 %639
    %v641 = vsel %vm559, %v536, 0.0
    %642 = vadd.xlane.f32.xlu0 %v641
    %v643 = vpop.xlane.xlu0 %642
    %v644 = vsel %vm559, %v537, 0.0
    %645 = vadd.xlane.f32.xlu0 %v644
    %v646 = vpop.xlane.xlu0 %645
    %v647 = vsel %vm559, %v538, 0.0
    %648 = vadd.xlane.f32.xlu0 %v647
    %v649 = vpop.xlane.xlu0 %648
    %v650 = vsel %vm559, %v539, 0.0
    %651 = vadd.xlane.f32.xlu0 %v650
    %v652 = vpop.xlane.xlu0 %651
    %v653 = vsel %vm559, %v540, 0.0
    %654 = vadd.xlane.f32.xlu0 %v653
    %v655 = vpop.xlane.xlu0 %654
    %v656 = vsel %vm559, %v541, 0.0
    %657 = vadd.xlane.f32.xlu0 %v656
    %v658 = vpop.xlane.xlu0 %657
    %v659 = vsel %vm559, %v542, 0.0
    %660 = vadd.xlane.f32.xlu0 %v659
    %v661 = vpop.xlane.xlu0 %660
    %v662 = vsel %vm559, %v543, 0.0
    %663 = vadd.xlane.f32.xlu0 %v662
    %v664 = vpop.xlane.xlu0 %663
    %v665 = vsel %vm559, %v544, 0.0
    %666 = vadd.xlane.f32.xlu0 %v665
    %v667 = vpop.xlane.xlu0 %666
    %v668 = vsel %vm559, %v545, 0.0
    %669 = vadd.xlane.f32.xlu0 %v668
    %v670 = vpop.xlane.xlu0 %669
    %v671 = vsel %vm559, %v546, 0.0
    %672 = vadd.xlane.f32.xlu0 %v671
    %v673 = vpop.xlane.xlu0 %672
    %v674 = vsel %vm559, %v547, 0.0
    %675 = vadd.xlane.f32.xlu0 %v674
    %v676 = vpop.xlane.xlu0 %675
    %v677 = vsel %vm559, %v548, 0.0
    %678 = vadd.xlane.f32.xlu0 %v677
    %v679 = vpop.xlane.xlu0 %678
    %v680 = vsel %vm559, %v549, 0.0
    %681 = vadd.xlane.f32.xlu0 %v680
    %v682 = vpop.xlane.xlu0 %681
    %v683 = vsel %vm559, %v550, 0.0
    %684 = vadd.xlane.f32.xlu0 %v683
    %v685 = vpop.xlane.xlu0 %684
    %v686 = vsel %vm559, %v551, 0.0
    %687 = vadd.xlane.f32.xlu0 %v686
    %v688 = vpop.xlane.xlu0 %687
    %v689 = vsel %vm559, %v552, 0.0
    %690 = vadd.xlane.f32.xlu0 %v689
    %v691 = vpop.xlane.xlu0 %690
    %v692 = vsel %vm559, %v553, 0.0
    %693 = vadd.xlane.f32.xlu0 %v692
    %v694 = vpop.xlane.xlu0 %693
    %v695 = vsel %vm559, %v554, 0.0
    %696 = vadd.xlane.f32.xlu0 %v695
    %v697 = vpop.xlane.xlu0 %696
    %v698 = vsel %vm559, %v555, 0.0
    %699 = vadd.xlane.f32.xlu0 %v698
    %v700 = vpop.xlane.xlu0 %699
    %v701 = vsel %vm559, %v556, 0.0
    %702 = vadd.xlane.f32.xlu0 %v701
    %v703 = vpop.xlane.xlu0 %702
    %v704 = vsel %vm559, %v557, 0.0
    %705 = vadd.xlane.f32.xlu0 %v704
    %v706 = vpop.xlane.xlu0 %705
    %v707 = vsel %vm559, %v558, 0.0
    %708 = vadd.xlane.f32.xlu0 %v707
    %v709 = vpop.xlane.xlu0 %708
    %v710 = vmul.f32 %v562, 20.0
    %v711 = vmul.f32 %v565, 20.0
    %v712 = vmul.f32 %v568, 20.0
    %v713 = vmul.f32 %v571, 20.0
    %v714 = vmul.f32 %v574, 20.0
    %v715 = vmul.f32 %v577, 20.0
    %v716 = vmul.f32 %v580, 20.0
    %v717 = vmul.f32 %v583, 20.0
    %v718 = vmul.f32 %v586, 20.0
    %v719 = vmul.f32 %v589, 20.0
    %v720 = vmul.f32 %v592, 20.0
    %v721 = vmul.f32 %v595, 20.0
    %v722 = vmul.f32 %v598, 20.0
    %v723 = vmul.f32 %v601, 20.0
    %v724 = vmul.f32 %v604, 20.0
    %v725 = vmul.f32 %v607, 20.0
    %v726 = vmul.f32 %v610, 20.0
    %v727 = vmul.f32 %v613, 20.0
    %v728 = vmul.f32 %v616, 20.0
    %v729 = vmul.f32 %v619, 20.0
    %v730 = vmul.f32 %v622, 20.0
    %v731 = vmul.f32 %v625, 20.0
    %v732 = vmul.f32 %v628, 20.0
    %v733 = vmul.f32 %v631, 20.0
    %v734 = vmul.f32 %v634, 20.0
    %v735 = vmul.f32 %v637, 20.0
    %v736 = vmul.f32 %v640, 20.0
    %v737 = vmul.f32 %v643, 20.0
    %v738 = vmul.f32 %v646, 20.0
    %v739 = vmul.f32 %v649, 20.0
    %v740 = vmul.f32 %v652, 20.0
    %v741 = vmul.f32 %v655, 20.0
    %v742 = vmul.f32 %v658, 20.0
    %v743 = vmul.f32 %v661, 20.0
    %v744 = vmul.f32 %v664, 20.0
    %v745 = vmul.f32 %v667, 20.0
    %v746 = vmul.f32 %v670, 20.0
    %v747 = vmul.f32 %v673, 20.0
    %v748 = vmul.f32 %v676, 20.0
    %v749 = vmul.f32 %v679, 20.0
    %v750 = vmul.f32 %v682, 20.0
    %v751 = vmul.f32 %v685, 20.0
    %v752 = vmul.f32 %v688, 20.0
    %v753 = vmul.f32 %v691, 20.0
    %v754 = vmul.f32 %v694, 20.0
    %v755 = vmul.f32 %v697, 20.0
    %v756 = vmul.f32 %v700, 20.0
    %v757 = vmul.f32 %v703, 20.0
    %v758 = vmul.f32 %v706, 20.0
    %v759 = vmul.f32 %v709, 20.0
    %v760 = vsub.f32 %v206, %v710
    %v761 = vsub.f32 %v207, %v711
    %v762 = vsub.f32 %v208, %v712
    %v763 = vsub.f32 %v209, %v713
    %v764 = vsub.f32 %v210, %v714
    %v765 = vsub.f32 %v211, %v715
    %v766 = vsub.f32 %v212, %v716
    %v767 = vsub.f32 %v213, %v717
    %v768 = vsub.f32 %v214, %v718
    %v769 = vsub.f32 %v215, %v719
    %v770 = vsub.f32 %v216, %v720
    %v771 = vsub.f32 %v217, %v721
    %v772 = vsub.f32 %v218, %v722
    %v773 = vsub.f32 %v219, %v723
    %v774 = vsub.f32 %v220, %v724
    %v775 = vsub.f32 %v221, %v725
    %v776 = vsub.f32 %v222, %v726
    %v777 = vsub.f32 %v223, %v727
    %v778 = vsub.f32 %v224, %v728
    %v779 = vsub.f32 %v225, %v729
    %v780 = vsub.f32 %v226, %v730
    %v781 = vsub.f32 %v227, %v731
    %v782 = vsub.f32 %v228, %v732
    %v783 = vsub.f32 %v229, %v733
    %v784 = vsub.f32 %v230, %v734
    %v785 = vsub.f32 %v231, %v735
    %v786 = vsub.f32 %v232, %v736
    %v787 = vsub.f32 %v233, %v737
    %v788 = vsub.f32 %v234, %v738
    %v789 = vsub.f32 %v235, %v739
    %v790 = vsub.f32 %v236, %v740
    %v791 = vsub.f32 %v237, %v741
    %v792 = vsub.f32 %v238, %v742
    %v793 = vsub.f32 %v239, %v743
    %v794 = vsub.f32 %v240, %v744
    %v795 = vsub.f32 %v241, %v745
    %v796 = vsub.f32 %v242, %v746
    %v797 = vsub.f32 %v243, %v747
    %v798 = vsub.f32 %v244, %v748
    %v799 = vsub.f32 %v245, %v749
    %v800 = vsub.f32 %v246, %v750
    %v801 = vsub.f32 %v247, %v751
    %v802 = vsub.f32 %v248, %v752
    %v803 = vsub.f32 %v249, %v753
    %v804 = vsub.f32 %v250, %v754
    %v805 = vsub.f32 %v251, %v755
    %v806 = vsub.f32 %v252, %v756
    %v807 = vsub.f32 %v253, %v757
    %v808 = vsub.f32 %v254, %v758
    %v809 = vsub.f32 %v255, %v759
    %vm810 = vcmp.eq.f32.partialorder %v760, %v256
    %vm811 = vcmp.eq.f32.partialorder %v761, %v256
    %vm812 = vcmp.eq.f32.partialorder %v762, %v256
    %vm813 = vcmp.eq.f32.partialorder %v763, %v256
    %vm814 = vcmp.eq.f32.partialorder %v764, %v256
    %vm815 = vcmp.eq.f32.partialorder %v765, %v256
    %vm816 = vcmp.eq.f32.partialorder %v766, %v256
    %vm817 = vcmp.eq.f32.partialorder %v767, %v256
    %vm818 = vcmp.eq.f32.partialorder %v768, %v256
    %vm819 = vcmp.eq.f32.partialorder %v769, %v256
    %vm820 = vcmp.eq.f32.partialorder %v770, %v256
    %vm821 = vcmp.eq.f32.partialorder %v771, %v256
    %vm822 = vcmp.eq.f32.partialorder %v772, %v256
    %vm823 = vcmp.eq.f32.partialorder %v773, %v256
    %vm824 = vcmp.eq.f32.partialorder %v774, %v256
    %vm825 = vcmp.eq.f32.partialorder %v775, %v256
    %vm826 = vcmp.eq.f32.partialorder %v776, %v256
    %vm827 = vcmp.eq.f32.partialorder %v777, %v256
    %vm828 = vcmp.eq.f32.partialorder %v778, %v256
    %vm829 = vcmp.eq.f32.partialorder %v779, %v256
    %vm830 = vcmp.eq.f32.partialorder %v780, %v256
    %vm831 = vcmp.eq.f32.partialorder %v781, %v256
    %vm832 = vcmp.eq.f32.partialorder %v782, %v256
    %vm833 = vcmp.eq.f32.partialorder %v783, %v256
    %vm834 = vcmp.eq.f32.partialorder %v784, %v256
    %vm835 = vcmp.eq.f32.partialorder %v785, %v256
    %vm836 = vcmp.eq.f32.partialorder %v786, %v256
    %vm837 = vcmp.eq.f32.partialorder %v787, %v256
    %vm838 = vcmp.eq.f32.partialorder %v788, %v256
    %vm839 = vcmp.eq.f32.partialorder %v789, %v256
    %vm840 = vcmp.eq.f32.partialorder %v790, %v256
    %vm841 = vcmp.eq.f32.partialorder %v791, %v256
    %vm842 = vcmp.eq.f32.partialorder %v792, %v256
    %vm843 = vcmp.eq.f32.partialorder %v793, %v256
    %vm844 = vcmp.eq.f32.partialorder %v794, %v256
    %vm845 = vcmp.eq.f32.partialorder %v795, %v256
    %vm846 = vcmp.eq.f32.partialorder %v796, %v256
    %vm847 = vcmp.eq.f32.partialorder %v797, %v256
    %vm848 = vcmp.eq.f32.partialorder %v798, %v256
    %vm849 = vcmp.eq.f32.partialorder %v799, %v256
    %vm850 = vcmp.eq.f32.partialorder %v800, %v256
    %vm851 = vcmp.eq.f32.partialorder %v801, %v256
    %vm852 = vcmp.eq.f32.partialorder %v802, %v256
    %vm853 = vcmp.eq.f32.partialorder %v803, %v256
    %vm854 = vcmp.eq.f32.partialorder %v804, %v256
    %vm855 = vcmp.eq.f32.partialorder %v805, %v256
    %vm856 = vcmp.eq.f32.partialorder %v806, %v256
    %vm857 = vcmp.eq.f32.partialorder %v807, %v256
    %vm858 = vcmp.eq.f32.partialorder %v808, %v256
    %vm859 = vcmp.eq.f32.partialorder %v809, %v256
    %v860 = vsel %vm810, 1, 0
    %v861 = vsel %vm811, 1, 0
    %v862 = vsel %vm812, 1, 0
    %v863 = vsel %vm813, 1, 0
    %v864 = vsel %vm814, 1, 0
    %v865 = vsel %vm815, 1, 0
    %v866 = vsel %vm816, 1, 0
    %v867 = vsel %vm817, 1, 0
    %v868 = vsel %vm818, 1, 0
    %v869 = vsel %vm819, 1, 0
    %v870 = vsel %vm820, 1, 0
    %v871 = vsel %vm821, 1, 0
    %v872 = vsel %vm822, 1, 0
    %v873 = vsel %vm823, 1, 0
    %v874 = vsel %vm824, 1, 0
    %v875 = vsel %vm825, 1, 0
    %v876 = vsel %vm826, 1, 0
    %v877 = vsel %vm827, 1, 0
    %v878 = vsel %vm828, 1, 0
    %v879 = vsel %vm829, 1, 0
    %v880 = vsel %vm830, 1, 0
    %v881 = vsel %vm831, 1, 0
    %v882 = vsel %vm832, 1, 0
    %v883 = vsel %vm833, 1, 0
    %v884 = vsel %vm834, 1, 0
    %v885 = vsel %vm835, 1, 0
    %v886 = vsel %vm836, 1, 0
    %v887 = vsel %vm837, 1, 0
    %v888 = vsel %vm838, 1, 0
    %v889 = vsel %vm839, 1, 0
    %v890 = vsel %vm840, 1, 0
    %v891 = vsel %vm841, 1, 0
    %v892 = vsel %vm842, 1, 0
    %v893 = vsel %vm843, 1, 0
    %v894 = vsel %vm844, 1, 0
    %v895 = vsel %vm845, 1, 0
    %v896 = vsel %vm846, 1, 0
    %v897 = vsel %vm847, 1, 0
    %v898 = vsel %vm848, 1, 0
    %v899 = vsel %vm849, 1, 0
    %v900 = vsel %vm850, 1, 0
    %v901 = vsel %vm851, 1, 0
    %v902 = vsel %vm852, 1, 0
    %v903 = vsel %vm853, 1, 0
    %v904 = vsel %vm854, 1, 0
    %v905 = vsel %vm855, 1, 0
    %v906 = vsel %vm856, 1, 0
    %v907 = vsel %vm857, 1, 0
    %v908 = vsel %vm858, 1, 0
    %v909 = vsel %vm859, 1, 0
    %v910 = vcvt.s32.f32 %v860
    %v911 = vcvt.s32.f32 %v861
    %v912 = vcvt.s32.f32 %v862
    %v913 = vcvt.s32.f32 %v863
    %v914 = vcvt.s32.f32 %v864
    %v915 = vcvt.s32.f32 %v865
    %v916 = vcvt.s32.f32 %v866
    %v917 = vcvt.s32.f32 %v867
    %v918 = vcvt.s32.f32 %v868
    %v919 = vcvt.s32.f32 %v869
    %v920 = vcvt.s32.f32 %v870
    %v921 = vcvt.s32.f32 %v871
    %v922 = vcvt.s32.f32 %v872
    %v923 = vcvt.s32.f32 %v873
    %v924 = vcvt.s32.f32 %v874
    %v925 = vcvt.s32.f32 %v875
    %v926 = vcvt.s32.f32 %v876
    %v927 = vcvt.s32.f32 %v877
    %v928 = vcvt.s32.f32 %v878
    %v929 = vcvt.s32.f32 %v879
    %v930 = vcvt.s32.f32 %v880
    %v931 = vcvt.s32.f32 %v881
    %v932 = vcvt.s32.f32 %v882
    %v933 = vcvt.s32.f32 %v883
    %v934 = vcvt.s32.f32 %v884
    %v935 = vcvt.s32.f32 %v885
    %v936 = vcvt.s32.f32 %v886
    %v937 = vcvt.s32.f32 %v887
    %v938 = vcvt.s32.f32 %v888
    %v939 = vcvt.s32.f32 %v889
    %v940 = vcvt.s32.f32 %v890
    %v941 = vcvt.s32.f32 %v891
    %v942 = vcvt.s32.f32 %v892
    %v943 = vcvt.s32.f32 %v893
    %v944 = vcvt.s32.f32 %v894
    %v945 = vcvt.s32.f32 %v895
    %v946 = vcvt.s32.f32 %v896
    %v947 = vcvt.s32.f32 %v897
    %v948 = vcvt.s32.f32 %v898
    %v949 = vcvt.s32.f32 %v899
    %v950 = vcvt.s32.f32 %v900
    %v951 = vcvt.s32.f32 %v901
    %v952 = vcvt.s32.f32 %v902
    %v953 = vcvt.s32.f32 %v903
    %v954 = vcvt.s32.f32 %v904
    %v955 = vcvt.s32.f32 %v905
    %v956 = vcvt.s32.f32 %v906
    %v957 = vcvt.s32.f32 %v907
    %v958 = vcvt.s32.f32 %v908
    %v959 = vcvt.s32.f32 %v909
    %v961 = vsel %vm559, %v459, 0
    %v964 = vsel %vm559, %v460, 0
    %v967 = vsel %vm559, %v461, 0
    %v970 = vsel %vm559, %v462, 0
    %v973 = vsel %vm559, %v463, 0
    %v976 = vsel %vm559, %v464, 0
    %v979 = vsel %vm559, %v465, 0
    %v982 = vsel %vm559, %v466, 0
    %v985 = vsel %vm559, %v467, 0
    %v988 = vsel %vm559, %v468, 0
    %v991 = vsel %vm559, %v469, 0
    %v994 = vsel %vm559, %v470, 0
    %v997 = vsel %vm559, %v471, 0
    %v1000 = vsel %vm559, %v472, 0
    %v1003 = vsel %vm559, %v473, 0
    %v1006 = vsel %vm559, %v474, 0
    %v1009 = vsel %vm559, %v475, 0
    %v1012 = vsel %vm559, %v476, 0
    %v1015 = vsel %vm559, %v477, 0
    %v1018 = vsel %vm559, %v478, 0
    %v1021 = vsel %vm559, %v479, 0
    %v1024 = vsel %vm559, %v480, 0
    %v1027 = vsel %vm559, %v481, 0
    %v1030 = vsel %vm559, %v482, 0
    %v1033 = vsel %vm559, %v483, 0
    %v1036 = vsel %vm559, %v484, 0
    %v1039 = vsel %vm559, %v485, 0
    %v1042 = vsel %vm559, %v486, 0
    %v1045 = vsel %vm559, %v487, 0
    %v1048 = vsel %vm559, %v488, 0
    %v1051 = vsel %vm559, %v489, 0
    %v1054 = vsel %vm559, %v490, 0
    %v1057 = vsel %vm559, %v491, 0
    %v1060 = vsel %vm559, %v492, 0
    %v1063 = vsel %vm559, %v493, 0
    %v1066 = vsel %vm559, %v494, 0
    %v1069 = vsel %vm559, %v495, 0
    %v1072 = vsel %vm559, %v496, 0
    %v1075 = vsel %vm559, %v497, 0
    %v1078 = vsel %vm559, %v498, 0
    %v1081 = vsel %vm559, %v499, 0
    %v1084 = vsel %vm559, %v500, 0
    %v1087 = vsel %vm559, %v501, 0
    %v1090 = vsel %vm559, %v502, 0
    %v1093 = vsel %vm559, %v503, 0
    %v1096 = vsel %vm559, %v504, 0
    %v1099 = vsel %vm559, %v505, 0
    %v1102 = vsel %vm559, %v506, 0
    %v1105 = vsel %vm559, %v507, 0
    %v1108 = vsel %vm559, %v508, 0
    %vm1110 = vcmask 1043456
    %v1112 = vsel %vm1110, %v152, 0
    %1114 = vmatpush.msra.mxu0 0.0
    %1115 = vmatpush.msra.mxu0 0.0
    %1116 = vmatpush.msra.mxu0 0.0
    %1117 = vmatpush.msra.mxu0 0.0
    %1118 = vmatpush.msra.mxu0 0.0
    %1119 = vmatpush.msra.mxu0 0.0
    %1120 = vmatpush.msra.mxu0 0.0
    %1121 = vmatpush.msra.mxu0 0.0
    %1122 = vmatpush.msra.mxu0 0.0
    %1123 = vmatpush.msra.mxu0 0.0
    %1124 = vmatpush.msra.mxu0 0.0
    %1125 = vmatpush.msra.mxu0 0.0
    %1126 = vmatpush.msra.mxu0 0.0
    %1127 = vmatpush.msra.mxu0 %v1112
    %1128 = vmatpush.msra.mxu0 %v137
    %1129 = vmatpush.msra.mxu0 %v122
    %1130 = vmatmul.f32.gmra.mxu0 %v961
    %v1131 = vpop.f32.mrf.mxu0
    %v1132 = vadd.f32 0.0, %v1131
    %1133 = vmatmul.f32.gmra.mxu0 %v964
    %v1134 = vpop.f32.mrf.mxu0
    %v1135 = vadd.f32 0.0, %v1134
    %1136 = vmatmul.f32.gmra.mxu0 %v967
    %v1137 = vpop.f32.mrf.mxu0
    %v1138 = vadd.f32 0.0, %v1137
    %1139 = vmatmul.f32.gmra.mxu0 %v970
    %v1140 = vpop.f32.mrf.mxu0
    %v1141 = vadd.f32 0.0, %v1140
    %1142 = vmatmul.f32.gmra.mxu0 %v973
    %v1143 = vpop.f32.mrf.mxu0
    %v1144 = vadd.f32 0.0, %v1143
    %1145 = vmatmul.f32.gmra.mxu0 %v976
    %v1146 = vpop.f32.mrf.mxu0
    %v1147 = vadd.f32 0.0, %v1146
    %1148 = vmatmul.f32.gmra.mxu0 %v979
    %v1149 = vpop.f32.mrf.mxu0
    %v1150 = vadd.f32 0.0, %v1149
    %1151 = vmatmul.f32.gmra.mxu0 %v982
    %v1152 = vpop.f32.mrf.mxu0
    %v1153 = vadd.f32 0.0, %v1152
    %1154 = vmatmul.f32.gmra.mxu0 %v985
    %v1155 = vpop.f32.mrf.mxu0
    %v1156 = vadd.f32 0.0, %v1155
    %1157 = vmatmul.f32.gmra.mxu0 %v988
    %v1158 = vpop.f32.mrf.mxu0
    %v1159 = vadd.f32 0.0, %v1158
    %1160 = vmatmul.f32.gmra.mxu0 %v991
    %v1161 = vpop.f32.mrf.mxu0
    %v1162 = vadd.f32 0.0, %v1161
    %1163 = vmatmul.f32.gmra.mxu0 %v994
    %v1164 = vpop.f32.mrf.mxu0
    %v1165 = vadd.f32 0.0, %v1164
    %1166 = vmatmul.f32.gmra.mxu0 %v997
    %v1167 = vpop.f32.mrf.mxu0
    %v1168 = vadd.f32 0.0, %v1167
    %1169 = vmatmul.f32.gmra.mxu0 %v1000
    %v1170 = vpop.f32.mrf.mxu0
    %v1171 = vadd.f32 0.0, %v1170
    %1172 = vmatmul.f32.gmra.mxu0 %v1003
    %v1173 = vpop.f32.mrf.mxu0
    %v1174 = vadd.f32 0.0, %v1173
    %1175 = vmatmul.f32.gmra.mxu0 %v1006
    %v1176 = vpop.f32.mrf.mxu0
    %v1177 = vadd.f32 0.0, %v1176
    %1178 = vmatmul.f32.gmra.mxu0 %v1009
    %v1179 = vpop.f32.mrf.mxu0
    %v1180 = vadd.f32 0.0, %v1179
    %1181 = vmatmul.f32.gmra.mxu0 %v1012
    %v1182 = vpop.f32.mrf.mxu0
    %v1183 = vadd.f32 0.0, %v1182
    %1184 = vmatmul.f32.gmra.mxu0 %v1015
    %v1185 = vpop.f32.mrf.mxu0
    %v1186 = vadd.f32 0.0, %v1185
    %1187 = vmatmul.f32.gmra.mxu0 %v1018
    %v1188 = vpop.f32.mrf.mxu0
    %v1189 = vadd.f32 0.0, %v1188
    %1190 = vmatmul.f32.gmra.mxu0 %v1021
    %v1191 = vpop.f32.mrf.mxu0
    %v1192 = vadd.f32 0.0, %v1191
    %1193 = vmatmul.f32.gmra.mxu0 %v1024
    %v1194 = vpop.f32.mrf.mxu0
    %v1195 = vadd.f32 0.0, %v1194
    %1196 = vmatmul.f32.gmra.mxu0 %v1027
    %v1197 = vpop.f32.mrf.mxu0
    %v1198 = vadd.f32 0.0, %v1197
    %1199 = vmatmul.f32.gmra.mxu0 %v1030
    %v1200 = vpop.f32.mrf.mxu0
    %v1201 = vadd.f32 0.0, %v1200
    %1202 = vmatmul.f32.gmra.mxu0 %v1033
    %v1203 = vpop.f32.mrf.mxu0
    %v1204 = vadd.f32 0.0, %v1203
    %1205 = vmatmul.f32.gmra.mxu0 %v1036
    %v1206 = vpop.f32.mrf.mxu0
    %v1207 = vadd.f32 0.0, %v1206
    %1208 = vmatmul.f32.gmra.mxu0 %v1039
    %v1209 = vpop.f32.mrf.mxu0
    %v1210 = vadd.f32 0.0, %v1209
    %1211 = vmatmul.f32.gmra.mxu0 %v1042
    %v1212 = vpop.f32.mrf.mxu0
    %v1213 = vadd.f32 0.0, %v1212
    %1214 = vmatmul.f32.gmra.mxu0 %v1045
    %v1215 = vpop.f32.mrf.mxu0
    %v1216 = vadd.f32 0.0, %v1215
    %1217 = vmatmul.f32.gmra.mxu0 %v1048
    %v1218 = vpop.f32.mrf.mxu0
    %v1219 = vadd.f32 0.0, %v1218
    %1220 = vmatmul.f32.gmra.mxu0 %v1051
    %v1221 = vpop.f32.mrf.mxu0
    %v1222 = vadd.f32 0.0, %v1221
    %1223 = vmatmul.f32.gmra.mxu0 %v1054
    %v1224 = vpop.f32.mrf.mxu0
    %v1225 = vadd.f32 0.0, %v1224
    %1226 = vmatmul.f32.gmra.mxu0 %v1057
    %v1227 = vpop.f32.mrf.mxu0
    %v1228 = vadd.f32 0.0, %v1227
    %1229 = vmatmul.f32.gmra.mxu0 %v1060
    %v1230 = vpop.f32.mrf.mxu0
    %v1231 = vadd.f32 0.0, %v1230
    %1232 = vmatmul.f32.gmra.mxu0 %v1063
    %v1233 = vpop.f32.mrf.mxu0
    %v1234 = vadd.f32 0.0, %v1233
    %1235 = vmatmul.f32.gmra.mxu0 %v1066
    %v1236 = vpop.f32.mrf.mxu0
    %v1237 = vadd.f32 0.0, %v1236
    %1238 = vmatmul.f32.gmra.mxu0 %v1069
    %v1239 = vpop.f32.mrf.mxu0
    %v1240 = vadd.f32 0.0, %v1239
    %1241 = vmatmul.f32.gmra.mxu0 %v1072
    %v1242 = vpop.f32.mrf.mxu0
    %v1243 = vadd.f32 0.0, %v1242
    %1244 = vmatmul.f32.gmra.mxu0 %v1075
    %v1245 = vpop.f32.mrf.mxu0
    %v1246 = vadd.f32 0.0, %v1245
    %1247 = vmatmul.f32.gmra.mxu0 %v1078
    %v1248 = vpop.f32.mrf.mxu0
    %v1249 = vadd.f32 0.0, %v1248
    %1250 = vmatmul.f32.gmra.mxu0 %v1081
    %v1251 = vpop.f32.mrf.mxu0
    %v1252 = vadd.f32 0.0, %v1251
    %1253 = vmatmul.f32.gmra.mxu0 %v1084
    %v1254 = vpop.f32.mrf.mxu0
    %v1255 = vadd.f32 0.0, %v1254
    %1256 = vmatmul.f32.gmra.mxu0 %v1087
    %v1257 = vpop.f32.mrf.mxu0
    %v1258 = vadd.f32 0.0, %v1257
    %1259 = vmatmul.f32.gmra.mxu0 %v1090
    %v1260 = vpop.f32.mrf.mxu0
    %v1261 = vadd.f32 0.0, %v1260
    %1262 = vmatmul.f32.gmra.mxu0 %v1093
    %v1263 = vpop.f32.mrf.mxu0
    %v1264 = vadd.f32 0.0, %v1263
    %1265 = vmatmul.f32.gmra.mxu0 %v1096
    %v1266 = vpop.f32.mrf.mxu0
    %v1267 = vadd.f32 0.0, %v1266
    %1268 = vmatmul.f32.gmra.mxu0 %v1099
    %v1269 = vpop.f32.mrf.mxu0
    %v1270 = vadd.f32 0.0, %v1269
    %1271 = vmatmul.f32.gmra.mxu0 %v1102
    %v1272 = vpop.f32.mrf.mxu0
    %v1273 = vadd.f32 0.0, %v1272
    %1274 = vmatmul.f32.gmra.mxu0 %v1105
    %v1275 = vpop.f32.mrf.mxu0
    %v1276 = vadd.f32 0.0, %v1275
    %1277 = vmatmul.f32.gmra.mxu0 %v1108
    %v1278 = vpop.f32.mrf.mxu0
    %v1279 = vadd.f32 0.0, %v1278
    %1280 = vdwg.mxu0
    %v1282 = vsel %vm559, %v910, 0
    %v1285 = vsel %vm559, %v911, 0
    %v1288 = vsel %vm559, %v912, 0
    %v1291 = vsel %vm559, %v913, 0
    %v1294 = vsel %vm559, %v914, 0
    %v1297 = vsel %vm559, %v915, 0
    %v1300 = vsel %vm559, %v916, 0
    %v1303 = vsel %vm559, %v917, 0
    %v1306 = vsel %vm559, %v918, 0
    %v1309 = vsel %vm559, %v919, 0
    %v1312 = vsel %vm559, %v920, 0
    %v1315 = vsel %vm559, %v921, 0
    %v1318 = vsel %vm559, %v922, 0
    %v1321 = vsel %vm559, %v923, 0
    %v1324 = vsel %vm559, %v924, 0
    %v1327 = vsel %vm559, %v925, 0
    %v1330 = vsel %vm559, %v926, 0
    %v1333 = vsel %vm559, %v927, 0
    %v1336 = vsel %vm559, %v928, 0
    %v1339 = vsel %vm559, %v929, 0
    %v1342 = vsel %vm559, %v930, 0
    %v1345 = vsel %vm559, %v931, 0
    %v1348 = vsel %vm559, %v932, 0
    %v1351 = vsel %vm559, %v933, 0
    %v1354 = vsel %vm559, %v934, 0
    %v1357 = vsel %vm559, %v935, 0
    %v1360 = vsel %vm559, %v936, 0
    %v1363 = vsel %vm559, %v937, 0
    %v1366 = vsel %vm559, %v938, 0
    %v1369 = vsel %vm559, %v939, 0
    %v1372 = vsel %vm559, %v940, 0
    %v1375 = vsel %vm559, %v941, 0
    %v1378 = vsel %vm559, %v942, 0
    %v1381 = vsel %vm559, %v943, 0
    %v1384 = vsel %vm559, %v944, 0
    %v1387 = vsel %vm559, %v945, 0
    %v1390 = vsel %vm559, %v946, 0
    %v1393 = vsel %vm559, %v947, 0
    %v1396 = vsel %vm559, %v948, 0
    %v1399 = vsel %vm559, %v949, 0
    %v1402 = vsel %vm559, %v950, 0
    %v1405 = vsel %vm559, %v951, 0
    %v1408 = vsel %vm559, %v952, 0
    %v1411 = vsel %vm559, %v953, 0
    %v1414 = vsel %vm559, %v954, 0
    %v1417 = vsel %vm559, %v955, 0
    %v1420 = vsel %vm559, %v956, 0
    %v1423 = vsel %vm559, %v957, 0
    %v1426 = vsel %vm559, %v958, 0
    %v1429 = vsel %vm559, %v959, 0
    %1431 = vmatpush.msra.mxu0 0.0
    %1432 = vmatpush.msra.mxu0 0.0
    %1433 = vmatpush.msra.mxu0 0.0
    %1434 = vmatpush.msra.mxu0 0.0
    %1435 = vmatpush.msra.mxu0 0.0
    %1436 = vmatpush.msra.mxu0 0.0
    %1437 = vmatpush.msra.mxu0 0.0
    %1438 = vmatpush.msra.mxu0 0.0
    %1439 = vmatpush.msra.mxu0 0.0
    %1440 = vmatpush.msra.mxu0 0.0
    %1441 = vmatpush.msra.mxu0 0.0
    %1442 = vmatpush.msra.mxu0 0.0
    %1443 = vmatpush.msra.mxu0 0.0
    %1444 = vmatpush.msra.mxu0 %v1112
    %1445 = vmatpush.msra.mxu0 %v137
    %1446 = vmatpush.msra.mxu0 %v122
    %1447 = vmatmul.f32.gmra.mxu0 %v1282
    %v1448 = vpop.f32.mrf.mxu0
    %v1449 = vadd.f32 0.0, %v1448
    %1450 = vmatmul.f32.gmra.mxu0 %v1285
    %v1451 = vpop.f32.mrf.mxu0
    %v1452 = vadd.f32 0.0, %v1451
    %1453 = vmatmul.f32.gmra.mxu0 %v1288
    %v1454 = vpop.f32.mrf.mxu0
    %v1455 = vadd.f32 0.0, %v1454
    %1456 = vmatmul.f32.gmra.mxu0 %v1291
    %v1457 = vpop.f32.mrf.mxu0
    %v1458 = vadd.f32 0.0, %v1457
    %1459 = vmatmul.f32.gmra.mxu0 %v1294
    %v1460 = vpop.f32.mrf.mxu0
    %v1461 = vadd.f32 0.0, %v1460
    %1462 = vmatmul.f32.gmra.mxu0 %v1297
    %v1463 = vpop.f32.mrf.mxu0
    %v1464 = vadd.f32 0.0, %v1463
    %1465 = vmatmul.f32.gmra.mxu0 %v1300
    %v1466 = vpop.f32.mrf.mxu0
    %v1467 = vadd.f32 0.0, %v1466
    %1468 = vmatmul.f32.gmra.mxu0 %v1303
    %v1469 = vpop.f32.mrf.mxu0
    %v1470 = vadd.f32 0.0, %v1469
    %1471 = vmatmul.f32.gmra.mxu0 %v1306
    %v1472 = vpop.f32.mrf.mxu0
    %v1473 = vadd.f32 0.0, %v1472
    %1474 = vmatmul.f32.gmra.mxu0 %v1309
    %v1475 = vpop.f32.mrf.mxu0
    %v1476 = vadd.f32 0.0, %v1475
    %1477 = vmatmul.f32.gmra.mxu0 %v1312
    %v1478 = vpop.f32.mrf.mxu0
    %v1479 = vadd.f32 0.0, %v1478
    %1480 = vmatmul.f32.gmra.mxu0 %v1315
    %v1481 = vpop.f32.mrf.mxu0
    %v1482 = vadd.f32 0.0, %v1481
    %1483 = vmatmul.f32.gmra.mxu0 %v1318
    %v1484 = vpop.f32.mrf.mxu0
    %v1485 = vadd.f32 0.0, %v1484
    %1486 = vmatmul.f32.gmra.mxu0 %v1321
    %v1487 = vpop.f32.mrf.mxu0
    %v1488 = vadd.f32 0.0, %v1487
    %1489 = vmatmul.f32.gmra.mxu0 %v1324
    %v1490 = vpop.f32.mrf.mxu0
    %v1491 = vadd.f32 0.0, %v1490
    %1492 = vmatmul.f32.gmra.mxu0 %v1327
    %v1493 = vpop.f32.mrf.mxu0
    %v1494 = vadd.f32 0.0, %v1493
    %1495 = vmatmul.f32.gmra.mxu0 %v1330
    %v1496 = vpop.f32.mrf.mxu0
    %v1497 = vadd.f32 0.0, %v1496
    %1498 = vmatmul.f32.gmra.mxu0 %v1333
    %v1499 = vpop.f32.mrf.mxu0
    %v1500 = vadd.f32 0.0, %v1499
    %1501 = vmatmul.f32.gmra.mxu0 %v1336
    %v1502 = vpop.f32.mrf.mxu0
    %v1503 = vadd.f32 0.0, %v1502
    %1504 = vmatmul.f32.gmra.mxu0 %v1339
    %v1505 = vpop.f32.mrf.mxu0
    %v1506 = vadd.f32 0.0, %v1505
    %1507 = vmatmul.f32.gmra.mxu0 %v1342
    %v1508 = vpop.f32.mrf.mxu0
    %v1509 = vadd.f32 0.0, %v1508
    %1510 = vmatmul.f32.gmra.mxu0 %v1345
    %v1511 = vpop.f32.mrf.mxu0
    %v1512 = vadd.f32 0.0, %v1511
    %1513 = vmatmul.f32.gmra.mxu0 %v1348
    %v1514 = vpop.f32.mrf.mxu0
    %v1515 = vadd.f32 0.0, %v1514
    %1516 = vmatmul.f32.gmra.mxu0 %v1351
    %v1517 = vpop.f32.mrf.mxu0
    %v1518 = vadd.f32 0.0, %v1517
    %1519 = vmatmul.f32.gmra.mxu0 %v1354
    %v1520 = vpop.f32.mrf.mxu0
    %v1521 = vadd.f32 0.0, %v1520
    %1522 = vmatmul.f32.gmra.mxu0 %v1357
    %v1523 = vpop.f32.mrf.mxu0
    %v1524 = vadd.f32 0.0, %v1523
    %1525 = vmatmul.f32.gmra.mxu0 %v1360
    %v1526 = vpop.f32.mrf.mxu0
    %v1527 = vadd.f32 0.0, %v1526
    %1528 = vmatmul.f32.gmra.mxu0 %v1363
    %v1529 = vpop.f32.mrf.mxu0
    %v1530 = vadd.f32 0.0, %v1529
    %1531 = vmatmul.f32.gmra.mxu0 %v1366
    %v1532 = vpop.f32.mrf.mxu0
    %v1533 = vadd.f32 0.0, %v1532
    %1534 = vmatmul.f32.gmra.mxu0 %v1369
    %v1535 = vpop.f32.mrf.mxu0
    %v1536 = vadd.f32 0.0, %v1535
    %1537 = vmatmul.f32.gmra.mxu0 %v1372
    %v1538 = vpop.f32.mrf.mxu0
    %v1539 = vadd.f32 0.0, %v1538
    %1540 = vmatmul.f32.gmra.mxu0 %v1375
    %v1541 = vpop.f32.mrf.mxu0
    %v1542 = vadd.f32 0.0, %v1541
    %1543 = vmatmul.f32.gmra.mxu0 %v1378
    %v1544 = vpop.f32.mrf.mxu0
    %v1545 = vadd.f32 0.0, %v1544
    %1546 = vmatmul.f32.gmra.mxu0 %v1381
    %v1547 = vpop.f32.mrf.mxu0
    %v1548 = vadd.f32 0.0, %v1547
    %1549 = vmatmul.f32.gmra.mxu0 %v1384
    %v1550 = vpop.f32.mrf.mxu0
    %v1551 = vadd.f32 0.0, %v1550
    %1552 = vmatmul.f32.gmra.mxu0 %v1387
    %v1553 = vpop.f32.mrf.mxu0
    %v1554 = vadd.f32 0.0, %v1553
    %1555 = vmatmul.f32.gmra.mxu0 %v1390
    %v1556 = vpop.f32.mrf.mxu0
    %v1557 = vadd.f32 0.0, %v1556
    %1558 = vmatmul.f32.gmra.mxu0 %v1393
    %v1559 = vpop.f32.mrf.mxu0
    %v1560 = vadd.f32 0.0, %v1559
    %1561 = vmatmul.f32.gmra.mxu0 %v1396
    %v1562 = vpop.f32.mrf.mxu0
    %v1563 = vadd.f32 0.0, %v1562
    %1564 = vmatmul.f32.gmra.mxu0 %v1399
    %v1565 = vpop.f32.mrf.mxu0
    %v1566 = vadd.f32 0.0, %v1565
    %1567 = vmatmul.f32.gmra.mxu0 %v1402
    %v1568 = vpop.f32.mrf.mxu0
    %v1569 = vadd.f32 0.0, %v1568
    %1570 = vmatmul.f32.gmra.mxu0 %v1405
    %v1571 = vpop.f32.mrf.mxu0
    %v1572 = vadd.f32 0.0, %v1571
    %1573 = vmatmul.f32.gmra.mxu0 %v1408
    %v1574 = vpop.f32.mrf.mxu0
    %v1575 = vadd.f32 0.0, %v1574
    %1576 = vmatmul.f32.gmra.mxu0 %v1411
    %v1577 = vpop.f32.mrf.mxu0
    %v1578 = vadd.f32 0.0, %v1577
    %1579 = vmatmul.f32.gmra.mxu0 %v1414
    %v1580 = vpop.f32.mrf.mxu0
    %v1581 = vadd.f32 0.0, %v1580
    %1582 = vmatmul.f32.gmra.mxu0 %v1417
    %v1583 = vpop.f32.mrf.mxu0
    %v1584 = vadd.f32 0.0, %v1583
    %1585 = vmatmul.f32.gmra.mxu0 %v1420
    %v1586 = vpop.f32.mrf.mxu0
    %v1587 = vadd.f32 0.0, %v1586
    %1588 = vmatmul.f32.gmra.mxu0 %v1423
    %v1589 = vpop.f32.mrf.mxu0
    %v1590 = vadd.f32 0.0, %v1589
    %1591 = vmatmul.f32.gmra.mxu0 %v1426
    %v1592 = vpop.f32.mrf.mxu0
    %v1593 = vadd.f32 0.0, %v1592
    %1594 = vmatmul.f32.gmra.mxu0 %v1429
    %v1595 = vpop.f32.mrf.mxu0
    %v1596 = vadd.f32 0.0, %v1595
    %1597 = vdwg.mxu0
    %v1598 = vmul.f32 %v1132, %v1449
    %v1599 = vmul.f32 %v1135, %v1452
    %v1600 = vmul.f32 %v1138, %v1455
    %v1601 = vmul.f32 %v1141, %v1458
    %v1602 = vmul.f32 %v1144, %v1461
    %v1603 = vmul.f32 %v1147, %v1464
    %v1604 = vmul.f32 %v1150, %v1467
    %v1605 = vmul.f32 %v1153, %v1470
    %v1606 = vmul.f32 %v1156, %v1473
    %v1607 = vmul.f32 %v1159, %v1476
    %v1608 = vmul.f32 %v1162, %v1479
    %v1609 = vmul.f32 %v1165, %v1482
    %v1610 = vmul.f32 %v1168, %v1485
    %v1611 = vmul.f32 %v1171, %v1488
    %v1612 = vmul.f32 %v1174, %v1491
    %v1613 = vmul.f32 %v1177, %v1494
    %v1614 = vmul.f32 %v1180, %v1497
    %v1615 = vmul.f32 %v1183, %v1500
    %v1616 = vmul.f32 %v1186, %v1503
    %v1617 = vmul.f32 %v1189, %v1506
    %v1618 = vmul.f32 %v1192, %v1509
    %v1619 = vmul.f32 %v1195, %v1512
    %v1620 = vmul.f32 %v1198, %v1515
    %v1621 = vmul.f32 %v1201, %v1518
    %v1622 = vmul.f32 %v1204, %v1521
    %v1623 = vmul.f32 %v1207, %v1524
    %v1624 = vmul.f32 %v1210, %v1527
    %v1625 = vmul.f32 %v1213, %v1530
    %v1626 = vmul.f32 %v1216, %v1533
    %v1627 = vmul.f32 %v1219, %v1536
    %v1628 = vmul.f32 %v1222, %v1539
    %v1629 = vmul.f32 %v1225, %v1542
    %v1630 = vmul.f32 %v1228, %v1545
    %v1631 = vmul.f32 %v1231, %v1548
    %v1632 = vmul.f32 %v1234, %v1551
    %v1633 = vmul.f32 %v1237, %v1554
    %v1634 = vmul.f32 %v1240, %v1557
    %v1635 = vmul.f32 %v1243, %v1560
    %v1636 = vmul.f32 %v1246, %v1563
    %v1637 = vmul.f32 %v1249, %v1566
    %v1638 = vmul.f32 %v1252, %v1569
    %v1639 = vmul.f32 %v1255, %v1572
    %v1640 = vmul.f32 %v1258, %v1575
    %v1641 = vmul.f32 %v1261, %v1578
    %v1642 = vmul.f32 %v1264, %v1581
    %v1643 = vmul.f32 %v1267, %v1584
    %v1644 = vmul.f32 %v1270, %v1587
    %v1645 = vmul.f32 %v1273, %v1590
    %v1646 = vmul.f32 %v1276, %v1593
    %v1647 = vmul.f32 %v1279, %v1596
    %v1648 = vld [vmem:[%s1] sm:$0xff]
    %v1649 = vld [vmem:[%s1 + $0x8] sm:$0xff]
    %v1650 = vld [vmem:[%s1 + $0x10] sm:$0xff]
    %v1651 = vld [vmem:[%s1 + $0x18] sm:$0xff]
    %v1652 = vld [vmem:[%s1 + $0x20] sm:$0xff]
    %v1653 = vld [vmem:[%s1 + $0x28] sm:$0xff]
    %v1654 = vld [vmem:[%s1 + $0x30] sm:$0xff]
    %v1655 = vld [vmem:[%s1 + $0x38] sm:$0xff]
    %v1656 = vld [vmem:[%s1 + $0x40] sm:$0xff]
    %v1657 = vld [vmem:[%s1 + $0x48] sm:$0xff]
    %v1658 = vld [vmem:[%s1 + $0x50] sm:$0xff]
    %v1659 = vld [vmem:[%s2] sm:$0x1]
    %v1661 = vperm.slane %v1659, 0
    %v1664 = vsel %vm58, %v1598, 0
    %v1667 = vsel %vm58, %v1599, 0
    %v1670 = vsel %vm58, %v1600, 0
    %v1673 = vsel %vm58, %v1601, 0
    %v1676 = vsel %vm58, %v1602, 0
    %v1679 = vsel %vm58, %v1603, 0
    %v1682 = vsel %vm58, %v1604, 0
    %v1685 = vsel %vm58, %v1605, 0
    %v1688 = vsel %vm58, %v1606, 0
    %v1691 = vsel %vm58, %v1607, 0
    %v1694 = vsel %vm58, %v1608, 0
    %v1697 = vsel %vm58, %v1609, 0
    %v1700 = vsel %vm58, %v1610, 0
    %v1703 = vsel %vm58, %v1611, 0
    %v1706 = vsel %vm58, %v1612, 0
    %v1709 = vsel %vm58, %v1613, 0
    %v1712 = vsel %vm58, %v1614, 0
    %v1715 = vsel %vm58, %v1615, 0
    %v1718 = vsel %vm58, %v1616, 0
    %v1721 = vsel %vm58, %v1617, 0
    %v1724 = vsel %vm58, %v1618, 0
    %v1727 = vsel %vm58, %v1619, 0
    %v1730 = vsel %vm58, %v1620, 0
    %v1733 = vsel %vm58, %v1621, 0
    %v1736 = vsel %vm58, %v1622, 0
    %v1739 = vsel %vm58, %v1623, 0
    %v1742 = vsel %vm58, %v1624, 0
    %v1745 = vsel %vm58, %v1625, 0
    %v1748 = vsel %vm58, %v1626, 0
    %v1751 = vsel %vm58, %v1627, 0
    %v1754 = vsel %vm58, %v1628, 0
    %v1757 = vsel %vm58, %v1629, 0
    %v1760 = vsel %vm58, %v1630, 0
    %v1763 = vsel %vm58, %v1631, 0
    %v1766 = vsel %vm58, %v1632, 0
    %v1769 = vsel %vm58, %v1633, 0
    %v1772 = vsel %vm58, %v1634, 0
    %v1775 = vsel %vm58, %v1635, 0
    %v1778 = vsel %vm58, %v1636, 0
    %v1781 = vsel %vm58, %v1637, 0
    %v1784 = vsel %vm58, %v1638, 0
    %v1787 = vsel %vm58, %v1639, 0
    %v1790 = vsel %vm58, %v1640, 0
    %v1793 = vsel %vm58, %v1641, 0
    %v1796 = vsel %vm58, %v1642, 0
    %v1799 = vsel %vm58, %v1643, 0
    %v1802 = vsel %vm58, %v1644, 0
    %v1805 = vsel %vm58, %v1645, 0
    %v1808 = vsel %vm58, %v1646, 0
    %v1811 = vsel %vm58, %v1647, 0
    %1813 = vmatpush.msra.mxu0 0.0
    %1814 = vmatpush.msra.mxu0 0.0
    %1815 = vmatpush.msra.mxu0 0.0
    %1816 = vmatpush.msra.mxu0 0.0
    %1817 = vmatpush.msra.mxu0 0.0
    %1818 = vmatpush.msra.mxu0 %v1658
    %1819 = vmatpush.msra.mxu0 %v1657
    %1820 = vmatpush.msra.mxu0 %v1656
    %1821 = vmatpush.msra.mxu0 %v1655
    %1822 = vmatpush.msra.mxu0 %v1654
    %1823 = vmatpush.msra.mxu0 %v1653
    %1824 = vmatpush.msra.mxu0 %v1652
    %1825 = vmatpush.msra.mxu0 %v1651
    %1826 = vmatpush.msra.mxu0 %v1650
    %1827 = vmatpush.msra.mxu0 %v1649
    %1828 = vmatpush.msra.mxu0 %v1648
    %1829 = vmatmul.f32.gmra.mxu0 %v1664
    %v1830 = vpop.f32.mrf.mxu0
    %v1831 = vadd.f32 %v1661, %v1830
    %1832 = vmatmul.f32.gmra.mxu0 %v1667
    %v1833 = vpop.f32.mrf.mxu0
    %v1834 = vadd.f32 %v1661, %v1833
    %1835 = vmatmul.f32.gmra.mxu0 %v1670
    %v1836 = vpop.f32.mrf.mxu0
    %v1837 = vadd.f32 %v1661, %v1836
    %1838 = vmatmul.f32.gmra.mxu0 %v1673
    %v1839 = vpop.f32.mrf.mxu0
    %v1840 = vadd.f32 %v1661, %v1839
    %1841 = vmatmul.f32.gmra.mxu0 %v1676
    %v1842 = vpop.f32.mrf.mxu0
    %v1843 = vadd.f32 %v1661, %v1842
    %1844 = vmatmul.f32.gmra.mxu0 %v1679
    %v1845 = vpop.f32.mrf.mxu0
    %v1846 = vadd.f32 %v1661, %v1845
    %1847 = vmatmul.f32.gmra.mxu0 %v1682
    %v1848 = vpop.f32.mrf.mxu0
    %v1849 = vadd.f32 %v1661, %v1848
    %1850 = vmatmul.f32.gmra.mxu0 %v1685
    %v1851 = vpop.f32.mrf.mxu0
    %v1852 = vadd.f32 %v1661, %v1851
    %1853 = vmatmul.f32.gmra.mxu0 %v1688
    %v1854 = vpop.f32.mrf.mxu0
    %v1855 = vadd.f32 %v1661, %v1854
    %1856 = vmatmul.f32.gmra.mxu0 %v1691
    %v1857 = vpop.f32.mrf.mxu0
    %v1858 = vadd.f32 %v1661, %v1857
    %1859 = vmatmul.f32.gmra.mxu0 %v1694
    %v1860 = vpop.f32.mrf.mxu0
    %v1861 = vadd.f32 %v1661, %v1860
    %1862 = vmatmul.f32.gmra.mxu0 %v1697
    %v1863 = vpop.f32.mrf.mxu0
    %v1864 = vadd.f32 %v1661, %v1863
    %1865 = vmatmul.f32.gmra.mxu0 %v1700
    %v1866 = vpop.f32.mrf.mxu0
    %v1867 = vadd.f32 %v1661, %v1866
    %1868 = vmatmul.f32.gmra.mxu0 %v1703
    %v1869 = vpop.f32.mrf.mxu0
    %v1870 = vadd.f32 %v1661, %v1869
    %1871 = vmatmul.f32.gmra.mxu0 %v1706
    %v1872 = vpop.f32.mrf.mxu0
    %v1873 = vadd.f32 %v1661, %v1872
    %1874 = vmatmul.f32.gmra.mxu0 %v1709
    %v1875 = vpop.f32.mrf.mxu0
    %v1876 = vadd.f32 %v1661, %v1875
    %1877 = vmatmul.f32.gmra.mxu0 %v1712
    %v1878 = vpop.f32.mrf.mxu0
    %v1879 = vadd.f32 %v1661, %v1878
    %1880 = vmatmul.f32.gmra.mxu0 %v1715
    %v1881 = vpop.f32.mrf.mxu0
    %v1882 = vadd.f32 %v1661, %v1881
    %1883 = vmatmul.f32.gmra.mxu0 %v1718
    %v1884 = vpop.f32.mrf.mxu0
    %v1885 = vadd.f32 %v1661, %v1884
    %1886 = vmatmul.f32.gmra.mxu0 %v1721
    %v1887 = vpop.f32.mrf.mxu0
    %v1888 = vadd.f32 %v1661, %v1887
    %1889 = vmatmul.f32.gmra.mxu0 %v1724
    %v1890 = vpop.f32.mrf.mxu0
    %v1891 = vadd.f32 %v1661, %v1890
    %1892 = vmatmul.f32.gmra.mxu0 %v1727
    %v1893 = vpop.f32.mrf.mxu0
    %v1894 = vadd.f32 %v1661, %v1893
    %1895 = vmatmul.f32.gmra.mxu0 %v1730
    %v1896 = vpop.f32.mrf.mxu0
    %v1897 = vadd.f32 %v1661, %v1896
    %1898 = vmatmul.f32.gmra.mxu0 %v1733
    %v1899 = vpop.f32.mrf.mxu0
    %v1900 = vadd.f32 %v1661, %v1899
    %1901 = vmatmul.f32.gmra.mxu0 %v1736
    %v1902 = vpop.f32.mrf.mxu0
    %v1903 = vadd.f32 %v1661, %v1902
    %1904 = vmatmul.f32.gmra.mxu0 %v1739
    %v1905 = vpop.f32.mrf.mxu0
    %v1906 = vadd.f32 %v1661, %v1905
    %1907 = vmatmul.f32.gmra.mxu0 %v1742
    %v1908 = vpop.f32.mrf.mxu0
    %v1909 = vadd.f32 %v1661, %v1908
    %1910 = vmatmul.f32.gmra.mxu0 %v1745
    %v1911 = vpop.f32.mrf.mxu0
    %v1912 = vadd.f32 %v1661, %v1911
    %1913 = vmatmul.f32.gmra.mxu0 %v1748
    %v1914 = vpop.f32.mrf.mxu0
    %v1915 = vadd.f32 %v1661, %v1914
    %1916 = vmatmul.f32.gmra.mxu0 %v1751
    %v1917 = vpop.f32.mrf.mxu0
    %v1918 = vadd.f32 %v1661, %v1917
    %1919 = vmatmul.f32.gmra.mxu0 %v1754
    %v1920 = vpop.f32.mrf.mxu0
    %v1921 = vadd.f32 %v1661, %v1920
    %1922 = vmatmul.f32.gmra.mxu0 %v1757
    %v1923 = vpop.f32.mrf.mxu0
    %v1924 = vadd.f32 %v1661, %v1923
    %1925 = vmatmul.f32.gmra.mxu0 %v1760
    %v1926 = vpop.f32.mrf.mxu0
    %v1927 = vadd.f32 %v1661, %v1926
    %1928 = vmatmul.f32.gmra.mxu0 %v1763
    %v1929 = vpop.f32.mrf.mxu0
    %v1930 = vadd.f32 %v1661, %v1929
    %1931 = vmatmul.f32.gmra.mxu0 %v1766
    %v1932 = vpop.f32.mrf.mxu0
    %v1933 = vadd.f32 %v1661, %v1932
    %1934 = vmatmul.f32.gmra.mxu0 %v1769
    %v1935 = vpop.f32.mrf.mxu0
    %v1936 = vadd.f32 %v1661, %v1935
    %1937 = vmatmul.f32.gmra.mxu0 %v1772
    %v1938 = vpop.f32.mrf.mxu0
    %v1939 = vadd.f32 %v1661, %v1938
    %1940 = vmatmul.f32.gmra.mxu0 %v1775
    %v1941 = vpop.f32.mrf.mxu0
    %v1942 = vadd.f32 %v1661, %v1941
    %1943 = vmatmul.f32.gmra.mxu0 %v1778
    %v1944 = vpop.f32.mrf.mxu0
    %v1945 = vadd.f32 %v1661, %v1944
    %1946 = vmatmul.f32.gmra.mxu0 %v1781
    %v1947 = vpop.f32.mrf.mxu0
    %v1948 = vadd.f32 %v1661, %v1947
    %1949 = vmatmul.f32.gmra.mxu0 %v1784
    %v1950 = vpop.f32.mrf.mxu0
    %v1951 = vadd.f32 %v1661, %v1950
    %1952 = vmatmul.f32.gmra.mxu0 %v1787
    %v1953 = vpop.f32.mrf.mxu0
    %v1954 = vadd.f32 %v1661, %v1953
    %1955 = vmatmul.f32.gmra.mxu0 %v1790
    %v1956 = vpop.f32.mrf.mxu0
    %v1957 = vadd.f32 %v1661, %v1956
    %1958 = vmatmul.f32.gmra.mxu0 %v1793
    %v1959 = vpop.f32.mrf.mxu0
    %v1960 = vadd.f32 %v1661, %v1959
    %1961 = vmatmul.f32.gmra.mxu0 %v1796
    %v1962 = vpop.f32.mrf.mxu0
    %v1963 = vadd.f32 %v1661, %v1962
    %1964 = vmatmul.f32.gmra.mxu0 %v1799
    %v1965 = vpop.f32.mrf.mxu0
    %v1966 = vadd.f32 %v1661, %v1965
    %1967 = vmatmul.f32.gmra.mxu0 %v1802
    %v1968 = vpop.f32.mrf.mxu0
    %v1969 = vadd.f32 %v1661, %v1968
    %1970 = vmatmul.f32.gmra.mxu0 %v1805
    %v1971 = vpop.f32.mrf.mxu0
    %v1972 = vadd.f32 %v1661, %v1971
    %1973 = vmatmul.f32.gmra.mxu0 %v1808
    %v1974 = vpop.f32.mrf.mxu0
    %v1975 = vadd.f32 %v1661, %v1974
    %1976 = vmatmul.f32.gmra.mxu0 %v1811
    %v1977 = vpop.f32.mrf.mxu0
    %v1978 = vadd.f32 %v1661, %v1977
    %1979 = vdwg.mxu0
    %vm1980 = vcmp.ge.f32.partialorder %v1831, 0.0
    %vm1981 = vcmp.ge.f32.partialorder %v1834, 0.0
    %vm1982 = vcmp.ge.f32.partialorder %v1837, 0.0
    %vm1983 = vcmp.ge.f32.partialorder %v1840, 0.0
    %vm1984 = vcmp.ge.f32.partialorder %v1843, 0.0
    %vm1985 = vcmp.ge.f32.partialorder %v1846, 0.0
    %vm1986 = vcmp.ge.f32.partialorder %v1849, 0.0
    %vm1987 = vcmp.ge.f32.partialorder %v1852, 0.0
    %vm1988 = vcmp.ge.f32.partialorder %v1855, 0.0
    %vm1989 = vcmp.ge.f32.partialorder %v1858, 0.0
    %vm1990 = vcmp.ge.f32.partialorder %v1861, 0.0
    %vm1991 = vcmp.ge.f32.partialorder %v1864, 0.0
    %vm1992 = vcmp.ge.f32.partialorder %v1867, 0.0
    %vm1993 = vcmp.ge.f32.partialorder %v1870, 0.0
    %vm1994 = vcmp.ge.f32.partialorder %v1873, 0.0
    %vm1995 = vcmp.ge.f32.partialorder %v1876, 0.0
    %vm1996 = vcmp.ge.f32.partialorder %v1879, 0.0
    %vm1997 = vcmp.ge.f32.partialorder %v1882, 0.0
    %vm1998 = vcmp.ge.f32.partialorder %v1885, 0.0
    %vm1999 = vcmp.ge.f32.partialorder %v1888, 0.0
    %vm2000 = vcmp.ge.f32.partialorder %v1891, 0.0
    %vm2001 = vcmp.ge.f32.partialorder %v1894, 0.0
    %vm2002 = vcmp.ge.f32.partialorder %v1897, 0.0
    %vm2003 = vcmp.ge.f32.partialorder %v1900, 0.0
    %vm2004 = vcmp.ge.f32.partialorder %v1903, 0.0
    %vm2005 = vcmp.ge.f32.partialorder %v1906, 0.0
    %vm2006 = vcmp.ge.f32.partialorder %v1909, 0.0
    %vm2007 = vcmp.ge.f32.partialorder %v1912, 0.0
    %vm2008 = vcmp.ge.f32.partialorder %v1915, 0.0
    %vm2009 = vcmp.ge.f32.partialorder %v1918, 0.0
    %vm2010 = vcmp.ge.f32.partialorder %v1921, 0.0
    %vm2011 = vcmp.ge.f32.partialorder %v1924, 0.0
    %vm2012 = vcmp.ge.f32.partialorder %v1927, 0.0
    %vm2013 = vcmp.ge.f32.partialorder %v1930, 0.0
    %vm2014 = vcmp.ge.f32.partialorder %v1933, 0.0
    %vm2015 = vcmp.ge.f32.partialorder %v1936, 0.0
    %vm2016 = vcmp.ge.f32.partialorder %v1939, 0.0
    %vm2017 = vcmp.ge.f32.partialorder %v1942, 0.0
    %vm2018 = vcmp.ge.f32.partialorder %v1945, 0.0
    %vm2019 = vcmp.ge.f32.partialorder %v1948, 0.0
    %vm2020 = vcmp.ge.f32.partialorder %v1951, 0.0
    %vm2021 = vcmp.ge.f32.partialorder %v1954, 0.0
    %vm2022 = vcmp.ge.f32.partialorder %v1957, 0.0
    %vm2023 = vcmp.ge.f32.partialorder %v1960, 0.0
    %vm2024 = vcmp.ge.f32.partialorder %v1963, 0.0
    %vm2025 = vcmp.ge.f32.partialorder %v1966, 0.0
    %vm2026 = vcmp.ge.f32.partialorder %v1969, 0.0
    %vm2027 = vcmp.ge.f32.partialorder %v1972, 0.0
    %vm2028 = vcmp.ge.f32.partialorder %v1975, 0.0
    %vm2029 = vcmp.ge.f32.partialorder %v1978, 0.0
    %v2030 = vmul.f32 %v1831, 0.01
    %v2031 = vmul.f32 %v1834, 0.01
    %v2032 = vmul.f32 %v1837, 0.01
    %v2033 = vmul.f32 %v1840, 0.01
    %v2034 = vmul.f32 %v1843, 0.01
    %v2035 = vmul.f32 %v1846, 0.01
    %v2036 = vmul.f32 %v1849, 0.01
    %v2037 = vmul.f32 %v1852, 0.01
    %v2038 = vmul.f32 %v1855, 0.01
    %v2039 = vmul.f32 %v1858, 0.01
    %v2040 = vmul.f32 %v1861, 0.01
    %v2041 = vmul.f32 %v1864, 0.01
    %v2042 = vmul.f32 %v1867, 0.01
    %v2043 = vmul.f32 %v1870, 0.01
    %v2044 = vmul.f32 %v1873, 0.01
    %v2045 = vmul.f32 %v1876, 0.01
    %v2046 = vmul.f32 %v1879, 0.01
    %v2047 = vmul.f32 %v1882, 0.01
    %v2048 = vmul.f32 %v1885, 0.01
    %v2049 = vmul.f32 %v1888, 0.01
    %v2050 = vmul.f32 %v1891, 0.01
    %v2051 = vmul.f32 %v1894, 0.01
    %v2052 = vmul.f32 %v1897, 0.01
    %v2053 = vmul.f32 %v1900, 0.01
    %v2054 = vmul.f32 %v1903, 0.01
    %v2055 = vmul.f32 %v1906, 0.01
    %v2056 = vmul.f32 %v1909, 0.01
    %v2057 = vmul.f32 %v1912, 0.01
    %v2058 = vmul.f32 %v1915, 0.01
    %v2059 = vmul.f32 %v1918, 0.01
    %v2060 = vmul.f32 %v1921, 0.01
    %v2061 = vmul.f32 %v1924, 0.01
    %v2062 = vmul.f32 %v1927, 0.01
    %v2063 = vmul.f32 %v1930, 0.01
    %v2064 = vmul.f32 %v1933, 0.01
    %v2065 = vmul.f32 %v1936, 0.01
    %v2066 = vmul.f32 %v1939, 0.01
    %v2067 = vmul.f32 %v1942, 0.01
    %v2068 = vmul.f32 %v1945, 0.01
    %v2069 = vmul.f32 %v1948, 0.01
    %v2070 = vmul.f32 %v1951, 0.01
    %v2071 = vmul.f32 %v1954, 0.01
    %v2072 = vmul.f32 %v1957, 0.01
    %v2073 = vmul.f32 %v1960, 0.01
    %v2074 = vmul.f32 %v1963, 0.01
    %v2075 = vmul.f32 %v1966, 0.01
    %v2076 = vmul.f32 %v1969, 0.01
    %v2077 = vmul.f32 %v1972, 0.01
    %v2078 = vmul.f32 %v1975, 0.01
    %v2079 = vmul.f32 %v1978, 0.01
    %v2080 = vsel %vm1980, %v1831, %v2030
    %v2081 = vsel %vm1981, %v1834, %v2031
    %v2082 = vsel %vm1982, %v1837, %v2032
    %v2083 = vsel %vm1983, %v1840, %v2033
    %v2084 = vsel %vm1984, %v1843, %v2034
    %v2085 = vsel %vm1985, %v1846, %v2035
    %v2086 = vsel %vm1986, %v1849, %v2036
    %v2087 = vsel %vm1987, %v1852, %v2037
    %v2088 = vsel %vm1988, %v1855, %v2038
    %v2089 = vsel %vm1989, %v1858, %v2039
    %v2090 = vsel %vm1990, %v1861, %v2040
    %v2091 = vsel %vm1991, %v1864, %v2041
    %v2092 = vsel %vm1992, %v1867, %v2042
    %v2093 = vsel %vm1993, %v1870, %v2043
    %v2094 = vsel %vm1994, %v1873, %v2044
    %v2095 = vsel %vm1995, %v1876, %v2045
    %v2096 = vsel %vm1996, %v1879, %v2046
    %v2097 = vsel %vm1997, %v1882, %v2047
    %v2098 = vsel %vm1998, %v1885, %v2048
    %v2099 = vsel %vm1999, %v1888, %v2049
    %v2100 = vsel %vm2000, %v1891, %v2050
    %v2101 = vsel %vm2001, %v1894, %v2051
    %v2102 = vsel %vm2002, %v1897, %v2052
    %v2103 = vsel %vm2003, %v1900, %v2053
    %v2104 = vsel %vm2004, %v1903, %v2054
    %v2105 = vsel %vm2005, %v1906, %v2055
    %v2106 = vsel %vm2006, %v1909, %v2056
    %v2107 = vsel %vm2007, %v1912, %v2057
    %v2108 = vsel %vm2008, %v1915, %v2058
    %v2109 = vsel %vm2009, %v1918, %v2059
    %v2110 = vsel %vm2010, %v1921, %v2060
    %v2111 = vsel %vm2011, %v1924, %v2061
    %v2112 = vsel %vm2012, %v1927, %v2062
    %v2113 = vsel %vm2013, %v1930, %v2063
    %v2114 = vsel %vm2014, %v1933, %v2064
    %v2115 = vsel %vm2015, %v1936, %v2065
    %v2116 = vsel %vm2016, %v1939, %v2066
    %v2117 = vsel %vm2017, %v1942, %v2067
    %v2118 = vsel %vm2018, %v1945, %v2068
    %v2119 = vsel %vm2019, %v1948, %v2069
    %v2120 = vsel %vm2020, %v1951, %v2070
    %v2121 = vsel %vm2021, %v1954, %v2071
    %v2122 = vsel %vm2022, %v1957, %v2072
    %v2123 = vsel %vm2023, %v1960, %v2073
    %v2124 = vsel %vm2024, %v1963, %v2074
    %v2125 = vsel %vm2025, %v1966, %v2075
    %v2126 = vsel %vm2026, %v1969, %v2076
    %v2127 = vsel %vm2027, %v1972, %v2077
    %v2128 = vsel %vm2028, %v1975, %v2078
    %v2129 = vsel %vm2029, %v1978, %v2079
    %v2130 = vld [vmem:[%s3] sm:$0xff]
    %v2131 = vld [vmem:[%s3 + $0x8] sm:$0xff]
    %v2132 = vld [vmem:[%s3 + $0x10] sm:$0xff]
    %v2133 = vld [vmem:[%s3 + $0x18] sm:$0xff]
    %v2134 = vld [vmem:[%s4] sm:$0x1]
    %v2136 = vperm.slane %v2134, 0
    %vm2138 = vcmask 261120
    %v2140 = vsel %vm2138, %v2080, 0
    %v2143 = vsel %vm2138, %v2081, 0
    %v2146 = vsel %vm2138, %v2082, 0
    %v2149 = vsel %vm2138, %v2083, 0
    %v2152 = vsel %vm2138, %v2084, 0
    %v2155 = vsel %vm2138, %v2085, 0
    %v2158 = vsel %vm2138, %v2086, 0
    %v2161 = vsel %vm2138, %v2087, 0
    %v2164 = vsel %vm2138, %v2088, 0
    %v2167 = vsel %vm2138, %v2089, 0
    %v2170 = vsel %vm2138, %v2090, 0
    %v2173 = vsel %vm2138, %v2091, 0
    %v2176 = vsel %vm2138, %v2092, 0
    %v2179 = vsel %vm2138, %v2093, 0
    %v2182 = vsel %vm2138, %v2094, 0
    %v2185 = vsel %vm2138, %v2095, 0
    %v2188 = vsel %vm2138, %v2096, 0
    %v2191 = vsel %vm2138, %v2097, 0
    %v2194 = vsel %vm2138, %v2098, 0
    %v2197 = vsel %vm2138, %v2099, 0
    %v2200 = vsel %vm2138, %v2100, 0
    %v2203 = vsel %vm2138, %v2101, 0
    %v2206 = vsel %vm2138, %v2102, 0
    %v2209 = vsel %vm2138, %v2103, 0
    %v2212 = vsel %vm2138, %v2104, 0
    %v2215 = vsel %vm2138, %v2105, 0
    %v2218 = vsel %vm2138, %v2106, 0
    %v2221 = vsel %vm2138, %v2107, 0
    %v2224 = vsel %vm2138, %v2108, 0
    %v2227 = vsel %vm2138, %v2109, 0
    %v2230 = vsel %vm2138, %v2110, 0
    %v2233 = vsel %vm2138, %v2111, 0
    %v2236 = vsel %vm2138, %v2112, 0
    %v2239 = vsel %vm2138, %v2113, 0
    %v2242 = vsel %vm2138, %v2114, 0
    %v2245 = vsel %vm2138, %v2115, 0
    %v2248 = vsel %vm2138, %v2116, 0
    %v2251 = vsel %vm2138, %v2117, 0
    %v2254 = vsel %vm2138, %v2118, 0
    %v2257 = vsel %vm2138, %v2119, 0
    %v2260 = vsel %vm2138, %v2120, 0
    %v2263 = vsel %vm2138, %v2121, 0
    %v2266 = vsel %vm2138, %v2122, 0
    %v2269 = vsel %vm2138, %v2123, 0
    %v2272 = vsel %vm2138, %v2124, 0
    %v2275 = vsel %vm2138, %v2125, 0
    %v2278 = vsel %vm2138, %v2126, 0
    %v2281 = vsel %vm2138, %v2127, 0
    %v2284 = vsel %vm2138, %v2128, 0
    %v2287 = vsel %vm2138, %v2129, 0
    %2289 = vmatpush.msra.mxu0 0.0
    %2290 = vmatpush.msra.mxu0 0.0
    %2291 = vmatpush.msra.mxu0 0.0
    %2292 = vmatpush.msra.mxu0 0.0
    %2293 = vmatpush.msra.mxu0 0.0
    %2294 = vmatpush.msra.mxu0 0.0
    %2295 = vmatpush.msra.mxu0 0.0
    %2296 = vmatpush.msra.mxu0 0.0
    %2297 = vmatpush.msra.mxu0 0.0
    %2298 = vmatpush.msra.mxu0 0.0
    %2299 = vmatpush.msra.mxu0 0.0
    %2300 = vmatpush.msra.mxu0 0.0
    %2301 = vmatpush.msra.mxu0 %v2133
    %2302 = vmatpush.msra.mxu0 %v2132
    %2303 = vmatpush.msra.mxu0 %v2131
    %2304 = vmatpush.msra.mxu0 %v2130
    %2305 = vmatmul.f32.gmra.mxu0 %v2140
    %v2306 = vpop.f32.mrf.mxu0
    %v2307 = vadd.f32 %v2136, %v2306
    %2308 = vmatmul.f32.gmra.mxu0 %v2143
    %v2309 = vpop.f32.mrf.mxu0
    %v2310 = vadd.f32 %v2136, %v2309
    %2311 = vmatmul.f32.gmra.mxu0 %v2146
    %v2312 = vpop.f32.mrf.mxu0
    %v2313 = vadd.f32 %v2136, %v2312
    %2314 = vmatmul.f32.gmra.mxu0 %v2149
    %v2315 = vpop.f32.mrf.mxu0
    %v2316 = vadd.f32 %v2136, %v2315
    %2317 = vmatmul.f32.gmra.mxu0 %v2152
    %v2318 = vpop.f32.mrf.mxu0
    %v2319 = vadd.f32 %v2136, %v2318
    %2320 = vmatmul.f32.gmra.mxu0 %v2155
    %v2321 = vpop.f32.mrf.mxu0
    %v2322 = vadd.f32 %v2136, %v2321
    %2323 = vmatmul.f32.gmra.mxu0 %v2158
    %v2324 = vpop.f32.mrf.mxu0
    %v2325 = vadd.f32 %v2136, %v2324
    %2326 = vmatmul.f32.gmra.mxu0 %v2161
    %v2327 = vpop.f32.mrf.mxu0
    %v2328 = vadd.f32 %v2136, %v2327
    %2329 = vmatmul.f32.gmra.mxu0 %v2164
    %v2330 = vpop.f32.mrf.mxu0
    %v2331 = vadd.f32 %v2136, %v2330
    %2332 = vmatmul.f32.gmra.mxu0 %v2167
    %v2333 = vpop.f32.mrf.mxu0
    %v2334 = vadd.f32 %v2136, %v2333
    %2335 = vmatmul.f32.gmra.mxu0 %v2170
    %v2336 = vpop.f32.mrf.mxu0
    %v2337 = vadd.f32 %v2136, %v2336
    %2338 = vmatmul.f32.gmra.mxu0 %v2173
    %v2339 = vpop.f32.mrf.mxu0
    %v2340 = vadd.f32 %v2136, %v2339
    %2341 = vmatmul.f32.gmra.mxu0 %v2176
    %v2342 = vpop.f32.mrf.mxu0
    %v2343 = vadd.f32 %v2136, %v2342
    %2344 = vmatmul.f32.gmra.mxu0 %v2179
    %v2345 = vpop.f32.mrf.mxu0
    %v2346 = vadd.f32 %v2136, %v2345
    %2347 = vmatmul.f32.gmra.mxu0 %v2182
    %v2348 = vpop.f32.mrf.mxu0
    %v2349 = vadd.f32 %v2136, %v2348
    %2350 = vmatmul.f32.gmra.mxu0 %v2185
    %v2351 = vpop.f32.mrf.mxu0
    %v2352 = vadd.f32 %v2136, %v2351
    %2353 = vmatmul.f32.gmra.mxu0 %v2188
    %v2354 = vpop.f32.mrf.mxu0
    %v2355 = vadd.f32 %v2136, %v2354
    %2356 = vmatmul.f32.gmra.mxu0 %v2191
    %v2357 = vpop.f32.mrf.mxu0
    %v2358 = vadd.f32 %v2136, %v2357
    %2359 = vmatmul.f32.gmra.mxu0 %v2194
    %v2360 = vpop.f32.mrf.mxu0
    %v2361 = vadd.f32 %v2136, %v2360
    %2362 = vmatmul.f32.gmra.mxu0 %v2197
    %v2363 = vpop.f32.mrf.mxu0
    %v2364 = vadd.f32 %v2136, %v2363
    %2365 = vmatmul.f32.gmra.mxu0 %v2200
    %v2366 = vpop.f32.mrf.mxu0
    %v2367 = vadd.f32 %v2136, %v2366
    %2368 = vmatmul.f32.gmra.mxu0 %v2203
    %v2369 = vpop.f32.mrf.mxu0
    %v2370 = vadd.f32 %v2136, %v2369
    %2371 = vmatmul.f32.gmra.mxu0 %v2206
    %v2372 = vpop.f32.mrf.mxu0
    %v2373 = vadd.f32 %v2136, %v2372
    %2374 = vmatmul.f32.gmra.mxu0 %v2209
    %v2375 = vpop.f32.mrf.mxu0
    %v2376 = vadd.f32 %v2136, %v2375
    %2377 = vmatmul.f32.gmra.mxu0 %v2212
    %v2378 = vpop.f32.mrf.mxu0
    %v2379 = vadd.f32 %v2136, %v2378
    %2380 = vmatmul.f32.gmra.mxu0 %v2215
    %v2381 = vpop.f32.mrf.mxu0
    %v2382 = vadd.f32 %v2136, %v2381
    %2383 = vmatmul.f32.gmra.mxu0 %v2218
    %v2384 = vpop.f32.mrf.mxu0
    %v2385 = vadd.f32 %v2136, %v2384
    %2386 = vmatmul.f32.gmra.mxu0 %v2221
    %v2387 = vpop.f32.mrf.mxu0
    %v2388 = vadd.f32 %v2136, %v2387
    %2389 = vmatmul.f32.gmra.mxu0 %v2224
    %v2390 = vpop.f32.mrf.mxu0
    %v2391 = vadd.f32 %v2136, %v2390
    %2392 = vmatmul.f32.gmra.mxu0 %v2227
    %v2393 = vpop.f32.mrf.mxu0
    %v2394 = vadd.f32 %v2136, %v2393
    %2395 = vmatmul.f32.gmra.mxu0 %v2230
    %v2396 = vpop.f32.mrf.mxu0
    %v2397 = vadd.f32 %v2136, %v2396
    %2398 = vmatmul.f32.gmra.mxu0 %v2233
    %v2399 = vpop.f32.mrf.mxu0
    %v2400 = vadd.f32 %v2136, %v2399
    %2401 = vmatmul.f32.gmra.mxu0 %v2236
    %v2402 = vpop.f32.mrf.mxu0
    %v2403 = vadd.f32 %v2136, %v2402
    %2404 = vmatmul.f32.gmra.mxu0 %v2239
    %v2405 = vpop.f32.mrf.mxu0
    %v2406 = vadd.f32 %v2136, %v2405
    %2407 = vmatmul.f32.gmra.mxu0 %v2242
    %v2408 = vpop.f32.mrf.mxu0
    %v2409 = vadd.f32 %v2136, %v2408
    %2410 = vmatmul.f32.gmra.mxu0 %v2245
    %v2411 = vpop.f32.mrf.mxu0
    %v2412 = vadd.f32 %v2136, %v2411
    %2413 = vmatmul.f32.gmra.mxu0 %v2248
    %v2414 = vpop.f32.mrf.mxu0
    %v2415 = vadd.f32 %v2136, %v2414
    %2416 = vmatmul.f32.gmra.mxu0 %v2251
    %v2417 = vpop.f32.mrf.mxu0
    %v2418 = vadd.f32 %v2136, %v2417
    %2419 = vmatmul.f32.gmra.mxu0 %v2254
    %v2420 = vpop.f32.mrf.mxu0
    %v2421 = vadd.f32 %v2136, %v2420
    %2422 = vmatmul.f32.gmra.mxu0 %v2257
    %v2423 = vpop.f32.mrf.mxu0
    %v2424 = vadd.f32 %v2136, %v2423
    %2425 = vmatmul.f32.gmra.mxu0 %v2260
    %v2426 = vpop.f32.mrf.mxu0
    %v2427 = vadd.f32 %v2136, %v2426
    %2428 = vmatmul.f32.gmra.mxu0 %v2263
    %v2429 = vpop.f32.mrf.mxu0
    %v2430 = vadd.f32 %v2136, %v2429
    %2431 = vmatmul.f32.gmra.mxu0 %v2266
    %v2432 = vpop.f32.mrf.mxu0
    %v2433 = vadd.f32 %v2136, %v2432
    %2434 = vmatmul.f32.gmra.mxu0 %v2269
    %v2435 = vpop.f32.mrf.mxu0
    %v2436 = vadd.f32 %v2136, %v2435
    %2437 = vmatmul.f32.gmra.mxu0 %v2272
    %v2438 = vpop.f32.mrf.mxu0
    %v2439 = vadd.f32 %v2136, %v2438
    %2440 = vmatmul.f32.gmra.mxu0 %v2275
    %v2441 = vpop.f32.mrf.mxu0
    %v2442 = vadd.f32 %v2136, %v2441
    %2443 = vmatmul.f32.gmra.mxu0 %v2278
    %v2444 = vpop.f32.mrf.mxu0
    %v2445 = vadd.f32 %v2136, %v2444
    %2446 = vmatmul.f32.gmra.mxu0 %v2281
    %v2447 = vpop.f32.mrf.mxu0
    %v2448 = vadd.f32 %v2136, %v2447
    %2449 = vmatmul.f32.gmra.mxu0 %v2284
    %v2450 = vpop.f32.mrf.mxu0
    %v2451 = vadd.f32 %v2136, %v2450
    %2452 = vmatmul.f32.gmra.mxu0 %v2287
    %v2453 = vpop.f32.mrf.mxu0
    %v2454 = vadd.f32 %v2136, %v2453
    %2455 = vdwg.mxu0
    %vm2456 = vcmp.ge.f32.partialorder %v2307, 0.0
    %vm2457 = vcmp.ge.f32.partialorder %v2310, 0.0
    %vm2458 = vcmp.ge.f32.partialorder %v2313, 0.0
    %vm2459 = vcmp.ge.f32.partialorder %v2316, 0.0
    %vm2460 = vcmp.ge.f32.partialorder %v2319, 0.0
    %vm2461 = vcmp.ge.f32.partialorder %v2322, 0.0
    %vm2462 = vcmp.ge.f32.partialorder %v2325, 0.0
    %vm2463 = vcmp.ge.f32.partialorder %v2328, 0.0
    %vm2464 = vcmp.ge.f32.partialorder %v2331, 0.0
    %vm2465 = vcmp.ge.f32.partialorder %v2334, 0.0
    %vm2466 = vcmp.ge.f32.partialorder %v2337, 0.0
    %vm2467 = vcmp.ge.f32.partialorder %v2340, 0.0
    %vm2468 = vcmp.ge.f32.partialorder %v2343, 0.0
    %vm2469 = vcmp.ge.f32.partialorder %v2346, 0.0
    %vm2470 = vcmp.ge.f32.partialorder %v2349, 0.0
    %vm2471 = vcmp.ge.f32.partialorder %v2352, 0.0
    %vm2472 = vcmp.ge.f32.partialorder %v2355, 0.0
    %vm2473 = vcmp.ge.f32.partialorder %v2358, 0.0
    %vm2474 = vcmp.ge.f32.partialorder %v2361, 0.0
    %vm2475 = vcmp.ge.f32.partialorder %v2364, 0.0
    %vm2476 = vcmp.ge.f32.partialorder %v2367, 0.0
    %vm2477 = vcmp.ge.f32.partialorder %v2370, 0.0
    %vm2478 = vcmp.ge.f32.partialorder %v2373, 0.0
    %vm2479 = vcmp.ge.f32.partialorder %v2376, 0.0
    %vm2480 = vcmp.ge.f32.partialorder %v2379, 0.0
    %vm2481 = vcmp.ge.f32.partialorder %v2382, 0.0
    %vm2482 = vcmp.ge.f32.partialorder %v2385, 0.0
    %vm2483 = vcmp.ge.f32.partialorder %v2388, 0.0
    %vm2484 = vcmp.ge.f32.partialorder %v2391, 0.0
    %vm2485 = vcmp.ge.f32.partialorder %v2394, 0.0
    %vm2486 = vcmp.ge.f32.partialorder %v2397, 0.0
    %vm2487 = vcmp.ge.f32.partialorder %v2400, 0.0
    %vm2488 = vcmp.ge.f32.partialorder %v2403, 0.0
    %vm2489 = vcmp.ge.f32.partialorder %v2406, 0.0
    %vm2490 = vcmp.ge.f32.partialorder %v2409, 0.0
    %vm2491 = vcmp.ge.f32.partialorder %v2412, 0.0
    %vm2492 = vcmp.ge.f32.partialorder %v2415, 0.0
    %vm2493 = vcmp.ge.f32.partialorder %v2418, 0.0
    %vm2494 = vcmp.ge.f32.partialorder %v2421, 0.0
    %vm2495 = vcmp.ge.f32.partialorder %v2424, 0.0
    %vm2496 = vcmp.ge.f32.partialorder %v2427, 0.0
    %vm2497 = vcmp.ge.f32.partialorder %v2430, 0.0
    %vm2498 = vcmp.ge.f32.partialorder %v2433, 0.0
    %vm2499 = vcmp.ge.f32.partialorder %v2436, 0.0
    %vm2500 = vcmp.ge.f32.partialorder %v2439, 0.0
    %vm2501 = vcmp.ge.f32.partialorder %v2442, 0.0
    %vm2502 = vcmp.ge.f32.partialorder %v2445, 0.0
    %vm2503 = vcmp.ge.f32.partialorder %v2448, 0.0
    %vm2504 = vcmp.ge.f32.partialorder %v2451, 0.0
    %vm2505 = vcmp.ge.f32.partialorder %v2454, 0.0
    %v2506 = vmul.f32 %v2307, 0.01
    %v2507 = vmul.f32 %v2310, 0.01
    %v2508 = vmul.f32 %v2313, 0.01
    %v2509 = vmul.f32 %v2316, 0.01
    %v2510 = vmul.f32 %v2319, 0.01
    %v2511 = vmul.f32 %v2322, 0.01
    %v2512 = vmul.f32 %v2325, 0.01
    %v2513 = vmul.f32 %v2328, 0.01
    %v2514 = vmul.f32 %v2331, 0.01
    %v2515 = vmul.f32 %v2334, 0.01
    %v2516 = vmul.f32 %v2337, 0.01
    %v2517 = vmul.f32 %v2340, 0.01
    %v2518 = vmul.f32 %v2343, 0.01
    %v2519 = vmul.f32 %v2346, 0.01
    %v2520 = vmul.f32 %v2349, 0.01
    %v2521 = vmul.f32 %v2352, 0.01
    %v2522 = vmul.f32 %v2355, 0.01
    %v2523 = vmul.f32 %v2358, 0.01
    %v2524 = vmul.f32 %v2361, 0.01
    %v2525 = vmul.f32 %v2364, 0.01
    %v2526 = vmul.f32 %v2367, 0.01
    %v2527 = vmul.f32 %v2370, 0.01
    %v2528 = vmul.f32 %v2373, 0.01
    %v2529 = vmul.f32 %v2376, 0.01
    %v2530 = vmul.f32 %v2379, 0.01
    %v2531 = vmul.f32 %v2382, 0.01
    %v2532 = vmul.f32 %v2385, 0.01
    %v2533 = vmul.f32 %v2388, 0.01
    %v2534 = vmul.f32 %v2391, 0.01
    %v2535 = vmul.f32 %v2394, 0.01
    %v2536 = vmul.f32 %v2397, 0.01
    %v2537 = vmul.f32 %v2400, 0.01
    %v2538 = vmul.f32 %v2403, 0.01
    %v2539 = vmul.f32 %v2406, 0.01
    %v2540 = vmul.f32 %v2409, 0.01
    %v2541 = vmul.f32 %v2412, 0.01
    %v2542 = vmul.f32 %v2415, 0.01
    %v2543 = vmul.f32 %v2418, 0.01
    %v2544 = vmul.f32 %v2421, 0.01
    %v2545 = vmul.f32 %v2424, 0.01
    %v2546 = vmul.f32 %v2427, 0.01
    %v2547 = vmul.f32 %v2430, 0.01
    %v2548 = vmul.f32 %v2433, 0.01
    %v2549 = vmul.f32 %v2436, 0.01
    %v2550 = vmul.f32 %v2439, 0.01
    %v2551 = vmul.f32 %v2442, 0.01
    %v2552 = vmul.f32 %v2445, 0.01
    %v2553 = vmul.f32 %v2448, 0.01
    %v2554 = vmul.f32 %v2451, 0.01
    %v2555 = vmul.f32 %v2454, 0.01
    %v2556 = vsel %vm2456, %v2307, %v2506
    %v2557 = vsel %vm2457, %v2310, %v2507
    %v2558 = vsel %vm2458, %v2313, %v2508
    %v2559 = vsel %vm2459, %v2316, %v2509
    %v2560 = vsel %vm2460, %v2319, %v2510
    %v2561 = vsel %vm2461, %v2322, %v2511
    %v2562 = vsel %vm2462, %v2325, %v2512
    %v2563 = vsel %vm2463, %v2328, %v2513
    %v2564 = vsel %vm2464, %v2331, %v2514
    %v2565 = vsel %vm2465, %v2334, %v2515
    %v2566 = vsel %vm2466, %v2337, %v2516
    %v2567 = vsel %vm2467, %v2340, %v2517
    %v2568 = vsel %vm2468, %v2343, %v2518
    %v2569 = vsel %vm2469, %v2346, %v2519
    %v2570 = vsel %vm2470, %v2349, %v2520
    %v2571 = vsel %vm2471, %v2352, %v2521
    %v2572 = vsel %vm2472, %v2355, %v2522
    %v2573 = vsel %vm2473, %v2358, %v2523
    %v2574 = vsel %vm2474, %v2361, %v2524
    %v2575 = vsel %vm2475, %v2364, %v2525
    %v2576 = vsel %vm2476, %v2367, %v2526
    %v2577 = vsel %vm2477, %v2370, %v2527
    %v2578 = vsel %vm2478, %v2373, %v2528
    %v2579 = vsel %vm2479, %v2376, %v2529
    %v2580 = vsel %vm2480, %v2379, %v2530
    %v2581 = vsel %vm2481, %v2382, %v2531
    %v2582 = vsel %vm2482, %v2385, %v2532
    %v2583 = vsel %vm2483, %v2388, %v2533
    %v2584 = vsel %vm2484, %v2391, %v2534
    %v2585 = vsel %vm2485, %v2394, %v2535
    %v2586 = vsel %vm2486, %v2397, %v2536
    %v2587 = vsel %vm2487, %v2400, %v2537
    %v2588 = vsel %vm2488, %v2403, %v2538
    %v2589 = vsel %vm2489, %v2406, %v2539
    %v2590 = vsel %vm2490, %v2409, %v2540
    %v2591 = vsel %vm2491, %v2412, %v2541
    %v2592 = vsel %vm2492, %v2415, %v2542
    %v2593 = vsel %vm2493, %v2418, %v2543
    %v2594 = vsel %vm2494, %v2421, %v2544
    %v2595 = vsel %vm2495, %v2424, %v2545
    %v2596 = vsel %vm2496, %v2427, %v2546
    %v2597 = vsel %vm2497, %v2430, %v2547
    %v2598 = vsel %vm2498, %v2433, %v2548
    %v2599 = vsel %vm2499, %v2436, %v2549
    %v2600 = vsel %vm2500, %v2439, %v2550
    %v2601 = vsel %vm2501, %v2442, %v2551
    %v2602 = vsel %vm2502, %v2445, %v2552
    %v2603 = vsel %vm2503, %v2448, %v2553
    %v2604 = vsel %vm2504, %v2451, %v2554
    %v2605 = vsel %vm2505, %v2454, %v2555
    %v2606 = vld [vmem:[%s5] sm:$0xff]
    %v2607 = vld [vmem:[%s5 + $0x8] sm:$0xff]
    %v2608 = vld [vmem:[%s5 + $0x10] sm:$0xff]
    %v2609 = vld [vmem:[%s5 + $0x18] sm:$0xff]
    %v2610 = vld [vmem:[%s6] sm:$0x1]
    %v2612 = vperm.slane %v2610, 0
    %v2615 = vsel %vm2138, %v2556, 0
    %v2618 = vsel %vm2138, %v2557, 0
    %v2621 = vsel %vm2138, %v2558, 0
    %v2624 = vsel %vm2138, %v2559, 0
    %v2627 = vsel %vm2138, %v2560, 0
    %v2630 = vsel %vm2138, %v2561, 0
    %v2633 = vsel %vm2138, %v2562, 0
    %v2636 = vsel %vm2138, %v2563, 0
    %v2639 = vsel %vm2138, %v2564, 0
    %v2642 = vsel %vm2138, %v2565, 0
    %v2645 = vsel %vm2138, %v2566, 0
    %v2648 = vsel %vm2138, %v2567, 0
    %v2651 = vsel %vm2138, %v2568, 0
    %v2654 = vsel %vm2138, %v2569, 0
    %v2657 = vsel %vm2138, %v2570, 0
    %v2660 = vsel %vm2138, %v2571, 0
    %v2663 = vsel %vm2138, %v2572, 0
    %v2666 = vsel %vm2138, %v2573, 0
    %v2669 = vsel %vm2138, %v2574, 0
    %v2672 = vsel %vm2138, %v2575, 0
    %v2675 = vsel %vm2138, %v2576, 0
    %v2678 = vsel %vm2138, %v2577, 0
    %v2681 = vsel %vm2138, %v2578, 0
    %v2684 = vsel %vm2138, %v2579, 0
    %v2687 = vsel %vm2138, %v2580, 0
    %v2690 = vsel %vm2138, %v2581, 0
    %v2693 = vsel %vm2138, %v2582, 0
    %v2696 = vsel %vm2138, %v2583, 0
    %v2699 = vsel %vm2138, %v2584, 0
    %v2702 = vsel %vm2138, %v2585, 0
    %v2705 = vsel %vm2138, %v2586, 0
    %v2708 = vsel %vm2138, %v2587, 0
    %v2711 = vsel %vm2138, %v2588, 0
    %v2714 = vsel %vm2138, %v2589, 0
    %v2717 = vsel %vm2138, %v2590, 0
    %v2720 = vsel %vm2138, %v2591, 0
    %v2723 = vsel %vm2138, %v2592, 0
    %v2726 = vsel %vm2138, %v2593, 0
    %v2729 = vsel %vm2138, %v2594, 0
    %v2732 = vsel %vm2138, %v2595, 0
    %v2735 = vsel %vm2138, %v2596, 0
    %v2738 = vsel %vm2138, %v2597, 0
    %v2741 = vsel %vm2138, %v2598, 0
    %v2744 = vsel %vm2138, %v2599, 0
    %v2747 = vsel %vm2138, %v2600, 0
    %v2750 = vsel %vm2138, %v2601, 0
    %v2753 = vsel %vm2138, %v2602, 0
    %v2756 = vsel %vm2138, %v2603, 0
    %v2759 = vsel %vm2138, %v2604, 0
    %v2762 = vsel %vm2138, %v2605, 0
    %2764 = vmatpush.msra.mxu0 0.0
    %2765 = vmatpush.msra.mxu0 0.0
    %2766 = vmatpush.msra.mxu0 0.0
    %2767 = vmatpush.msra.mxu0 0.0
    %2768 = vmatpush.msra.mxu0 0.0
    %2769 = vmatpush.msra.mxu0 0.0
    %2770 = vmatpush.msra.mxu0 0.0
    %2771 = vmatpush.msra.mxu0 0.0
    %2772 = vmatpush.msra.mxu0 0.0
    %2773 = vmatpush.msra.mxu0 0.0
    %2774 = vmatpush.msra.mxu0 0.0
    %2775 = vmatpush.msra.mxu0 0.0
    %2776 = vmatpush.msra.mxu0 %v2609
    %2777 = vmatpush.msra.mxu0 %v2608
    %2778 = vmatpush.msra.mxu0 %v2607
    %2779 = vmatpush.msra.mxu0 %v2606
    %2780 = vmatmul.f32.gmra.mxu0 %v2615
    %v2781 = vpop.f32.mrf.mxu0
    %v2782 = vadd.f32 %v2612, %v2781
    %2783 = vmatmul.f32.gmra.mxu0 %v2618
    %v2784 = vpop.f32.mrf.mxu0
    %v2785 = vadd.f32 %v2612, %v2784
    %2786 = vmatmul.f32.gmra.mxu0 %v2621
    %v2787 = vpop.f32.mrf.mxu0
    %v2788 = vadd.f32 %v2612, %v2787
    %2789 = vmatmul.f32.gmra.mxu0 %v2624
    %v2790 = vpop.f32.mrf.mxu0
    %v2791 = vadd.f32 %v2612, %v2790
    %2792 = vmatmul.f32.gmra.mxu0 %v2627
    %v2793 = vpop.f32.mrf.mxu0
    %v2794 = vadd.f32 %v2612, %v2793
    %2795 = vmatmul.f32.gmra.mxu0 %v2630
    %v2796 = vpop.f32.mrf.mxu0
    %v2797 = vadd.f32 %v2612, %v2796
    %2798 = vmatmul.f32.gmra.mxu0 %v2633
    %v2799 = vpop.f32.mrf.mxu0
    %v2800 = vadd.f32 %v2612, %v2799
    %2801 = vmatmul.f32.gmra.mxu0 %v2636
    %v2802 = vpop.f32.mrf.mxu0
    %v2803 = vadd.f32 %v2612, %v2802
    %2804 = vmatmul.f32.gmra.mxu0 %v2639
    %v2805 = vpop.f32.mrf.mxu0
    %v2806 = vadd.f32 %v2612, %v2805
    %2807 = vmatmul.f32.gmra.mxu0 %v2642
    %v2808 = vpop.f32.mrf.mxu0
    %v2809 = vadd.f32 %v2612, %v2808
    %2810 = vmatmul.f32.gmra.mxu0 %v2645
    %v2811 = vpop.f32.mrf.mxu0
    %v2812 = vadd.f32 %v2612, %v2811
    %2813 = vmatmul.f32.gmra.mxu0 %v2648
    %v2814 = vpop.f32.mrf.mxu0
    %v2815 = vadd.f32 %v2612, %v2814
    %2816 = vmatmul.f32.gmra.mxu0 %v2651
    %v2817 = vpop.f32.mrf.mxu0
    %v2818 = vadd.f32 %v2612, %v2817
    %2819 = vmatmul.f32.gmra.mxu0 %v2654
    %v2820 = vpop.f32.mrf.mxu0
    %v2821 = vadd.f32 %v2612, %v2820
    %2822 = vmatmul.f32.gmra.mxu0 %v2657
    %v2823 = vpop.f32.mrf.mxu0
    %v2824 = vadd.f32 %v2612, %v2823
    %2825 = vmatmul.f32.gmra.mxu0 %v2660
    %v2826 = vpop.f32.mrf.mxu0
    %v2827 = vadd.f32 %v2612, %v2826
    %2828 = vmatmul.f32.gmra.mxu0 %v2663
    %v2829 = vpop.f32.mrf.mxu0
    %v2830 = vadd.f32 %v2612, %v2829
    %2831 = vmatmul.f32.gmra.mxu0 %v2666
    %v2832 = vpop.f32.mrf.mxu0
    %v2833 = vadd.f32 %v2612, %v2832
    %2834 = vmatmul.f32.gmra.mxu0 %v2669
    %v2835 = vpop.f32.mrf.mxu0
    %v2836 = vadd.f32 %v2612, %v2835
    %2837 = vmatmul.f32.gmra.mxu0 %v2672
    %v2838 = vpop.f32.mrf.mxu0
    %v2839 = vadd.f32 %v2612, %v2838
    %2840 = vmatmul.f32.gmra.mxu0 %v2675
    %v2841 = vpop.f32.mrf.mxu0
    %v2842 = vadd.f32 %v2612, %v2841
    %2843 = vmatmul.f32.gmra.mxu0 %v2678
    %v2844 = vpop.f32.mrf.mxu0
    %v2845 = vadd.f32 %v2612, %v2844
    %2846 = vmatmul.f32.gmra.mxu0 %v2681
    %v2847 = vpop.f32.mrf.mxu0
    %v2848 = vadd.f32 %v2612, %v2847
    %2849 = vmatmul.f32.gmra.mxu0 %v2684
    %v2850 = vpop.f32.mrf.mxu0
    %v2851 = vadd.f32 %v2612, %v2850
    %2852 = vmatmul.f32.gmra.mxu0 %v2687
    %v2853 = vpop.f32.mrf.mxu0
    %v2854 = vadd.f32 %v2612, %v2853
    %2855 = vmatmul.f32.gmra.mxu0 %v2690
    %v2856 = vpop.f32.mrf.mxu0
    %v2857 = vadd.f32 %v2612, %v2856
    %2858 = vmatmul.f32.gmra.mxu0 %v2693
    %v2859 = vpop.f32.mrf.mxu0
    %v2860 = vadd.f32 %v2612, %v2859
    %2861 = vmatmul.f32.gmra.mxu0 %v2696
    %v2862 = vpop.f32.mrf.mxu0
    %v2863 = vadd.f32 %v2612, %v2862
    %2864 = vmatmul.f32.gmra.mxu0 %v2699
    %v2865 = vpop.f32.mrf.mxu0
    %v2866 = vadd.f32 %v2612, %v2865
    %2867 = vmatmul.f32.gmra.mxu0 %v2702
    %v2868 = vpop.f32.mrf.mxu0
    %v2869 = vadd.f32 %v2612, %v2868
    %2870 = vmatmul.f32.gmra.mxu0 %v2705
    %v2871 = vpop.f32.mrf.mxu0
    %v2872 = vadd.f32 %v2612, %v2871
    %2873 = vmatmul.f32.gmra.mxu0 %v2708
    %v2874 = vpop.f32.mrf.mxu0
    %v2875 = vadd.f32 %v2612, %v2874
    %2876 = vmatmul.f32.gmra.mxu0 %v2711
    %v2877 = vpop.f32.mrf.mxu0
    %v2878 = vadd.f32 %v2612, %v2877
    %2879 = vmatmul.f32.gmra.mxu0 %v2714
    %v2880 = vpop.f32.mrf.mxu0
    %v2881 = vadd.f32 %v2612, %v2880
    %2882 = vmatmul.f32.gmra.mxu0 %v2717
    %v2883 = vpop.f32.mrf.mxu0
    %v2884 = vadd.f32 %v2612, %v2883
    %2885 = vmatmul.f32.gmra.mxu0 %v2720
    %v2886 = vpop.f32.mrf.mxu0
    %v2887 = vadd.f32 %v2612, %v2886
    %2888 = vmatmul.f32.gmra.mxu0 %v2723
    %v2889 = vpop.f32.mrf.mxu0
    %v2890 = vadd.f32 %v2612, %v2889
    %2891 = vmatmul.f32.gmra.mxu0 %v2726
    %v2892 = vpop.f32.mrf.mxu0
    %v2893 = vadd.f32 %v2612, %v2892
    %2894 = vmatmul.f32.gmra.mxu0 %v2729
    %v2895 = vpop.f32.mrf.mxu0
    %v2896 = vadd.f32 %v2612, %v2895
    %2897 = vmatmul.f32.gmra.mxu0 %v2732
    %v2898 = vpop.f32.mrf.mxu0
    %v2899 = vadd.f32 %v2612, %v2898
    %2900 = vmatmul.f32.gmra.mxu0 %v2735
    %v2901 = vpop.f32.mrf.mxu0
    %v2902 = vadd.f32 %v2612, %v2901
    %2903 = vmatmul.f32.gmra.mxu0 %v2738
    %v2904 = vpop.f32.mrf.mxu0
    %v2905 = vadd.f32 %v2612, %v2904
    %2906 = vmatmul.f32.gmra.mxu0 %v2741
    %v2907 = vpop.f32.mrf.mxu0
    %v2908 = vadd.f32 %v2612, %v2907
    %2909 = vmatmul.f32.gmra.mxu0 %v2744
    %v2910 = vpop.f32.mrf.mxu0
    %v2911 = vadd.f32 %v2612, %v2910
    %2912 = vmatmul.f32.gmra.mxu0 %v2747
    %v2913 = vpop.f32.mrf.mxu0
    %v2914 = vadd.f32 %v2612, %v2913
    %2915 = vmatmul.f32.gmra.mxu0 %v2750
    %v2916 = vpop.f32.mrf.mxu0
    %v2917 = vadd.f32 %v2612, %v2916
    %2918 = vmatmul.f32.gmra.mxu0 %v2753
    %v2919 = vpop.f32.mrf.mxu0
    %v2920 = vadd.f32 %v2612, %v2919
    %2921 = vmatmul.f32.gmra.mxu0 %v2756
    %v2922 = vpop.f32.mrf.mxu0
    %v2923 = vadd.f32 %v2612, %v2922
    %2924 = vmatmul.f32.gmra.mxu0 %v2759
    %v2925 = vpop.f32.mrf.mxu0
    %v2926 = vadd.f32 %v2612, %v2925
    %2927 = vmatmul.f32.gmra.mxu0 %v2762
    %v2928 = vpop.f32.mrf.mxu0
    %v2929 = vadd.f32 %v2612, %v2928
    %2930 = vdwg.mxu0
    %vm2931 = vcmp.ge.f32.partialorder %v2782, 0.0
    %vm2932 = vcmp.ge.f32.partialorder %v2785, 0.0
    %vm2933 = vcmp.ge.f32.partialorder %v2788, 0.0
    %vm2934 = vcmp.ge.f32.partialorder %v2791, 0.0
    %vm2935 = vcmp.ge.f32.partialorder %v2794, 0.0
    %vm2936 = vcmp.ge.f32.partialorder %v2797, 0.0
    %vm2937 = vcmp.ge.f32.partialorder %v2800, 0.0
    %vm2938 = vcmp.ge.f32.partialorder %v2803, 0.0
    %vm2939 = vcmp.ge.f32.partialorder %v2806, 0.0
    %vm2940 = vcmp.ge.f32.partialorder %v2809, 0.0
    %vm2941 = vcmp.ge.f32.partialorder %v2812, 0.0
    %vm2942 = vcmp.ge.f32.partialorder %v2815, 0.0
    %vm2943 = vcmp.ge.f32.partialorder %v2818, 0.0
    %vm2944 = vcmp.ge.f32.partialorder %v2821, 0.0
    %vm2945 = vcmp.ge.f32.partialorder %v2824, 0.0
    %vm2946 = vcmp.ge.f32.partialorder %v2827, 0.0
    %vm2947 = vcmp.ge.f32.partialorder %v2830, 0.0
    %vm2948 = vcmp.ge.f32.partialorder %v2833, 0.0
    %vm2949 = vcmp.ge.f32.partialorder %v2836, 0.0
    %vm2950 = vcmp.ge.f32.partialorder %v2839, 0.0
    %vm2951 = vcmp.ge.f32.partialorder %v2842, 0.0
    %vm2952 = vcmp.ge.f32.partialorder %v2845, 0.0
    %vm2953 = vcmp.ge.f32.partialorder %v2848, 0.0
    %vm2954 = vcmp.ge.f32.partialorder %v2851, 0.0
    %vm2955 = vcmp.ge.f32.partialorder %v2854, 0.0
    %vm2956 = vcmp.ge.f32.partialorder %v2857, 0.0
    %vm2957 = vcmp.ge.f32.partialorder %v2860, 0.0
    %vm2958 = vcmp.ge.f32.partialorder %v2863, 0.0
    %vm2959 = vcmp.ge.f32.partialorder %v2866, 0.0
    %vm2960 = vcmp.ge.f32.partialorder %v2869, 0.0
    %vm2961 = vcmp.ge.f32.partialorder %v2872, 0.0
    %vm2962 = vcmp.ge.f32.partialorder %v2875, 0.0
    %vm2963 = vcmp.ge.f32.partialorder %v2878, 0.0
    %vm2964 = vcmp.ge.f32.partialorder %v2881, 0.0
    %vm2965 = vcmp.ge.f32.partialorder %v2884, 0.0
    %vm2966 = vcmp.ge.f32.partialorder %v2887, 0.0
    %vm2967 = vcmp.ge.f32.partialorder %v2890, 0.0
    %vm2968 = vcmp.ge.f32.partialorder %v2893, 0.0
    %vm2969 = vcmp.ge.f32.partialorder %v2896, 0.0
    %vm2970 = vcmp.ge.f32.partialorder %v2899, 0.0
    %vm2971 = vcmp.ge.f32.partialorder %v2902, 0.0
    %vm2972 = vcmp.ge.f32.partialorder %v2905, 0.0
    %vm2973 = vcmp.ge.f32.partialorder %v2908, 0.0
    %vm2974 = vcmp.ge.f32.partialorder %v2911, 0.0
    %vm2975 = vcmp.ge.f32.partialorder %v2914, 0.0
    %vm2976 = vcmp.ge.f32.partialorder %v2917, 0.0
    %vm2977 = vcmp.ge.f32.partialorder %v2920, 0.0
    %vm2978 = vcmp.ge.f32.partialorder %v2923, 0.0
    %vm2979 = vcmp.ge.f32.partialorder %v2926, 0.0
    %vm2980 = vcmp.ge.f32.partialorder %v2929, 0.0
    %v2981 = vmul.f32 %v2782, 0.01
    %v2982 = vmul.f32 %v2785, 0.01
    %v2983 = vmul.f32 %v2788, 0.01
    %v2984 = vmul.f32 %v2791, 0.01
    %v2985 = vmul.f32 %v2794, 0.01
    %v2986 = vmul.f32 %v2797, 0.01
    %v2987 = vmul.f32 %v2800, 0.01
    %v2988 = vmul.f32 %v2803, 0.01
    %v2989 = vmul.f32 %v2806, 0.01
    %v2990 = vmul.f32 %v2809, 0.01
    %v2991 = vmul.f32 %v2812, 0.01
    %v2992 = vmul.f32 %v2815, 0.01
    %v2993 = vmul.f32 %v2818, 0.01
    %v2994 = vmul.f32 %v2821, 0.01
    %v2995 = vmul.f32 %v2824, 0.01
    %v2996 = vmul.f32 %v2827, 0.01
    %v2997 = vmul.f32 %v2830, 0.01
    %v2998 = vmul.f32 %v2833, 0.01
    %v2999 = vmul.f32 %v2836, 0.01
    %v3000 = vmul.f32 %v2839, 0.01
    %v3001 = vmul.f32 %v2842, 0.01
    %v3002 = vmul.f32 %v2845, 0.01
    %v3003 = vmul.f32 %v2848, 0.01
    %v3004 = vmul.f32 %v2851, 0.01
    %v3005 = vmul.f32 %v2854, 0.01
    %v3006 = vmul.f32 %v2857, 0.01
    %v3007 = vmul.f32 %v2860, 0.01
    %v3008 = vmul.f32 %v2863, 0.01
    %v3009 = vmul.f32 %v2866, 0.01
    %v3010 = vmul.f32 %v2869, 0.01
    %v3011 = vmul.f32 %v2872, 0.01
    %v3012 = vmul.f32 %v2875, 0.01
    %v3013 = vmul.f32 %v2878, 0.01
    %v3014 = vmul.f32 %v2881, 0.01
    %v3015 = vmul.f32 %v2884, 0.01
    %v3016 = vmul.f32 %v2887, 0.01
    %v3017 = vmul.f32 %v2890, 0.01
    %v3018 = vmul.f32 %v2893, 0.01
    %v3019 = vmul.f32 %v2896, 0.01
    %v3020 = vmul.f32 %v2899, 0.01
    %v3021 = vmul.f32 %v2902, 0.01
    %v3022 = vmul.f32 %v2905, 0.01
    %v3023 = vmul.f32 %v2908, 0.01
    %v3024 = vmul.f32 %v2911, 0.01
    %v3025 = vmul.f32 %v2914, 0.01
    %v3026 = vmul.f32 %v2917, 0.01
    %v3027 = vmul.f32 %v2920, 0.01
    %v3028 = vmul.f32 %v2923, 0.01
    %v3029 = vmul.f32 %v2926, 0.01
    %v3030 = vmul.f32 %v2929, 0.01
    %v3031 = vsel %vm2931, %v2782, %v2981
    %v3032 = vsel %vm2932, %v2785, %v2982
    %v3033 = vsel %vm2933, %v2788, %v2983
    %v3034 = vsel %vm2934, %v2791, %v2984
    %v3035 = vsel %vm2935, %v2794, %v2985
    %v3036 = vsel %vm2936, %v2797, %v2986
    %v3037 = vsel %vm2937, %v2800, %v2987
    %v3038 = vsel %vm2938, %v2803, %v2988
    %v3039 = vsel %vm2939, %v2806, %v2989
    %v3040 = vsel %vm2940, %v2809, %v2990
    %v3041 = vsel %vm2941, %v2812, %v2991
    %v3042 = vsel %vm2942, %v2815, %v2992
    %v3043 = vsel %vm2943, %v2818, %v2993
    %v3044 = vsel %vm2944, %v2821, %v2994
    %v3045 = vsel %vm2945, %v2824, %v2995
    %v3046 = vsel %vm2946, %v2827, %v2996
    %v3047 = vsel %vm2947, %v2830, %v2997
    %v3048 = vsel %vm2948, %v2833, %v2998
    %v3049 = vsel %vm2949, %v2836, %v2999
    %v3050 = vsel %vm2950, %v2839, %v3000
    %v3051 = vsel %vm2951, %v2842, %v3001
    %v3052 = vsel %vm2952, %v2845, %v3002
    %v3053 = vsel %vm2953, %v2848, %v3003
    %v3054 = vsel %vm2954, %v2851, %v3004
    %v3055 = vsel %vm2955, %v2854, %v3005
    %v3056 = vsel %vm2956, %v2857, %v3006
    %v3057 = vsel %vm2957, %v2860, %v3007
    %v3058 = vsel %vm2958, %v2863, %v3008
    %v3059 = vsel %vm2959, %v2866, %v3009
    %v3060 = vsel %vm2960, %v2869, %v3010
    %v3061 = vsel %vm2961, %v2872, %v3011
    %v3062 = vsel %vm2962, %v2875, %v3012
    %v3063 = vsel %vm2963, %v2878, %v3013
    %v3064 = vsel %vm2964, %v2881, %v3014
    %v3065 = vsel %vm2965, %v2884, %v3015
    %v3066 = vsel %vm2966, %v2887, %v3016
    %v3067 = vsel %vm2967, %v2890, %v3017
    %v3068 = vsel %vm2968, %v2893, %v3018
    %v3069 = vsel %vm2969, %v2896, %v3019
    %v3070 = vsel %vm2970, %v2899, %v3020
    %v3071 = vsel %vm2971, %v2902, %v3021
    %v3072 = vsel %vm2972, %v2905, %v3022
    %v3073 = vsel %vm2973, %v2908, %v3023
    %v3074 = vsel %vm2974, %v2911, %v3024
    %v3075 = vsel %vm2975, %v2914, %v3025
    %v3076 = vsel %vm2976, %v2917, %v3026
    %v3077 = vsel %vm2977, %v2920, %v3027
    %v3078 = vsel %vm2978, %v2923, %v3028
    %v3079 = vsel %vm2979, %v2926, %v3029
    %v3080 = vsel %vm2980, %v2929, %v3030
    %v3081 = vld [vmem:[%s7] sm:$0xff]
    %v3082 = vld [vmem:[%s7 + $0x8] sm:$0xff]
    %v3083 = vld [vmem:[%s8] sm:$0x1]
    %v3085 = vperm.slane %v3083, 0
    %vm3087 = vcmask 130048
    %v3089 = vsel %vm3087, %v3031, 0
    %v3092 = vsel %vm3087, %v3032, 0
    %v3095 = vsel %vm3087, %v3033, 0
    %v3098 = vsel %vm3087, %v3034, 0
    %v3101 = vsel %vm3087, %v3035, 0
    %v3104 = vsel %vm3087, %v3036, 0
    %v3107 = vsel %vm3087, %v3037, 0
    %v3110 = vsel %vm3087, %v3038, 0
    %v3113 = vsel %vm3087, %v3039, 0
    %v3116 = vsel %vm3087, %v3040, 0
    %v3119 = vsel %vm3087, %v3041, 0
    %v3122 = vsel %vm3087, %v3042, 0
    %v3125 = vsel %vm3087, %v3043, 0
    %v3128 = vsel %vm3087, %v3044, 0
    %v3131 = vsel %vm3087, %v3045, 0
    %v3134 = vsel %vm3087, %v3046, 0
    %v3137 = vsel %vm3087, %v3047, 0
    %v3140 = vsel %vm3087, %v3048, 0
    %v3143 = vsel %vm3087, %v3049, 0
    %v3146 = vsel %vm3087, %v3050, 0
    %v3149 = vsel %vm3087, %v3051, 0
    %v3152 = vsel %vm3087, %v3052, 0
    %v3155 = vsel %vm3087, %v3053, 0
    %v3158 = vsel %vm3087, %v3054, 0
    %v3161 = vsel %vm3087, %v3055, 0
    %v3164 = vsel %vm3087, %v3056, 0
    %v3167 = vsel %vm3087, %v3057, 0
    %v3170 = vsel %vm3087, %v3058, 0
    %v3173 = vsel %vm3087, %v3059, 0
    %v3176 = vsel %vm3087, %v3060, 0
    %v3179 = vsel %vm3087, %v3061, 0
    %v3182 = vsel %vm3087, %v3062, 0
    %v3185 = vsel %vm3087, %v3063, 0
    %v3188 = vsel %vm3087, %v3064, 0
    %v3191 = vsel %vm3087, %v3065, 0
    %v3194 = vsel %vm3087, %v3066, 0
    %v3197 = vsel %vm3087, %v3067, 0
    %v3200 = vsel %vm3087, %v3068, 0
    %v3203 = vsel %vm3087, %v3069, 0
    %v3206 = vsel %vm3087, %v3070, 0
    %v3209 = vsel %vm3087, %v3071, 0
    %v3212 = vsel %vm3087, %v3072, 0
    %v3215 = vsel %vm3087, %v3073, 0
    %v3218 = vsel %vm3087, %v3074, 0
    %v3221 = vsel %vm3087, %v3075, 0
    %v3224 = vsel %vm3087, %v3076, 0
    %v3227 = vsel %vm3087, %v3077, 0
    %v3230 = vsel %vm3087, %v3078, 0
    %v3233 = vsel %vm3087, %v3079, 0
    %v3236 = vsel %vm3087, %v3080, 0
    %3238 = vmatpush.msra.mxu0 0.0
    %3239 = vmatpush.msra.mxu0 0.0
    %3240 = vmatpush.msra.mxu0 0.0
    %3241 = vmatpush.msra.mxu0 0.0
    %3242 = vmatpush.msra.mxu0 0.0
    %3243 = vmatpush.msra.mxu0 0.0
    %3244 = vmatpush.msra.mxu0 0.0
    %3245 = vmatpush.msra.mxu0 0.0
    %3246 = vmatpush.msra.mxu0 0.0
    %3247 = vmatpush.msra.mxu0 0.0
    %3248 = vmatpush.msra.mxu0 0.0
    %3249 = vmatpush.msra.mxu0 0.0
    %3250 = vmatpush.msra.mxu0 0.0
    %3251 = vmatpush.msra.mxu0 0.0
    %3252 = vmatpush.msra.mxu0 %v3082
    %3253 = vmatpush.msra.mxu0 %v3081
    %3254 = vmatmul.f32.gmra.mxu0 %v3089
    %v3255 = vpop.f32.mrf.mxu0
    %v3256 = vadd.f32 %v3085, %v3255
    %3257 = vmatmul.f32.gmra.mxu0 %v3092
    %v3258 = vpop.f32.mrf.mxu0
    %v3259 = vadd.f32 %v3085, %v3258
    %3260 = vmatmul.f32.gmra.mxu0 %v3095
    %v3261 = vpop.f32.mrf.mxu0
    %v3262 = vadd.f32 %v3085, %v3261
    %3263 = vmatmul.f32.gmra.mxu0 %v3098
    %v3264 = vpop.f32.mrf.mxu0
    %v3265 = vadd.f32 %v3085, %v3264
    %3266 = vmatmul.f32.gmra.mxu0 %v3101
    %v3267 = vpop.f32.mrf.mxu0
    %v3268 = vadd.f32 %v3085, %v3267
    %3269 = vmatmul.f32.gmra.mxu0 %v3104
    %v3270 = vpop.f32.mrf.mxu0
    %v3271 = vadd.f32 %v3085, %v3270
    %3272 = vmatmul.f32.gmra.mxu0 %v3107
    %v3273 = vpop.f32.mrf.mxu0
    %v3274 = vadd.f32 %v3085, %v3273
    %3275 = vmatmul.f32.gmra.mxu0 %v3110
    %v3276 = vpop.f32.mrf.mxu0
    %v3277 = vadd.f32 %v3085, %v3276
    %3278 = vmatmul.f32.gmra.mxu0 %v3113
    %v3279 = vpop.f32.mrf.mxu0
    %v3280 = vadd.f32 %v3085, %v3279
    %3281 = vmatmul.f32.gmra.mxu0 %v3116
    %v3282 = vpop.f32.mrf.mxu0
    %v3283 = vadd.f32 %v3085, %v3282
    %3284 = vmatmul.f32.gmra.mxu0 %v3119
    %v3285 = vpop.f32.mrf.mxu0
    %v3286 = vadd.f32 %v3085, %v3285
    %3287 = vmatmul.f32.gmra.mxu0 %v3122
    %v3288 = vpop.f32.mrf.mxu0
    %v3289 = vadd.f32 %v3085, %v3288
    %3290 = vmatmul.f32.gmra.mxu0 %v3125
    %v3291 = vpop.f32.mrf.mxu0
    %v3292 = vadd.f32 %v3085, %v3291
    %3293 = vmatmul.f32.gmra.mxu0 %v3128
    %v3294 = vpop.f32.mrf.mxu0
    %v3295 = vadd.f32 %v3085, %v3294
    %3296 = vmatmul.f32.gmra.mxu0 %v3131
    %v3297 = vpop.f32.mrf.mxu0
    %v3298 = vadd.f32 %v3085, %v3297
    %3299 = vmatmul.f32.gmra.mxu0 %v3134
    %v3300 = vpop.f32.mrf.mxu0
    %v3301 = vadd.f32 %v3085, %v3300
    %3302 = vmatmul.f32.gmra.mxu0 %v3137
    %v3303 = vpop.f32.mrf.mxu0
    %v3304 = vadd.f32 %v3085, %v3303
    %3305 = vmatmul.f32.gmra.mxu0 %v3140
    %v3306 = vpop.f32.mrf.mxu0
    %v3307 = vadd.f32 %v3085, %v3306
    %3308 = vmatmul.f32.gmra.mxu0 %v3143
    %v3309 = vpop.f32.mrf.mxu0
    %v3310 = vadd.f32 %v3085, %v3309
    %3311 = vmatmul.f32.gmra.mxu0 %v3146
    %v3312 = vpop.f32.mrf.mxu0
    %v3313 = vadd.f32 %v3085, %v3312
    %3314 = vmatmul.f32.gmra.mxu0 %v3149
    %v3315 = vpop.f32.mrf.mxu0
    %v3316 = vadd.f32 %v3085, %v3315
    %3317 = vmatmul.f32.gmra.mxu0 %v3152
    %v3318 = vpop.f32.mrf.mxu0
    %v3319 = vadd.f32 %v3085, %v3318
    %3320 = vmatmul.f32.gmra.mxu0 %v3155
    %v3321 = vpop.f32.mrf.mxu0
    %v3322 = vadd.f32 %v3085, %v3321
    %3323 = vmatmul.f32.gmra.mxu0 %v3158
    %v3324 = vpop.f32.mrf.mxu0
    %v3325 = vadd.f32 %v3085, %v3324
    %3326 = vmatmul.f32.gmra.mxu0 %v3161
    %v3327 = vpop.f32.mrf.mxu0
    %v3328 = vadd.f32 %v3085, %v3327
    %3329 = vmatmul.f32.gmra.mxu0 %v3164
    %v3330 = vpop.f32.mrf.mxu0
    %v3331 = vadd.f32 %v3085, %v3330
    %3332 = vmatmul.f32.gmra.mxu0 %v3167
    %v3333 = vpop.f32.mrf.mxu0
    %v3334 = vadd.f32 %v3085, %v3333
    %3335 = vmatmul.f32.gmra.mxu0 %v3170
    %v3336 = vpop.f32.mrf.mxu0
    %v3337 = vadd.f32 %v3085, %v3336
    %3338 = vmatmul.f32.gmra.mxu0 %v3173
    %v3339 = vpop.f32.mrf.mxu0
    %v3340 = vadd.f32 %v3085, %v3339
    %3341 = vmatmul.f32.gmra.mxu0 %v3176
    %v3342 = vpop.f32.mrf.mxu0
    %v3343 = vadd.f32 %v3085, %v3342
    %3344 = vmatmul.f32.gmra.mxu0 %v3179
    %v3345 = vpop.f32.mrf.mxu0
    %v3346 = vadd.f32 %v3085, %v3345
    %3347 = vmatmul.f32.gmra.mxu0 %v3182
    %v3348 = vpop.f32.mrf.mxu0
    %v3349 = vadd.f32 %v3085, %v3348
    %3350 = vmatmul.f32.gmra.mxu0 %v3185
    %v3351 = vpop.f32.mrf.mxu0
    %v3352 = vadd.f32 %v3085, %v3351
    %3353 = vmatmul.f32.gmra.mxu0 %v3188
    %v3354 = vpop.f32.mrf.mxu0
    %v3355 = vadd.f32 %v3085, %v3354
    %3356 = vmatmul.f32.gmra.mxu0 %v3191
    %v3357 = vpop.f32.mrf.mxu0
    %v3358 = vadd.f32 %v3085, %v3357
    %3359 = vmatmul.f32.gmra.mxu0 %v3194
    %v3360 = vpop.f32.mrf.mxu0
    %v3361 = vadd.f32 %v3085, %v3360
    %3362 = vmatmul.f32.gmra.mxu0 %v3197
    %v3363 = vpop.f32.mrf.mxu0
    %v3364 = vadd.f32 %v3085, %v3363
    %3365 = vmatmul.f32.gmra.mxu0 %v3200
    %v3366 = vpop.f32.mrf.mxu0
    %v3367 = vadd.f32 %v3085, %v3366
    %3368 = vmatmul.f32.gmra.mxu0 %v3203
    %v3369 = vpop.f32.mrf.mxu0
    %v3370 = vadd.f32 %v3085, %v3369
    %3371 = vmatmul.f32.gmra.mxu0 %v3206
    %v3372 = vpop.f32.mrf.mxu0
    %v3373 = vadd.f32 %v3085, %v3372
    %3374 = vmatmul.f32.gmra.mxu0 %v3209
    %v3375 = vpop.f32.mrf.mxu0
    %v3376 = vadd.f32 %v3085, %v3375
    %3377 = vmatmul.f32.gmra.mxu0 %v3212
    %v3378 = vpop.f32.mrf.mxu0
    %v3379 = vadd.f32 %v3085, %v3378
    %3380 = vmatmul.f32.gmra.mxu0 %v3215
    %v3381 = vpop.f32.mrf.mxu0
    %v3382 = vadd.f32 %v3085, %v3381
    %3383 = vmatmul.f32.gmra.mxu0 %v3218
    %v3384 = vpop.f32.mrf.mxu0
    %v3385 = vadd.f32 %v3085, %v3384
    %3386 = vmatmul.f32.gmra.mxu0 %v3221
    %v3387 = vpop.f32.mrf.mxu0
    %v3388 = vadd.f32 %v3085, %v3387
    %3389 = vmatmul.f32.gmra.mxu0 %v3224
    %v3390 = vpop.f32.mrf.mxu0
    %v3391 = vadd.f32 %v3085, %v3390
    %3392 = vmatmul.f32.gmra.mxu0 %v3227
    %v3393 = vpop.f32.mrf.mxu0
    %v3394 = vadd.f32 %v3085, %v3393
    %3395 = vmatmul.f32.gmra.mxu0 %v3230
    %v3396 = vpop.f32.mrf.mxu0
    %v3397 = vadd.f32 %v3085, %v3396
    %3398 = vmatmul.f32.gmra.mxu0 %v3233
    %v3399 = vpop.f32.mrf.mxu0
    %v3400 = vadd.f32 %v3085, %v3399
    %3401 = vmatmul.f32.gmra.mxu0 %v3236
    %v3402 = vpop.f32.mrf.mxu0
    %v3403 = vadd.f32 %v3085, %v3402
    %3404 = vdwg.mxu0
    %vm3405 = vcmp.ge.f32.partialorder %v3256, 0.0
    %vm3406 = vcmp.ge.f32.partialorder %v3259, 0.0
    %vm3407 = vcmp.ge.f32.partialorder %v3262, 0.0
    %vm3408 = vcmp.ge.f32.partialorder %v3265, 0.0
    %vm3409 = vcmp.ge.f32.partialorder %v3268, 0.0
    %vm3410 = vcmp.ge.f32.partialorder %v3271, 0.0
    %vm3411 = vcmp.ge.f32.partialorder %v3274, 0.0
    %vm3412 = vcmp.ge.f32.partialorder %v3277, 0.0
    %vm3413 = vcmp.ge.f32.partialorder %v3280, 0.0
    %vm3414 = vcmp.ge.f32.partialorder %v3283, 0.0
    %vm3415 = vcmp.ge.f32.partialorder %v3286, 0.0
    %vm3416 = vcmp.ge.f32.partialorder %v3289, 0.0
    %vm3417 = vcmp.ge.f32.partialorder %v3292, 0.0
    %vm3418 = vcmp.ge.f32.partialorder %v3295, 0.0
    %vm3419 = vcmp.ge.f32.partialorder %v3298, 0.0
    %vm3420 = vcmp.ge.f32.partialorder %v3301, 0.0
    %vm3421 = vcmp.ge.f32.partialorder %v3304, 0.0
    %vm3422 = vcmp.ge.f32.partialorder %v3307, 0.0
    %vm3423 = vcmp.ge.f32.partialorder %v3310, 0.0
    %vm3424 = vcmp.ge.f32.partialorder %v3313, 0.0
    %vm3425 = vcmp.ge.f32.partialorder %v3316, 0.0
    %vm3426 = vcmp.ge.f32.partialorder %v3319, 0.0
    %vm3427 = vcmp.ge.f32.partialorder %v3322, 0.0
    %vm3428 = vcmp.ge.f32.partialorder %v3325, 0.0
    %vm3429 = vcmp.ge.f32.partialorder %v3328, 0.0
    %vm3430 = vcmp.ge.f32.partialorder %v3331, 0.0
    %vm3431 = vcmp.ge.f32.partialorder %v3334, 0.0
    %vm3432 = vcmp.ge.f32.partialorder %v3337, 0.0
    %vm3433 = vcmp.ge.f32.partialorder %v3340, 0.0
    %vm3434 = vcmp.ge.f32.partialorder %v3343, 0.0
    %vm3435 = vcmp.ge.f32.partialorder %v3346, 0.0
    %vm3436 = vcmp.ge.f32.partialorder %v3349, 0.0
    %vm3437 = vcmp.ge.f32.partialorder %v3352, 0.0
    %vm3438 = vcmp.ge.f32.partialorder %v3355, 0.0
    %vm3439 = vcmp.ge.f32.partialorder %v3358, 0.0
    %vm3440 = vcmp.ge.f32.partialorder %v3361, 0.0
    %vm3441 = vcmp.ge.f32.partialorder %v3364, 0.0
    %vm3442 = vcmp.ge.f32.partialorder %v3367, 0.0
    %vm3443 = vcmp.ge.f32.partialorder %v3370, 0.0
    %vm3444 = vcmp.ge.f32.partialorder %v3373, 0.0
    %vm3445 = vcmp.ge.f32.partialorder %v3376, 0.0
    %vm3446 = vcmp.ge.f32.partialorder %v3379, 0.0
    %vm3447 = vcmp.ge.f32.partialorder %v3382, 0.0
    %vm3448 = vcmp.ge.f32.partialorder %v3385, 0.0
    %vm3449 = vcmp.ge.f32.partialorder %v3388, 0.0
    %vm3450 = vcmp.ge.f32.partialorder %v3391, 0.0
    %vm3451 = vcmp.ge.f32.partialorder %v3394, 0.0
    %vm3452 = vcmp.ge.f32.partialorder %v3397, 0.0
    %vm3453 = vcmp.ge.f32.partialorder %v3400, 0.0
    %vm3454 = vcmp.ge.f32.partialorder %v3403, 0.0
    %v3455 = vmul.f32 %v3256, 0.01
    %v3456 = vmul.f32 %v3259, 0.01
    %v3457 = vmul.f32 %v3262, 0.01
    %v3458 = vmul.f32 %v3265, 0.01
    %v3459 = vmul.f32 %v3268, 0.01
    %v3460 = vmul.f32 %v3271, 0.01
    %v3461 = vmul.f32 %v3274, 0.01
    %v3462 = vmul.f32 %v3277, 0.01
    %v3463 = vmul.f32 %v3280, 0.01
    %v3464 = vmul.f32 %v3283, 0.01
    %v3465 = vmul.f32 %v3286, 0.01
    %v3466 = vmul.f32 %v3289, 0.01
    %v3467 = vmul.f32 %v3292, 0.01
    %v3468 = vmul.f32 %v3295, 0.01
    %v3469 = vmul.f32 %v3298, 0.01
    %v3470 = vmul.f32 %v3301, 0.01
    %v3471 = vmul.f32 %v3304, 0.01
    %v3472 = vmul.f32 %v3307, 0.01
    %v3473 = vmul.f32 %v3310, 0.01
    %v3474 = vmul.f32 %v3313, 0.01
    %v3475 = vmul.f32 %v3316, 0.01
    %v3476 = vmul.f32 %v3319, 0.01
    %v3477 = vmul.f32 %v3322, 0.01
    %v3478 = vmul.f32 %v3325, 0.01
    %v3479 = vmul.f32 %v3328, 0.01
    %v3480 = vmul.f32 %v3331, 0.01
    %v3481 = vmul.f32 %v3334, 0.01
    %v3482 = vmul.f32 %v3337, 0.01
    %v3483 = vmul.f32 %v3340, 0.01
    %v3484 = vmul.f32 %v3343, 0.01
    %v3485 = vmul.f32 %v3346, 0.01
    %v3486 = vmul.f32 %v3349, 0.01
    %v3487 = vmul.f32 %v3352, 0.01
    %v3488 = vmul.f32 %v3355, 0.01
    %v3489 = vmul.f32 %v3358, 0.01
    %v3490 = vmul.f32 %v3361, 0.01
    %v3491 = vmul.f32 %v3364, 0.01
    %v3492 = vmul.f32 %v3367, 0.01
    %v3493 = vmul.f32 %v3370, 0.01
    %v3494 = vmul.f32 %v3373, 0.01
    %v3495 = vmul.f32 %v3376, 0.01
    %v3496 = vmul.f32 %v3379, 0.01
    %v3497 = vmul.f32 %v3382, 0.01
    %v3498 = vmul.f32 %v3385, 0.01
    %v3499 = vmul.f32 %v3388, 0.01
    %v3500 = vmul.f32 %v3391, 0.01
    %v3501 = vmul.f32 %v3394, 0.01
    %v3502 = vmul.f32 %v3397, 0.01
    %v3503 = vmul.f32 %v3400, 0.01
    %v3504 = vmul.f32 %v3403, 0.01
    %v3505 = vsel %vm3405, %v3256, %v3455
    %v3506 = vsel %vm3406, %v3259, %v3456
    %v3507 = vsel %vm3407, %v3262, %v3457
    %v3508 = vsel %vm3408, %v3265, %v3458
    %v3509 = vsel %vm3409, %v3268, %v3459
    %v3510 = vsel %vm3410, %v3271, %v3460
    %v3511 = vsel %vm3411, %v3274, %v3461
    %v3512 = vsel %vm3412, %v3277, %v3462
    %v3513 = vsel %vm3413, %v3280, %v3463
    %v3514 = vsel %vm3414, %v3283, %v3464
    %v3515 = vsel %vm3415, %v3286, %v3465
    %v3516 = vsel %vm3416, %v3289, %v3466
    %v3517 = vsel %vm3417, %v3292, %v3467
    %v3518 = vsel %vm3418, %v3295, %v3468
    %v3519 = vsel %vm3419, %v3298, %v3469
    %v3520 = vsel %vm3420, %v3301, %v3470
    %v3521 = vsel %vm3421, %v3304, %v3471
    %v3522 = vsel %vm3422, %v3307, %v3472
    %v3523 = vsel %vm3423, %v3310, %v3473
    %v3524 = vsel %vm3424, %v3313, %v3474
    %v3525 = vsel %vm3425, %v3316, %v3475
    %v3526 = vsel %vm3426, %v3319, %v3476
    %v3527 = vsel %vm3427, %v3322, %v3477
    %v3528 = vsel %vm3428, %v3325, %v3478
    %v3529 = vsel %vm3429, %v3328, %v3479
    %v3530 = vsel %vm3430, %v3331, %v3480
    %v3531 = vsel %vm3431, %v3334, %v3481
    %v3532 = vsel %vm3432, %v3337, %v3482
    %v3533 = vsel %vm3433, %v3340, %v3483
    %v3534 = vsel %vm3434, %v3343, %v3484
    %v3535 = vsel %vm3435, %v3346, %v3485
    %v3536 = vsel %vm3436, %v3349, %v3486
    %v3537 = vsel %vm3437, %v3352, %v3487
    %v3538 = vsel %vm3438, %v3355, %v3488
    %v3539 = vsel %vm3439, %v3358, %v3489
    %v3540 = vsel %vm3440, %v3361, %v3490
    %v3541 = vsel %vm3441, %v3364, %v3491
    %v3542 = vsel %vm3442, %v3367, %v3492
    %v3543 = vsel %vm3443, %v3370, %v3493
    %v3544 = vsel %vm3444, %v3373, %v3494
    %v3545 = vsel %vm3445, %v3376, %v3495
    %v3546 = vsel %vm3446, %v3379, %v3496
    %v3547 = vsel %vm3447, %v3382, %v3497
    %v3548 = vsel %vm3448, %v3385, %v3498
    %v3549 = vsel %vm3449, %v3388, %v3499
    %v3550 = vsel %vm3450, %v3391, %v3500
    %v3551 = vsel %vm3451, %v3394, %v3501
    %v3552 = vsel %vm3452, %v3397, %v3502
    %v3553 = vsel %vm3453, %v3400, %v3503
    %v3554 = vsel %vm3454, %v3403, %v3504
    %v3555 = vld [vmem:[%s9] sm:$0x1]
    %v3557 = vperm.slane %v3555, 0
    %v3559 = vmul.f32 %v3505, %v3557
    %v3560 = vmul.f32 %v3506, %v3557
    %v3561 = vmul.f32 %v3507, %v3557
    %v3562 = vmul.f32 %v3508, %v3557
    %v3563 = vmul.f32 %v3509, %v3557
    %v3564 = vmul.f32 %v3510, %v3557
    %v3565 = vmul.f32 %v3511, %v3557
    %v3566 = vmul.f32 %v3512, %v3557
    %v3567 = vmul.f32 %v3513, %v3557
    %v3568 = vmul.f32 %v3514, %v3557
    %v3569 = vmul.f32 %v3515, %v3557
    %v3570 = vmul.f32 %v3516, %v3557
    %v3571 = vmul.f32 %v3517, %v3557
    %v3572 = vmul.f32 %v3518, %v3557
    %v3573 = vmul.f32 %v3519, %v3557
    %v3574 = vmul.f32 %v3520, %v3557
    %v3575 = vmul.f32 %v3521, %v3557
    %v3576 = vmul.f32 %v3522, %v3557
    %v3577 = vmul.f32 %v3523, %v3557
    %v3578 = vmul.f32 %v3524, %v3557
    %v3579 = vmul.f32 %v3525, %v3557
    %v3580 = vmul.f32 %v3526, %v3557
    %v3581 = vmul.f32 %v3527, %v3557
    %v3582 = vmul.f32 %v3528, %v3557
    %v3583 = vmul.f32 %v3529, %v3557
    %v3584 = vmul.f32 %v3530, %v3557
    %v3585 = vmul.f32 %v3531, %v3557
    %v3586 = vmul.f32 %v3532, %v3557
    %v3587 = vmul.f32 %v3533, %v3557
    %v3588 = vmul.f32 %v3534, %v3557
    %v3589 = vmul.f32 %v3535, %v3557
    %v3590 = vmul.f32 %v3536, %v3557
    %v3591 = vmul.f32 %v3537, %v3557
    %v3592 = vmul.f32 %v3538, %v3557
    %v3593 = vmul.f32 %v3539, %v3557
    %v3594 = vmul.f32 %v3540, %v3557
    %v3595 = vmul.f32 %v3541, %v3557
    %v3596 = vmul.f32 %v3542, %v3557
    %v3597 = vmul.f32 %v3543, %v3557
    %v3598 = vmul.f32 %v3544, %v3557
    %v3599 = vmul.f32 %v3545, %v3557
    %v3600 = vmul.f32 %v3546, %v3557
    %v3601 = vmul.f32 %v3547, %v3557
    %v3602 = vmul.f32 %v3548, %v3557
    %v3603 = vmul.f32 %v3549, %v3557
    %v3604 = vmul.f32 %v3550, %v3557
    %v3605 = vmul.f32 %v3551, %v3557
    %v3606 = vmul.f32 %v3552, %v3557
    %v3607 = vmul.f32 %v3553, %v3557
    %v3608 = vmul.f32 %v3554, %v3557
    %v3609 = vsel %vm3087, %v3559, 0.0
    %3610 = vadd.xlane.f32.xlu0 %v3609
    %v3611 = vpop.xlane.xlu0 %3610
    %v3612 = vsel %vm3087, %v3560, 0.0
    %3613 = vadd.xlane.f32.xlu0 %v3612
    %v3614 = vpop.xlane.xlu0 %3613
    %v3615 = vsel %vm3087, %v3561, 0.0
    %3616 = vadd.xlane.f32.xlu0 %v3615
    %v3617 = vpop.xlane.xlu0 %3616
    %v3618 = vsel %vm3087, %v3562, 0.0
    %3619 = vadd.xlane.f32.xlu0 %v3618
    %v3620 = vpop.xlane.xlu0 %3619
    %v3621 = vsel %vm3087, %v3563, 0.0
    %3622 = vadd.xlane.f32.xlu0 %v3621
    %v3623 = vpop.xlane.xlu0 %3622
    %v3624 = vsel %vm3087, %v3564, 0.0
    %3625 = vadd.xlane.f32.xlu0 %v3624
    %v3626 = vpop.xlane.xlu0 %3625
    %v3627 = vsel %vm3087, %v3565, 0.0
    %3628 = vadd.xlane.f32.xlu0 %v3627
    %v3629 = vpop.xlane.xlu0 %3628
    %v3630 = vsel %vm3087, %v3566, 0.0
    %3631 = vadd.xlane.f32.xlu0 %v3630
    %v3632 = vpop.xlane.xlu0 %3631
    %v3633 = vsel %vm3087, %v3567, 0.0
    %3634 = vadd.xlane.f32.xlu0 %v3633
    %v3635 = vpop.xlane.xlu0 %3634
    %v3636 = vsel %vm3087, %v3568, 0.0
    %3637 = vadd.xlane.f32.xlu0 %v3636
    %v3638 = vpop.xlane.xlu0 %3637
    %v3639 = vsel %vm3087, %v3569, 0.0
    %3640 = vadd.xlane.f32.xlu0 %v3639
    %v3641 = vpop.xlane.xlu0 %3640
    %v3642 = vsel %vm3087, %v3570, 0.0
    %3643 = vadd.xlane.f32.xlu0 %v3642
    %v3644 = vpop.xlane.xlu0 %3643
    %v3645 = vsel %vm3087, %v3571, 0.0
    %3646 = vadd.xlane.f32.xlu0 %v3645
    %v3647 = vpop.xlane.xlu0 %3646
    %v3648 = vsel %vm3087, %v3572, 0.0
    %3649 = vadd.xlane.f32.xlu0 %v3648
    %v3650 = vpop.xlane.xlu0 %3649
    %v3651 = vsel %vm3087, %v3573, 0.0
    %3652 = vadd.xlane.f32.xlu0 %v3651
    %v3653 = vpop.xlane.xlu0 %3652
    %v3654 = vsel %vm3087, %v3574, 0.0
    %3655 = vadd.xlane.f32.xlu0 %v3654
    %v3656 = vpop.xlane.xlu0 %3655
    %v3657 = vsel %vm3087, %v3575, 0.0
    %3658 = vadd.xlane.f32.xlu0 %v3657
    %v3659 = vpop.xlane.xlu0 %3658
    %v3660 = vsel %vm3087, %v3576, 0.0
    %3661 = vadd.xlane.f32.xlu0 %v3660
    %v3662 = vpop.xlane.xlu0 %3661
    %v3663 = vsel %vm3087, %v3577, 0.0
    %3664 = vadd.xlane.f32.xlu0 %v3663
    %v3665 = vpop.xlane.xlu0 %3664
    %v3666 = vsel %vm3087, %v3578, 0.0
    %3667 = vadd.xlane.f32.xlu0 %v3666
    %v3668 = vpop.xlane.xlu0 %3667
    %v3669 = vsel %vm3087, %v3579, 0.0
    %3670 = vadd.xlane.f32.xlu0 %v3669
    %v3671 = vpop.xlane.xlu0 %3670
    %v3672 = vsel %vm3087, %v3580, 0.0
    %3673 = vadd.xlane.f32.xlu0 %v3672
    %v3674 = vpop.xlane.xlu0 %3673
    %v3675 = vsel %vm3087, %v3581, 0.0
    %3676 = vadd.xlane.f32.xlu0 %v3675
    %v3677 = vpop.xlane.xlu0 %3676
    %v3678 = vsel %vm3087, %v3582, 0.0
    %3679 = vadd.xlane.f32.xlu0 %v3678
    %v3680 = vpop.xlane.xlu0 %3679
    %v3681 = vsel %vm3087, %v3583, 0.0
    %3682 = vadd.xlane.f32.xlu0 %v3681
    %v3683 = vpop.xlane.xlu0 %3682
    %v3684 = vsel %vm3087, %v3584, 0.0
    %3685 = vadd.xlane.f32.xlu0 %v3684
    %v3686 = vpop.xlane.xlu0 %3685
    %v3687 = vsel %vm3087, %v3585, 0.0
    %3688 = vadd.xlane.f32.xlu0 %v3687
    %v3689 = vpop.xlane.xlu0 %3688
    %v3690 = vsel %vm3087, %v3586, 0.0
    %3691 = vadd.xlane.f32.xlu0 %v3690
    %v3692 = vpop.xlane.xlu0 %3691
    %v3693 = vsel %vm3087, %v3587, 0.0
    %3694 = vadd.xlane.f32.xlu0 %v3693
    %v3695 = vpop.xlane.xlu0 %3694
    %v3696 = vsel %vm3087, %v3588, 0.0
    %3697 = vadd.xlane.f32.xlu0 %v3696
    %v3698 = vpop.xlane.xlu0 %3697
    %v3699 = vsel %vm3087, %v3589, 0.0
    %3700 = vadd.xlane.f32.xlu0 %v3699
    %v3701 = vpop.xlane.xlu0 %3700
    %v3702 = vsel %vm3087, %v3590, 0.0
    %3703 = vadd.xlane.f32.xlu0 %v3702
    %v3704 = vpop.xlane.xlu0 %3703
    %v3705 = vsel %vm3087, %v3591, 0.0
    %3706 = vadd.xlane.f32.xlu0 %v3705
    %v3707 = vpop.xlane.xlu0 %3706
    %v3708 = vsel %vm3087, %v3592, 0.0
    %3709 = vadd.xlane.f32.xlu0 %v3708
    %v3710 = vpop.xlane.xlu0 %3709
    %v3711 = vsel %vm3087, %v3593, 0.0
    %3712 = vadd.xlane.f32.xlu0 %v3711
    %v3713 = vpop.xlane.xlu0 %3712
    %v3714 = vsel %vm3087, %v3594, 0.0
    %3715 = vadd.xlane.f32.xlu0 %v3714
    %v3716 = vpop.xlane.xlu0 %3715
    %v3717 = vsel %vm3087, %v3595, 0.0
    %3718 = vadd.xlane.f32.xlu0 %v3717
    %v3719 = vpop.xlane.xlu0 %3718
    %v3720 = vsel %vm3087, %v3596, 0.0
    %3721 = vadd.xlane.f32.xlu0 %v3720
    %v3722 = vpop.xlane.xlu0 %3721
    %v3723 = vsel %vm3087, %v3597, 0.0
    %3724 = vadd.xlane.f32.xlu0 %v3723
    %v3725 = vpop.xlane.xlu0 %3724
    %v3726 = vsel %vm3087, %v3598, 0.0
    %3727 = vadd.xlane.f32.xlu0 %v3726
    %v3728 = vpop.xlane.xlu0 %3727
    %v3729 = vsel %vm3087, %v3599, 0.0
    %3730 = vadd.xlane.f32.xlu0 %v3729
    %v3731 = vpop.xlane.xlu0 %3730
    %v3732 = vsel %vm3087, %v3600, 0.0
    %3733 = vadd.xlane.f32.xlu0 %v3732
    %v3734 = vpop.xlane.xlu0 %3733
    %v3735 = vsel %vm3087, %v3601, 0.0
    %3736 = vadd.xlane.f32.xlu0 %v3735
    %v3737 = vpop.xlane.xlu0 %3736
    %v3738 = vsel %vm3087, %v3602, 0.0
    %3739 = vadd.xlane.f32.xlu0 %v3738
    %v3740 = vpop.xlane.xlu0 %3739
    %v3741 = vsel %vm3087, %v3603, 0.0
    %3742 = vadd.xlane.f32.xlu0 %v3741
    %v3743 = vpop.xlane.xlu0 %3742
    %v3744 = vsel %vm3087, %v3604, 0.0
    %3745 = vadd.xlane.f32.xlu0 %v3744
    %v3746 = vpop.xlane.xlu0 %3745
    %v3747 = vsel %vm3087, %v3605, 0.0
    %3748 = vadd.xlane.f32.xlu0 %v3747
    %v3749 = vpop.xlane.xlu0 %3748
    %v3750 = vsel %vm3087, %v3606, 0.0
    %3751 = vadd.xlane.f32.xlu0 %v3750
    %v3752 = vpop.xlane.xlu0 %3751
    %v3753 = vsel %vm3087, %v3607, 0.0
    %3754 = vadd.xlane.f32.xlu0 %v3753
    %v3755 = vpop.xlane.xlu0 %3754
    %v3756 = vsel %vm3087, %v3608, 0.0
    %3757 = vadd.xlane.f32.xlu0 %v3756
    %v3758 = vpop.xlane.xlu0 %3757
    %v3759 = vadd.s32 %v205, 128
    %v3760 = vadd.s32 %v205, 256
    %v3761 = vadd.s32 %v205, 384
    %v3762 = vmul.u32 %v154, 20
    %v3763 = vmul.u32 %v155, 20
    %v3764 = vmul.u32 %v156, 20
    %vm3765 = vcmp.ge.s32.totalorder %v205, %v3762
    %vm3766 = vcmp.ge.s32.totalorder %v3759, %v3762
    %vm3767 = vcmp.ge.s32.totalorder %v3760, %v3762
    %vm3768 = vcmp.ge.s32.totalorder %v3761, %v3762
    %vm3769 = vcmp.ge.s32.totalorder %v205, %v3763
    %vm3770 = vcmp.ge.s32.totalorder %v3759, %v3763
    %vm3771 = vcmp.ge.s32.totalorder %v3760, %v3763
    %vm3772 = vcmp.ge.s32.totalorder %v3761, %v3763
    %vm3773 = vcmp.ge.s32.totalorder %v205, %v3764
    %vm3774 = vcmp.ge.s32.totalorder %v3759, %v3764
    %vm3775 = vcmp.ge.s32.totalorder %v3760, %v3764
    %vm3776 = vcmp.ge.s32.totalorder %v3761, %v3764
    %v3777 = vadd.s32 %v3762, 20
    %v3778 = vadd.s32 %v3763, 20
    %v3779 = vadd.s32 %v3764, 20
    %vm3780 = vcmp.lt.s32.totalorder %v205, %v3777
    %vm3781 = vcmp.lt.s32.totalorder %v3759, %v3777
    %vm3782 = vcmp.lt.s32.totalorder %v3760, %v3777
    %vm3783 = vcmp.lt.s32.totalorder %v3761, %v3777
    %vm3784 = vcmp.lt.s32.totalorder %v205, %v3778
    %vm3785 = vcmp.lt.s32.totalorder %v3759, %v3778
    %vm3786 = vcmp.lt.s32.totalorder %v3760, %v3778
    %vm3787 = vcmp.lt.s32.totalorder %v3761, %v3778
    %vm3788 = vcmp.lt.s32.totalorder %v205, %v3779
    %vm3789 = vcmp.lt.s32.totalorder %v3759, %v3779
    %vm3790 = vcmp.lt.s32.totalorder %v3760, %v3779
    %vm3791 = vcmp.lt.s32.totalorder %v3761, %v3779
    %vm3792 = vmand %vm3765, %vm3780
    %vm3793 = vmand %vm3766, %vm3781
    %vm3794 = vmand %vm3767, %vm3782
    %vm3795 = vmand %vm3768, %vm3783
    %vm3796 = vmand %vm3769, %vm3784
    %vm3797 = vmand %vm3770, %vm3785
    %vm3798 = vmand %vm3771, %vm3786
    %vm3799 = vmand %vm3772, %vm3787
    %vm3800 = vmand %vm3773, %vm3788
    %vm3801 = vmand %vm3774, %vm3789
    %vm3802 = vmand %vm3775, %vm3790
    %vm3803 = vmand %vm3776, %vm3791
    %v3804 = vsel %vm3792, 1, 0
    %v3805 = vsel %vm3793, 1, 0
    %v3806 = vsel %vm3794, 1, 0
    %v3807 = vsel %vm3795, 1, 0
    %v3808 = vsel %vm3796, 1, 0
    %v3809 = vsel %vm3797, 1, 0
    %v3810 = vsel %vm3798, 1, 0
    %v3811 = vsel %vm3799, 1, 0
    %v3812 = vsel %vm3800, 1, 0
    %v3813 = vsel %vm3801, 1, 0
    %v3814 = vsel %vm3802, 1, 0
    %v3815 = vsel %vm3803, 1, 0
    %v3816 = vcvt.s32.f32 %v3804
    %v3817 = vcvt.s32.f32 %v3805
    %v3818 = vcvt.s32.f32 %v3806
    %v3819 = vcvt.s32.f32 %v3807
    %v3820 = vcvt.s32.f32 %v3808
    %v3821 = vcvt.s32.f32 %v3809
    %v3822 = vcvt.s32.f32 %v3810
    %v3823 = vcvt.s32.f32 %v3811
    %v3824 = vcvt.s32.f32 %v3812
    %v3825 = vcvt.s32.f32 %v3813
    %v3826 = vcvt.s32.f32 %v3814
    %v3827 = vcvt.s32.f32 %v3815
    %v3828 = vmul.f32 %v3611, %v910
    %v3829 = vmul.f32 %v3614, %v911
    %v3830 = vmul.f32 %v3617, %v912
    %v3831 = vmul.f32 %v3620, %v913
    %v3832 = vmul.f32 %v3623, %v914
    %v3833 = vmul.f32 %v3626, %v915
    %v3834 = vmul.f32 %v3629, %v916
    %v3835 = vmul.f32 %v3632, %v917
    %v3836 = vmul.f32 %v3635, %v918
    %v3837 = vmul.f32 %v3638, %v919
    %v3838 = vmul.f32 %v3641, %v920
    %v3839 = vmul.f32 %v3644, %v921
    %v3840 = vmul.f32 %v3647, %v922
    %v3841 = vmul.f32 %v3650, %v923
    %v3842 = vmul.f32 %v3653, %v924
    %v3843 = vmul.f32 %v3656, %v925
    %v3844 = vmul.f32 %v3659, %v926
    %v3845 = vmul.f32 %v3662, %v927
    %v3846 = vmul.f32 %v3665, %v928
    %v3847 = vmul.f32 %v3668, %v929
    %v3848 = vmul.f32 %v3671, %v930
    %v3849 = vmul.f32 %v3674, %v931
    %v3850 = vmul.f32 %v3677, %v932
    %v3851 = vmul.f32 %v3680, %v933
    %v3852 = vmul.f32 %v3683, %v934
    %v3853 = vmul.f32 %v3686, %v935
    %v3854 = vmul.f32 %v3689, %v936
    %v3855 = vmul.f32 %v3692, %v937
    %v3856 = vmul.f32 %v3695, %v938
    %v3857 = vmul.f32 %v3698, %v939
    %v3858 = vmul.f32 %v3701, %v940
    %v3859 = vmul.f32 %v3704, %v941
    %v3860 = vmul.f32 %v3707, %v942
    %v3861 = vmul.f32 %v3710, %v943
    %v3862 = vmul.f32 %v3713, %v944
    %v3863 = vmul.f32 %v3716, %v945
    %v3864 = vmul.f32 %v3719, %v946
    %v3865 = vmul.f32 %v3722, %v947
    %v3866 = vmul.f32 %v3725, %v948
    %v3867 = vmul.f32 %v3728, %v949
    %v3868 = vmul.f32 %v3731, %v950
    %v3869 = vmul.f32 %v3734, %v951
    %v3870 = vmul.f32 %v3737, %v952
    %v3871 = vmul.f32 %v3740, %v953
    %v3872 = vmul.f32 %v3743, %v954
    %v3873 = vmul.f32 %v3746, %v955
    %v3874 = vmul.f32 %v3749, %v956
    %v3875 = vmul.f32 %v3752, %v957
    %v3876 = vmul.f32 %v3755, %v958
    %v3877 = vmul.f32 %v3758, %v959
    %v3878 = vld [vmem:[#allocation2] sm:$0x1]
    %v3880 = vperm.slane %v3878, 0
    %3881 = vset.pattern.permute.xlu0 0
    %3882 = vperm.xlu0 %3881, %v3880
    %v3883 = vpop.permute.xlu0 %3882
    %v3886 = vsel %vm3087, %v3819, 0
    %v3889 = vsel %vm3087, %v3823, 0
    %v3892 = vsel %vm3087, %v3827, 0
    %3894 = vmatpush.msra.mxu0 %v3843
    %3895 = vmatpush.msra.mxu0 %v3842
    %3896 = vmatpush.msra.mxu0 %v3841
    %3897 = vmatpush.msra.mxu0 %v3840
    %3898 = vmatpush.msra.mxu0 %v3839
    %3899 = vmatpush.msra.mxu0 %v3838
    %3900 = vmatpush.msra.mxu0 %v3837
    %3901 = vmatpush.msra.mxu0 %v3836
    %3902 = vmatpush.msra.mxu0 %v3835
    %3903 = vmatpush.msra.mxu0 %v3834
    %3904 = vmatpush.msra.mxu0 %v3833
    %3905 = vmatpush.msra.mxu0 %v3832
    %3906 = vmatpush.msra.mxu0 %v3831
    %3907 = vmatpush.msra.mxu0 %v3830
    %3908 = vmatpush.msra.mxu0 %v3829
    %3909 = vmatpush.msra.mxu0 %v3828
    %3910 = vmatmul.f32.gmra.mxu0 %v3816
    %v3911 = vpop.f32.mrf.mxu0
    %v3912 = vadd.f32 %v3883, %v3911
    %3913 = vmatmul.f32.gmra.mxu0 %v3820
    %v3914 = vpop.f32.mrf.mxu0
    %v3915 = vadd.f32 %v3883, %v3914
    %3916 = vmatmul.f32.gmra.mxu0 %v3824
    %v3917 = vpop.f32.mrf.mxu0
    %v3918 = vadd.f32 %v3883, %v3917
    %3919 = vdwg.mxu0
    %3920 = vmatpush.msra.mxu0 %v3859
    %3921 = vmatpush.msra.mxu0 %v3858
    %3922 = vmatpush.msra.mxu0 %v3857
    %3923 = vmatpush.msra.mxu0 %v3856
    %3924 = vmatpush.msra.mxu0 %v3855
    %3925 = vmatpush.msra.mxu0 %v3854
    %3926 = vmatpush.msra.mxu0 %v3853
    %3927 = vmatpush.msra.mxu0 %v3852
    %3928 = vmatpush.msra.mxu0 %v3851
    %3929 = vmatpush.msra.mxu0 %v3850
    %3930 = vmatpush.msra.mxu0 %v3849
    %3931 = vmatpush.msra.mxu0 %v3848
    %3932 = vmatpush.msra.mxu0 %v3847
    %3933 = vmatpush.msra.mxu0 %v3846
    %3934 = vmatpush.msra.mxu0 %v3845
    %3935 = vmatpush.msra.mxu0 %v3844
    %3936 = vmatmul.f32.gmra.mxu0 %v3817
    %v3937 = vpop.f32.mrf.mxu0
    %v3938 = vadd.f32 %v3912, %v3937
    %3939 = vmatmul.f32.gmra.mxu0 %v3821
    %v3940 = vpop.f32.mrf.mxu0
    %v3941 = vadd.f32 %v3915, %v3940
    %3942 = vmatmul.f32.gmra.mxu0 %v3825
    %v3943 = vpop.f32.mrf.mxu0
    %v3944 = vadd.f32 %v3918, %v3943
    %3945 = vdwg.mxu0
    %3946 = vmatpush.msra.mxu0 %v3875
    %3947 = vmatpush.msra.mxu0 %v3874
    %3948 = vmatpush.msra.mxu0 %v3873
    %3949 = vmatpush.msra.mxu0 %v3872
    %3950 = vmatpush.msra.mxu0 %v3871
    %3951 = vmatpush.msra.mxu0 %v3870
    %3952 = vmatpush.msra.mxu0 %v3869
    %3953 = vmatpush.msra.mxu0 %v3868
    %3954 = vmatpush.msra.mxu0 %v3867
    %3955 = vmatpush.msra.mxu0 %v3866
    %3956 = vmatpush.msra.mxu0 %v3865
    %3957 = vmatpush.msra.mxu0 %v3864
    %3958 = vmatpush.msra.mxu0 %v3863
    %3959 = vmatpush.msra.mxu0 %v3862
    %3960 = vmatpush.msra.mxu0 %v3861
    %3961 = vmatpush.msra.mxu0 %v3860
    %3962 = vmatmul.f32.gmra.mxu0 %v3818
    %v3963 = vpop.f32.mrf.mxu0
    %v3964 = vadd.f32 %v3938, %v3963
    %3965 = vmatmul.f32.gmra.mxu0 %v3822
    %v3966 = vpop.f32.mrf.mxu0
    %v3967 = vadd.f32 %v3941, %v3966
    %3968 = vmatmul.f32.gmra.mxu0 %v3826
    %v3969 = vpop.f32.mrf.mxu0
    %v3970 = vadd.f32 %v3944, %v3969
    %3971 = vdwg.mxu0
    %3972 = vmatpush.msra.mxu0 0.0
    %3973 = vmatpush.msra.mxu0 0.0
    %3974 = vmatpush.msra.mxu0 0.0
    %3975 = vmatpush.msra.mxu0 0.0
    %3976 = vmatpush.msra.mxu0 0.0
    %3977 = vmatpush.msra.mxu0 0.0
    %3978 = vmatpush.msra.mxu0 0.0
    %3979 = vmatpush.msra.mxu0 0.0
    %3980 = vmatpush.msra.mxu0 0.0
    %3981 = vmatpush.msra.mxu0 0.0
    %3982 = vmatpush.msra.mxu0 0.0
    %3983 = vmatpush.msra.mxu0 0.0
    %3984 = vmatpush.msra.mxu0 0.0
    %3985 = vmatpush.msra.mxu0 0.0
    %3986 = vmatpush.msra.mxu0 %v3877
    %3987 = vmatpush.msra.mxu0 %v3876
    %3988 = vmatmul.f32.gmra.mxu0 %v3886
    %v3989 = vpop.f32.mrf.mxu0
    %v3990 = vadd.f32 %v3964, %v3989
    %3991 = vmatmul.f32.gmra.mxu0 %v3889
    %v3992 = vpop.f32.mrf.mxu0
    %v3993 = vadd.f32 %v3967, %v3992
    %3994 = vmatmul.f32.gmra.mxu0 %v3892
    %v3995 = vpop.f32.mrf.mxu0
    %v3996 = vadd.f32 %v3970, %v3995
    %3997 = vdwg.mxu0
    %vm3998 = vcmp.eq.s32.totalorder %v154, %v205
    %vm3999 = vcmp.eq.s32.totalorder %v155, %v205
    %vm4000 = vcmp.eq.s32.totalorder %v156, %v205
    %v4001 = vsel %vm3998, 1, 0
    %v4002 = vsel %vm3999, 1, 0
    %v4003 = vsel %vm4000, 1, 0
    %v4004 = vcvt.s32.f32 %v4001
    %v4005 = vcvt.s32.f32 %v4002
    %v4006 = vcvt.s32.f32 %v4003
    %v4007 = vsub.f32 1.0, %v4004
    %v4008 = vsub.f32 1.0, %v4005
    %v4009 = vsub.f32 1.0, %v4006
    %v4010 = vmul.f32 %v3990, %v4007
    %v4011 = vmul.f32 %v3993, %v4008
    %v4012 = vmul.f32 %v3996, %v4009
    %v4013 = vsel %vm559, %v4010, -inf
    %4014 = vmax.xlane.f32.xlu0 %v4013
    %v4015 = vpop.xlane.xlu0 %4014
    %v4016 = vsel %vm559, %v4011, -inf
    %4017 = vmax.xlane.f32.xlu0 %v4016
    %v4018 = vpop.xlane.xlu0 %4017
    %vm4019 = vcmask 158720
    %v4020 = vsel %vm4019, %v4012, -inf
    %4021 = vmax.xlane.f32.xlu0 %v4020
    %v4022 = vpop.xlane.xlu0 %4021
    %v4023 = vsub.f32 %v4010, %v4015
    %v4024 = vsub.f32 %v4011, %v4018
    %v4025 = vsub.f32 %v4012, %v4022
    %v4026 = vmul.f32 %v4023, 1.442695
    %v4027 = vpow.pop %v4026
    %v4028 = vmul.f32 %v4024, 1.442695
    %v4029 = vpow.pop %v4028
    %v4030 = vmul.f32 %v4025, 1.442695
    %v4031 = vpow.pop %v4030
    %v4032 = vsel %vm559, %v4027, 0.0
    %4033 = vadd.xlane.f32.xlu0 %v4032
    %v4034 = vpop.xlane.xlu0 %4033
    %v4035 = vsel %vm559, %v4029, 0.0
    %4036 = vadd.xlane.f32.xlu0 %v4035
    %v4037 = vpop.xlane.xlu0 %4036
    %v4038 = vsel %vm4019, %v4031, 0.0
    %4039 = vadd.xlane.f32.xlu0 %v4038
    %v4040 = vpop.xlane.xlu0 %4039
    %v4041 = vrcp.pop %v4034
    %v4042 = vmul.f32 %v4034, %v4041
    %v4043 = vsub.f32 1.0, %v4042
    %v4044 = vmul.f32 %v4041, %v4043
    %v4045 = vadd.f32 %v4041, %v4044
    %vm4046 = vweird.f32 %v4034
    %vm4047 = vweird.f32 %v4041
    %vm4048 = vmor %vm4046, %vm4047
    %v4049 = vsel %vm4048, %v4041, %v4045
    %v4050 = vand.u32 2147483647, %v4034
    %vm4051 = vcmp.eq.f32.partialorder %v4050, 8.507059e+37
    %v4052 = vand.u32 %v4034, 2147483648
    %v4053 = vor.u32 1.1754944e-38, %v4052
    %v4054 = vsel %vm4051, %v4053, %v4049
    %v4055 = vmul.f32 %v4027, %v4054
    %v4056 = vrcp.pop %v4037
    %v4057 = vmul.f32 %v4037, %v4056
    %v4058 = vsub.f32 1.0, %v4057
    %v4059 = vmul.f32 %v4056, %v4058
    %v4060 = vadd.f32 %v4056, %v4059
    %vm4061 = vweird.f32 %v4037
    %vm4062 = vweird.f32 %v4056
    %vm4063 = vmor %vm4061, %vm4062
    %v4064 = vsel %vm4063, %v4056, %v4060
    %v4065 = vand.u32 2147483647, %v4037
    %vm4066 = vcmp.eq.f32.partialorder %v4065, 8.507059e+37
    %v4067 = vand.u32 %v4037, 2147483648
    %v4068 = vor.u32 1.1754944e-38, %v4067
    %v4069 = vsel %vm4066, %v4068, %v4064
    %v4070 = vmul.f32 %v4029, %v4069
    %v4071 = vrcp.pop %v4040
    %v4072 = vmul.f32 %v4040, %v4071
    %v4073 = vsub.f32 1.0, %v4072
    %v4074 = vmul.f32 %v4071, %v4073
    %v4075 = vadd.f32 %v4071, %v4074
    %vm4076 = vweird.f32 %v4040
    %vm4077 = vweird.f32 %v4071
    %vm4078 = vmor %vm4076, %vm4077
    %v4079 = vsel %vm4078, %v4071, %v4075
    %v4080 = vand.u32 2147483647, %v4040
    %vm4081 = vcmp.eq.f32.partialorder %v4080, 8.507059e+37
    %v4082 = vand.u32 %v4040, 2147483648
    %v4083 = vor.u32 1.1754944e-38, %v4082
    %v4084 = vsel %vm4081, %v4083, %v4079
    %v4085 = vmul.f32 %v4031, %v4084
    %v4086 = vadd.f32 %v4055, %v4004
    %v4087 = vadd.f32 %v4070, %v4005
    %v4088 = vadd.f32 %v4085, %v4006
    %v4089 = vld [vmem:[%s11] sm:$0xff]
    %v4090 = vld [vmem:[%s11 + $0x8] sm:$0xff]
    %v4091 = vld [vmem:[%s11 + $0x10] sm:$0xff]
    %v4092 = vld [vmem:[%s11 + $0x18] sm:$0xff]
    %v4093 = vld [vmem:[%s11 + $0x20] sm:$0xff]
    %v4094 = vld [vmem:[%s11 + $0x28] sm:$0xff]
    %v4095 = vld [vmem:[%s11 + $0x30] sm:$0xff]
    %v4096 = vld [vmem:[%s11 + $0x38] sm:$0xff]
    %v4097 = vld [vmem:[%s11 + $0x40] sm:$0xff]
    %v4098 = vld [vmem:[%s11 + $0x48] sm:$0xff]
    %v4099 = vld [vmem:[%s11 + $0x50] sm:$0xff]
    %v4101 = vsel %vm58, %v52, 0
    %v4104 = vsel %vm58, %v53, 0
    %v4107 = vsel %vm58, %v54, 0
    %4109 = vmatpush.msra.mxu0 0.0
    %4110 = vmatpush.msra.mxu0 0.0
    %4111 = vmatpush.msra.mxu0 0.0
    %4112 = vmatpush.msra.mxu0 0.0
    %4113 = vmatpush.msra.mxu0 0.0
    %4114 = vmatpush.msra.mxu0 %v4099
    %4115 = vmatpush.msra.mxu0 %v4098
    %4116 = vmatpush.msra.mxu0 %v4097
    %4117 = vmatpush.msra.mxu0 %v4096
    %4118 = vmatpush.msra.mxu0 %v4095
    %4119 = vmatpush.msra.mxu0 %v4094
    %4120 = vmatpush.msra.mxu0 %v4093
    %4121 = vmatpush.msra.mxu0 %v4092
    %4122 = vmatpush.msra.mxu0 %v4091
    %4123 = vmatpush.msra.mxu0 %v4090
    %4124 = vmatpush.msra.mxu0 %v4089
    %4125 = vmatmul.f32.gmra.mxu0 %v4101
    %v4126 = vpop.f32.mrf.mxu0
    %v4127 = vadd.f32 0.0, %v4126
    %4128 = vmatmul.f32.gmra.mxu0 %v4104
    %v4129 = vpop.f32.mrf.mxu0
    %v4130 = vadd.f32 0.0, %v4129
    %4131 = vmatmul.f32.gmra.mxu0 %v4107
    %v4132 = vpop.f32.mrf.mxu0
    %v4133 = vadd.f32 0.0, %v4132
    %4134 = vdwg.mxu0
    %v4135 = vld [vmem:[%s12] sm:$0x1]
    %v4137 = vperm.slane %v4135, 0
    %v4140 = vsel %vm559, %v4086, 0
    %v4143 = vsel %vm559, %v4087, 0
    %v4146 = vsel %vm559, %v4088, 0
    %v4149 = vsel %vm1110, %v4133, 0
    %4151 = vmatpush.msra.mxu0 0.0
    %4152 = vmatpush.msra.mxu0 0.0
    %4153 = vmatpush.msra.mxu0 0.0
    %4154 = vmatpush.msra.mxu0 0.0
    %4155 = vmatpush.msra.mxu0 0.0
    %4156 = vmatpush.msra.mxu0 0.0
    %4157 = vmatpush.msra.mxu0 0.0
    %4158 = vmatpush.msra.mxu0 0.0
    %4159 = vmatpush.msra.mxu0 0.0
    %4160 = vmatpush.msra.mxu0 0.0
    %4161 = vmatpush.msra.mxu0 0.0
    %4162 = vmatpush.msra.mxu0 0.0
    %4163 = vmatpush.msra.mxu0 0.0
    %4164 = vmatpush.msra.mxu0 %v4149
    %4165 = vmatpush.msra.mxu0 %v4130
    %4166 = vmatpush.msra.mxu0 %v4127
    %4167 = vmatmul.f32.gmra.mxu0 %v4140
    %v4168 = vpop.f32.mrf.mxu0
    %v4169 = vadd.f32 %v4137, %v4168
    %4170 = vmatmul.f32.gmra.mxu0 %v4143
    %v4171 = vpop.f32.mrf.mxu0
    %v4172 = vadd.f32 %v4137, %v4171
    %4173 = vmatmul.f32.gmra.mxu0 %v4146
    %v4174 = vpop.f32.mrf.mxu0
    %v4175 = vadd.f32 %v4137, %v4174
    %4176 = vdwg.mxu0
    %v4177 = vmax.f32 %v4169, 0.0
    %v4178 = vmax.f32 %v4172, 0.0
    %v4179 = vmax.f32 %v4175, 0.0
    %vm4180 = vcmask 523264
    %4181 = vst.msk [vmem:[#allocation3] sm:$0xff] %vm4180, %v4177
    %4182 = vst.msk [vmem:[#allocation3 + $0x8] sm:$0xff] %vm4180, %v4178
    %vm4183 = vcmask 519168
    %4184 = vst.msk [vmem:[#allocation3 + $0x10] sm:$0xf] %vm4183, %v4179
    %v4185 = vmul.f32 %v4177, %v4177
    %v4186 = vmul.f32 %v4178, %v4178
    %v4187 = vmul.f32 %v4179, %v4179
    %v4188 = vsel %vm4180, %v4185, 0.0
    %4189 = vadd.xlane.f32.xlu0 %v4188
    %v4190 = vpop.xlane.xlu0 %4189
    %v4191 = vsel %vm4180, %v4186, 0.0
    %4192 = vadd.xlane.f32.xlu0 %v4191
    %v4193 = vpop.xlane.xlu0 %4192
    %v4194 = vsel %vm4183, %v4187, 0.0
    %4195 = vadd.xlane.f32.xlu0 %v4194
    %v4196 = vpop.xlane.xlu0 %4195
    %v4197 = vrsqrt.pop %v4190
    %v4198 = vmul.f32 %v4197, %v4190
    %v4199 = vmul.f32 %v4198, %v4197
    %v4200 = vmul.f32 0.5, %v4199
    %v4201 = vsub.f32 1.5, %v4200
    %v4202 = vmul.f32 %v4197, %v4201
    %v4203 = vmul.f32 %v4190, %v4202
    %vm4204 = vcmp.eq.f32.partialorder %v4190, inf
    %v4205 = vsel %vm4204, %v4190, %v4203
    %vm4206 = vcmp.eq.f32.partialorder %v4190, 0.0
    %v4207 = vand.u32 %v4190, 2147483648
    %v4208 = vsel %vm4206, %v4207, %v4205
    %v4209 = vrsqrt.pop %v4193
    %v4210 = vmul.f32 %v4209, %v4193
    %v4211 = vmul.f32 %v4210, %v4209
    %v4212 = vmul.f32 0.5, %v4211
    %v4213 = vsub.f32 1.5, %v4212
    %v4214 = vmul.f32 %v4209, %v4213
    %v4215 = vmul.f32 %v4193, %v4214
    %vm4216 = vcmp.eq.f32.partialorder %v4193, inf
    %v4217 = vsel %vm4216, %v4193, %v4215
    %vm4218 = vcmp.eq.f32.partialorder %v4193, 0.0
    %v4219 = vand.u32 %v4193, 2147483648
    %v4220 = vsel %vm4218, %v4219, %v4217
    %v4221 = vrsqrt.pop %v4196
    %v4222 = vmul.f32 %v4221, %v4196
    %v4223 = vmul.f32 %v4222, %v4221
    %v4224 = vmul.f32 0.5, %v4223
    %v4225 = vsub.f32 1.5, %v4224
    %v4226 = vmul.f32 %v4221, %v4225
    %v4227 = vmul.f32 %v4196, %v4226
    %vm4228 = vcmp.eq.f32.partialorder %v4196, inf
    %v4229 = vsel %vm4228, %v4196, %v4227
    %vm4230 = vcmp.eq.f32.partialorder %v4196, 0.0
    %v4231 = vand.u32 %v4196, 2147483648
    %v4232 = vsel %vm4230, %v4231, %v4229
    %v4233 = vmax.f32 %v4208, 1e-12
    %v4234 = vmax.f32 %v4220, 1e-12
    %v4235 = vmax.f32 %v4232, 1e-12
    %v4236 = vrcp.pop %v4233
    %v4237 = vmul.f32 %v4233, %v4236
    %v4238 = vsub.f32 1.0, %v4237
    %v4239 = vmul.f32 %v4236, %v4238
    %v4240 = vadd.f32 %v4236, %v4239
    %vm4241 = vweird.f32 %v4233
    %vm4242 = vweird.f32 %v4236
    %vm4243 = vmor %vm4241, %vm4242
    %v4244 = vsel %vm4243, %v4236, %v4240
    %v4245 = vand.u32 2147483647, %v4233
    %vm4246 = vcmp.eq.f32.partialorder %v4245, 8.507059e+37
    %v4247 = vand.u32 %v4233, 2147483648
    %v4248 = vor.u32 1.1754944e-38, %v4247
    %v4249 = vsel %vm4246, %v4248, %v4244
    %v4250 = vmul.f32 %v4177, %v4249
    %v4251 = vrcp.pop %v4234
    %v4252 = vmul.f32 %v4234, %v4251
    %v4253 = vsub.f32 1.0, %v4252
    %v4254 = vmul.f32 %v4251, %v4253
    %v4255 = vadd.f32 %v4251, %v4254
    %vm4256 = vweird.f32 %v4234
    %vm4257 = vweird.f32 %v4251
    %vm4258 = vmor %vm4256, %vm4257
    %v4259 = vsel %vm4258, %v4251, %v4255
    %v4260 = vand.u32 2147483647, %v4234
    %vm4261 = vcmp.eq.f32.partialorder %v4260, 8.507059e+37
    %v4262 = vand.u32 %v4234, 2147483648
    %v4263 = vor.u32 1.1754944e-38, %v4262
    %v4264 = vsel %vm4261, %v4263, %v4259
    %v4265 = vmul.f32 %v4178, %v4264
    %v4266 = vrcp.pop %v4235
    %v4267 = vmul.f32 %v4235, %v4266
    %v4268 = vsub.f32 1.0, %v4267
    %v4269 = vmul.f32 %v4266, %v4268
    %v4270 = vadd.f32 %v4266, %v4269
    %vm4271 = vweird.f32 %v4235
    %vm4272 = vweird.f32 %v4266
    %vm4273 = vmor %vm4271, %vm4272
    %v4274 = vsel %vm4273, %v4266, %v4270
    %v4275 = vand.u32 2147483647, %v4235
    %vm4276 = vcmp.eq.f32.partialorder %v4275, 8.507059e+37
    %v4277 = vand.u32 %v4235, 2147483648
    %v4278 = vor.u32 1.1754944e-38, %v4277
    %v4279 = vsel %vm4276, %v4278, %v4274
    %v4280 = vmul.f32 %v4179, %v4279
    %v4281 = vld [vmem:[%s13] sm:$0xff]
    %v4282 = vld [vmem:[%s13 + $0x8] sm:$0xff]
    %v4284 = vsel %vm4180, %v4250, 0
    %v4287 = vsel %vm4180, %v4265, 0
    %v4290 = vsel %vm4180, %v4280, 0
    %v4293 = vsel %vm4180, %v4281, 0
    %v4296 = vsel %vm4180, %v4282, 0
    %4298 = vmatpush.xpose.msra.mxu0 0.0
    %4299 = vmatpush.xpose.msra.mxu0 0.0
    %4300 = vmatpush.xpose.msra.mxu0 0.0
    %4301 = vmatpush.xpose.msra.mxu0 0.0
    %4302 = vmatpush.xpose.msra.mxu0 0.0
    %4303 = vmatpush.xpose.msra.mxu0 0.0
    %4304 = vmatpush.xpose.msra.mxu0 0.0
    %4305 = vmatpush.xpose.msra.mxu0 0.0
    %4306 = vmatpush.xpose.msra.mxu0 0.0
    %4307 = vmatpush.xpose.msra.mxu0 0.0
    %4308 = vmatpush.xpose.msra.mxu0 0.0
    %4309 = vmatpush.xpose.msra.mxu0 0.0
    %4310 = vmatpush.xpose.msra.mxu0 0.0
    %4311 = vmatpush.xpose.msra.mxu0 0.0
    %4312 = vmatpush.xpose.msra.mxu0 %v4296
    %4313 = vmatpush.xpose.msra.mxu0 %v4293
    %4314 = vmatmul.f32.gmra.mxu0 %v4284
    %v4315 = vpop.f32.mrf.mxu0
    %v4316 = vadd.f32 0.0, %v4315
    %4317 = vmatmul.f32.gmra.mxu0 %v4287
    %v4318 = vpop.f32.mrf.mxu0
    %v4319 = vadd.f32 0.0, %v4318
    %4320 = vmatmul.f32.gmra.mxu0 %v4290
    %v4321 = vpop.f32.mrf.mxu0
    %v4322 = vadd.f32 0.0, %v4321
    %4323 = vdwg.mxu0
    %v4324 = vmul.f32 %v4316, 16.0
    %v4325 = vmul.f32 %v4319, 16.0
    %v4326 = vmul.f32 %v4322, 16.0
    %4327 = vst.msk [vmem:[%s15] sm:$0xff] %vm3087, %v4324
    %4328 = vst.msk [vmem:[%s15 + $0x8] sm:$0xff] %vm3087, %v4325
    %vm4329 = vcmask 125952
    %4330 = vst.msk [vmem:[%s15 + $0x10] sm:$0xf] %vm4329, %v4326
    // Predicated region
    $region58: #{mynet_forward.5} parent=1 // pred_check
      _
    $region59: #{mynet_forward.5} parent=1 // pred_check_branch
      %4332 = sbr.rel (0) target = $region61
    $region60: #{mynet_forward.5} parent=1 // pred_region
      %4334 = vsyncadd [#allocation4], 0
      %s4335 = sshll.u32 [#allocation3], 4
      %s4336 = int_to_ptr.vmem [resolvable:$true] %s4335
      %s4337 = sshll.u32 %s14, 4
      %s4338 = int_to_ptr.hbm [resolvable:$true] %s4337
      %4343 = dma.vmem_to_hbm [thread:$0]  %s4336, 384, %s4338, [#allocation4], 128, 128, 8
    $region61: #{mynet_forward.5} parent=1 // pred_fallthru
      _
    // Predicated region
    $region62: #{mynet_forward.5} parent=1 // pred_check
      _
    $region63: #{mynet_forward.5} parent=1 // pred_check_branch
      %4345 = sbr.rel (0) target = $region65
    $region64: #{mynet_forward.5} parent=1 // pred_region
      _
    $region65: #{mynet_forward.5} parent=1 // pred_fallthru
      _
    // Predicated region
    $region66: #{mynet_forward.5} parent=1 // pred_check
      _
    $region67: #{mynet_forward.5} parent=1 // pred_check_branch
      %4347 = sbr.rel (0) target = $region69
    $region68: #{mynet_forward.5} parent=1 // pred_region
      %4349 = dma.done [#allocation4], 384
    $region69: #{mynet_forward.5} parent=1 // pred_fallthru
      _
    // Predicated region
    $region70: #{mynet_forward.5} parent=1 // pred_check
      _
    $region71: #{mynet_forward.5} parent=1 // pred_check_branch
      %4351 = sbr.rel (0) target = $region73
    $region72: #{mynet_forward.5} parent=1 // pred_region
      _
    $region73: #{mynet_forward.5} parent=1 // pred_fallthru
      _
    %4352 = vsyncpa [#allocation4], 1

// kernel: mynet_forward.3
$region0: #{mynet_forward.3}
  #allocation0 [shape = 'u32[]', space=smem, size = 0x4, offset = 0x4, fixed_abs, tag = 'smem constant byte address 0x4 - core index']
  #allocation1 [shape = 'u32[72,128]{1,0:T(1,128)}', space=vmem, size = 0x9000, scoped, tag = 'internal scratch']
  #allocation2 [shape = 'f32[1,1]{1,0:T(1,128)S(1)}', space=vmem, size = 0x200, scoped, tag = 'scoped memory for mynet_forward.3']
  %s0 = inlined_call_operand.vmem [shape: f32[25,64], index: 0, kind: input, shape index: {}]
  %s1 = inlined_call_operand.vmem [shape: f32[64,32], index: 1, kind: input, shape index: {}]
  %s2 = inlined_call_operand.vmem [shape: f32[1,32], index: 2, kind: input, shape index: {}]
  %s3 = inlined_call_operand.vmem [shape: f32[32,32], index: 3, kind: input, shape index: {}]
  %s4 = inlined_call_operand.vmem [shape: f32[1,32], index: 4, kind: input, shape index: {}]
  %s5 = inlined_call_operand.vmem [shape: f32[32,16], index: 5, kind: input, shape index: {}]
  %s6 = inlined_call_operand.vmem [shape: f32[1,16], index: 6, kind: input, shape index: {}]
  %s7 = inlined_call_operand.vmem [shape: f32[16,16], index: 7, kind: input, shape index: {}]
  %s8 = inlined_call_operand.vmem [shape: f32[1,16], index: 8, kind: input, shape index: {}]
  %s9 = inlined_call_operand.vmem [shape: f32[1,16], index: 9, kind: input, shape index: {}]
  %s10 = inlined_call_operand.<no memory space> [shape: f32[1,1], index: 10, kind: input, shape index: {}]
  %s11 = inlined_call_operand.vmem [shape: f32[64,64], index: 11, kind: input, shape index: {}]
  %s12 = inlined_call_operand.vmem [shape: f32[1,64], index: 12, kind: input, shape index: {}]
  %s13 = inlined_call_operand.vmem [shape: f32[16,64], index: 13, kind: input, shape index: {}]
  %s14 = inlined_call_operand.vmem [shape: f32[25,64], index: 14, kind: output, shape index: {0}]
  %s15 = inlined_call_operand.vmem [shape: f32[25,16], index: 15, kind: output, shape index: {1}]
  %16 = xla_tuple %s14, %s15
  %s17 = sld [smem:[#allocation0]]
  $region74: #{mynet_forward.3} parent=0
    _
  %s19 = ssub.s32 1, %s17
  %s20 = scalar_select 0, %s19, %s17
  %v21 = vstv %s10
  %22 = vst [vmem:[#allocation2] sm:$0x1] %v21
  // Predicated region
  $region2: #{mynet_forward.3} parent=0 // pred_check
    _
  $region3: #{mynet_forward.3} parent=0 // pred_check_branch
    %24 = sbr.rel (0) target = $region5
  $region4: #{mynet_forward.3} parent=0 // pred_region
    _
  $region5: #{mynet_forward.3} parent=0 // pred_fallthru
    _
  // Predicated region
  $region6: #{mynet_forward.3} parent=0 // pred_check
    _
  $region7: #{mynet_forward.3} parent=0 // pred_check_branch
    %26 = sbr.rel (0) target = $region9
  $region8: #{mynet_forward.3} parent=0 // pred_region
    _
  $region9: #{mynet_forward.3} parent=0 // pred_fallthru
    _
  // Predicated region
  $region10: #{mynet_forward.3} parent=0 // pred_check
    _
  $region11: #{mynet_forward.3} parent=0 // pred_check_branch
    %28 = sbr.rel (0) target = $region13
  $region12: #{mynet_forward.3} parent=0 // pred_region
    _
  $region13: #{mynet_forward.3} parent=0 // pred_fallthru
    _
  // Predicated region
  $region14: #{mynet_forward.3} parent=0 // pred_check
    _
  $region15: #{mynet_forward.3} parent=0 // pred_check_branch
    %30 = sbr.rel (0) target = $region17
  $region16: #{mynet_forward.3} parent=0 // pred_region
    _
  $region17: #{mynet_forward.3} parent=0 // pred_fallthru
    _
  // Predicated region
  $region18: #{mynet_forward.3} parent=0 // pred_check
    _
  $region19: #{mynet_forward.3} parent=0 // pred_check_branch
    %32 = sbr.rel (0) target = $region21
  $region20: #{mynet_forward.3} parent=0 // pred_region
    _
  $region21: #{mynet_forward.3} parent=0 // pred_fallthru
    _
  // Predicated region
  $region22: #{mynet_forward.3} parent=0 // pred_check
    _
  $region23: #{mynet_forward.3} parent=0 // pred_check_branch
    %34 = sbr.rel (0) target = $region25
  $region24: #{mynet_forward.3} parent=0 // pred_region
    _
  $region25: #{mynet_forward.3} parent=0 // pred_fallthru
    _
  // Predicated region
  $region26: #{mynet_forward.3} parent=0 // pred_check
    _
  $region27: #{mynet_forward.3} parent=0 // pred_check_branch
    %36 = sbr.rel (0) target = $region29
  $region28: #{mynet_forward.3} parent=0 // pred_region
    _
  $region29: #{mynet_forward.3} parent=0 // pred_fallthru
    _
  // Predicated region
  $region30: #{mynet_forward.3} parent=0 // pred_check
    _
  $region31: #{mynet_forward.3} parent=0 // pred_check_branch
    %38 = sbr.rel (0) target = $region33
  $region32: #{mynet_forward.3} parent=0 // pred_region
    _
  $region33: #{mynet_forward.3} parent=0 // pred_fallthru
    _
  // Predicated region
  $region34: #{mynet_forward.3} parent=0 // pred_check
    _
  $region35: #{mynet_forward.3} parent=0 // pred_check_branch
    %40 = sbr.rel (0) target = $region37
  $region36: #{mynet_forward.3} parent=0 // pred_region
    _
  $region37: #{mynet_forward.3} parent=0 // pred_fallthru
    _
  // Predicated region
  $region38: #{mynet_forward.3} parent=0 // pred_check
    _
  $region39: #{mynet_forward.3} parent=0 // pred_check_branch
    %42 = sbr.rel (0) target = $region41
  $region40: #{mynet_forward.3} parent=0 // pred_region
    _
  $region41: #{mynet_forward.3} parent=0 // pred_fallthru
    _
  // Predicated region
  $region42: #{mynet_forward.3} parent=0 // pred_check
    _
  $region43: #{mynet_forward.3} parent=0 // pred_check_branch
    %44 = sbr.rel (0) target = $region45
  $region44: #{mynet_forward.3} parent=0 // pred_region
    _
  $region45: #{mynet_forward.3} parent=0 // pred_fallthru
    _
  // Predicated region
  $region46: #{mynet_forward.3} parent=0 // pred_check
    _
  $region47: #{mynet_forward.3} parent=0 // pred_check_branch
    %46 = sbr.rel (0) target = $region49
  $region48: #{mynet_forward.3} parent=0 // pred_region
    _
  $region49: #{mynet_forward.3} parent=0 // pred_fallthru
    _
  // Predicated region
  $region50: #{mynet_forward.3} parent=0 // pred_check
    _
  $region51: #{mynet_forward.3} parent=0 // pred_check_branch
    %48 = sbr.rel (0) target = $region53
  $region52: #{mynet_forward.3} parent=0 // pred_region
    _
  $region53: #{mynet_forward.3} parent=0 // pred_fallthru
    _
  // Predicated region
  $region54: #{mynet_forward.3} parent=0 // pred_check
    _
  $region55: #{mynet_forward.3} parent=0 // pred_check_branch
    %50 = sbr.rel (0) target = $region57
  $region56: #{mynet_forward.3} parent=0 // pred_region
    _
  $region57: #{mynet_forward.3} parent=0 // pred_fallthru
    _
  %v51 = vld [vmem:[%s0] sm:$0xff]
  %v52 = vld [vmem:[%s0 + $0x8] sm:$0xff]
  %v53 = vld [vmem:[%s0 + $0x10] sm:$0xff]
  %v54 = vld [vmem:[%s0 + $0x18] sm:$0x1]
  %v55 = vmul.f32 %v51, %v51
  %v56 = vmul.f32 %v52, %v52
  %v57 = vmul.f32 %v53, %v53
  %v58 = vmul.f32 %v54, %v54
  %vm59 = vcmask 523264
  %v60 = vsel %vm59, %v55, 0.0
  %61 = vadd.xlane.f32.xlu0 %v60
  %v62 = vpop.xlane.xlu0 %61
  %v63 = vsel %vm59, %v56, 0.0
  %64 = vadd.xlane.f32.xlu0 %v63
  %v65 = vpop.xlane.xlu0 %64
  %v66 = vsel %vm59, %v57, 0.0
  %67 = vadd.xlane.f32.xlu0 %v66
  %v68 = vpop.xlane.xlu0 %67
  %vm69 = vcmask 516096
  %v70 = vsel %vm69, %v58, 0.0
  %71 = vadd.xlane.f32.xlu0 %v70
  %v72 = vpop.xlane.xlu0 %71
  %v73 = vrsqrt.pop %v62
  %v74 = vmul.f32 %v73, %v62
  %v75 = vmul.f32 %v74, %v73
  %v76 = vmul.f32 0.5, %v75
  %v77 = vsub.f32 1.5, %v76
  %v78 = vmul.f32 %v73, %v77
  %v79 = vmul.f32 %v62, %v78
  %vm80 = vcmp.eq.f32.partialorder %v62, inf
  %v81 = vsel %vm80, %v62, %v79
  %vm82 = vcmp.eq.f32.partialorder %v62, 0.0
  %v83 = vand.u32 %v62, 2147483648
  %v84 = vsel %vm82, %v83, %v81
  %v85 = vrsqrt.pop %v65
  %v86 = vmul.f32 %v85, %v65
  %v87 = vmul.f32 %v86, %v85
  %v88 = vmul.f32 0.5, %v87
  %v89 = vsub.f32 1.5, %v88
  %v90 = vmul.f32 %v85, %v89
  %v91 = vmul.f32 %v65, %v90
  %vm92 = vcmp.eq.f32.partialorder %v65, inf
  %v93 = vsel %vm92, %v65, %v91
  %vm94 = vcmp.eq.f32.partialorder %v65, 0.0
  %v95 = vand.u32 %v65, 2147483648
  %v96 = vsel %vm94, %v95, %v93
  %v97 = vrsqrt.pop %v68
  %v98 = vmul.f32 %v97, %v68
  %v99 = vmul.f32 %v98, %v97
  %v100 = vmul.f32 0.5, %v99
  %v101 = vsub.f32 1.5, %v100
  %v102 = vmul.f32 %v97, %v101
  %v103 = vmul.f32 %v68, %v102
  %vm104 = vcmp.eq.f32.partialorder %v68, inf
  %v105 = vsel %vm104, %v68, %v103
  %vm106 = vcmp.eq.f32.partialorder %v68, 0.0
  %v107 = vand.u32 %v68, 2147483648
  %v108 = vsel %vm106, %v107, %v105
  %v109 = vrsqrt.pop %v72
  %v110 = vmul.f32 %v109, %v72
  %v111 = vmul.f32 %v110, %v109
  %v112 = vmul.f32 0.5, %v111
  %v113 = vsub.f32 1.5, %v112
  %v114 = vmul.f32 %v109, %v113
  %v115 = vmul.f32 %v72, %v114
  %vm116 = vcmp.eq.f32.partialorder %v72, inf
  %v117 = vsel %vm116, %v72, %v115
  %vm118 = vcmp.eq.f32.partialorder %v72, 0.0
  %v119 = vand.u32 %v72, 2147483648
  %v120 = vsel %vm118, %v119, %v117
  %v121 = vmax.f32 %v84, 1e-12
  %v122 = vmax.f32 %v96, 1e-12
  %v123 = vmax.f32 %v108, 1e-12
  %v124 = vmax.f32 %v120, 1e-12
  %v125 = vrcp.pop %v121
  %v126 = vmul.f32 %v121, %v125
  %v127 = vsub.f32 1.0, %v126
  %v128 = vmul.f32 %v125, %v127
  %v129 = vadd.f32 %v125, %v128
  %vm130 = vweird.f32 %v121
  %vm131 = vweird.f32 %v125
  %vm132 = vmor %vm130, %vm131
  %v133 = vsel %vm132, %v125, %v129
  %v134 = vand.u32 2147483647, %v121
  %vm135 = vcmp.eq.f32.partialorder %v134, 8.507059e+37
  %v136 = vand.u32 %v121, 2147483648
  %v137 = vor.u32 1.1754944e-38, %v136
  %v138 = vsel %vm135, %v137, %v133
  %v139 = vmul.f32 %v51, %v138
  %v140 = vrcp.pop %v122
  %v141 = vmul.f32 %v122, %v140
  %v142 = vsub.f32 1.0, %v141
  %v143 = vmul.f32 %v140, %v142
  %v144 = vadd.f32 %v140, %v143
  %vm145 = vweird.f32 %v122
  %vm146 = vweird.f32 %v140
  %vm147 = vmor %vm145, %vm146
  %v148 = vsel %vm147, %v140, %v144
  %v149 = vand.u32 2147483647, %v122
  %vm150 = vcmp.eq.f32.partialorder %v149, 8.507059e+37
  %v151 = vand.u32 %v122, 2147483648
  %v152 = vor.u32 1.1754944e-38, %v151
  %v153 = vsel %vm150, %v152, %v148
  %v154 = vmul.f32 %v52, %v153
  %v155 = vrcp.pop %v123
  %v156 = vmul.f32 %v123, %v155
  %v157 = vsub.f32 1.0, %v156
  %v158 = vmul.f32 %v155, %v157
  %v159 = vadd.f32 %v155, %v158
  %vm160 = vweird.f32 %v123
  %vm161 = vweird.f32 %v155
  %vm162 = vmor %vm160, %vm161
  %v163 = vsel %vm162, %v155, %v159
  %v164 = vand.u32 2147483647, %v123
  %vm165 = vcmp.eq.f32.partialorder %v164, 8.507059e+37
  %v166 = vand.u32 %v123, 2147483648
  %v167 = vor.u32 1.1754944e-38, %v166
  %v168 = vsel %vm165, %v167, %v163
  %v169 = vmul.f32 %v53, %v168
  %v170 = vrcp.pop %v124
  %v171 = vmul.f32 %v124, %v170
  %v172 = vsub.f32 1.0, %v171
  %v173 = vmul.f32 %v170, %v172
  %v174 = vadd.f32 %v170, %v173
  %vm175 = vweird.f32 %v124
  %vm176 = vweird.f32 %v170
  %vm177 = vmor %vm175, %vm176
  %v178 = vsel %vm177, %v170, %v174
  %v179 = vand.u32 2147483647, %v124
  %vm180 = vcmp.eq.f32.partialorder %v179, 8.507059e+37
  %v181 = vand.u32 %v124, 2147483648
  %v182 = vor.u32 1.1754944e-38, %v181
  %v183 = vsel %vm180, %v182, %v178
  %v184 = vmul.f32 %v54, %v183
  %v185 = vlaneseq
  %v186 = vshrl.u32 %v185, 7
  %v187 = vadd.s32 %v186, 8
  %v188 = vadd.s32 %v186, 16
  %v189 = vadd.s32 %v186, 24
  %v190 = vadd.s32 %v186, 32
  %v191 = vadd.s32 %v186, 40
  %v192 = vadd.s32 %v186, 48
  %v193 = vadd.s32 %v186, 56
  %v194 = vadd.s32 %v186, 64
  %v195 = vadd.s32 %v186, 72
  %v196 = vadd.s32 %v186, 80
  %v197 = vadd.s32 %v186, 88
  %v198 = vadd.s32 %v186, 96
  %v199 = vadd.s32 %v186, 104
  %v200 = vadd.s32 %v186, 112
  %v201 = vadd.s32 %v186, 120
  %v202 = vadd.s32 %v186, 128
  %v203 = vadd.s32 %v186, 136
  %v204 = vadd.s32 %v186, 144
  %v205 = vadd.s32 %v186, 152
  %v206 = vadd.s32 %v186, 160
  %v207 = vadd.s32 %v186, 168
  %v208 = vadd.s32 %v186, 176
  %v209 = vadd.s32 %v186, 184
  %v210 = vadd.s32 %v186, 192
  %v211 = vadd.s32 %v186, 200
  %v212 = vadd.s32 %v186, 208
  %v213 = vadd.s32 %v186, 216
  %v214 = vadd.s32 %v186, 224
  %v215 = vadd.s32 %v186, 232
  %v216 = vadd.s32 %v186, 240
  %v217 = vadd.s32 %v186, 248
  %v218 = vadd.s32 %v186, 256
  %v219 = vadd.s32 %v186, 264
  %v220 = vadd.s32 %v186, 272
  %v221 = vadd.s32 %v186, 280
  %v222 = vadd.s32 %v186, 288
  %v223 = vadd.s32 %v186, 296
  %v224 = vadd.s32 %v186, 304
  %v225 = vadd.s32 %v186, 312
  %v226 = vadd.s32 %v186, 320
  %v227 = vadd.s32 %v186, 328
  %v228 = vadd.s32 %v186, 336
  %v229 = vadd.s32 %v186, 344
  %v230 = vadd.s32 %v186, 352
  %v231 = vadd.s32 %v186, 360
  %v232 = vadd.s32 %v186, 368
  %v233 = vadd.s32 %v186, 376
  %v234 = vadd.s32 %v186, 384
  %v235 = vadd.s32 %v186, 392
  %v236 = vadd.s32 %v186, 400
  %v237 = vadd.s32 %v186, 408
  %v238 = vadd.s32 %v186, 416
  %v239 = vadd.s32 %v186, 424
  %v240 = vadd.s32 %v186, 432
  %v241 = vadd.s32 %v186, 440
  %v242 = vadd.s32 %v186, 448
  %v243 = vadd.s32 %v186, 456
  %v244 = vadd.s32 %v186, 464
  %v245 = vadd.s32 %v186, 472
  %v246 = vadd.s32 %v186, 480
  %v247 = vadd.s32 %v186, 488
  %v248 = vadd.s32 %v186, 496
  %v249 = vadd.s32 %v186, 504
  %v250 = vadd.s32 %v186, 512
  %v251 = vadd.s32 %v186, 520
  %v252 = vadd.s32 %v186, 528
  %v253 = vadd.s32 %v186, 536
  %v254 = vadd.s32 %v186, 544
  %v255 = vadd.s32 %v186, 552
  %v256 = vadd.s32 %v186, 560
  %v257 = vadd.s32 %v186, 568
  %v258 = vadd.s32 %v186, 576
  %v259 = vadd.s32 %v186, 584
  %v260 = vadd.s32 %v186, 592
  %v261 = vadd.s32 %v186, 600
  %v262 = vadd.s32 %v186, 608
  %v263 = vadd.s32 %v186, 616
  %v264 = vadd.s32 %v186, 624
  %v265 = vlaneseq
  %v266 = vand.u32 %v265, 127
  %v267 = vcvt.s32.f32 %v186
  %v268 = vcvt.s32.f32 %v187
  %v269 = vcvt.s32.f32 %v188
  %v270 = vcvt.s32.f32 %v189
  %v271 = vcvt.s32.f32 %v190
  %v272 = vcvt.s32.f32 %v191
  %v273 = vcvt.s32.f32 %v192
  %v274 = vcvt.s32.f32 %v193
  %v275 = vcvt.s32.f32 %v194
  %v276 = vcvt.s32.f32 %v195
  %v277 = vcvt.s32.f32 %v196
  %v278 = vcvt.s32.f32 %v197
  %v279 = vcvt.s32.f32 %v198
  %v280 = vcvt.s32.f32 %v199
  %v281 = vcvt.s32.f32 %v200
  %v282 = vcvt.s32.f32 %v201
  %v283 = vcvt.s32.f32 %v202
  %v284 = vcvt.s32.f32 %v203
  %v285 = vcvt.s32.f32 %v204
  %v286 = vcvt.s32.f32 %v205
  %v287 = vcvt.s32.f32 %v206
  %v288 = vcvt.s32.f32 %v207
  %v289 = vcvt.s32.f32 %v208
  %v290 = vcvt.s32.f32 %v209
  %v291 = vcvt.s32.f32 %v210
  %v292 = vcvt.s32.f32 %v211
  %v293 = vcvt.s32.f32 %v212
  %v294 = vcvt.s32.f32 %v213
  %v295 = vcvt.s32.f32 %v214
  %v296 = vcvt.s32.f32 %v215
  %v297 = vcvt.s32.f32 %v216
  %v298 = vcvt.s32.f32 %v217
  %v299 = vcvt.s32.f32 %v218
  %v300 = vcvt.s32.f32 %v219
  %v301 = vcvt.s32.f32 %v220
  %v302 = vcvt.s32.f32 %v221
  %v303 = vcvt.s32.f32 %v222
  %v304 = vcvt.s32.f32 %v223
  %v305 = vcvt.s32.f32 %v224
  %v306 = vcvt.s32.f32 %v225
  %v307 = vcvt.s32.f32 %v226
  %v308 = vcvt.s32.f32 %v227
  %v309 = vcvt.s32.f32 %v228
  %v310 = vcvt.s32.f32 %v229
  %v311 = vcvt.s32.f32 %v230
  %v312 = vcvt.s32.f32 %v231
  %v313 = vcvt.s32.f32 %v232
  %v314 = vcvt.s32.f32 %v233
  %v315 = vcvt.s32.f32 %v234
  %v316 = vcvt.s32.f32 %v235
  %v317 = vcvt.s32.f32 %v236
  %v318 = vcvt.s32.f32 %v237
  %v319 = vcvt.s32.f32 %v238
  %v320 = vcvt.s32.f32 %v239
  %v321 = vcvt.s32.f32 %v240
  %v322 = vcvt.s32.f32 %v241
  %v323 = vcvt.s32.f32 %v242
  %v324 = vcvt.s32.f32 %v243
  %v325 = vcvt.s32.f32 %v244
  %v326 = vcvt.s32.f32 %v245
  %v327 = vcvt.s32.f32 %v246
  %v328 = vcvt.s32.f32 %v247
  %v329 = vcvt.s32.f32 %v248
  %v330 = vcvt.s32.f32 %v249
  %v331 = vcvt.s32.f32 %v250
  %v332 = vcvt.s32.f32 %v251
  %v333 = vcvt.s32.f32 %v252
  %v334 = vcvt.s32.f32 %v253
  %v335 = vcvt.s32.f32 %v254
  %v336 = vcvt.s32.f32 %v255
  %v337 = vcvt.s32.f32 %v256
  %v338 = vcvt.s32.f32 %v257
  %v339 = vcvt.s32.f32 %v258
  %v340 = vcvt.s32.f32 %v259
  %v341 = vcvt.s32.f32 %v260
  %v342 = vcvt.s32.f32 %v261
  %v343 = vcvt.s32.f32 %v262
  %v344 = vcvt.s32.f32 %v263
  %v345 = vcvt.s32.f32 %v264
  %v346 = vcvt.s32.f32 %v266
  %v347 = vmul.u32 %v266, 25
  %vm348 = vcmp.ge.s32.totalorder %v186, %v347
  %vm349 = vcmp.ge.s32.totalorder %v187, %v347
  %vm350 = vcmp.ge.s32.totalorder %v188, %v347
  %vm351 = vcmp.ge.s32.totalorder %v189, %v347
  %vm352 = vcmp.ge.s32.totalorder %v190, %v347
  %vm353 = vcmp.ge.s32.totalorder %v191, %v347
  %vm354 = vcmp.ge.s32.totalorder %v192, %v347
  %vm355 = vcmp.ge.s32.totalorder %v193, %v347
  %vm356 = vcmp.ge.s32.totalorder %v194, %v347
  %vm357 = vcmp.ge.s32.totalorder %v195, %v347
  %vm358 = vcmp.ge.s32.totalorder %v196, %v347
  %vm359 = vcmp.ge.s32.totalorder %v197, %v347
  %vm360 = vcmp.ge.s32.totalorder %v198, %v347
  %vm361 = vcmp.ge.s32.totalorder %v199, %v347
  %vm362 = vcmp.ge.s32.totalorder %v200, %v347
  %vm363 = vcmp.ge.s32.totalorder %v201, %v347
  %vm364 = vcmp.ge.s32.totalorder %v202, %v347
  %vm365 = vcmp.ge.s32.totalorder %v203, %v347
  %vm366 = vcmp.ge.s32.totalorder %v204, %v347
  %vm367 = vcmp.ge.s32.totalorder %v205, %v347
  %vm368 = vcmp.ge.s32.totalorder %v206, %v347
  %vm369 = vcmp.ge.s32.totalorder %v207, %v347
  %vm370 = vcmp.ge.s32.totalorder %v208, %v347
  %vm371 = vcmp.ge.s32.totalorder %v209, %v347
  %vm372 = vcmp.ge.s32.totalorder %v210, %v347
  %vm373 = vcmp.ge.s32.totalorder %v211, %v347
  %vm374 = vcmp.ge.s32.totalorder %v212, %v347
  %vm375 = vcmp.ge.s32.totalorder %v213, %v347
  %vm376 = vcmp.ge.s32.totalorder %v214, %v347
  %vm377 = vcmp.ge.s32.totalorder %v215, %v347
  %vm378 = vcmp.ge.s32.totalorder %v216, %v347
  %vm379 = vcmp.ge.s32.totalorder %v217, %v347
  %vm380 = vcmp.ge.s32.totalorder %v218, %v347
  %vm381 = vcmp.ge.s32.totalorder %v219, %v347
  %vm382 = vcmp.ge.s32.totalorder %v220, %v347
  %vm383 = vcmp.ge.s32.totalorder %v221, %v347
  %vm384 = vcmp.ge.s32.totalorder %v222, %v347
  %vm385 = vcmp.ge.s32.totalorder %v223, %v347
  %vm386 = vcmp.ge.s32.totalorder %v224, %v347
  %vm387 = vcmp.ge.s32.totalorder %v225, %v347
  %vm388 = vcmp.ge.s32.totalorder %v226, %v347
  %vm389 = vcmp.ge.s32.totalorder %v227, %v347
  %vm390 = vcmp.ge.s32.totalorder %v228, %v347
  %vm391 = vcmp.ge.s32.totalorder %v229, %v347
  %vm392 = vcmp.ge.s32.totalorder %v230, %v347
  %vm393 = vcmp.ge.s32.totalorder %v231, %v347
  %vm394 = vcmp.ge.s32.totalorder %v232, %v347
  %vm395 = vcmp.ge.s32.totalorder %v233, %v347
  %vm396 = vcmp.ge.s32.totalorder %v234, %v347
  %vm397 = vcmp.ge.s32.totalorder %v235, %v347
  %vm398 = vcmp.ge.s32.totalorder %v236, %v347
  %vm399 = vcmp.ge.s32.totalorder %v237, %v347
  %vm400 = vcmp.ge.s32.totalorder %v238, %v347
  %vm401 = vcmp.ge.s32.totalorder %v239, %v347
  %vm402 = vcmp.ge.s32.totalorder %v240, %v347
  %vm403 = vcmp.ge.s32.totalorder %v241, %v347
  %vm404 = vcmp.ge.s32.totalorder %v242, %v347
  %vm405 = vcmp.ge.s32.totalorder %v243, %v347
  %vm406 = vcmp.ge.s32.totalorder %v244, %v347
  %vm407 = vcmp.ge.s32.totalorder %v245, %v347
  %vm408 = vcmp.ge.s32.totalorder %v246, %v347
  %vm409 = vcmp.ge.s32.totalorder %v247, %v347
  %vm410 = vcmp.ge.s32.totalorder %v248, %v347
  %vm411 = vcmp.ge.s32.totalorder %v249, %v347
  %vm412 = vcmp.ge.s32.totalorder %v250, %v347
  %vm413 = vcmp.ge.s32.totalorder %v251, %v347
  %vm414 = vcmp.ge.s32.totalorder %v252, %v347
  %vm415 = vcmp.ge.s32.totalorder %v253, %v347
  %vm416 = vcmp.ge.s32.totalorder %v254, %v347
  %vm417 = vcmp.ge.s32.totalorder %v255, %v347
  %vm418 = vcmp.ge.s32.totalorder %v256, %v347
  %vm419 = vcmp.ge.s32.totalorder %v257, %v347
  %vm420 = vcmp.ge.s32.totalorder %v258, %v347
  %vm421 = vcmp.ge.s32.totalorder %v259, %v347
  %vm422 = vcmp.ge.s32.totalorder %v260, %v347
  %vm423 = vcmp.ge.s32.totalorder %v261, %v347
  %vm424 = vcmp.ge.s32.totalorder %v262, %v347
  %vm425 = vcmp.ge.s32.totalorder %v263, %v347
  %vm426 = vcmp.ge.s32.totalorder %v264, %v347
  %v427 = vadd.s32 %v347, 25
  %vm428 = vcmp.lt.s32.totalorder %v186, %v427
  %vm429 = vcmp.lt.s32.totalorder %v187, %v427
  %vm430 = vcmp.lt.s32.totalorder %v188, %v427
  %vm431 = vcmp.lt.s32.totalorder %v189, %v427
  %vm432 = vcmp.lt.s32.totalorder %v190, %v427
  %vm433 = vcmp.lt.s32.totalorder %v191, %v427
  %vm434 = vcmp.lt.s32.totalorder %v192, %v427
  %vm435 = vcmp.lt.s32.totalorder %v193, %v427
  %vm436 = vcmp.lt.s32.totalorder %v194, %v427
  %vm437 = vcmp.lt.s32.totalorder %v195, %v427
  %vm438 = vcmp.lt.s32.totalorder %v196, %v427
  %vm439 = vcmp.lt.s32.totalorder %v197, %v427
  %vm440 = vcmp.lt.s32.totalorder %v198, %v427
  %vm441 = vcmp.lt.s32.totalorder %v199, %v427
  %vm442 = vcmp.lt.s32.totalorder %v200, %v427
  %vm443 = vcmp.lt.s32.totalorder %v201, %v427
  %vm444 = vcmp.lt.s32.totalorder %v202, %v427
  %vm445 = vcmp.lt.s32.totalorder %v203, %v427
  %vm446 = vcmp.lt.s32.totalorder %v204, %v427
  %vm447 = vcmp.lt.s32.totalorder %v205, %v427
  %vm448 = vcmp.lt.s32.totalorder %v206, %v427
  %vm449 = vcmp.lt.s32.totalorder %v207, %v427
  %vm450 = vcmp.lt.s32.totalorder %v208, %v427
  %vm451 = vcmp.lt.s32.totalorder %v209, %v427
  %vm452 = vcmp.lt.s32.totalorder %v210, %v427
  %vm453 = vcmp.lt.s32.totalorder %v211, %v427
  %vm454 = vcmp.lt.s32.totalorder %v212, %v427
  %vm455 = vcmp.lt.s32.totalorder %v213, %v427
  %vm456 = vcmp.lt.s32.totalorder %v214, %v427
  %vm457 = vcmp.lt.s32.totalorder %v215, %v427
  %vm458 = vcmp.lt.s32.totalorder %v216, %v427
  %vm459 = vcmp.lt.s32.totalorder %v217, %v427
  %vm460 = vcmp.lt.s32.totalorder %v218, %v427
  %vm461 = vcmp.lt.s32.totalorder %v219, %v427
  %vm462 = vcmp.lt.s32.totalorder %v220, %v427
  %vm463 = vcmp.lt.s32.totalorder %v221, %v427
  %vm464 = vcmp.lt.s32.totalorder %v222, %v427
  %vm465 = vcmp.lt.s32.totalorder %v223, %v427
  %vm466 = vcmp.lt.s32.totalorder %v224, %v427
  %vm467 = vcmp.lt.s32.totalorder %v225, %v427
  %vm468 = vcmp.lt.s32.totalorder %v226, %v427
  %vm469 = vcmp.lt.s32.totalorder %v227, %v427
  %vm470 = vcmp.lt.s32.totalorder %v228, %v427
  %vm471 = vcmp.lt.s32.totalorder %v229, %v427
  %vm472 = vcmp.lt.s32.totalorder %v230, %v427
  %vm473 = vcmp.lt.s32.totalorder %v231, %v427
  %vm474 = vcmp.lt.s32.totalorder %v232, %v427
  %vm475 = vcmp.lt.s32.totalorder %v233, %v427
  %vm476 = vcmp.lt.s32.totalorder %v234, %v427
  %vm477 = vcmp.lt.s32.totalorder %v235, %v427
  %vm478 = vcmp.lt.s32.totalorder %v236, %v427
  %vm479 = vcmp.lt.s32.totalorder %v237, %v427
  %vm480 = vcmp.lt.s32.totalorder %v238, %v427
  %vm481 = vcmp.lt.s32.totalorder %v239, %v427
  %vm482 = vcmp.lt.s32.totalorder %v240, %v427
  %vm483 = vcmp.lt.s32.totalorder %v241, %v427
  %vm484 = vcmp.lt.s32.totalorder %v242, %v427
  %vm485 = vcmp.lt.s32.totalorder %v243, %v427
  %vm486 = vcmp.lt.s32.totalorder %v244, %v427
  %vm487 = vcmp.lt.s32.totalorder %v245, %v427
  %vm488 = vcmp.lt.s32.totalorder %v246, %v427
  %vm489 = vcmp.lt.s32.totalorder %v247, %v427
  %vm490 = vcmp.lt.s32.totalorder %v248, %v427
  %vm491 = vcmp.lt.s32.totalorder %v249, %v427
  %vm492 = vcmp.lt.s32.totalorder %v250, %v427
  %vm493 = vcmp.lt.s32.totalorder %v251, %v427
  %vm494 = vcmp.lt.s32.totalorder %v252, %v427
  %vm495 = vcmp.lt.s32.totalorder %v253, %v427
  %vm496 = vcmp.lt.s32.totalorder %v254, %v427
  %vm497 = vcmp.lt.s32.totalorder %v255, %v427
  %vm498 = vcmp.lt.s32.totalorder %v256, %v427
  %vm499 = vcmp.lt.s32.totalorder %v257, %v427
  %vm500 = vcmp.lt.s32.totalorder %v258, %v427
  %vm501 = vcmp.lt.s32.totalorder %v259, %v427
  %vm502 = vcmp.lt.s32.totalorder %v260, %v427
  %vm503 = vcmp.lt.s32.totalorder %v261, %v427
  %vm504 = vcmp.lt.s32.totalorder %v262, %v427
  %vm505 = vcmp.lt.s32.totalorder %v263, %v427
  %vm506 = vcmp.lt.s32.totalorder %v264, %v427
  %vm507 = vmand %vm348, %vm428
  %vm508 = vmand %vm349, %vm429
  %vm509 = vmand %vm350, %vm430
  %vm510 = vmand %vm351, %vm431
  %vm511 = vmand %vm352, %vm432
  %vm512 = vmand %vm353, %vm433
  %vm513 = vmand %vm354, %vm434
  %vm514 = vmand %vm355, %vm435
  %vm515 = vmand %vm356, %vm436
  %vm516 = vmand %vm357, %vm437
  %vm517 = vmand %vm358, %vm438
  %vm518 = vmand %vm359, %vm439
  %vm519 = vmand %vm360, %vm440
  %vm520 = vmand %vm361, %vm441
  %vm521 = vmand %vm362, %vm442
  %vm522 = vmand %vm363, %vm443
  %vm523 = vmand %vm364, %vm444
  %vm524 = vmand %vm365, %vm445
  %vm525 = vmand %vm366, %vm446
  %vm526 = vmand %vm367, %vm447
  %vm527 = vmand %vm368, %vm448
  %vm528 = vmand %vm369, %vm449
  %vm529 = vmand %vm370, %vm450
  %vm530 = vmand %vm371, %vm451
  %vm531 = vmand %vm372, %vm452
  %vm532 = vmand %vm373, %vm453
  %vm533 = vmand %vm374, %vm454
  %vm534 = vmand %vm375, %vm455
  %vm535 = vmand %vm376, %vm456
  %vm536 = vmand %vm377, %vm457
  %vm537 = vmand %vm378, %vm458
  %vm538 = vmand %vm379, %vm459
  %vm539 = vmand %vm380, %vm460
  %vm540 = vmand %vm381, %vm461
  %vm541 = vmand %vm382, %vm462
  %vm542 = vmand %vm383, %vm463
  %vm543 = vmand %vm384, %vm464
  %vm544 = vmand %vm385, %vm465
  %vm545 = vmand %vm386, %vm466
  %vm546 = vmand %vm387, %vm467
  %vm547 = vmand %vm388, %vm468
  %vm548 = vmand %vm389, %vm469
  %vm549 = vmand %vm390, %vm470
  %vm550 = vmand %vm391, %vm471
  %vm551 = vmand %vm392, %vm472
  %vm552 = vmand %vm393, %vm473
  %vm553 = vmand %vm394, %vm474
  %vm554 = vmand %vm395, %vm475
  %vm555 = vmand %vm396, %vm476
  %vm556 = vmand %vm397, %vm477
  %vm557 = vmand %vm398, %vm478
  %vm558 = vmand %vm399, %vm479
  %vm559 = vmand %vm400, %vm480
  %vm560 = vmand %vm401, %vm481
  %vm561 = vmand %vm402, %vm482
  %vm562 = vmand %vm403, %vm483
  %vm563 = vmand %vm404, %vm484
  %vm564 = vmand %vm405, %vm485
  %vm565 = vmand %vm406, %vm486
  %vm566 = vmand %vm407, %vm487
  %vm567 = vmand %vm408, %vm488
  %vm568 = vmand %vm409, %vm489
  %vm569 = vmand %vm410, %vm490
  %vm570 = vmand %vm411, %vm491
  %vm571 = vmand %vm412, %vm492
  %vm572 = vmand %vm413, %vm493
  %vm573 = vmand %vm414, %vm494
  %vm574 = vmand %vm415, %vm495
  %vm575 = vmand %vm416, %vm496
  %vm576 = vmand %vm417, %vm497
  %vm577 = vmand %vm418, %vm498
  %vm578 = vmand %vm419, %vm499
  %vm579 = vmand %vm420, %vm500
  %vm580 = vmand %vm421, %vm501
  %vm581 = vmand %vm422, %vm502
  %vm582 = vmand %vm423, %vm503
  %vm583 = vmand %vm424, %vm504
  %vm584 = vmand %vm425, %vm505
  %vm585 = vmand %vm426, %vm506
  %v586 = vsel %vm507, 1, 0
  %v587 = vsel %vm508, 1, 0
  %v588 = vsel %vm509, 1, 0
  %v589 = vsel %vm510, 1, 0
  %v590 = vsel %vm511, 1, 0
  %v591 = vsel %vm512, 1, 0
  %v592 = vsel %vm513, 1, 0
  %v593 = vsel %vm514, 1, 0
  %v594 = vsel %vm515, 1, 0
  %v595 = vsel %vm516, 1, 0
  %v596 = vsel %vm517, 1, 0
  %v597 = vsel %vm518, 1, 0
  %v598 = vsel %vm519, 1, 0
  %v599 = vsel %vm520, 1, 0
  %v600 = vsel %vm521, 1, 0
  %v601 = vsel %vm522, 1, 0
  %v602 = vsel %vm523, 1, 0
  %v603 = vsel %vm524, 1, 0
  %v604 = vsel %vm525, 1, 0
  %v605 = vsel %vm526, 1, 0
  %v606 = vsel %vm527, 1, 0
  %v607 = vsel %vm528, 1, 0
  %v608 = vsel %vm529, 1, 0
  %v609 = vsel %vm530, 1, 0
  %v610 = vsel %vm531, 1, 0
  %v611 = vsel %vm532, 1, 0
  %v612 = vsel %vm533, 1, 0
  %v613 = vsel %vm534, 1, 0
  %v614 = vsel %vm535, 1, 0
  %v615 = vsel %vm536, 1, 0
  %v616 = vsel %vm537, 1, 0
  %v617 = vsel %vm538, 1, 0
  %v618 = vsel %vm539, 1, 0
  %v619 = vsel %vm540, 1, 0
  %v620 = vsel %vm541, 1, 0
  %v621 = vsel %vm542, 1, 0
  %v622 = vsel %vm543, 1, 0
  %v623 = vsel %vm544, 1, 0
  %v624 = vsel %vm545, 1, 0
  %v625 = vsel %vm546, 1, 0
  %v626 = vsel %vm547, 1, 0
  %v627 = vsel %vm548, 1, 0
  %v628 = vsel %vm549, 1, 0
  %v629 = vsel %vm550, 1, 0
  %v630 = vsel %vm551, 1, 0
  %v631 = vsel %vm552, 1, 0
  %v632 = vsel %vm553, 1, 0
  %v633 = vsel %vm554, 1, 0
  %v634 = vsel %vm555, 1, 0
  %v635 = vsel %vm556, 1, 0
  %v636 = vsel %vm557, 1, 0
  %v637 = vsel %vm558, 1, 0
  %v638 = vsel %vm559, 1, 0
  %v639 = vsel %vm560, 1, 0
  %v640 = vsel %vm561, 1, 0
  %v641 = vsel %vm562, 1, 0
  %v642 = vsel %vm563, 1, 0
  %v643 = vsel %vm564, 1, 0
  %v644 = vsel %vm565, 1, 0
  %v645 = vsel %vm566, 1, 0
  %v646 = vsel %vm567, 1, 0
  %v647 = vsel %vm568, 1, 0
  %v648 = vsel %vm569, 1, 0
  %v649 = vsel %vm570, 1, 0
  %v650 = vsel %vm571, 1, 0
  %v651 = vsel %vm572, 1, 0
  %v652 = vsel %vm573, 1, 0
  %v653 = vsel %vm574, 1, 0
  %v654 = vsel %vm575, 1, 0
  %v655 = vsel %vm576, 1, 0
  %v656 = vsel %vm577, 1, 0
  %v657 = vsel %vm578, 1, 0
  %v658 = vsel %vm579, 1, 0
  %v659 = vsel %vm580, 1, 0
  %v660 = vsel %vm581, 1, 0
  %v661 = vsel %vm582, 1, 0
  %v662 = vsel %vm583, 1, 0
  %v663 = vsel %vm584, 1, 0
  %v664 = vsel %vm585, 1, 0
  %v665 = vcvt.s32.f32 %v586
  %v666 = vcvt.s32.f32 %v587
  %v667 = vcvt.s32.f32 %v588
  %v668 = vcvt.s32.f32 %v589
  %v669 = vcvt.s32.f32 %v590
  %v670 = vcvt.s32.f32 %v591
  %v671 = vcvt.s32.f32 %v592
  %v672 = vcvt.s32.f32 %v593
  %v673 = vcvt.s32.f32 %v594
  %v674 = vcvt.s32.f32 %v595
  %v675 = vcvt.s32.f32 %v596
  %v676 = vcvt.s32.f32 %v597
  %v677 = vcvt.s32.f32 %v598
  %v678 = vcvt.s32.f32 %v599
  %v679 = vcvt.s32.f32 %v600
  %v680 = vcvt.s32.f32 %v601
  %v681 = vcvt.s32.f32 %v602
  %v682 = vcvt.s32.f32 %v603
  %v683 = vcvt.s32.f32 %v604
  %v684 = vcvt.s32.f32 %v605
  %v685 = vcvt.s32.f32 %v606
  %v686 = vcvt.s32.f32 %v607
  %v687 = vcvt.s32.f32 %v608
  %v688 = vcvt.s32.f32 %v609
  %v689 = vcvt.s32.f32 %v610
  %v690 = vcvt.s32.f32 %v611
  %v691 = vcvt.s32.f32 %v612
  %v692 = vcvt.s32.f32 %v613
  %v693 = vcvt.s32.f32 %v614
  %v694 = vcvt.s32.f32 %v615
  %v695 = vcvt.s32.f32 %v616
  %v696 = vcvt.s32.f32 %v617
  %v697 = vcvt.s32.f32 %v618
  %v698 = vcvt.s32.f32 %v619
  %v699 = vcvt.s32.f32 %v620
  %v700 = vcvt.s32.f32 %v621
  %v701 = vcvt.s32.f32 %v622
  %v702 = vcvt.s32.f32 %v623
  %v703 = vcvt.s32.f32 %v624
  %v704 = vcvt.s32.f32 %v625
  %v705 = vcvt.s32.f32 %v626
  %v706 = vcvt.s32.f32 %v627
  %v707 = vcvt.s32.f32 %v628
  %v708 = vcvt.s32.f32 %v629
  %v709 = vcvt.s32.f32 %v630
  %v710 = vcvt.s32.f32 %v631
  %v711 = vcvt.s32.f32 %v632
  %v712 = vcvt.s32.f32 %v633
  %v713 = vcvt.s32.f32 %v634
  %v714 = vcvt.s32.f32 %v635
  %v715 = vcvt.s32.f32 %v636
  %v716 = vcvt.s32.f32 %v637
  %v717 = vcvt.s32.f32 %v638
  %v718 = vcvt.s32.f32 %v639
  %v719 = vcvt.s32.f32 %v640
  %v720 = vcvt.s32.f32 %v641
  %v721 = vcvt.s32.f32 %v642
  %v722 = vcvt.s32.f32 %v643
  %v723 = vcvt.s32.f32 %v644
  %v724 = vcvt.s32.f32 %v645
  %v725 = vcvt.s32.f32 %v646
  %v726 = vcvt.s32.f32 %v647
  %v727 = vcvt.s32.f32 %v648
  %v728 = vcvt.s32.f32 %v649
  %v729 = vcvt.s32.f32 %v650
  %v730 = vcvt.s32.f32 %v651
  %v731 = vcvt.s32.f32 %v652
  %v732 = vcvt.s32.f32 %v653
  %v733 = vcvt.s32.f32 %v654
  %v734 = vcvt.s32.f32 %v655
  %v735 = vcvt.s32.f32 %v656
  %v736 = vcvt.s32.f32 %v657
  %v737 = vcvt.s32.f32 %v658
  %v738 = vcvt.s32.f32 %v659
  %v739 = vcvt.s32.f32 %v660
  %v740 = vcvt.s32.f32 %v661
  %v741 = vcvt.s32.f32 %v662
  %v742 = vcvt.s32.f32 %v663
  %v743 = vcvt.s32.f32 %v664
  %v744 = vmul.f32 %v665, %v346
  %v745 = vmul.f32 %v666, %v346
  %v746 = vmul.f32 %v667, %v346
  %v747 = vmul.f32 %v668, %v346
  %v748 = vmul.f32 %v669, %v346
  %v749 = vmul.f32 %v670, %v346
  %v750 = vmul.f32 %v671, %v346
  %v751 = vmul.f32 %v672, %v346
  %v752 = vmul.f32 %v673, %v346
  %v753 = vmul.f32 %v674, %v346
  %v754 = vmul.f32 %v675, %v346
  %v755 = vmul.f32 %v676, %v346
  %v756 = vmul.f32 %v677, %v346
  %v757 = vmul.f32 %v678, %v346
  %v758 = vmul.f32 %v679, %v346
  %v759 = vmul.f32 %v680, %v346
  %v760 = vmul.f32 %v681, %v346
  %v761 = vmul.f32 %v682, %v346
  %v762 = vmul.f32 %v683, %v346
  %v763 = vmul.f32 %v684, %v346
  %v764 = vmul.f32 %v685, %v346
  %v765 = vmul.f32 %v686, %v346
  %v766 = vmul.f32 %v687, %v346
  %v767 = vmul.f32 %v688, %v346
  %v768 = vmul.f32 %v689, %v346
  %v769 = vmul.f32 %v690, %v346
  %v770 = vmul.f32 %v691, %v346
  %v771 = vmul.f32 %v692, %v346
  %v772 = vmul.f32 %v693, %v346
  %v773 = vmul.f32 %v694, %v346
  %v774 = vmul.f32 %v695, %v346
  %v775 = vmul.f32 %v696, %v346
  %v776 = vmul.f32 %v697, %v346
  %v777 = vmul.f32 %v698, %v346
  %v778 = vmul.f32 %v699, %v346
  %v779 = vmul.f32 %v700, %v346
  %v780 = vmul.f32 %v701, %v346
  %v781 = vmul.f32 %v702, %v346
  %v782 = vmul.f32 %v703, %v346
  %v783 = vmul.f32 %v704, %v346
  %v784 = vmul.f32 %v705, %v346
  %v785 = vmul.f32 %v706, %v346
  %v786 = vmul.f32 %v707, %v346
  %v787 = vmul.f32 %v708, %v346
  %v788 = vmul.f32 %v709, %v346
  %v789 = vmul.f32 %v710, %v346
  %v790 = vmul.f32 %v711, %v346
  %v791 = vmul.f32 %v712, %v346
  %v792 = vmul.f32 %v713, %v346
  %v793 = vmul.f32 %v714, %v346
  %v794 = vmul.f32 %v715, %v346
  %v795 = vmul.f32 %v716, %v346
  %v796 = vmul.f32 %v717, %v346
  %v797 = vmul.f32 %v718, %v346
  %v798 = vmul.f32 %v719, %v346
  %v799 = vmul.f32 %v720, %v346
  %v800 = vmul.f32 %v721, %v346
  %v801 = vmul.f32 %v722, %v346
  %v802 = vmul.f32 %v723, %v346
  %v803 = vmul.f32 %v724, %v346
  %v804 = vmul.f32 %v725, %v346
  %v805 = vmul.f32 %v726, %v346
  %v806 = vmul.f32 %v727, %v346
  %v807 = vmul.f32 %v728, %v346
  %v808 = vmul.f32 %v729, %v346
  %v809 = vmul.f32 %v730, %v346
  %v810 = vmul.f32 %v731, %v346
  %v811 = vmul.f32 %v732, %v346
  %v812 = vmul.f32 %v733, %v346
  %v813 = vmul.f32 %v734, %v346
  %v814 = vmul.f32 %v735, %v346
  %v815 = vmul.f32 %v736, %v346
  %v816 = vmul.f32 %v737, %v346
  %v817 = vmul.f32 %v738, %v346
  %v818 = vmul.f32 %v739, %v346
  %v819 = vmul.f32 %v740, %v346
  %v820 = vmul.f32 %v741, %v346
  %v821 = vmul.f32 %v742, %v346
  %v822 = vmul.f32 %v743, %v346
  %vm823 = vcmask 203776
  %v824 = vsel %vm823, %v744, 0.0
  %825 = vadd.xlane.f32.xlu0 %v824
  %v826 = vpop.xlane.xlu0 %825
  %v827 = vsel %vm823, %v745, 0.0
  %828 = vadd.xlane.f32.xlu0 %v827
  %v829 = vpop.xlane.xlu0 %828
  %v830 = vsel %vm823, %v746, 0.0
  %831 = vadd.xlane.f32.xlu0 %v830
  %v832 = vpop.xlane.xlu0 %831
  %v833 = vsel %vm823, %v747, 0.0
  %834 = vadd.xlane.f32.xlu0 %v833
  %v835 = vpop.xlane.xlu0 %834
  %v836 = vsel %vm823, %v748, 0.0
  %837 = vadd.xlane.f32.xlu0 %v836
  %v838 = vpop.xlane.xlu0 %837
  %v839 = vsel %vm823, %v749, 0.0
  %840 = vadd.xlane.f32.xlu0 %v839
  %v841 = vpop.xlane.xlu0 %840
  %v842 = vsel %vm823, %v750, 0.0
  %843 = vadd.xlane.f32.xlu0 %v842
  %v844 = vpop.xlane.xlu0 %843
  %v845 = vsel %vm823, %v751, 0.0
  %846 = vadd.xlane.f32.xlu0 %v845
  %v847 = vpop.xlane.xlu0 %846
  %v848 = vsel %vm823, %v752, 0.0
  %849 = vadd.xlane.f32.xlu0 %v848
  %v850 = vpop.xlane.xlu0 %849
  %v851 = vsel %vm823, %v753, 0.0
  %852 = vadd.xlane.f32.xlu0 %v851
  %v853 = vpop.xlane.xlu0 %852
  %v854 = vsel %vm823, %v754, 0.0
  %855 = vadd.xlane.f32.xlu0 %v854
  %v856 = vpop.xlane.xlu0 %855
  %v857 = vsel %vm823, %v755, 0.0
  %858 = vadd.xlane.f32.xlu0 %v857
  %v859 = vpop.xlane.xlu0 %858
  %v860 = vsel %vm823, %v756, 0.0
  %861 = vadd.xlane.f32.xlu0 %v860
  %v862 = vpop.xlane.xlu0 %861
  %v863 = vsel %vm823, %v757, 0.0
  %864 = vadd.xlane.f32.xlu0 %v863
  %v865 = vpop.xlane.xlu0 %864
  %v866 = vsel %vm823, %v758, 0.0
  %867 = vadd.xlane.f32.xlu0 %v866
  %v868 = vpop.xlane.xlu0 %867
  %v869 = vsel %vm823, %v759, 0.0
  %870 = vadd.xlane.f32.xlu0 %v869
  %v871 = vpop.xlane.xlu0 %870
  %v872 = vsel %vm823, %v760, 0.0
  %873 = vadd.xlane.f32.xlu0 %v872
  %v874 = vpop.xlane.xlu0 %873
  %v875 = vsel %vm823, %v761, 0.0
  %876 = vadd.xlane.f32.xlu0 %v875
  %v877 = vpop.xlane.xlu0 %876
  %v878 = vsel %vm823, %v762, 0.0
  %879 = vadd.xlane.f32.xlu0 %v878
  %v880 = vpop.xlane.xlu0 %879
  %v881 = vsel %vm823, %v763, 0.0
  %882 = vadd.xlane.f32.xlu0 %v881
  %v883 = vpop.xlane.xlu0 %882
  %v884 = vsel %vm823, %v764, 0.0
  %885 = vadd.xlane.f32.xlu0 %v884
  %v886 = vpop.xlane.xlu0 %885
  %v887 = vsel %vm823, %v765, 0.0
  %888 = vadd.xlane.f32.xlu0 %v887
  %v889 = vpop.xlane.xlu0 %888
  %v890 = vsel %vm823, %v766, 0.0
  %891 = vadd.xlane.f32.xlu0 %v890
  %v892 = vpop.xlane.xlu0 %891
  %v893 = vsel %vm823, %v767, 0.0
  %894 = vadd.xlane.f32.xlu0 %v893
  %v895 = vpop.xlane.xlu0 %894
  %v896 = vsel %vm823, %v768, 0.0
  %897 = vadd.xlane.f32.xlu0 %v896
  %v898 = vpop.xlane.xlu0 %897
  %v899 = vsel %vm823, %v769, 0.0
  %900 = vadd.xlane.f32.xlu0 %v899
  %v901 = vpop.xlane.xlu0 %900
  %v902 = vsel %vm823, %v770, 0.0
  %903 = vadd.xlane.f32.xlu0 %v902
  %v904 = vpop.xlane.xlu0 %903
  %v905 = vsel %vm823, %v771, 0.0
  %906 = vadd.xlane.f32.xlu0 %v905
  %v907 = vpop.xlane.xlu0 %906
  %v908 = vsel %vm823, %v772, 0.0
  %909 = vadd.xlane.f32.xlu0 %v908
  %v910 = vpop.xlane.xlu0 %909
  %v911 = vsel %vm823, %v773, 0.0
  %912 = vadd.xlane.f32.xlu0 %v911
  %v913 = vpop.xlane.xlu0 %912
  %v914 = vsel %vm823, %v774, 0.0
  %915 = vadd.xlane.f32.xlu0 %v914
  %v916 = vpop.xlane.xlu0 %915
  %v917 = vsel %vm823, %v775, 0.0
  %918 = vadd.xlane.f32.xlu0 %v917
  %v919 = vpop.xlane.xlu0 %918
  %v920 = vsel %vm823, %v776, 0.0
  %921 = vadd.xlane.f32.xlu0 %v920
  %v922 = vpop.xlane.xlu0 %921
  %v923 = vsel %vm823, %v777, 0.0
  %924 = vadd.xlane.f32.xlu0 %v923
  %v925 = vpop.xlane.xlu0 %924
  %v926 = vsel %vm823, %v778, 0.0
  %927 = vadd.xlane.f32.xlu0 %v926
  %v928 = vpop.xlane.xlu0 %927
  %v929 = vsel %vm823, %v779, 0.0
  %930 = vadd.xlane.f32.xlu0 %v929
  %v931 = vpop.xlane.xlu0 %930
  %v932 = vsel %vm823, %v780, 0.0
  %933 = vadd.xlane.f32.xlu0 %v932
  %v934 = vpop.xlane.xlu0 %933
  %v935 = vsel %vm823, %v781, 0.0
  %936 = vadd.xlane.f32.xlu0 %v935
  %v937 = vpop.xlane.xlu0 %936
  %v938 = vsel %vm823, %v782, 0.0
  %939 = vadd.xlane.f32.xlu0 %v938
  %v940 = vpop.xlane.xlu0 %939
  %v941 = vsel %vm823, %v783, 0.0
  %942 = vadd.xlane.f32.xlu0 %v941
  %v943 = vpop.xlane.xlu0 %942
  %v944 = vsel %vm823, %v784, 0.0
  %945 = vadd.xlane.f32.xlu0 %v944
  %v946 = vpop.xlane.xlu0 %945
  %v947 = vsel %vm823, %v785, 0.0
  %948 = vadd.xlane.f32.xlu0 %v947
  %v949 = vpop.xlane.xlu0 %948
  %v950 = vsel %vm823, %v786, 0.0
  %951 = vadd.xlane.f32.xlu0 %v950
  %v952 = vpop.xlane.xlu0 %951
  %v953 = vsel %vm823, %v787, 0.0
  %954 = vadd.xlane.f32.xlu0 %v953
  %v955 = vpop.xlane.xlu0 %954
  %v956 = vsel %vm823, %v788, 0.0
  %957 = vadd.xlane.f32.xlu0 %v956
  %v958 = vpop.xlane.xlu0 %957
  %v959 = vsel %vm823, %v789, 0.0
  %960 = vadd.xlane.f32.xlu0 %v959
  %v961 = vpop.xlane.xlu0 %960
  %v962 = vsel %vm823, %v790, 0.0
  %963 = vadd.xlane.f32.xlu0 %v962
  %v964 = vpop.xlane.xlu0 %963
  %v965 = vsel %vm823, %v791, 0.0
  %966 = vadd.xlane.f32.xlu0 %v965
  %v967 = vpop.xlane.xlu0 %966
  %v968 = vsel %vm823, %v792, 0.0
  %969 = vadd.xlane.f32.xlu0 %v968
  %v970 = vpop.xlane.xlu0 %969
  %v971 = vsel %vm823, %v793, 0.0
  %972 = vadd.xlane.f32.xlu0 %v971
  %v973 = vpop.xlane.xlu0 %972
  %v974 = vsel %vm823, %v794, 0.0
  %975 = vadd.xlane.f32.xlu0 %v974
  %v976 = vpop.xlane.xlu0 %975
  %v977 = vsel %vm823, %v795, 0.0
  %978 = vadd.xlane.f32.xlu0 %v977
  %v979 = vpop.xlane.xlu0 %978
  %v980 = vsel %vm823, %v796, 0.0
  %981 = vadd.xlane.f32.xlu0 %v980
  %v982 = vpop.xlane.xlu0 %981
  %v983 = vsel %vm823, %v797, 0.0
  %984 = vadd.xlane.f32.xlu0 %v983
  %v985 = vpop.xlane.xlu0 %984
  %v986 = vsel %vm823, %v798, 0.0
  %987 = vadd.xlane.f32.xlu0 %v986
  %v988 = vpop.xlane.xlu0 %987
  %v989 = vsel %vm823, %v799, 0.0
  %990 = vadd.xlane.f32.xlu0 %v989
  %v991 = vpop.xlane.xlu0 %990
  %v992 = vsel %vm823, %v800, 0.0
  %993 = vadd.xlane.f32.xlu0 %v992
  %v994 = vpop.xlane.xlu0 %993
  %v995 = vsel %vm823, %v801, 0.0
  %996 = vadd.xlane.f32.xlu0 %v995
  %v997 = vpop.xlane.xlu0 %996
  %v998 = vsel %vm823, %v802, 0.0
  %999 = vadd.xlane.f32.xlu0 %v998
  %v1000 = vpop.xlane.xlu0 %999
  %v1001 = vsel %vm823, %v803, 0.0
  %1002 = vadd.xlane.f32.xlu0 %v1001
  %v1003 = vpop.xlane.xlu0 %1002
  %v1004 = vsel %vm823, %v804, 0.0
  %1005 = vadd.xlane.f32.xlu0 %v1004
  %v1006 = vpop.xlane.xlu0 %1005
  %v1007 = vsel %vm823, %v805, 0.0
  %1008 = vadd.xlane.f32.xlu0 %v1007
  %v1009 = vpop.xlane.xlu0 %1008
  %v1010 = vsel %vm823, %v806, 0.0
  %1011 = vadd.xlane.f32.xlu0 %v1010
  %v1012 = vpop.xlane.xlu0 %1011
  %v1013 = vsel %vm823, %v807, 0.0
  %1014 = vadd.xlane.f32.xlu0 %v1013
  %v1015 = vpop.xlane.xlu0 %1014
  %v1016 = vsel %vm823, %v808, 0.0
  %1017 = vadd.xlane.f32.xlu0 %v1016
  %v1018 = vpop.xlane.xlu0 %1017
  %v1019 = vsel %vm823, %v809, 0.0
  %1020 = vadd.xlane.f32.xlu0 %v1019
  %v1021 = vpop.xlane.xlu0 %1020
  %v1022 = vsel %vm823, %v810, 0.0
  %1023 = vadd.xlane.f32.xlu0 %v1022
  %v1024 = vpop.xlane.xlu0 %1023
  %v1025 = vsel %vm823, %v811, 0.0
  %1026 = vadd.xlane.f32.xlu0 %v1025
  %v1027 = vpop.xlane.xlu0 %1026
  %v1028 = vsel %vm823, %v812, 0.0
  %1029 = vadd.xlane.f32.xlu0 %v1028
  %v1030 = vpop.xlane.xlu0 %1029
  %v1031 = vsel %vm823, %v813, 0.0
  %1032 = vadd.xlane.f32.xlu0 %v1031
  %v1033 = vpop.xlane.xlu0 %1032
  %v1034 = vsel %vm823, %v814, 0.0
  %1035 = vadd.xlane.f32.xlu0 %v1034
  %v1036 = vpop.xlane.xlu0 %1035
  %v1037 = vsel %vm823, %v815, 0.0
  %1038 = vadd.xlane.f32.xlu0 %v1037
  %v1039 = vpop.xlane.xlu0 %1038
  %v1040 = vsel %vm823, %v816, 0.0
  %1041 = vadd.xlane.f32.xlu0 %v1040
  %v1042 = vpop.xlane.xlu0 %1041
  %v1043 = vsel %vm823, %v817, 0.0
  %1044 = vadd.xlane.f32.xlu0 %v1043
  %v1045 = vpop.xlane.xlu0 %1044
  %v1046 = vsel %vm823, %v818, 0.0
  %1047 = vadd.xlane.f32.xlu0 %v1046
  %v1048 = vpop.xlane.xlu0 %1047
  %v1049 = vsel %vm823, %v819, 0.0
  %1050 = vadd.xlane.f32.xlu0 %v1049
  %v1051 = vpop.xlane.xlu0 %1050
  %v1052 = vsel %vm823, %v820, 0.0
  %1053 = vadd.xlane.f32.xlu0 %v1052
  %v1054 = vpop.xlane.xlu0 %1053
  %v1055 = vsel %vm823, %v821, 0.0
  %1056 = vadd.xlane.f32.xlu0 %v1055
  %v1057 = vpop.xlane.xlu0 %1056
  %vm1058 = vcmask 196608
  %v1059 = vsel %vm1058, %v822, 0.0
  %1060 = vadd.xlane.f32.xlu0 %v1059
  %v1061 = vpop.xlane.xlu0 %1060
  %v1062 = vmul.f32 %v826, 25.0
  %v1063 = vmul.f32 %v829, 25.0
  %v1064 = vmul.f32 %v832, 25.0
  %v1065 = vmul.f32 %v835, 25.0
  %v1066 = vmul.f32 %v838, 25.0
  %v1067 = vmul.f32 %v841, 25.0
  %v1068 = vmul.f32 %v844, 25.0
  %v1069 = vmul.f32 %v847, 25.0
  %v1070 = vmul.f32 %v850, 25.0
  %v1071 = vmul.f32 %v853, 25.0
  %v1072 = vmul.f32 %v856, 25.0
  %v1073 = vmul.f32 %v859, 25.0
  %v1074 = vmul.f32 %v862, 25.0
  %v1075 = vmul.f32 %v865, 25.0
  %v1076 = vmul.f32 %v868, 25.0
  %v1077 = vmul.f32 %v871, 25.0
  %v1078 = vmul.f32 %v874, 25.0
  %v1079 = vmul.f32 %v877, 25.0
  %v1080 = vmul.f32 %v880, 25.0
  %v1081 = vmul.f32 %v883, 25.0
  %v1082 = vmul.f32 %v886, 25.0
  %v1083 = vmul.f32 %v889, 25.0
  %v1084 = vmul.f32 %v892, 25.0
  %v1085 = vmul.f32 %v895, 25.0
  %v1086 = vmul.f32 %v898, 25.0
  %v1087 = vmul.f32 %v901, 25.0
  %v1088 = vmul.f32 %v904, 25.0
  %v1089 = vmul.f32 %v907, 25.0
  %v1090 = vmul.f32 %v910, 25.0
  %v1091 = vmul.f32 %v913, 25.0
  %v1092 = vmul.f32 %v916, 25.0
  %v1093 = vmul.f32 %v919, 25.0
  %v1094 = vmul.f32 %v922, 25.0
  %v1095 = vmul.f32 %v925, 25.0
  %v1096 = vmul.f32 %v928, 25.0
  %v1097 = vmul.f32 %v931, 25.0
  %v1098 = vmul.f32 %v934, 25.0
  %v1099 = vmul.f32 %v937, 25.0
  %v1100 = vmul.f32 %v940, 25.0
  %v1101 = vmul.f32 %v943, 25.0
  %v1102 = vmul.f32 %v946, 25.0
  %v1103 = vmul.f32 %v949, 25.0
  %v1104 = vmul.f32 %v952, 25.0
  %v1105 = vmul.f32 %v955, 25.0
  %v1106 = vmul.f32 %v958, 25.0
  %v1107 = vmul.f32 %v961, 25.0
  %v1108 = vmul.f32 %v964, 25.0
  %v1109 = vmul.f32 %v967, 25.0
  %v1110 = vmul.f32 %v970, 25.0
  %v1111 = vmul.f32 %v973, 25.0
  %v1112 = vmul.f32 %v976, 25.0
  %v1113 = vmul.f32 %v979, 25.0
  %v1114 = vmul.f32 %v982, 25.0
  %v1115 = vmul.f32 %v985, 25.0
  %v1116 = vmul.f32 %v988, 25.0
  %v1117 = vmul.f32 %v991, 25.0
  %v1118 = vmul.f32 %v994, 25.0
  %v1119 = vmul.f32 %v997, 25.0
  %v1120 = vmul.f32 %v1000, 25.0
  %v1121 = vmul.f32 %v1003, 25.0
  %v1122 = vmul.f32 %v1006, 25.0
  %v1123 = vmul.f32 %v1009, 25.0
  %v1124 = vmul.f32 %v1012, 25.0
  %v1125 = vmul.f32 %v1015, 25.0
  %v1126 = vmul.f32 %v1018, 25.0
  %v1127 = vmul.f32 %v1021, 25.0
  %v1128 = vmul.f32 %v1024, 25.0
  %v1129 = vmul.f32 %v1027, 25.0
  %v1130 = vmul.f32 %v1030, 25.0
  %v1131 = vmul.f32 %v1033, 25.0
  %v1132 = vmul.f32 %v1036, 25.0
  %v1133 = vmul.f32 %v1039, 25.0
  %v1134 = vmul.f32 %v1042, 25.0
  %v1135 = vmul.f32 %v1045, 25.0
  %v1136 = vmul.f32 %v1048, 25.0
  %v1137 = vmul.f32 %v1051, 25.0
  %v1138 = vmul.f32 %v1054, 25.0
  %v1139 = vmul.f32 %v1057, 25.0
  %v1140 = vmul.f32 %v1061, 25.0
  %v1141 = vsub.f32 %v267, %v1062
  %v1142 = vsub.f32 %v268, %v1063
  %v1143 = vsub.f32 %v269, %v1064
  %v1144 = vsub.f32 %v270, %v1065
  %v1145 = vsub.f32 %v271, %v1066
  %v1146 = vsub.f32 %v272, %v1067
  %v1147 = vsub.f32 %v273, %v1068
  %v1148 = vsub.f32 %v274, %v1069
  %v1149 = vsub.f32 %v275, %v1070
  %v1150 = vsub.f32 %v276, %v1071
  %v1151 = vsub.f32 %v277, %v1072
  %v1152 = vsub.f32 %v278, %v1073
  %v1153 = vsub.f32 %v279, %v1074
  %v1154 = vsub.f32 %v280, %v1075
  %v1155 = vsub.f32 %v281, %v1076
  %v1156 = vsub.f32 %v282, %v1077
  %v1157 = vsub.f32 %v283, %v1078
  %v1158 = vsub.f32 %v284, %v1079
  %v1159 = vsub.f32 %v285, %v1080
  %v1160 = vsub.f32 %v286, %v1081
  %v1161 = vsub.f32 %v287, %v1082
  %v1162 = vsub.f32 %v288, %v1083
  %v1163 = vsub.f32 %v289, %v1084
  %v1164 = vsub.f32 %v290, %v1085
  %v1165 = vsub.f32 %v291, %v1086
  %v1166 = vsub.f32 %v292, %v1087
  %v1167 = vsub.f32 %v293, %v1088
  %v1168 = vsub.f32 %v294, %v1089
  %v1169 = vsub.f32 %v295, %v1090
  %v1170 = vsub.f32 %v296, %v1091
  %v1171 = vsub.f32 %v297, %v1092
  %v1172 = vsub.f32 %v298, %v1093
  %v1173 = vsub.f32 %v299, %v1094
  %v1174 = vsub.f32 %v300, %v1095
  %v1175 = vsub.f32 %v301, %v1096
  %v1176 = vsub.f32 %v302, %v1097
  %v1177 = vsub.f32 %v303, %v1098
  %v1178 = vsub.f32 %v304, %v1099
  %v1179 = vsub.f32 %v305, %v1100
  %v1180 = vsub.f32 %v306, %v1101
  %v1181 = vsub.f32 %v307, %v1102
  %v1182 = vsub.f32 %v308, %v1103
  %v1183 = vsub.f32 %v309, %v1104
  %v1184 = vsub.f32 %v310, %v1105
  %v1185 = vsub.f32 %v311, %v1106
  %v1186 = vsub.f32 %v312, %v1107
  %v1187 = vsub.f32 %v313, %v1108
  %v1188 = vsub.f32 %v314, %v1109
  %v1189 = vsub.f32 %v315, %v1110
  %v1190 = vsub.f32 %v316, %v1111
  %v1191 = vsub.f32 %v317, %v1112
  %v1192 = vsub.f32 %v318, %v1113
  %v1193 = vsub.f32 %v319, %v1114
  %v1194 = vsub.f32 %v320, %v1115
  %v1195 = vsub.f32 %v321, %v1116
  %v1196 = vsub.f32 %v322, %v1117
  %v1197 = vsub.f32 %v323, %v1118
  %v1198 = vsub.f32 %v324, %v1119
  %v1199 = vsub.f32 %v325, %v1120
  %v1200 = vsub.f32 %v326, %v1121
  %v1201 = vsub.f32 %v327, %v1122
  %v1202 = vsub.f32 %v328, %v1123
  %v1203 = vsub.f32 %v329, %v1124
  %v1204 = vsub.f32 %v330, %v1125
  %v1205 = vsub.f32 %v331, %v1126
  %v1206 = vsub.f32 %v332, %v1127
  %v1207 = vsub.f32 %v333, %v1128
  %v1208 = vsub.f32 %v334, %v1129
  %v1209 = vsub.f32 %v335, %v1130
  %v1210 = vsub.f32 %v336, %v1131
  %v1211 = vsub.f32 %v337, %v1132
  %v1212 = vsub.f32 %v338, %v1133
  %v1213 = vsub.f32 %v339, %v1134
  %v1214 = vsub.f32 %v340, %v1135
  %v1215 = vsub.f32 %v341, %v1136
  %v1216 = vsub.f32 %v342, %v1137
  %v1217 = vsub.f32 %v343, %v1138
  %v1218 = vsub.f32 %v344, %v1139
  %v1219 = vsub.f32 %v345, %v1140
  %vm1220 = vcmp.eq.f32.partialorder %v1141, %v346
  %vm1221 = vcmp.eq.f32.partialorder %v1142, %v346
  %vm1222 = vcmp.eq.f32.partialorder %v1143, %v346
  %vm1223 = vcmp.eq.f32.partialorder %v1144, %v346
  %vm1224 = vcmp.eq.f32.partialorder %v1145, %v346
  %vm1225 = vcmp.eq.f32.partialorder %v1146, %v346
  %vm1226 = vcmp.eq.f32.partialorder %v1147, %v346
  %vm1227 = vcmp.eq.f32.partialorder %v1148, %v346
  %vm1228 = vcmp.eq.f32.partialorder %v1149, %v346
  %vm1229 = vcmp.eq.f32.partialorder %v1150, %v346
  %vm1230 = vcmp.eq.f32.partialorder %v1151, %v346
  %vm1231 = vcmp.eq.f32.partialorder %v1152, %v346
  %vm1232 = vcmp.eq.f32.partialorder %v1153, %v346
  %vm1233 = vcmp.eq.f32.partialorder %v1154, %v346
  %vm1234 = vcmp.eq.f32.partialorder %v1155, %v346
  %vm1235 = vcmp.eq.f32.partialorder %v1156, %v346
  %vm1236 = vcmp.eq.f32.partialorder %v1157, %v346
  %vm1237 = vcmp.eq.f32.partialorder %v1158, %v346
  %vm1238 = vcmp.eq.f32.partialorder %v1159, %v346
  %vm1239 = vcmp.eq.f32.partialorder %v1160, %v346
  %vm1240 = vcmp.eq.f32.partialorder %v1161, %v346
  %vm1241 = vcmp.eq.f32.partialorder %v1162, %v346
  %vm1242 = vcmp.eq.f32.partialorder %v1163, %v346
  %vm1243 = vcmp.eq.f32.partialorder %v1164, %v346
  %vm1244 = vcmp.eq.f32.partialorder %v1165, %v346
  %vm1245 = vcmp.eq.f32.partialorder %v1166, %v346
  %vm1246 = vcmp.eq.f32.partialorder %v1167, %v346
  %vm1247 = vcmp.eq.f32.partialorder %v1168, %v346
  %vm1248 = vcmp.eq.f32.partialorder %v1169, %v346
  %vm1249 = vcmp.eq.f32.partialorder %v1170, %v346
  %vm1250 = vcmp.eq.f32.partialorder %v1171, %v346
  %vm1251 = vcmp.eq.f32.partialorder %v1172, %v346
  %vm1252 = vcmp.eq.f32.partialorder %v1173, %v346
  %vm1253 = vcmp.eq.f32.partialorder %v1174, %v346
  %vm1254 = vcmp.eq.f32.partialorder %v1175, %v346
  %vm1255 = vcmp.eq.f32.partialorder %v1176, %v346
  %vm1256 = vcmp.eq.f32.partialorder %v1177, %v346
  %vm1257 = vcmp.eq.f32.partialorder %v1178, %v346
  %vm1258 = vcmp.eq.f32.partialorder %v1179, %v346
  %vm1259 = vcmp.eq.f32.partialorder %v1180, %v346
  %vm1260 = vcmp.eq.f32.partialorder %v1181, %v346
  %vm1261 = vcmp.eq.f32.partialorder %v1182, %v346
  %vm1262 = vcmp.eq.f32.partialorder %v1183, %v346
  %vm1263 = vcmp.eq.f32.partialorder %v1184, %v346
  %vm1264 = vcmp.eq.f32.partialorder %v1185, %v346
  %vm1265 = vcmp.eq.f32.partialorder %v1186, %v346
  %vm1266 = vcmp.eq.f32.partialorder %v1187, %v346
  %vm1267 = vcmp.eq.f32.partialorder %v1188, %v346
  %vm1268 = vcmp.eq.f32.partialorder %v1189, %v346
  %vm1269 = vcmp.eq.f32.partialorder %v1190, %v346
  %vm1270 = vcmp.eq.f32.partialorder %v1191, %v346
  %vm1271 = vcmp.eq.f32.partialorder %v1192, %v346
  %vm1272 = vcmp.eq.f32.partialorder %v1193, %v346
  %vm1273 = vcmp.eq.f32.partialorder %v1194, %v346
  %vm1274 = vcmp.eq.f32.partialorder %v1195, %v346
  %vm1275 = vcmp.eq.f32.partialorder %v1196, %v346
  %vm1276 = vcmp.eq.f32.partialorder %v1197, %v346
  %vm1277 = vcmp.eq.f32.partialorder %v1198, %v346
  %vm1278 = vcmp.eq.f32.partialorder %v1199, %v346
  %vm1279 = vcmp.eq.f32.partialorder %v1200, %v346
  %vm1280 = vcmp.eq.f32.partialorder %v1201, %v346
  %vm1281 = vcmp.eq.f32.partialorder %v1202, %v346
  %vm1282 = vcmp.eq.f32.partialorder %v1203, %v346
  %vm1283 = vcmp.eq.f32.partialorder %v1204, %v346
  %vm1284 = vcmp.eq.f32.partialorder %v1205, %v346
  %vm1285 = vcmp.eq.f32.partialorder %v1206, %v346
  %vm1286 = vcmp.eq.f32.partialorder %v1207, %v346
  %vm1287 = vcmp.eq.f32.partialorder %v1208, %v346
  %vm1288 = vcmp.eq.f32.partialorder %v1209, %v346
  %vm1289 = vcmp.eq.f32.partialorder %v1210, %v346
  %vm1290 = vcmp.eq.f32.partialorder %v1211, %v346
  %vm1291 = vcmp.eq.f32.partialorder %v1212, %v346
  %vm1292 = vcmp.eq.f32.partialorder %v1213, %v346
  %vm1293 = vcmp.eq.f32.partialorder %v1214, %v346
  %vm1294 = vcmp.eq.f32.partialorder %v1215, %v346
  %vm1295 = vcmp.eq.f32.partialorder %v1216, %v346
  %vm1296 = vcmp.eq.f32.partialorder %v1217, %v346
  %vm1297 = vcmp.eq.f32.partialorder %v1218, %v346
  %vm1298 = vcmp.eq.f32.partialorder %v1219, %v346
  %v1299 = vsel %vm1220, 1, 0
  %v1300 = vsel %vm1221, 1, 0
  %v1301 = vsel %vm1222, 1, 0
  %v1302 = vsel %vm1223, 1, 0
  %v1303 = vsel %vm1224, 1, 0
  %v1304 = vsel %vm1225, 1, 0
  %v1305 = vsel %vm1226, 1, 0
  %v1306 = vsel %vm1227, 1, 0
  %v1307 = vsel %vm1228, 1, 0
  %v1308 = vsel %vm1229, 1, 0
  %v1309 = vsel %vm1230, 1, 0
  %v1310 = vsel %vm1231, 1, 0
  %v1311 = vsel %vm1232, 1, 0
  %v1312 = vsel %vm1233, 1, 0
  %v1313 = vsel %vm1234, 1, 0
  %v1314 = vsel %vm1235, 1, 0
  %v1315 = vsel %vm1236, 1, 0
  %v1316 = vsel %vm1237, 1, 0
  %v1317 = vsel %vm1238, 1, 0
  %v1318 = vsel %vm1239, 1, 0
  %v1319 = vsel %vm1240, 1, 0
  %v1320 = vsel %vm1241, 1, 0
  %v1321 = vsel %vm1242, 1, 0
  %v1322 = vsel %vm1243, 1, 0
  %v1323 = vsel %vm1244, 1, 0
  %v1324 = vsel %vm1245, 1, 0
  %v1325 = vsel %vm1246, 1, 0
  %v1326 = vsel %vm1247, 1, 0
  %v1327 = vsel %vm1248, 1, 0
  %v1328 = vsel %vm1249, 1, 0
  %v1329 = vsel %vm1250, 1, 0
  %v1330 = vsel %vm1251, 1, 0
  %v1331 = vsel %vm1252, 1, 0
  %v1332 = vsel %vm1253, 1, 0
  %v1333 = vsel %vm1254, 1, 0
  %v1334 = vsel %vm1255, 1, 0
  %v1335 = vsel %vm1256, 1, 0
  %v1336 = vsel %vm1257, 1, 0
  %v1337 = vsel %vm1258, 1, 0
  %v1338 = vsel %vm1259, 1, 0
  %v1339 = vsel %vm1260, 1, 0
  %v1340 = vsel %vm1261, 1, 0
  %v1341 = vsel %vm1262, 1, 0
  %v1342 = vsel %vm1263, 1, 0
  %v1343 = vsel %vm1264, 1, 0
  %v1344 = vsel %vm1265, 1, 0
  %v1345 = vsel %vm1266, 1, 0
  %v1346 = vsel %vm1267, 1, 0
  %v1347 = vsel %vm1268, 1, 0
  %v1348 = vsel %vm1269, 1, 0
  %v1349 = vsel %vm1270, 1, 0
  %v1350 = vsel %vm1271, 1, 0
  %v1351 = vsel %vm1272, 1, 0
  %v1352 = vsel %vm1273, 1, 0
  %v1353 = vsel %vm1274, 1, 0
  %v1354 = vsel %vm1275, 1, 0
  %v1355 = vsel %vm1276, 1, 0
  %v1356 = vsel %vm1277, 1, 0
  %v1357 = vsel %vm1278, 1, 0
  %v1358 = vsel %vm1279, 1, 0
  %v1359 = vsel %vm1280, 1, 0
  %v1360 = vsel %vm1281, 1, 0
  %v1361 = vsel %vm1282, 1, 0
  %v1362 = vsel %vm1283, 1, 0
  %v1363 = vsel %vm1284, 1, 0
  %v1364 = vsel %vm1285, 1, 0
  %v1365 = vsel %vm1286, 1, 0
  %v1366 = vsel %vm1287, 1, 0
  %v1367 = vsel %vm1288, 1, 0
  %v1368 = vsel %vm1289, 1, 0
  %v1369 = vsel %vm1290, 1, 0
  %v1370 = vsel %vm1291, 1, 0
  %v1371 = vsel %vm1292, 1, 0
  %v1372 = vsel %vm1293, 1, 0
  %v1373 = vsel %vm1294, 1, 0
  %v1374 = vsel %vm1295, 1, 0
  %v1375 = vsel %vm1296, 1, 0
  %v1376 = vsel %vm1297, 1, 0
  %v1377 = vsel %vm1298, 1, 0
  %v1378 = vcvt.s32.f32 %v1299
  %v1379 = vcvt.s32.f32 %v1300
  %v1380 = vcvt.s32.f32 %v1301
  %v1381 = vcvt.s32.f32 %v1302
  %v1382 = vcvt.s32.f32 %v1303
  %v1383 = vcvt.s32.f32 %v1304
  %v1384 = vcvt.s32.f32 %v1305
  %v1385 = vcvt.s32.f32 %v1306
  %v1386 = vcvt.s32.f32 %v1307
  %v1387 = vcvt.s32.f32 %v1308
  %v1388 = vcvt.s32.f32 %v1309
  %v1389 = vcvt.s32.f32 %v1310
  %v1390 = vcvt.s32.f32 %v1311
  %v1391 = vcvt.s32.f32 %v1312
  %v1392 = vcvt.s32.f32 %v1313
  %v1393 = vcvt.s32.f32 %v1314
  %v1394 = vcvt.s32.f32 %v1315
  %v1395 = vcvt.s32.f32 %v1316
  %v1396 = vcvt.s32.f32 %v1317
  %v1397 = vcvt.s32.f32 %v1318
  %v1398 = vcvt.s32.f32 %v1319
  %v1399 = vcvt.s32.f32 %v1320
  %v1400 = vcvt.s32.f32 %v1321
  %v1401 = vcvt.s32.f32 %v1322
  %v1402 = vcvt.s32.f32 %v1323
  %v1403 = vcvt.s32.f32 %v1324
  %v1404 = vcvt.s32.f32 %v1325
  %v1405 = vcvt.s32.f32 %v1326
  %v1406 = vcvt.s32.f32 %v1327
  %v1407 = vcvt.s32.f32 %v1328
  %v1408 = vcvt.s32.f32 %v1329
  %v1409 = vcvt.s32.f32 %v1330
  %v1410 = vcvt.s32.f32 %v1331
  %v1411 = vcvt.s32.f32 %v1332
  %v1412 = vcvt.s32.f32 %v1333
  %v1413 = vcvt.s32.f32 %v1334
  %v1414 = vcvt.s32.f32 %v1335
  %v1415 = vcvt.s32.f32 %v1336
  %v1416 = vcvt.s32.f32 %v1337
  %v1417 = vcvt.s32.f32 %v1338
  %v1418 = vcvt.s32.f32 %v1339
  %v1419 = vcvt.s32.f32 %v1340
  %v1420 = vcvt.s32.f32 %v1341
  %v1421 = vcvt.s32.f32 %v1342
  %v1422 = vcvt.s32.f32 %v1343
  %v1423 = vcvt.s32.f32 %v1344
  %v1424 = vcvt.s32.f32 %v1345
  %v1425 = vcvt.s32.f32 %v1346
  %v1426 = vcvt.s32.f32 %v1347
  %v1427 = vcvt.s32.f32 %v1348
  %v1428 = vcvt.s32.f32 %v1349
  %v1429 = vcvt.s32.f32 %v1350
  %v1430 = vcvt.s32.f32 %v1351
  %v1431 = vcvt.s32.f32 %v1352
  %v1432 = vcvt.s32.f32 %v1353
  %v1433 = vcvt.s32.f32 %v1354
  %v1434 = vcvt.s32.f32 %v1355
  %v1435 = vcvt.s32.f32 %v1356
  %v1436 = vcvt.s32.f32 %v1357
  %v1437 = vcvt.s32.f32 %v1358
  %v1438 = vcvt.s32.f32 %v1359
  %v1439 = vcvt.s32.f32 %v1360
  %v1440 = vcvt.s32.f32 %v1361
  %v1441 = vcvt.s32.f32 %v1362
  %v1442 = vcvt.s32.f32 %v1363
  %v1443 = vcvt.s32.f32 %v1364
  %v1444 = vcvt.s32.f32 %v1365
  %v1445 = vcvt.s32.f32 %v1366
  %v1446 = vcvt.s32.f32 %v1367
  %v1447 = vcvt.s32.f32 %v1368
  %v1448 = vcvt.s32.f32 %v1369
  %v1449 = vcvt.s32.f32 %v1370
  %v1450 = vcvt.s32.f32 %v1371
  %v1451 = vcvt.s32.f32 %v1372
  %v1452 = vcvt.s32.f32 %v1373
  %v1453 = vcvt.s32.f32 %v1374
  %v1454 = vcvt.s32.f32 %v1375
  %v1455 = vcvt.s32.f32 %v1376
  %v1456 = vcvt.s32.f32 %v1377
  %v1458 = vsel %vm823, %v665, 0
  %v1461 = vsel %vm823, %v666, 0
  %v1464 = vsel %vm823, %v667, 0
  %v1467 = vsel %vm823, %v668, 0
  %v1470 = vsel %vm823, %v669, 0
  %v1473 = vsel %vm823, %v670, 0
  %v1476 = vsel %vm823, %v671, 0
  %v1479 = vsel %vm823, %v672, 0
  %v1482 = vsel %vm823, %v673, 0
  %v1485 = vsel %vm823, %v674, 0
  %v1488 = vsel %vm823, %v675, 0
  %v1491 = vsel %vm823, %v676, 0
  %v1494 = vsel %vm823, %v677, 0
  %v1497 = vsel %vm823, %v678, 0
  %v1500 = vsel %vm823, %v679, 0
  %v1503 = vsel %vm823, %v680, 0
  %v1506 = vsel %vm823, %v681, 0
  %v1509 = vsel %vm823, %v682, 0
  %v1512 = vsel %vm823, %v683, 0
  %v1515 = vsel %vm823, %v684, 0
  %v1518 = vsel %vm823, %v685, 0
  %v1521 = vsel %vm823, %v686, 0
  %v1524 = vsel %vm823, %v687, 0
  %v1527 = vsel %vm823, %v688, 0
  %v1530 = vsel %vm823, %v689, 0
  %v1533 = vsel %vm823, %v690, 0
  %v1536 = vsel %vm823, %v691, 0
  %v1539 = vsel %vm823, %v692, 0
  %v1542 = vsel %vm823, %v693, 0
  %v1545 = vsel %vm823, %v694, 0
  %v1548 = vsel %vm823, %v695, 0
  %v1551 = vsel %vm823, %v696, 0
  %v1554 = vsel %vm823, %v697, 0
  %v1557 = vsel %vm823, %v698, 0
  %v1560 = vsel %vm823, %v699, 0
  %v1563 = vsel %vm823, %v700, 0
  %v1566 = vsel %vm823, %v701, 0
  %v1569 = vsel %vm823, %v702, 0
  %v1572 = vsel %vm823, %v703, 0
  %v1575 = vsel %vm823, %v704, 0
  %v1578 = vsel %vm823, %v705, 0
  %v1581 = vsel %vm823, %v706, 0
  %v1584 = vsel %vm823, %v707, 0
  %v1587 = vsel %vm823, %v708, 0
  %v1590 = vsel %vm823, %v709, 0
  %v1593 = vsel %vm823, %v710, 0
  %v1596 = vsel %vm823, %v711, 0
  %v1599 = vsel %vm823, %v712, 0
  %v1602 = vsel %vm823, %v713, 0
  %v1605 = vsel %vm823, %v714, 0
  %v1608 = vsel %vm823, %v715, 0
  %v1611 = vsel %vm823, %v716, 0
  %v1614 = vsel %vm823, %v717, 0
  %v1617 = vsel %vm823, %v718, 0
  %v1620 = vsel %vm823, %v719, 0
  %v1623 = vsel %vm823, %v720, 0
  %v1626 = vsel %vm823, %v721, 0
  %v1629 = vsel %vm823, %v722, 0
  %v1632 = vsel %vm823, %v723, 0
  %v1635 = vsel %vm823, %v724, 0
  %v1638 = vsel %vm823, %v725, 0
  %v1641 = vsel %vm823, %v726, 0
  %v1644 = vsel %vm823, %v727, 0
  %v1647 = vsel %vm823, %v728, 0
  %v1650 = vsel %vm823, %v729, 0
  %v1653 = vsel %vm823, %v730, 0
  %v1656 = vsel %vm823, %v731, 0
  %v1659 = vsel %vm823, %v732, 0
  %v1662 = vsel %vm823, %v733, 0
  %v1665 = vsel %vm823, %v734, 0
  %v1668 = vsel %vm823, %v735, 0
  %v1671 = vsel %vm823, %v736, 0
  %v1674 = vsel %vm823, %v737, 0
  %v1677 = vsel %vm823, %v738, 0
  %v1680 = vsel %vm823, %v739, 0
  %v1683 = vsel %vm823, %v740, 0
  %v1686 = vsel %vm823, %v741, 0
  %v1689 = vsel %vm823, %v742, 0
  %v1692 = vsel %vm823, %v743, 0
  %vm1694 = vcmask 1040384
  %v1696 = vsel %vm1694, %v184, 0
  %1698 = vmatpush.msra.mxu0 0.0
  %1699 = vmatpush.msra.mxu0 0.0
  %1700 = vmatpush.msra.mxu0 0.0
  %1701 = vmatpush.msra.mxu0 0.0
  %1702 = vmatpush.msra.mxu0 0.0
  %1703 = vmatpush.msra.mxu0 0.0
  %1704 = vmatpush.msra.mxu0 0.0
  %1705 = vmatpush.msra.mxu0 0.0
  %1706 = vmatpush.msra.mxu0 0.0
  %1707 = vmatpush.msra.mxu0 0.0
  %1708 = vmatpush.msra.mxu0 0.0
  %1709 = vmatpush.msra.mxu0 0.0
  %1710 = vmatpush.msra.mxu0 %v1696
  %1711 = vmatpush.msra.mxu0 %v169
  %1712 = vmatpush.msra.mxu0 %v154
  %1713 = vmatpush.msra.mxu0 %v139
  %1714 = vmatmul.f32.gmra.mxu0 %v1458
  %v1715 = vpop.f32.mrf.mxu0
  %v1716 = vadd.f32 0.0, %v1715
  %1717 = vmatmul.f32.gmra.mxu0 %v1461
  %v1718 = vpop.f32.mrf.mxu0
  %v1719 = vadd.f32 0.0, %v1718
  %1720 = vmatmul.f32.gmra.mxu0 %v1464
  %v1721 = vpop.f32.mrf.mxu0
  %v1722 = vadd.f32 0.0, %v1721
  %1723 = vmatmul.f32.gmra.mxu0 %v1467
  %v1724 = vpop.f32.mrf.mxu0
  %v1725 = vadd.f32 0.0, %v1724
  %1726 = vmatmul.f32.gmra.mxu0 %v1470
  %v1727 = vpop.f32.mrf.mxu0
  %v1728 = vadd.f32 0.0, %v1727
  %1729 = vmatmul.f32.gmra.mxu0 %v1473
  %v1730 = vpop.f32.mrf.mxu0
  %v1731 = vadd.f32 0.0, %v1730
  %1732 = vmatmul.f32.gmra.mxu0 %v1476
  %v1733 = vpop.f32.mrf.mxu0
  %v1734 = vadd.f32 0.0, %v1733
  %1735 = vmatmul.f32.gmra.mxu0 %v1479
  %v1736 = vpop.f32.mrf.mxu0
  %v1737 = vadd.f32 0.0, %v1736
  %1738 = vmatmul.f32.gmra.mxu0 %v1482
  %v1739 = vpop.f32.mrf.mxu0
  %v1740 = vadd.f32 0.0, %v1739
  %1741 = vmatmul.f32.gmra.mxu0 %v1485
  %v1742 = vpop.f32.mrf.mxu0
  %v1743 = vadd.f32 0.0, %v1742
  %1744 = vmatmul.f32.gmra.mxu0 %v1488
  %v1745 = vpop.f32.mrf.mxu0
  %v1746 = vadd.f32 0.0, %v1745
  %1747 = vmatmul.f32.gmra.mxu0 %v1491
  %v1748 = vpop.f32.mrf.mxu0
  %v1749 = vadd.f32 0.0, %v1748
  %1750 = vmatmul.f32.gmra.mxu0 %v1494
  %v1751 = vpop.f32.mrf.mxu0
  %v1752 = vadd.f32 0.0, %v1751
  %1753 = vmatmul.f32.gmra.mxu0 %v1497
  %v1754 = vpop.f32.mrf.mxu0
  %v1755 = vadd.f32 0.0, %v1754
  %1756 = vmatmul.f32.gmra.mxu0 %v1500
  %v1757 = vpop.f32.mrf.mxu0
  %v1758 = vadd.f32 0.0, %v1757
  %1759 = vmatmul.f32.gmra.mxu0 %v1503
  %v1760 = vpop.f32.mrf.mxu0
  %v1761 = vadd.f32 0.0, %v1760
  %1762 = vmatmul.f32.gmra.mxu0 %v1506
  %v1763 = vpop.f32.mrf.mxu0
  %v1764 = vadd.f32 0.0, %v1763
  %1765 = vmatmul.f32.gmra.mxu0 %v1509
  %v1766 = vpop.f32.mrf.mxu0
  %v1767 = vadd.f32 0.0, %v1766
  %1768 = vmatmul.f32.gmra.mxu0 %v1512
  %v1769 = vpop.f32.mrf.mxu0
  %v1770 = vadd.f32 0.0, %v1769
  %1771 = vmatmul.f32.gmra.mxu0 %v1515
  %v1772 = vpop.f32.mrf.mxu0
  %v1773 = vadd.f32 0.0, %v1772
  %1774 = vmatmul.f32.gmra.mxu0 %v1518
  %v1775 = vpop.f32.mrf.mxu0
  %v1776 = vadd.f32 0.0, %v1775
  %1777 = vmatmul.f32.gmra.mxu0 %v1521
  %v1778 = vpop.f32.mrf.mxu0
  %v1779 = vadd.f32 0.0, %v1778
  %1780 = vmatmul.f32.gmra.mxu0 %v1524
  %v1781 = vpop.f32.mrf.mxu0
  %v1782 = vadd.f32 0.0, %v1781
  %1783 = vmatmul.f32.gmra.mxu0 %v1527
  %v1784 = vpop.f32.mrf.mxu0
  %v1785 = vadd.f32 0.0, %v1784
  %1786 = vmatmul.f32.gmra.mxu0 %v1530
  %v1787 = vpop.f32.mrf.mxu0
  %v1788 = vadd.f32 0.0, %v1787
  %1789 = vmatmul.f32.gmra.mxu0 %v1533
  %v1790 = vpop.f32.mrf.mxu0
  %v1791 = vadd.f32 0.0, %v1790
  %1792 = vmatmul.f32.gmra.mxu0 %v1536
  %v1793 = vpop.f32.mrf.mxu0
  %v1794 = vadd.f32 0.0, %v1793
  %1795 = vmatmul.f32.gmra.mxu0 %v1539
  %v1796 = vpop.f32.mrf.mxu0
  %v1797 = vadd.f32 0.0, %v1796
  %1798 = vmatmul.f32.gmra.mxu0 %v1542
  %v1799 = vpop.f32.mrf.mxu0
  %v1800 = vadd.f32 0.0, %v1799
  %1801 = vmatmul.f32.gmra.mxu0 %v1545
  %v1802 = vpop.f32.mrf.mxu0
  %v1803 = vadd.f32 0.0, %v1802
  %1804 = vmatmul.f32.gmra.mxu0 %v1548
  %v1805 = vpop.f32.mrf.mxu0
  %v1806 = vadd.f32 0.0, %v1805
  %1807 = vmatmul.f32.gmra.mxu0 %v1551
  %v1808 = vpop.f32.mrf.mxu0
  %v1809 = vadd.f32 0.0, %v1808
  %1810 = vmatmul.f32.gmra.mxu0 %v1554
  %v1811 = vpop.f32.mrf.mxu0
  %v1812 = vadd.f32 0.0, %v1811
  %1813 = vmatmul.f32.gmra.mxu0 %v1557
  %v1814 = vpop.f32.mrf.mxu0
  %v1815 = vadd.f32 0.0, %v1814
  %1816 = vmatmul.f32.gmra.mxu0 %v1560
  %v1817 = vpop.f32.mrf.mxu0
  %v1818 = vadd.f32 0.0, %v1817
  %1819 = vmatmul.f32.gmra.mxu0 %v1563
  %v1820 = vpop.f32.mrf.mxu0
  %v1821 = vadd.f32 0.0, %v1820
  %1822 = vmatmul.f32.gmra.mxu0 %v1566
  %v1823 = vpop.f32.mrf.mxu0
  %v1824 = vadd.f32 0.0, %v1823
  %1825 = vmatmul.f32.gmra.mxu0 %v1569
  %v1826 = vpop.f32.mrf.mxu0
  %v1827 = vadd.f32 0.0, %v1826
  %1828 = vmatmul.f32.gmra.mxu0 %v1572
  %v1829 = vpop.f32.mrf.mxu0
  %v1830 = vadd.f32 0.0, %v1829
  %1831 = vmatmul.f32.gmra.mxu0 %v1575
  %v1832 = vpop.f32.mrf.mxu0
  %v1833 = vadd.f32 0.0, %v1832
  %1834 = vmatmul.f32.gmra.mxu0 %v1578
  %v1835 = vpop.f32.mrf.mxu0
  %v1836 = vadd.f32 0.0, %v1835
  %1837 = vmatmul.f32.gmra.mxu0 %v1581
  %v1838 = vpop.f32.mrf.mxu0
  %v1839 = vadd.f32 0.0, %v1838
  %1840 = vmatmul.f32.gmra.mxu0 %v1584
  %v1841 = vpop.f32.mrf.mxu0
  %v1842 = vadd.f32 0.0, %v1841
  %1843 = vmatmul.f32.gmra.mxu0 %v1587
  %v1844 = vpop.f32.mrf.mxu0
  %v1845 = vadd.f32 0.0, %v1844
  %1846 = vmatmul.f32.gmra.mxu0 %v1590
  %v1847 = vpop.f32.mrf.mxu0
  %v1848 = vadd.f32 0.0, %v1847
  %1849 = vmatmul.f32.gmra.mxu0 %v1593
  %v1850 = vpop.f32.mrf.mxu0
  %v1851 = vadd.f32 0.0, %v1850
  %1852 = vmatmul.f32.gmra.mxu0 %v1596
  %v1853 = vpop.f32.mrf.mxu0
  %v1854 = vadd.f32 0.0, %v1853
  %1855 = vmatmul.f32.gmra.mxu0 %v1599
  %v1856 = vpop.f32.mrf.mxu0
  %v1857 = vadd.f32 0.0, %v1856
  %1858 = vmatmul.f32.gmra.mxu0 %v1602
  %v1859 = vpop.f32.mrf.mxu0
  %v1860 = vadd.f32 0.0, %v1859
  %1861 = vmatmul.f32.gmra.mxu0 %v1605
  %v1862 = vpop.f32.mrf.mxu0
  %v1863 = vadd.f32 0.0, %v1862
  %1864 = vmatmul.f32.gmra.mxu0 %v1608
  %v1865 = vpop.f32.mrf.mxu0
  %v1866 = vadd.f32 0.0, %v1865
  %1867 = vmatmul.f32.gmra.mxu0 %v1611
  %v1868 = vpop.f32.mrf.mxu0
  %v1869 = vadd.f32 0.0, %v1868
  %1870 = vmatmul.f32.gmra.mxu0 %v1614
  %v1871 = vpop.f32.mrf.mxu0
  %v1872 = vadd.f32 0.0, %v1871
  %1873 = vmatmul.f32.gmra.mxu0 %v1617
  %v1874 = vpop.f32.mrf.mxu0
  %v1875 = vadd.f32 0.0, %v1874
  %1876 = vmatmul.f32.gmra.mxu0 %v1620
  %v1877 = vpop.f32.mrf.mxu0
  %v1878 = vadd.f32 0.0, %v1877
  %1879 = vmatmul.f32.gmra.mxu0 %v1623
  %v1880 = vpop.f32.mrf.mxu0
  %v1881 = vadd.f32 0.0, %v1880
  %1882 = vmatmul.f32.gmra.mxu0 %v1626
  %v1883 = vpop.f32.mrf.mxu0
  %v1884 = vadd.f32 0.0, %v1883
  %1885 = vmatmul.f32.gmra.mxu0 %v1629
  %v1886 = vpop.f32.mrf.mxu0
  %v1887 = vadd.f32 0.0, %v1886
  %1888 = vmatmul.f32.gmra.mxu0 %v1632
  %v1889 = vpop.f32.mrf.mxu0
  %v1890 = vadd.f32 0.0, %v1889
  %1891 = vmatmul.f32.gmra.mxu0 %v1635
  %v1892 = vpop.f32.mrf.mxu0
  %v1893 = vadd.f32 0.0, %v1892
  %1894 = vmatmul.f32.gmra.mxu0 %v1638
  %v1895 = vpop.f32.mrf.mxu0
  %v1896 = vadd.f32 0.0, %v1895
  %1897 = vmatmul.f32.gmra.mxu0 %v1641
  %v1898 = vpop.f32.mrf.mxu0
  %v1899 = vadd.f32 0.0, %v1898
  %1900 = vmatmul.f32.gmra.mxu0 %v1644
  %v1901 = vpop.f32.mrf.mxu0
  %v1902 = vadd.f32 0.0, %v1901
  %1903 = vmatmul.f32.gmra.mxu0 %v1647
  %v1904 = vpop.f32.mrf.mxu0
  %v1905 = vadd.f32 0.0, %v1904
  %1906 = vmatmul.f32.gmra.mxu0 %v1650
  %v1907 = vpop.f32.mrf.mxu0
  %v1908 = vadd.f32 0.0, %v1907
  %1909 = vmatmul.f32.gmra.mxu0 %v1653
  %v1910 = vpop.f32.mrf.mxu0
  %v1911 = vadd.f32 0.0, %v1910
  %1912 = vmatmul.f32.gmra.mxu0 %v1656
  %v1913 = vpop.f32.mrf.mxu0
  %v1914 = vadd.f32 0.0, %v1913
  %1915 = vmatmul.f32.gmra.mxu0 %v1659
  %v1916 = vpop.f32.mrf.mxu0
  %v1917 = vadd.f32 0.0, %v1916
  %1918 = vmatmul.f32.gmra.mxu0 %v1662
  %v1919 = vpop.f32.mrf.mxu0
  %v1920 = vadd.f32 0.0, %v1919
  %1921 = vmatmul.f32.gmra.mxu0 %v1665
  %v1922 = vpop.f32.mrf.mxu0
  %v1923 = vadd.f32 0.0, %v1922
  %1924 = vmatmul.f32.gmra.mxu0 %v1668
  %v1925 = vpop.f32.mrf.mxu0
  %v1926 = vadd.f32 0.0, %v1925
  %1927 = vmatmul.f32.gmra.mxu0 %v1671
  %v1928 = vpop.f32.mrf.mxu0
  %v1929 = vadd.f32 0.0, %v1928
  %1930 = vmatmul.f32.gmra.mxu0 %v1674
  %v1931 = vpop.f32.mrf.mxu0
  %v1932 = vadd.f32 0.0, %v1931
  %1933 = vmatmul.f32.gmra.mxu0 %v1677
  %v1934 = vpop.f32.mrf.mxu0
  %v1935 = vadd.f32 0.0, %v1934
  %1936 = vmatmul.f32.gmra.mxu0 %v1680
  %v1937 = vpop.f32.mrf.mxu0
  %v1938 = vadd.f32 0.0, %v1937
  %1939 = vmatmul.f32.gmra.mxu0 %v1683
  %v1940 = vpop.f32.mrf.mxu0
  %v1941 = vadd.f32 0.0, %v1940
  %1942 = vmatmul.f32.gmra.mxu0 %v1686
  %v1943 = vpop.f32.mrf.mxu0
  %v1944 = vadd.f32 0.0, %v1943
  %1945 = vmatmul.f32.gmra.mxu0 %v1689
  %v1946 = vpop.f32.mrf.mxu0
  %v1947 = vadd.f32 0.0, %v1946
  %1948 = vmatmul.f32.gmra.mxu0 %v1692
  %v1949 = vpop.f32.mrf.mxu0
  %v1950 = vadd.f32 0.0, %v1949
  %1951 = vdwg.mxu0
  %v1953 = vsel %vm823, %v1378, 0
  %v1956 = vsel %vm823, %v1379, 0
  %v1959 = vsel %vm823, %v1380, 0
  %v1962 = vsel %vm823, %v1381, 0
  %v1965 = vsel %vm823, %v1382, 0
  %v1968 = vsel %vm823, %v1383, 0
  %v1971 = vsel %vm823, %v1384, 0
  %v1974 = vsel %vm823, %v1385, 0
  %v1977 = vsel %vm823, %v1386, 0
  %v1980 = vsel %vm823, %v1387, 0
  %v1983 = vsel %vm823, %v1388, 0
  %v1986 = vsel %vm823, %v1389, 0
  %v1989 = vsel %vm823, %v1390, 0
  %v1992 = vsel %vm823, %v1391, 0
  %v1995 = vsel %vm823, %v1392, 0
  %v1998 = vsel %vm823, %v1393, 0
  %v2001 = vsel %vm823, %v1394, 0
  %v2004 = vsel %vm823, %v1395, 0
  %v2007 = vsel %vm823, %v1396, 0
  %v2010 = vsel %vm823, %v1397, 0
  %v2013 = vsel %vm823, %v1398, 0
  %v2016 = vsel %vm823, %v1399, 0
  %v2019 = vsel %vm823, %v1400, 0
  %v2022 = vsel %vm823, %v1401, 0
  %v2025 = vsel %vm823, %v1402, 0
  %v2028 = vsel %vm823, %v1403, 0
  %v2031 = vsel %vm823, %v1404, 0
  %v2034 = vsel %vm823, %v1405, 0
  %v2037 = vsel %vm823, %v1406, 0
  %v2040 = vsel %vm823, %v1407, 0
  %v2043 = vsel %vm823, %v1408, 0
  %v2046 = vsel %vm823, %v1409, 0
  %v2049 = vsel %vm823, %v1410, 0
  %v2052 = vsel %vm823, %v1411, 0
  %v2055 = vsel %vm823, %v1412, 0
  %v2058 = vsel %vm823, %v1413, 0
  %v2061 = vsel %vm823, %v1414, 0
  %v2064 = vsel %vm823, %v1415, 0
  %v2067 = vsel %vm823, %v1416, 0
  %v2070 = vsel %vm823, %v1417, 0
  %v2073 = vsel %vm823, %v1418, 0
  %v2076 = vsel %vm823, %v1419, 0
  %v2079 = vsel %vm823, %v1420, 0
  %v2082 = vsel %vm823, %v1421, 0
  %v2085 = vsel %vm823, %v1422, 0
  %v2088 = vsel %vm823, %v1423, 0
  %v2091 = vsel %vm823, %v1424, 0
  %v2094 = vsel %vm823, %v1425, 0
  %v2097 = vsel %vm823, %v1426, 0
  %v2100 = vsel %vm823, %v1427, 0
  %v2103 = vsel %vm823, %v1428, 0
  %v2106 = vsel %vm823, %v1429, 0
  %v2109 = vsel %vm823, %v1430, 0
  %v2112 = vsel %vm823, %v1431, 0
  %v2115 = vsel %vm823, %v1432, 0
  %v2118 = vsel %vm823, %v1433, 0
  %v2121 = vsel %vm823, %v1434, 0
  %v2124 = vsel %vm823, %v1435, 0
  %v2127 = vsel %vm823, %v1436, 0
  %v2130 = vsel %vm823, %v1437, 0
  %v2133 = vsel %vm823, %v1438, 0
  %v2136 = vsel %vm823, %v1439, 0
  %v2139 = vsel %vm823, %v1440, 0
  %v2142 = vsel %vm823, %v1441, 0
  %v2145 = vsel %vm823, %v1442, 0
  %v2148 = vsel %vm823, %v1443, 0
  %v2151 = vsel %vm823, %v1444, 0
  %v2154 = vsel %vm823, %v1445, 0
  %v2157 = vsel %vm823, %v1446, 0
  %v2160 = vsel %vm823, %v1447, 0
  %v2163 = vsel %vm823, %v1448, 0
  %v2166 = vsel %vm823, %v1449, 0
  %v2169 = vsel %vm823, %v1450, 0
  %v2172 = vsel %vm823, %v1451, 0
  %v2175 = vsel %vm823, %v1452, 0
  %v2178 = vsel %vm823, %v1453, 0
  %v2181 = vsel %vm823, %v1454, 0
  %v2184 = vsel %vm823, %v1455, 0
  %v2187 = vsel %vm823, %v1456, 0
  %2189 = vmatpush.msra.mxu0 0.0
  %2190 = vmatpush.msra.mxu0 0.0
  %2191 = vmatpush.msra.mxu0 0.0
  %2192 = vmatpush.msra.mxu0 0.0
  %2193 = vmatpush.msra.mxu0 0.0
  %2194 = vmatpush.msra.mxu0 0.0
  %2195 = vmatpush.msra.mxu0 0.0
  %2196 = vmatpush.msra.mxu0 0.0
  %2197 = vmatpush.msra.mxu0 0.0
  %2198 = vmatpush.msra.mxu0 0.0
  %2199 = vmatpush.msra.mxu0 0.0
  %2200 = vmatpush.msra.mxu0 0.0
  %2201 = vmatpush.msra.mxu0 %v1696
  %2202 = vmatpush.msra.mxu0 %v169
  %2203 = vmatpush.msra.mxu0 %v154
  %2204 = vmatpush.msra.mxu0 %v139
  %2205 = vmatmul.f32.gmra.mxu0 %v1953
  %v2206 = vpop.f32.mrf.mxu0
  %v2207 = vadd.f32 0.0, %v2206
  %2208 = vmatmul.f32.gmra.mxu0 %v1956
  %v2209 = vpop.f32.mrf.mxu0
  %v2210 = vadd.f32 0.0, %v2209
  %2211 = vmatmul.f32.gmra.mxu0 %v1959
  %v2212 = vpop.f32.mrf.mxu0
  %v2213 = vadd.f32 0.0, %v2212
  %2214 = vmatmul.f32.gmra.mxu0 %v1962
  %v2215 = vpop.f32.mrf.mxu0
  %v2216 = vadd.f32 0.0, %v2215
  %2217 = vmatmul.f32.gmra.mxu0 %v1965
  %v2218 = vpop.f32.mrf.mxu0
  %v2219 = vadd.f32 0.0, %v2218
  %2220 = vmatmul.f32.gmra.mxu0 %v1968
  %v2221 = vpop.f32.mrf.mxu0
  %v2222 = vadd.f32 0.0, %v2221
  %2223 = vmatmul.f32.gmra.mxu0 %v1971
  %v2224 = vpop.f32.mrf.mxu0
  %v2225 = vadd.f32 0.0, %v2224
  %2226 = vmatmul.f32.gmra.mxu0 %v1974
  %v2227 = vpop.f32.mrf.mxu0
  %v2228 = vadd.f32 0.0, %v2227
  %2229 = vmatmul.f32.gmra.mxu0 %v1977
  %v2230 = vpop.f32.mrf.mxu0
  %v2231 = vadd.f32 0.0, %v2230
  %2232 = vmatmul.f32.gmra.mxu0 %v1980
  %v2233 = vpop.f32.mrf.mxu0
  %v2234 = vadd.f32 0.0, %v2233
  %2235 = vmatmul.f32.gmra.mxu0 %v1983
  %v2236 = vpop.f32.mrf.mxu0
  %v2237 = vadd.f32 0.0, %v2236
  %2238 = vmatmul.f32.gmra.mxu0 %v1986
  %v2239 = vpop.f32.mrf.mxu0
  %v2240 = vadd.f32 0.0, %v2239
  %2241 = vmatmul.f32.gmra.mxu0 %v1989
  %v2242 = vpop.f32.mrf.mxu0
  %v2243 = vadd.f32 0.0, %v2242
  %2244 = vmatmul.f32.gmra.mxu0 %v1992
  %v2245 = vpop.f32.mrf.mxu0
  %v2246 = vadd.f32 0.0, %v2245
  %2247 = vmatmul.f32.gmra.mxu0 %v1995
  %v2248 = vpop.f32.mrf.mxu0
  %v2249 = vadd.f32 0.0, %v2248
  %2250 = vmatmul.f32.gmra.mxu0 %v1998
  %v2251 = vpop.f32.mrf.mxu0
  %v2252 = vadd.f32 0.0, %v2251
  %2253 = vmatmul.f32.gmra.mxu0 %v2001
  %v2254 = vpop.f32.mrf.mxu0
  %v2255 = vadd.f32 0.0, %v2254
  %2256 = vmatmul.f32.gmra.mxu0 %v2004
  %v2257 = vpop.f32.mrf.mxu0
  %v2258 = vadd.f32 0.0, %v2257
  %2259 = vmatmul.f32.gmra.mxu0 %v2007
  %v2260 = vpop.f32.mrf.mxu0
  %v2261 = vadd.f32 0.0, %v2260
  %2262 = vmatmul.f32.gmra.mxu0 %v2010
  %v2263 = vpop.f32.mrf.mxu0
  %v2264 = vadd.f32 0.0, %v2263
  %2265 = vmatmul.f32.gmra.mxu0 %v2013
  %v2266 = vpop.f32.mrf.mxu0
  %v2267 = vadd.f32 0.0, %v2266
  %2268 = vmatmul.f32.gmra.mxu0 %v2016
  %v2269 = vpop.f32.mrf.mxu0
  %v2270 = vadd.f32 0.0, %v2269
  %2271 = vmatmul.f32.gmra.mxu0 %v2019
  %v2272 = vpop.f32.mrf.mxu0
  %v2273 = vadd.f32 0.0, %v2272
  %2274 = vmatmul.f32.gmra.mxu0 %v2022
  %v2275 = vpop.f32.mrf.mxu0
  %v2276 = vadd.f32 0.0, %v2275
  %2277 = vmatmul.f32.gmra.mxu0 %v2025
  %v2278 = vpop.f32.mrf.mxu0
  %v2279 = vadd.f32 0.0, %v2278
  %2280 = vmatmul.f32.gmra.mxu0 %v2028
  %v2281 = vpop.f32.mrf.mxu0
  %v2282 = vadd.f32 0.0, %v2281
  %2283 = vmatmul.f32.gmra.mxu0 %v2031
  %v2284 = vpop.f32.mrf.mxu0
  %v2285 = vadd.f32 0.0, %v2284
  %2286 = vmatmul.f32.gmra.mxu0 %v2034
  %v2287 = vpop.f32.mrf.mxu0
  %v2288 = vadd.f32 0.0, %v2287
  %2289 = vmatmul.f32.gmra.mxu0 %v2037
  %v2290 = vpop.f32.mrf.mxu0
  %v2291 = vadd.f32 0.0, %v2290
  %2292 = vmatmul.f32.gmra.mxu0 %v2040
  %v2293 = vpop.f32.mrf.mxu0
  %v2294 = vadd.f32 0.0, %v2293
  %2295 = vmatmul.f32.gmra.mxu0 %v2043
  %v2296 = vpop.f32.mrf.mxu0
  %v2297 = vadd.f32 0.0, %v2296
  %2298 = vmatmul.f32.gmra.mxu0 %v2046
  %v2299 = vpop.f32.mrf.mxu0
  %v2300 = vadd.f32 0.0, %v2299
  %2301 = vmatmul.f32.gmra.mxu0 %v2049
  %v2302 = vpop.f32.mrf.mxu0
  %v2303 = vadd.f32 0.0, %v2302
  %2304 = vmatmul.f32.gmra.mxu0 %v2052
  %v2305 = vpop.f32.mrf.mxu0
  %v2306 = vadd.f32 0.0, %v2305
  %2307 = vmatmul.f32.gmra.mxu0 %v2055
  %v2308 = vpop.f32.mrf.mxu0
  %v2309 = vadd.f32 0.0, %v2308
  %2310 = vmatmul.f32.gmra.mxu0 %v2058
  %v2311 = vpop.f32.mrf.mxu0
  %v2312 = vadd.f32 0.0, %v2311
  %2313 = vmatmul.f32.gmra.mxu0 %v2061
  %v2314 = vpop.f32.mrf.mxu0
  %v2315 = vadd.f32 0.0, %v2314
  %2316 = vmatmul.f32.gmra.mxu0 %v2064
  %v2317 = vpop.f32.mrf.mxu0
  %v2318 = vadd.f32 0.0, %v2317
  %2319 = vmatmul.f32.gmra.mxu0 %v2067
  %v2320 = vpop.f32.mrf.mxu0
  %v2321 = vadd.f32 0.0, %v2320
  %2322 = vmatmul.f32.gmra.mxu0 %v2070
  %v2323 = vpop.f32.mrf.mxu0
  %v2324 = vadd.f32 0.0, %v2323
  %2325 = vmatmul.f32.gmra.mxu0 %v2073
  %v2326 = vpop.f32.mrf.mxu0
  %v2327 = vadd.f32 0.0, %v2326
  %2328 = vmatmul.f32.gmra.mxu0 %v2076
  %v2329 = vpop.f32.mrf.mxu0
  %v2330 = vadd.f32 0.0, %v2329
  %2331 = vmatmul.f32.gmra.mxu0 %v2079
  %v2332 = vpop.f32.mrf.mxu0
  %v2333 = vadd.f32 0.0, %v2332
  %2334 = vmatmul.f32.gmra.mxu0 %v2082
  %v2335 = vpop.f32.mrf.mxu0
  %v2336 = vadd.f32 0.0, %v2335
  %2337 = vmatmul.f32.gmra.mxu0 %v2085
  %v2338 = vpop.f32.mrf.mxu0
  %v2339 = vadd.f32 0.0, %v2338
  %2340 = vmatmul.f32.gmra.mxu0 %v2088
  %v2341 = vpop.f32.mrf.mxu0
  %v2342 = vadd.f32 0.0, %v2341
  %2343 = vmatmul.f32.gmra.mxu0 %v2091
  %v2344 = vpop.f32.mrf.mxu0
  %v2345 = vadd.f32 0.0, %v2344
  %2346 = vmatmul.f32.gmra.mxu0 %v2094
  %v2347 = vpop.f32.mrf.mxu0
  %v2348 = vadd.f32 0.0, %v2347
  %2349 = vmatmul.f32.gmra.mxu0 %v2097
  %v2350 = vpop.f32.mrf.mxu0
  %v2351 = vadd.f32 0.0, %v2350
  %2352 = vmatmul.f32.gmra.mxu0 %v2100
  %v2353 = vpop.f32.mrf.mxu0
  %v2354 = vadd.f32 0.0, %v2353
  %2355 = vmatmul.f32.gmra.mxu0 %v2103
  %v2356 = vpop.f32.mrf.mxu0
  %v2357 = vadd.f32 0.0, %v2356
  %2358 = vmatmul.f32.gmra.mxu0 %v2106
  %v2359 = vpop.f32.mrf.mxu0
  %v2360 = vadd.f32 0.0, %v2359
  %2361 = vmatmul.f32.gmra.mxu0 %v2109
  %v2362 = vpop.f32.mrf.mxu0
  %v2363 = vadd.f32 0.0, %v2362
  %2364 = vmatmul.f32.gmra.mxu0 %v2112
  %v2365 = vpop.f32.mrf.mxu0
  %v2366 = vadd.f32 0.0, %v2365
  %2367 = vmatmul.f32.gmra.mxu0 %v2115
  %v2368 = vpop.f32.mrf.mxu0
  %v2369 = vadd.f32 0.0, %v2368
  %2370 = vmatmul.f32.gmra.mxu0 %v2118
  %v2371 = vpop.f32.mrf.mxu0
  %v2372 = vadd.f32 0.0, %v2371
  %2373 = vmatmul.f32.gmra.mxu0 %v2121
  %v2374 = vpop.f32.mrf.mxu0
  %v2375 = vadd.f32 0.0, %v2374
  %2376 = vmatmul.f32.gmra.mxu0 %v2124
  %v2377 = vpop.f32.mrf.mxu0
  %v2378 = vadd.f32 0.0, %v2377
  %2379 = vmatmul.f32.gmra.mxu0 %v2127
  %v2380 = vpop.f32.mrf.mxu0
  %v2381 = vadd.f32 0.0, %v2380
  %2382 = vmatmul.f32.gmra.mxu0 %v2130
  %v2383 = vpop.f32.mrf.mxu0
  %v2384 = vadd.f32 0.0, %v2383
  %2385 = vmatmul.f32.gmra.mxu0 %v2133
  %v2386 = vpop.f32.mrf.mxu0
  %v2387 = vadd.f32 0.0, %v2386
  %2388 = vmatmul.f32.gmra.mxu0 %v2136
  %v2389 = vpop.f32.mrf.mxu0
  %v2390 = vadd.f32 0.0, %v2389
  %2391 = vmatmul.f32.gmra.mxu0 %v2139
  %v2392 = vpop.f32.mrf.mxu0
  %v2393 = vadd.f32 0.0, %v2392
  %2394 = vmatmul.f32.gmra.mxu0 %v2142
  %v2395 = vpop.f32.mrf.mxu0
  %v2396 = vadd.f32 0.0, %v2395
  %2397 = vmatmul.f32.gmra.mxu0 %v2145
  %v2398 = vpop.f32.mrf.mxu0
  %v2399 = vadd.f32 0.0, %v2398
  %2400 = vmatmul.f32.gmra.mxu0 %v2148
  %v2401 = vpop.f32.mrf.mxu0
  %v2402 = vadd.f32 0.0, %v2401
  %2403 = vmatmul.f32.gmra.mxu0 %v2151
  %v2404 = vpop.f32.mrf.mxu0
  %v2405 = vadd.f32 0.0, %v2404
  %2406 = vmatmul.f32.gmra.mxu0 %v2154
  %v2407 = vpop.f32.mrf.mxu0
  %v2408 = vadd.f32 0.0, %v2407
  %2409 = vmatmul.f32.gmra.mxu0 %v2157
  %v2410 = vpop.f32.mrf.mxu0
  %v2411 = vadd.f32 0.0, %v2410
  %2412 = vmatmul.f32.gmra.mxu0 %v2160
  %v2413 = vpop.f32.mrf.mxu0
  %v2414 = vadd.f32 0.0, %v2413
  %2415 = vmatmul.f32.gmra.mxu0 %v2163
  %v2416 = vpop.f32.mrf.mxu0
  %v2417 = vadd.f32 0.0, %v2416
  %2418 = vmatmul.f32.gmra.mxu0 %v2166
  %v2419 = vpop.f32.mrf.mxu0
  %v2420 = vadd.f32 0.0, %v2419
  %2421 = vmatmul.f32.gmra.mxu0 %v2169
  %v2422 = vpop.f32.mrf.mxu0
  %v2423 = vadd.f32 0.0, %v2422
  %2424 = vmatmul.f32.gmra.mxu0 %v2172
  %v2425 = vpop.f32.mrf.mxu0
  %v2426 = vadd.f32 0.0, %v2425
  %2427 = vmatmul.f32.gmra.mxu0 %v2175
  %v2428 = vpop.f32.mrf.mxu0
  %v2429 = vadd.f32 0.0, %v2428
  %2430 = vmatmul.f32.gmra.mxu0 %v2178
  %v2431 = vpop.f32.mrf.mxu0
  %v2432 = vadd.f32 0.0, %v2431
  %2433 = vmatmul.f32.gmra.mxu0 %v2181
  %v2434 = vpop.f32.mrf.mxu0
  %v2435 = vadd.f32 0.0, %v2434
  %2436 = vmatmul.f32.gmra.mxu0 %v2184
  %v2437 = vpop.f32.mrf.mxu0
  %v2438 = vadd.f32 0.0, %v2437
  %2439 = vmatmul.f32.gmra.mxu0 %v2187
  %v2440 = vpop.f32.mrf.mxu0
  %v2441 = vadd.f32 0.0, %v2440
  %2442 = vdwg.mxu0
  %v2443 = vmul.f32 %v1716, %v2207
  %v2444 = vmul.f32 %v1719, %v2210
  %v2445 = vmul.f32 %v1722, %v2213
  %v2446 = vmul.f32 %v1725, %v2216
  %v2447 = vmul.f32 %v1728, %v2219
  %v2448 = vmul.f32 %v1731, %v2222
  %v2449 = vmul.f32 %v1734, %v2225
  %v2450 = vmul.f32 %v1737, %v2228
  %v2451 = vmul.f32 %v1740, %v2231
  %v2452 = vmul.f32 %v1743, %v2234
  %v2453 = vmul.f32 %v1746, %v2237
  %v2454 = vmul.f32 %v1749, %v2240
  %v2455 = vmul.f32 %v1752, %v2243
  %v2456 = vmul.f32 %v1755, %v2246
  %v2457 = vmul.f32 %v1758, %v2249
  %v2458 = vmul.f32 %v1761, %v2252
  %v2459 = vmul.f32 %v1764, %v2255
  %v2460 = vmul.f32 %v1767, %v2258
  %v2461 = vmul.f32 %v1770, %v2261
  %v2462 = vmul.f32 %v1773, %v2264
  %v2463 = vmul.f32 %v1776, %v2267
  %v2464 = vmul.f32 %v1779, %v2270
  %v2465 = vmul.f32 %v1782, %v2273
  %v2466 = vmul.f32 %v1785, %v2276
  %v2467 = vmul.f32 %v1788, %v2279
  %v2468 = vmul.f32 %v1791, %v2282
  %v2469 = vmul.f32 %v1794, %v2285
  %v2470 = vmul.f32 %v1797, %v2288
  %v2471 = vmul.f32 %v1800, %v2291
  %v2472 = vmul.f32 %v1803, %v2294
  %v2473 = vmul.f32 %v1806, %v2297
  %v2474 = vmul.f32 %v1809, %v2300
  %v2475 = vmul.f32 %v1812, %v2303
  %v2476 = vmul.f32 %v1815, %v2306
  %v2477 = vmul.f32 %v1818, %v2309
  %v2478 = vmul.f32 %v1821, %v2312
  %v2479 = vmul.f32 %v1824, %v2315
  %v2480 = vmul.f32 %v1827, %v2318
  %v2481 = vmul.f32 %v1830, %v2321
  %v2482 = vmul.f32 %v1833, %v2324
  %v2483 = vmul.f32 %v1836, %v2327
  %v2484 = vmul.f32 %v1839, %v2330
  %v2485 = vmul.f32 %v1842, %v2333
  %v2486 = vmul.f32 %v1845, %v2336
  %v2487 = vmul.f32 %v1848, %v2339
  %v2488 = vmul.f32 %v1851, %v2342
  %v2489 = vmul.f32 %v1854, %v2345
  %v2490 = vmul.f32 %v1857, %v2348
  %v2491 = vmul.f32 %v1860, %v2351
  %v2492 = vmul.f32 %v1863, %v2354
  %v2493 = vmul.f32 %v1866, %v2357
  %v2494 = vmul.f32 %v1869, %v2360
  %v2495 = vmul.f32 %v1872, %v2363
  %v2496 = vmul.f32 %v1875, %v2366
  %v2497 = vmul.f32 %v1878, %v2369
  %v2498 = vmul.f32 %v1881, %v2372
  %v2499 = vmul.f32 %v1884, %v2375
  %v2500 = vmul.f32 %v1887, %v2378
  %v2501 = vmul.f32 %v1890, %v2381
  %v2502 = vmul.f32 %v1893, %v2384
  %v2503 = vmul.f32 %v1896, %v2387
  %v2504 = vmul.f32 %v1899, %v2390
  %v2505 = vmul.f32 %v1902, %v2393
  %v2506 = vmul.f32 %v1905, %v2396
  %v2507 = vmul.f32 %v1908, %v2399
  %v2508 = vmul.f32 %v1911, %v2402
  %v2509 = vmul.f32 %v1914, %v2405
  %v2510 = vmul.f32 %v1917, %v2408
  %v2511 = vmul.f32 %v1920, %v2411
  %v2512 = vmul.f32 %v1923, %v2414
  %v2513 = vmul.f32 %v1926, %v2417
  %v2514 = vmul.f32 %v1929, %v2420
  %v2515 = vmul.f32 %v1932, %v2423
  %v2516 = vmul.f32 %v1935, %v2426
  %v2517 = vmul.f32 %v1938, %v2429
  %v2518 = vmul.f32 %v1941, %v2432
  %v2519 = vmul.f32 %v1944, %v2435
  %v2520 = vmul.f32 %v1947, %v2438
  %v2521 = vmul.f32 %v1950, %v2441
  %v2522 = vld [vmem:[%s1] sm:$0xff]
  %v2523 = vld [vmem:[%s1 + $0x8] sm:$0xff]
  %v2524 = vld [vmem:[%s1 + $0x10] sm:$0xff]
  %v2525 = vld [vmem:[%s1 + $0x18] sm:$0xff]
  %v2526 = vld [vmem:[%s1 + $0x20] sm:$0xff]
  %v2527 = vld [vmem:[%s1 + $0x28] sm:$0xff]
  %v2528 = vld [vmem:[%s1 + $0x30] sm:$0xff]
  %v2529 = vld [vmem:[%s1 + $0x38] sm:$0xff]
  %v2530 = vld [vmem:[%s2] sm:$0x1]
  %v2532 = vperm.slane %v2530, 0
  %v2535 = vsel %vm59, %v2443, 0
  %v2538 = vsel %vm59, %v2444, 0
  %v2541 = vsel %vm59, %v2445, 0
  %v2544 = vsel %vm59, %v2446, 0
  %v2547 = vsel %vm59, %v2447, 0
  %v2550 = vsel %vm59, %v2448, 0
  %v2553 = vsel %vm59, %v2449, 0
  %v2556 = vsel %vm59, %v2450, 0
  %v2559 = vsel %vm59, %v2451, 0
  %v2562 = vsel %vm59, %v2452, 0
  %v2565 = vsel %vm59, %v2453, 0
  %v2568 = vsel %vm59, %v2454, 0
  %v2571 = vsel %vm59, %v2455, 0
  %v2574 = vsel %vm59, %v2456, 0
  %v2577 = vsel %vm59, %v2457, 0
  %v2580 = vsel %vm59, %v2458, 0
  %v2583 = vsel %vm59, %v2459, 0
  %v2586 = vsel %vm59, %v2460, 0
  %v2589 = vsel %vm59, %v2461, 0
  %v2592 = vsel %vm59, %v2462, 0
  %v2595 = vsel %vm59, %v2463, 0
  %v2598 = vsel %vm59, %v2464, 0
  %v2601 = vsel %vm59, %v2465, 0
  %v2604 = vsel %vm59, %v2466, 0
  %v2607 = vsel %vm59, %v2467, 0
  %v2610 = vsel %vm59, %v2468, 0
  %v2613 = vsel %vm59, %v2469, 0
  %v2616 = vsel %vm59, %v2470, 0
  %v2619 = vsel %vm59, %v2471, 0
  %v2622 = vsel %vm59, %v2472, 0
  %v2625 = vsel %vm59, %v2473, 0
  %v2628 = vsel %vm59, %v2474, 0
  %v2631 = vsel %vm59, %v2475, 0
  %v2634 = vsel %vm59, %v2476, 0
  %v2637 = vsel %vm59, %v2477, 0
  %v2640 = vsel %vm59, %v2478, 0
  %v2643 = vsel %vm59, %v2479, 0
  %v2646 = vsel %vm59, %v2480, 0
  %v2649 = vsel %vm59, %v2481, 0
  %v2652 = vsel %vm59, %v2482, 0
  %v2655 = vsel %vm59, %v2483, 0
  %v2658 = vsel %vm59, %v2484, 0
  %v2661 = vsel %vm59, %v2485, 0
  %v2664 = vsel %vm59, %v2486, 0
  %v2667 = vsel %vm59, %v2487, 0
  %v2670 = vsel %vm59, %v2488, 0
  %v2673 = vsel %vm59, %v2489, 0
  %v2676 = vsel %vm59, %v2490, 0
  %v2679 = vsel %vm59, %v2491, 0
  %v2682 = vsel %vm59, %v2492, 0
  %v2685 = vsel %vm59, %v2493, 0
  %v2688 = vsel %vm59, %v2494, 0
  %v2691 = vsel %vm59, %v2495, 0
  %v2694 = vsel %vm59, %v2496, 0
  %v2697 = vsel %vm59, %v2497, 0
  %v2700 = vsel %vm59, %v2498, 0
  %v2703 = vsel %vm59, %v2499, 0
  %v2706 = vsel %vm59, %v2500, 0
  %v2709 = vsel %vm59, %v2501, 0
  %v2712 = vsel %vm59, %v2502, 0
  %v2715 = vsel %vm59, %v2503, 0
  %v2718 = vsel %vm59, %v2504, 0
  %v2721 = vsel %vm59, %v2505, 0
  %v2724 = vsel %vm59, %v2506, 0
  %v2727 = vsel %vm59, %v2507, 0
  %v2730 = vsel %vm59, %v2508, 0
  %v2733 = vsel %vm59, %v2509, 0
  %v2736 = vsel %vm59, %v2510, 0
  %v2739 = vsel %vm59, %v2511, 0
  %v2742 = vsel %vm59, %v2512, 0
  %v2745 = vsel %vm59, %v2513, 0
  %v2748 = vsel %vm59, %v2514, 0
  %v2751 = vsel %vm59, %v2515, 0
  %v2754 = vsel %vm59, %v2516, 0
  %v2757 = vsel %vm59, %v2517, 0
  %v2760 = vsel %vm59, %v2518, 0
  %v2763 = vsel %vm59, %v2519, 0
  %v2766 = vsel %vm59, %v2520, 0
  %v2769 = vsel %vm59, %v2521, 0
  %2771 = vmatpush.msra.mxu0 0.0
  %2772 = vmatpush.msra.mxu0 0.0
  %2773 = vmatpush.msra.mxu0 0.0
  %2774 = vmatpush.msra.mxu0 0.0
  %2775 = vmatpush.msra.mxu0 0.0
  %2776 = vmatpush.msra.mxu0 0.0
  %2777 = vmatpush.msra.mxu0 0.0
  %2778 = vmatpush.msra.mxu0 0.0
  %2779 = vmatpush.msra.mxu0 %v2529
  %2780 = vmatpush.msra.mxu0 %v2528
  %2781 = vmatpush.msra.mxu0 %v2527
  %2782 = vmatpush.msra.mxu0 %v2526
  %2783 = vmatpush.msra.mxu0 %v2525
  %2784 = vmatpush.msra.mxu0 %v2524
  %2785 = vmatpush.msra.mxu0 %v2523
  %2786 = vmatpush.msra.mxu0 %v2522
  %2787 = vmatmul.f32.gmra.mxu0 %v2535
  %v2788 = vpop.f32.mrf.mxu0
  %v2789 = vadd.f32 %v2532, %v2788
  %2790 = vmatmul.f32.gmra.mxu0 %v2538
  %v2791 = vpop.f32.mrf.mxu0
  %v2792 = vadd.f32 %v2532, %v2791
  %2793 = vmatmul.f32.gmra.mxu0 %v2541
  %v2794 = vpop.f32.mrf.mxu0
  %v2795 = vadd.f32 %v2532, %v2794
  %2796 = vmatmul.f32.gmra.mxu0 %v2544
  %v2797 = vpop.f32.mrf.mxu0
  %v2798 = vadd.f32 %v2532, %v2797
  %2799 = vmatmul.f32.gmra.mxu0 %v2547
  %v2800 = vpop.f32.mrf.mxu0
  %v2801 = vadd.f32 %v2532, %v2800
  %2802 = vmatmul.f32.gmra.mxu0 %v2550
  %v2803 = vpop.f32.mrf.mxu0
  %v2804 = vadd.f32 %v2532, %v2803
  %2805 = vmatmul.f32.gmra.mxu0 %v2553
  %v2806 = vpop.f32.mrf.mxu0
  %v2807 = vadd.f32 %v2532, %v2806
  %2808 = vmatmul.f32.gmra.mxu0 %v2556
  %v2809 = vpop.f32.mrf.mxu0
  %v2810 = vadd.f32 %v2532, %v2809
  %2811 = vmatmul.f32.gmra.mxu0 %v2559
  %v2812 = vpop.f32.mrf.mxu0
  %v2813 = vadd.f32 %v2532, %v2812
  %2814 = vmatmul.f32.gmra.mxu0 %v2562
  %v2815 = vpop.f32.mrf.mxu0
  %v2816 = vadd.f32 %v2532, %v2815
  %2817 = vmatmul.f32.gmra.mxu0 %v2565
  %v2818 = vpop.f32.mrf.mxu0
  %v2819 = vadd.f32 %v2532, %v2818
  %2820 = vmatmul.f32.gmra.mxu0 %v2568
  %v2821 = vpop.f32.mrf.mxu0
  %v2822 = vadd.f32 %v2532, %v2821
  %2823 = vmatmul.f32.gmra.mxu0 %v2571
  %v2824 = vpop.f32.mrf.mxu0
  %v2825 = vadd.f32 %v2532, %v2824
  %2826 = vmatmul.f32.gmra.mxu0 %v2574
  %v2827 = vpop.f32.mrf.mxu0
  %v2828 = vadd.f32 %v2532, %v2827
  %2829 = vmatmul.f32.gmra.mxu0 %v2577
  %v2830 = vpop.f32.mrf.mxu0
  %v2831 = vadd.f32 %v2532, %v2830
  %2832 = vmatmul.f32.gmra.mxu0 %v2580
  %v2833 = vpop.f32.mrf.mxu0
  %v2834 = vadd.f32 %v2532, %v2833
  %2835 = vmatmul.f32.gmra.mxu0 %v2583
  %v2836 = vpop.f32.mrf.mxu0
  %v2837 = vadd.f32 %v2532, %v2836
  %2838 = vmatmul.f32.gmra.mxu0 %v2586
  %v2839 = vpop.f32.mrf.mxu0
  %v2840 = vadd.f32 %v2532, %v2839
  %2841 = vmatmul.f32.gmra.mxu0 %v2589
  %v2842 = vpop.f32.mrf.mxu0
  %v2843 = vadd.f32 %v2532, %v2842
  %2844 = vmatmul.f32.gmra.mxu0 %v2592
  %v2845 = vpop.f32.mrf.mxu0
  %v2846 = vadd.f32 %v2532, %v2845
  %2847 = vmatmul.f32.gmra.mxu0 %v2595
  %v2848 = vpop.f32.mrf.mxu0
  %v2849 = vadd.f32 %v2532, %v2848
  %2850 = vmatmul.f32.gmra.mxu0 %v2598
  %v2851 = vpop.f32.mrf.mxu0
  %v2852 = vadd.f32 %v2532, %v2851
  %2853 = vmatmul.f32.gmra.mxu0 %v2601
  %v2854 = vpop.f32.mrf.mxu0
  %v2855 = vadd.f32 %v2532, %v2854
  %2856 = vmatmul.f32.gmra.mxu0 %v2604
  %v2857 = vpop.f32.mrf.mxu0
  %v2858 = vadd.f32 %v2532, %v2857
  %2859 = vmatmul.f32.gmra.mxu0 %v2607
  %v2860 = vpop.f32.mrf.mxu0
  %v2861 = vadd.f32 %v2532, %v2860
  %2862 = vmatmul.f32.gmra.mxu0 %v2610
  %v2863 = vpop.f32.mrf.mxu0
  %v2864 = vadd.f32 %v2532, %v2863
  %2865 = vmatmul.f32.gmra.mxu0 %v2613
  %v2866 = vpop.f32.mrf.mxu0
  %v2867 = vadd.f32 %v2532, %v2866
  %2868 = vmatmul.f32.gmra.mxu0 %v2616
  %v2869 = vpop.f32.mrf.mxu0
  %v2870 = vadd.f32 %v2532, %v2869
  %2871 = vmatmul.f32.gmra.mxu0 %v2619
  %v2872 = vpop.f32.mrf.mxu0
  %v2873 = vadd.f32 %v2532, %v2872
  %2874 = vmatmul.f32.gmra.mxu0 %v2622
  %v2875 = vpop.f32.mrf.mxu0
  %v2876 = vadd.f32 %v2532, %v2875
  %2877 = vmatmul.f32.gmra.mxu0 %v2625
  %v2878 = vpop.f32.mrf.mxu0
  %v2879 = vadd.f32 %v2532, %v2878
  %2880 = vmatmul.f32.gmra.mxu0 %v2628
  %v2881 = vpop.f32.mrf.mxu0
  %v2882 = vadd.f32 %v2532, %v2881
  %2883 = vmatmul.f32.gmra.mxu0 %v2631
  %v2884 = vpop.f32.mrf.mxu0
  %v2885 = vadd.f32 %v2532, %v2884
  %2886 = vmatmul.f32.gmra.mxu0 %v2634
  %v2887 = vpop.f32.mrf.mxu0
  %v2888 = vadd.f32 %v2532, %v2887
  %2889 = vmatmul.f32.gmra.mxu0 %v2637
  %v2890 = vpop.f32.mrf.mxu0
  %v2891 = vadd.f32 %v2532, %v2890
  %2892 = vmatmul.f32.gmra.mxu0 %v2640
  %v2893 = vpop.f32.mrf.mxu0
  %v2894 = vadd.f32 %v2532, %v2893
  %2895 = vmatmul.f32.gmra.mxu0 %v2643
  %v2896 = vpop.f32.mrf.mxu0
  %v2897 = vadd.f32 %v2532, %v2896
  %2898 = vmatmul.f32.gmra.mxu0 %v2646
  %v2899 = vpop.f32.mrf.mxu0
  %v2900 = vadd.f32 %v2532, %v2899
  %2901 = vmatmul.f32.gmra.mxu0 %v2649
  %v2902 = vpop.f32.mrf.mxu0
  %v2903 = vadd.f32 %v2532, %v2902
  %2904 = vmatmul.f32.gmra.mxu0 %v2652
  %v2905 = vpop.f32.mrf.mxu0
  %v2906 = vadd.f32 %v2532, %v2905
  %2907 = vmatmul.f32.gmra.mxu0 %v2655
  %v2908 = vpop.f32.mrf.mxu0
  %v2909 = vadd.f32 %v2532, %v2908
  %2910 = vmatmul.f32.gmra.mxu0 %v2658
  %v2911 = vpop.f32.mrf.mxu0
  %v2912 = vadd.f32 %v2532, %v2911
  %2913 = vmatmul.f32.gmra.mxu0 %v2661
  %v2914 = vpop.f32.mrf.mxu0
  %v2915 = vadd.f32 %v2532, %v2914
  %2916 = vmatmul.f32.gmra.mxu0 %v2664
  %v2917 = vpop.f32.mrf.mxu0
  %v2918 = vadd.f32 %v2532, %v2917
  %2919 = vmatmul.f32.gmra.mxu0 %v2667
  %v2920 = vpop.f32.mrf.mxu0
  %v2921 = vadd.f32 %v2532, %v2920
  %2922 = vmatmul.f32.gmra.mxu0 %v2670
  %v2923 = vpop.f32.mrf.mxu0
  %v2924 = vadd.f32 %v2532, %v2923
  %2925 = vmatmul.f32.gmra.mxu0 %v2673
  %v2926 = vpop.f32.mrf.mxu0
  %v2927 = vadd.f32 %v2532, %v2926
  %2928 = vmatmul.f32.gmra.mxu0 %v2676
  %v2929 = vpop.f32.mrf.mxu0
  %v2930 = vadd.f32 %v2532, %v2929
  %2931 = vmatmul.f32.gmra.mxu0 %v2679
  %v2932 = vpop.f32.mrf.mxu0
  %v2933 = vadd.f32 %v2532, %v2932
  %2934 = vmatmul.f32.gmra.mxu0 %v2682
  %v2935 = vpop.f32.mrf.mxu0
  %v2936 = vadd.f32 %v2532, %v2935
  %2937 = vmatmul.f32.gmra.mxu0 %v2685
  %v2938 = vpop.f32.mrf.mxu0
  %v2939 = vadd.f32 %v2532, %v2938
  %2940 = vmatmul.f32.gmra.mxu0 %v2688
  %v2941 = vpop.f32.mrf.mxu0
  %v2942 = vadd.f32 %v2532, %v2941
  %2943 = vmatmul.f32.gmra.mxu0 %v2691
  %v2944 = vpop.f32.mrf.mxu0
  %v2945 = vadd.f32 %v2532, %v2944
  %2946 = vmatmul.f32.gmra.mxu0 %v2694
  %v2947 = vpop.f32.mrf.mxu0
  %v2948 = vadd.f32 %v2532, %v2947
  %2949 = vmatmul.f32.gmra.mxu0 %v2697
  %v2950 = vpop.f32.mrf.mxu0
  %v2951 = vadd.f32 %v2532, %v2950
  %2952 = vmatmul.f32.gmra.mxu0 %v2700
  %v2953 = vpop.f32.mrf.mxu0
  %v2954 = vadd.f32 %v2532, %v2953
  %2955 = vmatmul.f32.gmra.mxu0 %v2703
  %v2956 = vpop.f32.mrf.mxu0
  %v2957 = vadd.f32 %v2532, %v2956
  %2958 = vmatmul.f32.gmra.mxu0 %v2706
  %v2959 = vpop.f32.mrf.mxu0
  %v2960 = vadd.f32 %v2532, %v2959
  %2961 = vmatmul.f32.gmra.mxu0 %v2709
  %v2962 = vpop.f32.mrf.mxu0
  %v2963 = vadd.f32 %v2532, %v2962
  %2964 = vmatmul.f32.gmra.mxu0 %v2712
  %v2965 = vpop.f32.mrf.mxu0
  %v2966 = vadd.f32 %v2532, %v2965
  %2967 = vmatmul.f32.gmra.mxu0 %v2715
  %v2968 = vpop.f32.mrf.mxu0
  %v2969 = vadd.f32 %v2532, %v2968
  %2970 = vmatmul.f32.gmra.mxu0 %v2718
  %v2971 = vpop.f32.mrf.mxu0
  %v2972 = vadd.f32 %v2532, %v2971
  %2973 = vmatmul.f32.gmra.mxu0 %v2721
  %v2974 = vpop.f32.mrf.mxu0
  %v2975 = vadd.f32 %v2532, %v2974
  %2976 = vmatmul.f32.gmra.mxu0 %v2724
  %v2977 = vpop.f32.mrf.mxu0
  %v2978 = vadd.f32 %v2532, %v2977
  %2979 = vmatmul.f32.gmra.mxu0 %v2727
  %v2980 = vpop.f32.mrf.mxu0
  %v2981 = vadd.f32 %v2532, %v2980
  %2982 = vmatmul.f32.gmra.mxu0 %v2730
  %v2983 = vpop.f32.mrf.mxu0
  %v2984 = vadd.f32 %v2532, %v2983
  %2985 = vmatmul.f32.gmra.mxu0 %v2733
  %v2986 = vpop.f32.mrf.mxu0
  %v2987 = vadd.f32 %v2532, %v2986
  %2988 = vmatmul.f32.gmra.mxu0 %v2736
  %v2989 = vpop.f32.mrf.mxu0
  %v2990 = vadd.f32 %v2532, %v2989
  %2991 = vmatmul.f32.gmra.mxu0 %v2739
  %v2992 = vpop.f32.mrf.mxu0
  %v2993 = vadd.f32 %v2532, %v2992
  %2994 = vmatmul.f32.gmra.mxu0 %v2742
  %v2995 = vpop.f32.mrf.mxu0
  %v2996 = vadd.f32 %v2532, %v2995
  %2997 = vmatmul.f32.gmra.mxu0 %v2745
  %v2998 = vpop.f32.mrf.mxu0
  %v2999 = vadd.f32 %v2532, %v2998
  %3000 = vmatmul.f32.gmra.mxu0 %v2748
  %v3001 = vpop.f32.mrf.mxu0
  %v3002 = vadd.f32 %v2532, %v3001
  %3003 = vmatmul.f32.gmra.mxu0 %v2751
  %v3004 = vpop.f32.mrf.mxu0
  %v3005 = vadd.f32 %v2532, %v3004
  %3006 = vmatmul.f32.gmra.mxu0 %v2754
  %v3007 = vpop.f32.mrf.mxu0
  %v3008 = vadd.f32 %v2532, %v3007
  %3009 = vmatmul.f32.gmra.mxu0 %v2757
  %v3010 = vpop.f32.mrf.mxu0
  %v3011 = vadd.f32 %v2532, %v3010
  %3012 = vmatmul.f32.gmra.mxu0 %v2760
  %v3013 = vpop.f32.mrf.mxu0
  %v3014 = vadd.f32 %v2532, %v3013
  %3015 = vmatmul.f32.gmra.mxu0 %v2763
  %v3016 = vpop.f32.mrf.mxu0
  %v3017 = vadd.f32 %v2532, %v3016
  %3018 = vmatmul.f32.gmra.mxu0 %v2766
  %v3019 = vpop.f32.mrf.mxu0
  %v3020 = vadd.f32 %v2532, %v3019
  %3021 = vmatmul.f32.gmra.mxu0 %v2769
  %v3022 = vpop.f32.mrf.mxu0
  %v3023 = vadd.f32 %v2532, %v3022
  %3024 = vdwg.mxu0
  %vm3025 = vcmp.ge.f32.partialorder %v2789, 0.0
  %vm3026 = vcmp.ge.f32.partialorder %v2792, 0.0
  %vm3027 = vcmp.ge.f32.partialorder %v2795, 0.0
  %vm3028 = vcmp.ge.f32.partialorder %v2798, 0.0
  %vm3029 = vcmp.ge.f32.partialorder %v2801, 0.0
  %vm3030 = vcmp.ge.f32.partialorder %v2804, 0.0
  %vm3031 = vcmp.ge.f32.partialorder %v2807, 0.0
  %vm3032 = vcmp.ge.f32.partialorder %v2810, 0.0
  %vm3033 = vcmp.ge.f32.partialorder %v2813, 0.0
  %vm3034 = vcmp.ge.f32.partialorder %v2816, 0.0
  %vm3035 = vcmp.ge.f32.partialorder %v2819, 0.0
  %vm3036 = vcmp.ge.f32.partialorder %v2822, 0.0
  %vm3037 = vcmp.ge.f32.partialorder %v2825, 0.0
  %vm3038 = vcmp.ge.f32.partialorder %v2828, 0.0
  %vm3039 = vcmp.ge.f32.partialorder %v2831, 0.0
  %vm3040 = vcmp.ge.f32.partialorder %v2834, 0.0
  %vm3041 = vcmp.ge.f32.partialorder %v2837, 0.0
  %vm3042 = vcmp.ge.f32.partialorder %v2840, 0.0
  %vm3043 = vcmp.ge.f32.partialorder %v2843, 0.0
  %vm3044 = vcmp.ge.f32.partialorder %v2846, 0.0
  %vm3045 = vcmp.ge.f32.partialorder %v2849, 0.0
  %vm3046 = vcmp.ge.f32.partialorder %v2852, 0.0
  %vm3047 = vcmp.ge.f32.partialorder %v2855, 0.0
  %vm3048 = vcmp.ge.f32.partialorder %v2858, 0.0
  %vm3049 = vcmp.ge.f32.partialorder %v2861, 0.0
  %vm3050 = vcmp.ge.f32.partialorder %v2864, 0.0
  %vm3051 = vcmp.ge.f32.partialorder %v2867, 0.0
  %vm3052 = vcmp.ge.f32.partialorder %v2870, 0.0
  %vm3053 = vcmp.ge.f32.partialorder %v2873, 0.0
  %vm3054 = vcmp.ge.f32.partialorder %v2876, 0.0
  %vm3055 = vcmp.ge.f32.partialorder %v2879, 0.0
  %vm3056 = vcmp.ge.f32.partialorder %v2882, 0.0
  %vm3057 = vcmp.ge.f32.partialorder %v2885, 0.0
  %vm3058 = vcmp.ge.f32.partialorder %v2888, 0.0
  %vm3059 = vcmp.ge.f32.partialorder %v2891, 0.0
  %vm3060 = vcmp.ge.f32.partialorder %v2894, 0.0
  %vm3061 = vcmp.ge.f32.partialorder %v2897, 0.0
  %vm3062 = vcmp.ge.f32.partialorder %v2900, 0.0
  %vm3063 = vcmp.ge.f32.partialorder %v2903, 0.0
  %vm3064 = vcmp.ge.f32.partialorder %v2906, 0.0
  %vm3065 = vcmp.ge.f32.partialorder %v2909, 0.0
  %vm3066 = vcmp.ge.f32.partialorder %v2912, 0.0
  %vm3067 = vcmp.ge.f32.partialorder %v2915, 0.0
  %vm3068 = vcmp.ge.f32.partialorder %v2918, 0.0
  %vm3069 = vcmp.ge.f32.partialorder %v2921, 0.0
  %vm3070 = vcmp.ge.f32.partialorder %v2924, 0.0
  %vm3071 = vcmp.ge.f32.partialorder %v2927, 0.0
  %vm3072 = vcmp.ge.f32.partialorder %v2930, 0.0
  %vm3073 = vcmp.ge.f32.partialorder %v2933, 0.0
  %vm3074 = vcmp.ge.f32.partialorder %v2936, 0.0
  %vm3075 = vcmp.ge.f32.partialorder %v2939, 0.0
  %vm3076 = vcmp.ge.f32.partialorder %v2942, 0.0
  %vm3077 = vcmp.ge.f32.partialorder %v2945, 0.0
  %vm3078 = vcmp.ge.f32.partialorder %v2948, 0.0
  %vm3079 = vcmp.ge.f32.partialorder %v2951, 0.0
  %vm3080 = vcmp.ge.f32.partialorder %v2954, 0.0
  %vm3081 = vcmp.ge.f32.partialorder %v2957, 0.0
  %vm3082 = vcmp.ge.f32.partialorder %v2960, 0.0
  %vm3083 = vcmp.ge.f32.partialorder %v2963, 0.0
  %vm3084 = vcmp.ge.f32.partialorder %v2966, 0.0
  %vm3085 = vcmp.ge.f32.partialorder %v2969, 0.0
  %vm3086 = vcmp.ge.f32.partialorder %v2972, 0.0
  %vm3087 = vcmp.ge.f32.partialorder %v2975, 0.0
  %vm3088 = vcmp.ge.f32.partialorder %v2978, 0.0
  %vm3089 = vcmp.ge.f32.partialorder %v2981, 0.0
  %vm3090 = vcmp.ge.f32.partialorder %v2984, 0.0
  %vm3091 = vcmp.ge.f32.partialorder %v2987, 0.0
  %vm3092 = vcmp.ge.f32.partialorder %v2990, 0.0
  %vm3093 = vcmp.ge.f32.partialorder %v2993, 0.0
  %vm3094 = vcmp.ge.f32.partialorder %v2996, 0.0
  %vm3095 = vcmp.ge.f32.partialorder %v2999, 0.0
  %vm3096 = vcmp.ge.f32.partialorder %v3002, 0.0
  %vm3097 = vcmp.ge.f32.partialorder %v3005, 0.0
  %vm3098 = vcmp.ge.f32.partialorder %v3008, 0.0
  %vm3099 = vcmp.ge.f32.partialorder %v3011, 0.0
  %vm3100 = vcmp.ge.f32.partialorder %v3014, 0.0
  %vm3101 = vcmp.ge.f32.partialorder %v3017, 0.0
  %vm3102 = vcmp.ge.f32.partialorder %v3020, 0.0
  %vm3103 = vcmp.ge.f32.partialorder %v3023, 0.0
  %v3104 = vmul.f32 %v2789, 0.01
  %v3105 = vmul.f32 %v2792, 0.01
  %v3106 = vmul.f32 %v2795, 0.01
  %v3107 = vmul.f32 %v2798, 0.01
  %v3108 = vmul.f32 %v2801, 0.01
  %v3109 = vmul.f32 %v2804, 0.01
  %v3110 = vmul.f32 %v2807, 0.01
  %v3111 = vmul.f32 %v2810, 0.01
  %v3112 = vmul.f32 %v2813, 0.01
  %v3113 = vmul.f32 %v2816, 0.01
  %v3114 = vmul.f32 %v2819, 0.01
  %v3115 = vmul.f32 %v2822, 0.01
  %v3116 = vmul.f32 %v2825, 0.01
  %v3117 = vmul.f32 %v2828, 0.01
  %v3118 = vmul.f32 %v2831, 0.01
  %v3119 = vmul.f32 %v2834, 0.01
  %v3120 = vmul.f32 %v2837, 0.01
  %v3121 = vmul.f32 %v2840, 0.01
  %v3122 = vmul.f32 %v2843, 0.01
  %v3123 = vmul.f32 %v2846, 0.01
  %v3124 = vmul.f32 %v2849, 0.01
  %v3125 = vmul.f32 %v2852, 0.01
  %v3126 = vmul.f32 %v2855, 0.01
  %v3127 = vmul.f32 %v2858, 0.01
  %v3128 = vmul.f32 %v2861, 0.01
  %v3129 = vmul.f32 %v2864, 0.01
  %v3130 = vmul.f32 %v2867, 0.01
  %v3131 = vmul.f32 %v2870, 0.01
  %v3132 = vmul.f32 %v2873, 0.01
  %v3133 = vmul.f32 %v2876, 0.01
  %v3134 = vmul.f32 %v2879, 0.01
  %v3135 = vmul.f32 %v2882, 0.01
  %v3136 = vmul.f32 %v2885, 0.01
  %v3137 = vmul.f32 %v2888, 0.01
  %v3138 = vmul.f32 %v2891, 0.01
  %v3139 = vmul.f32 %v2894, 0.01
  %v3140 = vmul.f32 %v2897, 0.01
  %v3141 = vmul.f32 %v2900, 0.01
  %v3142 = vmul.f32 %v2903, 0.01
  %v3143 = vmul.f32 %v2906, 0.01
  %v3144 = vmul.f32 %v2909, 0.01
  %v3145 = vmul.f32 %v2912, 0.01
  %v3146 = vmul.f32 %v2915, 0.01
  %v3147 = vmul.f32 %v2918, 0.01
  %v3148 = vmul.f32 %v2921, 0.01
  %v3149 = vmul.f32 %v2924, 0.01
  %v3150 = vmul.f32 %v2927, 0.01
  %v3151 = vmul.f32 %v2930, 0.01
  %v3152 = vmul.f32 %v2933, 0.01
  %v3153 = vmul.f32 %v2936, 0.01
  %v3154 = vmul.f32 %v2939, 0.01
  %v3155 = vmul.f32 %v2942, 0.01
  %v3156 = vmul.f32 %v2945, 0.01
  %v3157 = vmul.f32 %v2948, 0.01
  %v3158 = vmul.f32 %v2951, 0.01
  %v3159 = vmul.f32 %v2954, 0.01
  %v3160 = vmul.f32 %v2957, 0.01
  %v3161 = vmul.f32 %v2960, 0.01
  %v3162 = vmul.f32 %v2963, 0.01
  %v3163 = vmul.f32 %v2966, 0.01
  %v3164 = vmul.f32 %v2969, 0.01
  %v3165 = vmul.f32 %v2972, 0.01
  %v3166 = vmul.f32 %v2975, 0.01
  %v3167 = vmul.f32 %v2978, 0.01
  %v3168 = vmul.f32 %v2981, 0.01
  %v3169 = vmul.f32 %v2984, 0.01
  %v3170 = vmul.f32 %v2987, 0.01
  %v3171 = vmul.f32 %v2990, 0.01
  %v3172 = vmul.f32 %v2993, 0.01
  %v3173 = vmul.f32 %v2996, 0.01
  %v3174 = vmul.f32 %v2999, 0.01
  %v3175 = vmul.f32 %v3002, 0.01
  %v3176 = vmul.f32 %v3005, 0.01
  %v3177 = vmul.f32 %v3008, 0.01
  %v3178 = vmul.f32 %v3011, 0.01
  %v3179 = vmul.f32 %v3014, 0.01
  %v3180 = vmul.f32 %v3017, 0.01
  %v3181 = vmul.f32 %v3020, 0.01
  %v3182 = vmul.f32 %v3023, 0.01
  %v3183 = vsel %vm3025, %v2789, %v3104
  %v3184 = vsel %vm3026, %v2792, %v3105
  %v3185 = vsel %vm3027, %v2795, %v3106
  %v3186 = vsel %vm3028, %v2798, %v3107
  %v3187 = vsel %vm3029, %v2801, %v3108
  %v3188 = vsel %vm3030, %v2804, %v3109
  %v3189 = vsel %vm3031, %v2807, %v3110
  %v3190 = vsel %vm3032, %v2810, %v3111
  %v3191 = vsel %vm3033, %v2813, %v3112
  %v3192 = vsel %vm3034, %v2816, %v3113
  %v3193 = vsel %vm3035, %v2819, %v3114
  %v3194 = vsel %vm3036, %v2822, %v3115
  %v3195 = vsel %vm3037, %v2825, %v3116
  %v3196 = vsel %vm3038, %v2828, %v3117
  %v3197 = vsel %vm3039, %v2831, %v3118
  %v3198 = vsel %vm3040, %v2834, %v3119
  %v3199 = vsel %vm3041, %v2837, %v3120
  %v3200 = vsel %vm3042, %v2840, %v3121
  %v3201 = vsel %vm3043, %v2843, %v3122
  %v3202 = vsel %vm3044, %v2846, %v3123
  %v3203 = vsel %vm3045, %v2849, %v3124
  %v3204 = vsel %vm3046, %v2852, %v3125
  %v3205 = vsel %vm3047, %v2855, %v3126
  %v3206 = vsel %vm3048, %v2858, %v3127
  %v3207 = vsel %vm3049, %v2861, %v3128
  %v3208 = vsel %vm3050, %v2864, %v3129
  %v3209 = vsel %vm3051, %v2867, %v3130
  %v3210 = vsel %vm3052, %v2870, %v3131
  %v3211 = vsel %vm3053, %v2873, %v3132
  %v3212 = vsel %vm3054, %v2876, %v3133
  %v3213 = vsel %vm3055, %v2879, %v3134
  %v3214 = vsel %vm3056, %v2882, %v3135
  %v3215 = vsel %vm3057, %v2885, %v3136
  %v3216 = vsel %vm3058, %v2888, %v3137
  %v3217 = vsel %vm3059, %v2891, %v3138
  %v3218 = vsel %vm3060, %v2894, %v3139
  %v3219 = vsel %vm3061, %v2897, %v3140
  %v3220 = vsel %vm3062, %v2900, %v3141
  %v3221 = vsel %vm3063, %v2903, %v3142
  %v3222 = vsel %vm3064, %v2906, %v3143
  %v3223 = vsel %vm3065, %v2909, %v3144
  %v3224 = vsel %vm3066, %v2912, %v3145
  %v3225 = vsel %vm3067, %v2915, %v3146
  %v3226 = vsel %vm3068, %v2918, %v3147
  %v3227 = vsel %vm3069, %v2921, %v3148
  %v3228 = vsel %vm3070, %v2924, %v3149
  %v3229 = vsel %vm3071, %v2927, %v3150
  %v3230 = vsel %vm3072, %v2930, %v3151
  %v3231 = vsel %vm3073, %v2933, %v3152
  %v3232 = vsel %vm3074, %v2936, %v3153
  %v3233 = vsel %vm3075, %v2939, %v3154
  %v3234 = vsel %vm3076, %v2942, %v3155
  %v3235 = vsel %vm3077, %v2945, %v3156
  %v3236 = vsel %vm3078, %v2948, %v3157
  %v3237 = vsel %vm3079, %v2951, %v3158
  %v3238 = vsel %vm3080, %v2954, %v3159
  %v3239 = vsel %vm3081, %v2957, %v3160
  %v3240 = vsel %vm3082, %v2960, %v3161
  %v3241 = vsel %vm3083, %v2963, %v3162
  %v3242 = vsel %vm3084, %v2966, %v3163
  %v3243 = vsel %vm3085, %v2969, %v3164
  %v3244 = vsel %vm3086, %v2972, %v3165
  %v3245 = vsel %vm3087, %v2975, %v3166
  %v3246 = vsel %vm3088, %v2978, %v3167
  %v3247 = vsel %vm3089, %v2981, %v3168
  %v3248 = vsel %vm3090, %v2984, %v3169
  %v3249 = vsel %vm3091, %v2987, %v3170
  %v3250 = vsel %vm3092, %v2990, %v3171
  %v3251 = vsel %vm3093, %v2993, %v3172
  %v3252 = vsel %vm3094, %v2996, %v3173
  %v3253 = vsel %vm3095, %v2999, %v3174
  %v3254 = vsel %vm3096, %v3002, %v3175
  %v3255 = vsel %vm3097, %v3005, %v3176
  %v3256 = vsel %vm3098, %v3008, %v3177
  %v3257 = vsel %vm3099, %v3011, %v3178
  %v3258 = vsel %vm3100, %v3014, %v3179
  %v3259 = vsel %vm3101, %v3017, %v3180
  %v3260 = vsel %vm3102, %v3020, %v3181
  %v3261 = vsel %vm3103, %v3023, %v3182
  %v3262 = vld [vmem:[%s3] sm:$0xff]
  %v3263 = vld [vmem:[%s3 + $0x8] sm:$0xff]
  %v3264 = vld [vmem:[%s3 + $0x10] sm:$0xff]
  %v3265 = vld [vmem:[%s3 + $0x18] sm:$0xff]
  %v3266 = vld [vmem:[%s4] sm:$0x1]
  %v3268 = vperm.slane %v3266, 0
  %vm3270 = vcmask 261120
  %v3272 = vsel %vm3270, %v3183, 0
  %v3275 = vsel %vm3270, %v3184, 0
  %v3278 = vsel %vm3270, %v3185, 0
  %v3281 = vsel %vm3270, %v3186, 0
  %v3284 = vsel %vm3270, %v3187, 0
  %v3287 = vsel %vm3270, %v3188, 0
  %v3290 = vsel %vm3270, %v3189, 0
  %v3293 = vsel %vm3270, %v3190, 0
  %v3296 = vsel %vm3270, %v3191, 0
  %v3299 = vsel %vm3270, %v3192, 0
  %v3302 = vsel %vm3270, %v3193, 0
  %v3305 = vsel %vm3270, %v3194, 0
  %v3308 = vsel %vm3270, %v3195, 0
  %v3311 = vsel %vm3270, %v3196, 0
  %v3314 = vsel %vm3270, %v3197, 0
  %v3317 = vsel %vm3270, %v3198, 0
  %v3320 = vsel %vm3270, %v3199, 0
  %v3323 = vsel %vm3270, %v3200, 0
  %v3326 = vsel %vm3270, %v3201, 0
  %v3329 = vsel %vm3270, %v3202, 0
  %v3332 = vsel %vm3270, %v3203, 0
  %v3335 = vsel %vm3270, %v3204, 0
  %v3338 = vsel %vm3270, %v3205, 0
  %v3341 = vsel %vm3270, %v3206, 0
  %v3344 = vsel %vm3270, %v3207, 0
  %v3347 = vsel %vm3270, %v3208, 0
  %v3350 = vsel %vm3270, %v3209, 0
  %v3353 = vsel %vm3270, %v3210, 0
  %v3356 = vsel %vm3270, %v3211, 0
  %v3359 = vsel %vm3270, %v3212, 0
  %v3362 = vsel %vm3270, %v3213, 0
  %v3365 = vsel %vm3270, %v3214, 0
  %v3368 = vsel %vm3270, %v3215, 0
  %v3371 = vsel %vm3270, %v3216, 0
  %v3374 = vsel %vm3270, %v3217, 0
  %v3377 = vsel %vm3270, %v3218, 0
  %v3380 = vsel %vm3270, %v3219, 0
  %v3383 = vsel %vm3270, %v3220, 0
  %v3386 = vsel %vm3270, %v3221, 0
  %v3389 = vsel %vm3270, %v3222, 0
  %v3392 = vsel %vm3270, %v3223, 0
  %v3395 = vsel %vm3270, %v3224, 0
  %v3398 = vsel %vm3270, %v3225, 0
  %v3401 = vsel %vm3270, %v3226, 0
  %v3404 = vsel %vm3270, %v3227, 0
  %v3407 = vsel %vm3270, %v3228, 0
  %v3410 = vsel %vm3270, %v3229, 0
  %v3413 = vsel %vm3270, %v3230, 0
  %v3416 = vsel %vm3270, %v3231, 0
  %v3419 = vsel %vm3270, %v3232, 0
  %v3422 = vsel %vm3270, %v3233, 0
  %v3425 = vsel %vm3270, %v3234, 0
  %v3428 = vsel %vm3270, %v3235, 0
  %v3431 = vsel %vm3270, %v3236, 0
  %v3434 = vsel %vm3270, %v3237, 0
  %v3437 = vsel %vm3270, %v3238, 0
  %v3440 = vsel %vm3270, %v3239, 0
  %v3443 = vsel %vm3270, %v3240, 0
  %v3446 = vsel %vm3270, %v3241, 0
  %v3449 = vsel %vm3270, %v3242, 0
  %v3452 = vsel %vm3270, %v3243, 0
  %v3455 = vsel %vm3270, %v3244, 0
  %v3458 = vsel %vm3270, %v3245, 0
  %v3461 = vsel %vm3270, %v3246, 0
  %v3464 = vsel %vm3270, %v3247, 0
  %v3467 = vsel %vm3270, %v3248, 0
  %v3470 = vsel %vm3270, %v3249, 0
  %v3473 = vsel %vm3270, %v3250, 0
  %v3476 = vsel %vm3270, %v3251, 0
  %v3479 = vsel %vm3270, %v3252, 0
  %v3482 = vsel %vm3270, %v3253, 0
  %v3485 = vsel %vm3270, %v3254, 0
  %v3488 = vsel %vm3270, %v3255, 0
  %v3491 = vsel %vm3270, %v3256, 0
  %v3494 = vsel %vm3270, %v3257, 0
  %v3497 = vsel %vm3270, %v3258, 0
  %v3500 = vsel %vm3270, %v3259, 0
  %v3503 = vsel %vm3270, %v3260, 0
  %v3506 = vsel %vm3270, %v3261, 0
  %3508 = vmatpush.msra.mxu0 0.0
  %3509 = vmatpush.msra.mxu0 0.0
  %3510 = vmatpush.msra.mxu0 0.0
  %3511 = vmatpush.msra.mxu0 0.0
  %3512 = vmatpush.msra.mxu0 0.0
  %3513 = vmatpush.msra.mxu0 0.0
  %3514 = vmatpush.msra.mxu0 0.0
  %3515 = vmatpush.msra.mxu0 0.0
  %3516 = vmatpush.msra.mxu0 0.0
  %3517 = vmatpush.msra.mxu0 0.0
  %3518 = vmatpush.msra.mxu0 0.0
  %3519 = vmatpush.msra.mxu0 0.0
  %3520 = vmatpush.msra.mxu0 %v3265
  %3521 = vmatpush.msra.mxu0 %v3264
  %3522 = vmatpush.msra.mxu0 %v3263
  %3523 = vmatpush.msra.mxu0 %v3262
  %3524 = vmatmul.f32.gmra.mxu0 %v3272
  %v3525 = vpop.f32.mrf.mxu0
  %v3526 = vadd.f32 %v3268, %v3525
  %3527 = vmatmul.f32.gmra.mxu0 %v3275
  %v3528 = vpop.f32.mrf.mxu0
  %v3529 = vadd.f32 %v3268, %v3528
  %3530 = vmatmul.f32.gmra.mxu0 %v3278
  %v3531 = vpop.f32.mrf.mxu0
  %v3532 = vadd.f32 %v3268, %v3531
  %3533 = vmatmul.f32.gmra.mxu0 %v3281
  %v3534 = vpop.f32.mrf.mxu0
  %v3535 = vadd.f32 %v3268, %v3534
  %3536 = vmatmul.f32.gmra.mxu0 %v3284
  %v3537 = vpop.f32.mrf.mxu0
  %v3538 = vadd.f32 %v3268, %v3537
  %3539 = vmatmul.f32.gmra.mxu0 %v3287
  %v3540 = vpop.f32.mrf.mxu0
  %v3541 = vadd.f32 %v3268, %v3540
  %3542 = vmatmul.f32.gmra.mxu0 %v3290
  %v3543 = vpop.f32.mrf.mxu0
  %v3544 = vadd.f32 %v3268, %v3543
  %3545 = vmatmul.f32.gmra.mxu0 %v3293
  %v3546 = vpop.f32.mrf.mxu0
  %v3547 = vadd.f32 %v3268, %v3546
  %3548 = vmatmul.f32.gmra.mxu0 %v3296
  %v3549 = vpop.f32.mrf.mxu0
  %v3550 = vadd.f32 %v3268, %v3549
  %3551 = vmatmul.f32.gmra.mxu0 %v3299
  %v3552 = vpop.f32.mrf.mxu0
  %v3553 = vadd.f32 %v3268, %v3552
  %3554 = vmatmul.f32.gmra.mxu0 %v3302
  %v3555 = vpop.f32.mrf.mxu0
  %v3556 = vadd.f32 %v3268, %v3555
  %3557 = vmatmul.f32.gmra.mxu0 %v3305
  %v3558 = vpop.f32.mrf.mxu0
  %v3559 = vadd.f32 %v3268, %v3558
  %3560 = vmatmul.f32.gmra.mxu0 %v3308
  %v3561 = vpop.f32.mrf.mxu0
  %v3562 = vadd.f32 %v3268, %v3561
  %3563 = vmatmul.f32.gmra.mxu0 %v3311
  %v3564 = vpop.f32.mrf.mxu0
  %v3565 = vadd.f32 %v3268, %v3564
  %3566 = vmatmul.f32.gmra.mxu0 %v3314
  %v3567 = vpop.f32.mrf.mxu0
  %v3568 = vadd.f32 %v3268, %v3567
  %3569 = vmatmul.f32.gmra.mxu0 %v3317
  %v3570 = vpop.f32.mrf.mxu0
  %v3571 = vadd.f32 %v3268, %v3570
  %3572 = vmatmul.f32.gmra.mxu0 %v3320
  %v3573 = vpop.f32.mrf.mxu0
  %v3574 = vadd.f32 %v3268, %v3573
  %3575 = vmatmul.f32.gmra.mxu0 %v3323
  %v3576 = vpop.f32.mrf.mxu0
  %v3577 = vadd.f32 %v3268, %v3576
  %3578 = vmatmul.f32.gmra.mxu0 %v3326
  %v3579 = vpop.f32.mrf.mxu0
  %v3580 = vadd.f32 %v3268, %v3579
  %3581 = vmatmul.f32.gmra.mxu0 %v3329
  %v3582 = vpop.f32.mrf.mxu0
  %v3583 = vadd.f32 %v3268, %v3582
  %3584 = vmatmul.f32.gmra.mxu0 %v3332
  %v3585 = vpop.f32.mrf.mxu0
  %v3586 = vadd.f32 %v3268, %v3585
  %3587 = vmatmul.f32.gmra.mxu0 %v3335
  %v3588 = vpop.f32.mrf.mxu0
  %v3589 = vadd.f32 %v3268, %v3588
  %3590 = vmatmul.f32.gmra.mxu0 %v3338
  %v3591 = vpop.f32.mrf.mxu0
  %v3592 = vadd.f32 %v3268, %v3591
  %3593 = vmatmul.f32.gmra.mxu0 %v3341
  %v3594 = vpop.f32.mrf.mxu0
  %v3595 = vadd.f32 %v3268, %v3594
  %3596 = vmatmul.f32.gmra.mxu0 %v3344
  %v3597 = vpop.f32.mrf.mxu0
  %v3598 = vadd.f32 %v3268, %v3597
  %3599 = vmatmul.f32.gmra.mxu0 %v3347
  %v3600 = vpop.f32.mrf.mxu0
  %v3601 = vadd.f32 %v3268, %v3600
  %3602 = vmatmul.f32.gmra.mxu0 %v3350
  %v3603 = vpop.f32.mrf.mxu0
  %v3604 = vadd.f32 %v3268, %v3603
  %3605 = vmatmul.f32.gmra.mxu0 %v3353
  %v3606 = vpop.f32.mrf.mxu0
  %v3607 = vadd.f32 %v3268, %v3606
  %3608 = vmatmul.f32.gmra.mxu0 %v3356
  %v3609 = vpop.f32.mrf.mxu0
  %v3610 = vadd.f32 %v3268, %v3609
  %3611 = vmatmul.f32.gmra.mxu0 %v3359
  %v3612 = vpop.f32.mrf.mxu0
  %v3613 = vadd.f32 %v3268, %v3612
  %3614 = vmatmul.f32.gmra.mxu0 %v3362
  %v3615 = vpop.f32.mrf.mxu0
  %v3616 = vadd.f32 %v3268, %v3615
  %3617 = vmatmul.f32.gmra.mxu0 %v3365
  %v3618 = vpop.f32.mrf.mxu0
  %v3619 = vadd.f32 %v3268, %v3618
  %3620 = vmatmul.f32.gmra.mxu0 %v3368
  %v3621 = vpop.f32.mrf.mxu0
  %v3622 = vadd.f32 %v3268, %v3621
  %3623 = vmatmul.f32.gmra.mxu0 %v3371
  %v3624 = vpop.f32.mrf.mxu0
  %v3625 = vadd.f32 %v3268, %v3624
  %3626 = vmatmul.f32.gmra.mxu0 %v3374
  %v3627 = vpop.f32.mrf.mxu0
  %v3628 = vadd.f32 %v3268, %v3627
  %3629 = vmatmul.f32.gmra.mxu0 %v3377
  %v3630 = vpop.f32.mrf.mxu0
  %v3631 = vadd.f32 %v3268, %v3630
  %3632 = vmatmul.f32.gmra.mxu0 %v3380
  %v3633 = vpop.f32.mrf.mxu0
  %v3634 = vadd.f32 %v3268, %v3633
  %3635 = vmatmul.f32.gmra.mxu0 %v3383
  %v3636 = vpop.f32.mrf.mxu0
  %v3637 = vadd.f32 %v3268, %v3636
  %3638 = vmatmul.f32.gmra.mxu0 %v3386
  %v3639 = vpop.f32.mrf.mxu0
  %v3640 = vadd.f32 %v3268, %v3639
  %3641 = vmatmul.f32.gmra.mxu0 %v3389
  %v3642 = vpop.f32.mrf.mxu0
  %v3643 = vadd.f32 %v3268, %v3642
  %3644 = vmatmul.f32.gmra.mxu0 %v3392
  %v3645 = vpop.f32.mrf.mxu0
  %v3646 = vadd.f32 %v3268, %v3645
  %3647 = vmatmul.f32.gmra.mxu0 %v3395
  %v3648 = vpop.f32.mrf.mxu0
  %v3649 = vadd.f32 %v3268, %v3648
  %3650 = vmatmul.f32.gmra.mxu0 %v3398
  %v3651 = vpop.f32.mrf.mxu0
  %v3652 = vadd.f32 %v3268, %v3651
  %3653 = vmatmul.f32.gmra.mxu0 %v3401
  %v3654 = vpop.f32.mrf.mxu0
  %v3655 = vadd.f32 %v3268, %v3654
  %3656 = vmatmul.f32.gmra.mxu0 %v3404
  %v3657 = vpop.f32.mrf.mxu0
  %v3658 = vadd.f32 %v3268, %v3657
  %3659 = vmatmul.f32.gmra.mxu0 %v3407
  %v3660 = vpop.f32.mrf.mxu0
  %v3661 = vadd.f32 %v3268, %v3660
  %3662 = vmatmul.f32.gmra.mxu0 %v3410
  %v3663 = vpop.f32.mrf.mxu0
  %v3664 = vadd.f32 %v3268, %v3663
  %3665 = vmatmul.f32.gmra.mxu0 %v3413
  %v3666 = vpop.f32.mrf.mxu0
  %v3667 = vadd.f32 %v3268, %v3666
  %3668 = vmatmul.f32.gmra.mxu0 %v3416
  %v3669 = vpop.f32.mrf.mxu0
  %v3670 = vadd.f32 %v3268, %v3669
  %3671 = vmatmul.f32.gmra.mxu0 %v3419
  %v3672 = vpop.f32.mrf.mxu0
  %v3673 = vadd.f32 %v3268, %v3672
  %3674 = vmatmul.f32.gmra.mxu0 %v3422
  %v3675 = vpop.f32.mrf.mxu0
  %v3676 = vadd.f32 %v3268, %v3675
  %3677 = vmatmul.f32.gmra.mxu0 %v3425
  %v3678 = vpop.f32.mrf.mxu0
  %v3679 = vadd.f32 %v3268, %v3678
  %3680 = vmatmul.f32.gmra.mxu0 %v3428
  %v3681 = vpop.f32.mrf.mxu0
  %v3682 = vadd.f32 %v3268, %v3681
  %3683 = vmatmul.f32.gmra.mxu0 %v3431
  %v3684 = vpop.f32.mrf.mxu0
  %v3685 = vadd.f32 %v3268, %v3684
  %3686 = vmatmul.f32.gmra.mxu0 %v3434
  %v3687 = vpop.f32.mrf.mxu0
  %v3688 = vadd.f32 %v3268, %v3687
  %3689 = vmatmul.f32.gmra.mxu0 %v3437
  %v3690 = vpop.f32.mrf.mxu0
  %v3691 = vadd.f32 %v3268, %v3690
  %3692 = vmatmul.f32.gmra.mxu0 %v3440
  %v3693 = vpop.f32.mrf.mxu0
  %v3694 = vadd.f32 %v3268, %v3693
  %3695 = vmatmul.f32.gmra.mxu0 %v3443
  %v3696 = vpop.f32.mrf.mxu0
  %v3697 = vadd.f32 %v3268, %v3696
  %3698 = vmatmul.f32.gmra.mxu0 %v3446
  %v3699 = vpop.f32.mrf.mxu0
  %v3700 = vadd.f32 %v3268, %v3699
  %3701 = vmatmul.f32.gmra.mxu0 %v3449
  %v3702 = vpop.f32.mrf.mxu0
  %v3703 = vadd.f32 %v3268, %v3702
  %3704 = vmatmul.f32.gmra.mxu0 %v3452
  %v3705 = vpop.f32.mrf.mxu0
  %v3706 = vadd.f32 %v3268, %v3705
  %3707 = vmatmul.f32.gmra.mxu0 %v3455
  %v3708 = vpop.f32.mrf.mxu0
  %v3709 = vadd.f32 %v3268, %v3708
  %3710 = vmatmul.f32.gmra.mxu0 %v3458
  %v3711 = vpop.f32.mrf.mxu0
  %v3712 = vadd.f32 %v3268, %v3711
  %3713 = vmatmul.f32.gmra.mxu0 %v3461
  %v3714 = vpop.f32.mrf.mxu0
  %v3715 = vadd.f32 %v3268, %v3714
  %3716 = vmatmul.f32.gmra.mxu0 %v3464
  %v3717 = vpop.f32.mrf.mxu0
  %v3718 = vadd.f32 %v3268, %v3717
  %3719 = vmatmul.f32.gmra.mxu0 %v3467
  %v3720 = vpop.f32.mrf.mxu0
  %v3721 = vadd.f32 %v3268, %v3720
  %3722 = vmatmul.f32.gmra.mxu0 %v3470
  %v3723 = vpop.f32.mrf.mxu0
  %v3724 = vadd.f32 %v3268, %v3723
  %3725 = vmatmul.f32.gmra.mxu0 %v3473
  %v3726 = vpop.f32.mrf.mxu0
  %v3727 = vadd.f32 %v3268, %v3726
  %3728 = vmatmul.f32.gmra.mxu0 %v3476
  %v3729 = vpop.f32.mrf.mxu0
  %v3730 = vadd.f32 %v3268, %v3729
  %3731 = vmatmul.f32.gmra.mxu0 %v3479
  %v3732 = vpop.f32.mrf.mxu0
  %v3733 = vadd.f32 %v3268, %v3732
  %3734 = vmatmul.f32.gmra.mxu0 %v3482
  %v3735 = vpop.f32.mrf.mxu0
  %v3736 = vadd.f32 %v3268, %v3735
  %3737 = vmatmul.f32.gmra.mxu0 %v3485
  %v3738 = vpop.f32.mrf.mxu0
  %v3739 = vadd.f32 %v3268, %v3738
  %3740 = vmatmul.f32.gmra.mxu0 %v3488
  %v3741 = vpop.f32.mrf.mxu0
  %v3742 = vadd.f32 %v3268, %v3741
  %3743 = vmatmul.f32.gmra.mxu0 %v3491
  %v3744 = vpop.f32.mrf.mxu0
  %v3745 = vadd.f32 %v3268, %v3744
  %3746 = vmatmul.f32.gmra.mxu0 %v3494
  %v3747 = vpop.f32.mrf.mxu0
  %v3748 = vadd.f32 %v3268, %v3747
  %3749 = vmatmul.f32.gmra.mxu0 %v3497
  %v3750 = vpop.f32.mrf.mxu0
  %v3751 = vadd.f32 %v3268, %v3750
  %3752 = vmatmul.f32.gmra.mxu0 %v3500
  %v3753 = vpop.f32.mrf.mxu0
  %v3754 = vadd.f32 %v3268, %v3753
  %3755 = vmatmul.f32.gmra.mxu0 %v3503
  %v3756 = vpop.f32.mrf.mxu0
  %v3757 = vadd.f32 %v3268, %v3756
  %3758 = vmatmul.f32.gmra.mxu0 %v3506
  %v3759 = vpop.f32.mrf.mxu0
  %v3760 = vadd.f32 %v3268, %v3759
  %3761 = vdwg.mxu0
  %vm3762 = vcmp.ge.f32.partialorder %v3526, 0.0
  %vm3763 = vcmp.ge.f32.partialorder %v3529, 0.0
  %vm3764 = vcmp.ge.f32.partialorder %v3532, 0.0
  %vm3765 = vcmp.ge.f32.partialorder %v3535, 0.0
  %vm3766 = vcmp.ge.f32.partialorder %v3538, 0.0
  %vm3767 = vcmp.ge.f32.partialorder %v3541, 0.0
  %vm3768 = vcmp.ge.f32.partialorder %v3544, 0.0
  %vm3769 = vcmp.ge.f32.partialorder %v3547, 0.0
  %vm3770 = vcmp.ge.f32.partialorder %v3550, 0.0
  %vm3771 = vcmp.ge.f32.partialorder %v3553, 0.0
  %vm3772 = vcmp.ge.f32.partialorder %v3556, 0.0
  %vm3773 = vcmp.ge.f32.partialorder %v3559, 0.0
  %vm3774 = vcmp.ge.f32.partialorder %v3562, 0.0
  %vm3775 = vcmp.ge.f32.partialorder %v3565, 0.0
  %vm3776 = vcmp.ge.f32.partialorder %v3568, 0.0
  %vm3777 = vcmp.ge.f32.partialorder %v3571, 0.0
  %vm3778 = vcmp.ge.f32.partialorder %v3574, 0.0
  %vm3779 = vcmp.ge.f32.partialorder %v3577, 0.0
  %vm3780 = vcmp.ge.f32.partialorder %v3580, 0.0
  %vm3781 = vcmp.ge.f32.partialorder %v3583, 0.0
  %vm3782 = vcmp.ge.f32.partialorder %v3586, 0.0
  %vm3783 = vcmp.ge.f32.partialorder %v3589, 0.0
  %vm3784 = vcmp.ge.f32.partialorder %v3592, 0.0
  %vm3785 = vcmp.ge.f32.partialorder %v3595, 0.0
  %vm3786 = vcmp.ge.f32.partialorder %v3598, 0.0
  %vm3787 = vcmp.ge.f32.partialorder %v3601, 0.0
  %vm3788 = vcmp.ge.f32.partialorder %v3604, 0.0
  %vm3789 = vcmp.ge.f32.partialorder %v3607, 0.0
  %vm3790 = vcmp.ge.f32.partialorder %v3610, 0.0
  %vm3791 = vcmp.ge.f32.partialorder %v3613, 0.0
  %vm3792 = vcmp.ge.f32.partialorder %v3616, 0.0
  %vm3793 = vcmp.ge.f32.partialorder %v3619, 0.0
  %vm3794 = vcmp.ge.f32.partialorder %v3622, 0.0
  %vm3795 = vcmp.ge.f32.partialorder %v3625, 0.0
  %vm3796 = vcmp.ge.f32.partialorder %v3628, 0.0
  %vm3797 = vcmp.ge.f32.partialorder %v3631, 0.0
  %vm3798 = vcmp.ge.f32.partialorder %v3634, 0.0
  %vm3799 = vcmp.ge.f32.partialorder %v3637, 0.0
  %vm3800 = vcmp.ge.f32.partialorder %v3640, 0.0
  %vm3801 = vcmp.ge.f32.partialorder %v3643, 0.0
  %vm3802 = vcmp.ge.f32.partialorder %v3646, 0.0
  %vm3803 = vcmp.ge.f32.partialorder %v3649, 0.0
  %vm3804 = vcmp.ge.f32.partialorder %v3652, 0.0
  %vm3805 = vcmp.ge.f32.partialorder %v3655, 0.0
  %vm3806 = vcmp.ge.f32.partialorder %v3658, 0.0
  %vm3807 = vcmp.ge.f32.partialorder %v3661, 0.0
  %vm3808 = vcmp.ge.f32.partialorder %v3664, 0.0
  %vm3809 = vcmp.ge.f32.partialorder %v3667, 0.0
  %vm3810 = vcmp.ge.f32.partialorder %v3670, 0.0
  %vm3811 = vcmp.ge.f32.partialorder %v3673, 0.0
  %vm3812 = vcmp.ge.f32.partialorder %v3676, 0.0
  %vm3813 = vcmp.ge.f32.partialorder %v3679, 0.0
  %vm3814 = vcmp.ge.f32.partialorder %v3682, 0.0
  %vm3815 = vcmp.ge.f32.partialorder %v3685, 0.0
  %vm3816 = vcmp.ge.f32.partialorder %v3688, 0.0
  %vm3817 = vcmp.ge.f32.partialorder %v3691, 0.0
  %vm3818 = vcmp.ge.f32.partialorder %v3694, 0.0
  %vm3819 = vcmp.ge.f32.partialorder %v3697, 0.0
  %vm3820 = vcmp.ge.f32.partialorder %v3700, 0.0
  %vm3821 = vcmp.ge.f32.partialorder %v3703, 0.0
  %vm3822 = vcmp.ge.f32.partialorder %v3706, 0.0
  %vm3823 = vcmp.ge.f32.partialorder %v3709, 0.0
  %vm3824 = vcmp.ge.f32.partialorder %v3712, 0.0
  %vm3825 = vcmp.ge.f32.partialorder %v3715, 0.0
  %vm3826 = vcmp.ge.f32.partialorder %v3718, 0.0
  %vm3827 = vcmp.ge.f32.partialorder %v3721, 0.0
  %vm3828 = vcmp.ge.f32.partialorder %v3724, 0.0
  %vm3829 = vcmp.ge.f32.partialorder %v3727, 0.0
  %vm3830 = vcmp.ge.f32.partialorder %v3730, 0.0
  %vm3831 = vcmp.ge.f32.partialorder %v3733, 0.0
  %vm3832 = vcmp.ge.f32.partialorder %v3736, 0.0
  %vm3833 = vcmp.ge.f32.partialorder %v3739, 0.0
  %vm3834 = vcmp.ge.f32.partialorder %v3742, 0.0
  %vm3835 = vcmp.ge.f32.partialorder %v3745, 0.0
  %vm3836 = vcmp.ge.f32.partialorder %v3748, 0.0
  %vm3837 = vcmp.ge.f32.partialorder %v3751, 0.0
  %vm3838 = vcmp.ge.f32.partialorder %v3754, 0.0
  %vm3839 = vcmp.ge.f32.partialorder %v3757, 0.0
  %vm3840 = vcmp.ge.f32.partialorder %v3760, 0.0
  %v3841 = vmul.f32 %v3526, 0.01
  %v3842 = vmul.f32 %v3529, 0.01
  %v3843 = vmul.f32 %v3532, 0.01
  %v3844 = vmul.f32 %v3535, 0.01
  %v3845 = vmul.f32 %v3538, 0.01
  %v3846 = vmul.f32 %v3541, 0.01
  %v3847 = vmul.f32 %v3544, 0.01
  %v3848 = vmul.f32 %v3547, 0.01
  %v3849 = vmul.f32 %v3550, 0.01
  %v3850 = vmul.f32 %v3553, 0.01
  %v3851 = vmul.f32 %v3556, 0.01
  %v3852 = vmul.f32 %v3559, 0.01
  %v3853 = vmul.f32 %v3562, 0.01
  %v3854 = vmul.f32 %v3565, 0.01
  %v3855 = vmul.f32 %v3568, 0.01
  %v3856 = vmul.f32 %v3571, 0.01
  %v3857 = vmul.f32 %v3574, 0.01
  %v3858 = vmul.f32 %v3577, 0.01
  %v3859 = vmul.f32 %v3580, 0.01
  %v3860 = vmul.f32 %v3583, 0.01
  %v3861 = vmul.f32 %v3586, 0.01
  %v3862 = vmul.f32 %v3589, 0.01
  %v3863 = vmul.f32 %v3592, 0.01
  %v3864 = vmul.f32 %v3595, 0.01
  %v3865 = vmul.f32 %v3598, 0.01
  %v3866 = vmul.f32 %v3601, 0.01
  %v3867 = vmul.f32 %v3604, 0.01
  %v3868 = vmul.f32 %v3607, 0.01
  %v3869 = vmul.f32 %v3610, 0.01
  %v3870 = vmul.f32 %v3613, 0.01
  %v3871 = vmul.f32 %v3616, 0.01
  %v3872 = vmul.f32 %v3619, 0.01
  %v3873 = vmul.f32 %v3622, 0.01
  %v3874 = vmul.f32 %v3625, 0.01
  %v3875 = vmul.f32 %v3628, 0.01
  %v3876 = vmul.f32 %v3631, 0.01
  %v3877 = vmul.f32 %v3634, 0.01
  %v3878 = vmul.f32 %v3637, 0.01
  %v3879 = vmul.f32 %v3640, 0.01
  %v3880 = vmul.f32 %v3643, 0.01
  %v3881 = vmul.f32 %v3646, 0.01
  %v3882 = vmul.f32 %v3649, 0.01
  %v3883 = vmul.f32 %v3652, 0.01
  %v3884 = vmul.f32 %v3655, 0.01
  %v3885 = vmul.f32 %v3658, 0.01
  %v3886 = vmul.f32 %v3661, 0.01
  %v3887 = vmul.f32 %v3664, 0.01
  %v3888 = vmul.f32 %v3667, 0.01
  %v3889 = vmul.f32 %v3670, 0.01
  %v3890 = vmul.f32 %v3673, 0.01
  %v3891 = vmul.f32 %v3676, 0.01
  %v3892 = vmul.f32 %v3679, 0.01
  %v3893 = vmul.f32 %v3682, 0.01
  %v3894 = vmul.f32 %v3685, 0.01
  %v3895 = vmul.f32 %v3688, 0.01
  %v3896 = vmul.f32 %v3691, 0.01
  %v3897 = vmul.f32 %v3694, 0.01
  %v3898 = vmul.f32 %v3697, 0.01
  %v3899 = vmul.f32 %v3700, 0.01
  %v3900 = vmul.f32 %v3703, 0.01
  %v3901 = vmul.f32 %v3706, 0.01
  %v3902 = vmul.f32 %v3709, 0.01
  %v3903 = vmul.f32 %v3712, 0.01
  %v3904 = vmul.f32 %v3715, 0.01
  %v3905 = vmul.f32 %v3718, 0.01
  %v3906 = vmul.f32 %v3721, 0.01
  %v3907 = vmul.f32 %v3724, 0.01
  %v3908 = vmul.f32 %v3727, 0.01
  %v3909 = vmul.f32 %v3730, 0.01
  %v3910 = vmul.f32 %v3733, 0.01
  %v3911 = vmul.f32 %v3736, 0.01
  %v3912 = vmul.f32 %v3739, 0.01
  %v3913 = vmul.f32 %v3742, 0.01
  %v3914 = vmul.f32 %v3745, 0.01
  %v3915 = vmul.f32 %v3748, 0.01
  %v3916 = vmul.f32 %v3751, 0.01
  %v3917 = vmul.f32 %v3754, 0.01
  %v3918 = vmul.f32 %v3757, 0.01
  %v3919 = vmul.f32 %v3760, 0.01
  %v3920 = vsel %vm3762, %v3526, %v3841
  %v3921 = vsel %vm3763, %v3529, %v3842
  %v3922 = vsel %vm3764, %v3532, %v3843
  %v3923 = vsel %vm3765, %v3535, %v3844
  %v3924 = vsel %vm3766, %v3538, %v3845
  %v3925 = vsel %vm3767, %v3541, %v3846
  %v3926 = vsel %vm3768, %v3544, %v3847
  %v3927 = vsel %vm3769, %v3547, %v3848
  %v3928 = vsel %vm3770, %v3550, %v3849
  %v3929 = vsel %vm3771, %v3553, %v3850
  %v3930 = vsel %vm3772, %v3556, %v3851
  %v3931 = vsel %vm3773, %v3559, %v3852
  %v3932 = vsel %vm3774, %v3562, %v3853
  %v3933 = vsel %vm3775, %v3565, %v3854
  %v3934 = vsel %vm3776, %v3568, %v3855
  %v3935 = vsel %vm3777, %v3571, %v3856
  %v3936 = vsel %vm3778, %v3574, %v3857
  %v3937 = vsel %vm3779, %v3577, %v3858
  %v3938 = vsel %vm3780, %v3580, %v3859
  %v3939 = vsel %vm3781, %v3583, %v3860
  %v3940 = vsel %vm3782, %v3586, %v3861
  %v3941 = vsel %vm3783, %v3589, %v3862
  %v3942 = vsel %vm3784, %v3592, %v3863
  %v3943 = vsel %vm3785, %v3595, %v3864
  %v3944 = vsel %vm3786, %v3598, %v3865
  %v3945 = vsel %vm3787, %v3601, %v3866
  %v3946 = vsel %vm3788, %v3604, %v3867
  %v3947 = vsel %vm3789, %v3607, %v3868
  %v3948 = vsel %vm3790, %v3610, %v3869
  %v3949 = vsel %vm3791, %v3613, %v3870
  %v3950 = vsel %vm3792, %v3616, %v3871
  %v3951 = vsel %vm3793, %v3619, %v3872
  %v3952 = vsel %vm3794, %v3622, %v3873
  %v3953 = vsel %vm3795, %v3625, %v3874
  %v3954 = vsel %vm3796, %v3628, %v3875
  %v3955 = vsel %vm3797, %v3631, %v3876
  %v3956 = vsel %vm3798, %v3634, %v3877
  %v3957 = vsel %vm3799, %v3637, %v3878
  %v3958 = vsel %vm3800, %v3640, %v3879
  %v3959 = vsel %vm3801, %v3643, %v3880
  %v3960 = vsel %vm3802, %v3646, %v3881
  %v3961 = vsel %vm3803, %v3649, %v3882
  %v3962 = vsel %vm3804, %v3652, %v3883
  %v3963 = vsel %vm3805, %v3655, %v3884
  %v3964 = vsel %vm3806, %v3658, %v3885
  %v3965 = vsel %vm3807, %v3661, %v3886
  %v3966 = vsel %vm3808, %v3664, %v3887
  %v3967 = vsel %vm3809, %v3667, %v3888
  %v3968 = vsel %vm3810, %v3670, %v3889
  %v3969 = vsel %vm3811, %v3673, %v3890
  %v3970 = vsel %vm3812, %v3676, %v3891
  %v3971 = vsel %vm3813, %v3679, %v3892
  %v3972 = vsel %vm3814, %v3682, %v3893
  %v3973 = vsel %vm3815, %v3685, %v3894
  %v3974 = vsel %vm3816, %v3688, %v3895
  %v3975 = vsel %vm3817, %v3691, %v3896
  %v3976 = vsel %vm3818, %v3694, %v3897
  %v3977 = vsel %vm3819, %v3697, %v3898
  %v3978 = vsel %vm3820, %v3700, %v3899
  %v3979 = vsel %vm3821, %v3703, %v3900
  %v3980 = vsel %vm3822, %v3706, %v3901
  %v3981 = vsel %vm3823, %v3709, %v3902
  %v3982 = vsel %vm3824, %v3712, %v3903
  %v3983 = vsel %vm3825, %v3715, %v3904
  %v3984 = vsel %vm3826, %v3718, %v3905
  %v3985 = vsel %vm3827, %v3721, %v3906
  %v3986 = vsel %vm3828, %v3724, %v3907
  %v3987 = vsel %vm3829, %v3727, %v3908
  %v3988 = vsel %vm3830, %v3730, %v3909
  %v3989 = vsel %vm3831, %v3733, %v3910
  %v3990 = vsel %vm3832, %v3736, %v3911
  %v3991 = vsel %vm3833, %v3739, %v3912
  %v3992 = vsel %vm3834, %v3742, %v3913
  %v3993 = vsel %vm3835, %v3745, %v3914
  %v3994 = vsel %vm3836, %v3748, %v3915
  %v3995 = vsel %vm3837, %v3751, %v3916
  %v3996 = vsel %vm3838, %v3754, %v3917
  %v3997 = vsel %vm3839, %v3757, %v3918
  %v3998 = vsel %vm3840, %v3760, %v3919
  %v3999 = vld [vmem:[%s5] sm:$0xff]
  %v4000 = vld [vmem:[%s5 + $0x8] sm:$0xff]
  %v4001 = vld [vmem:[%s5 + $0x10] sm:$0xff]
  %v4002 = vld [vmem:[%s5 + $0x18] sm:$0xff]
  %v4003 = vld [vmem:[%s6] sm:$0x1]
  %v4005 = vperm.slane %v4003, 0
  %v4008 = vsel %vm3270, %v3920, 0
  %v4011 = vsel %vm3270, %v3921, 0
  %v4014 = vsel %vm3270, %v3922, 0
  %v4017 = vsel %vm3270, %v3923, 0
  %v4020 = vsel %vm3270, %v3924, 0
  %v4023 = vsel %vm3270, %v3925, 0
  %v4026 = vsel %vm3270, %v3926, 0
  %v4029 = vsel %vm3270, %v3927, 0
  %v4032 = vsel %vm3270, %v3928, 0
  %v4035 = vsel %vm3270, %v3929, 0
  %v4038 = vsel %vm3270, %v3930, 0
  %v4041 = vsel %vm3270, %v3931, 0
  %v4044 = vsel %vm3270, %v3932, 0
  %v4047 = vsel %vm3270, %v3933, 0
  %v4050 = vsel %vm3270, %v3934, 0
  %v4053 = vsel %vm3270, %v3935, 0
  %v4056 = vsel %vm3270, %v3936, 0
  %v4059 = vsel %vm3270, %v3937, 0
  %v4062 = vsel %vm3270, %v3938, 0
  %v4065 = vsel %vm3270, %v3939, 0
  %v4068 = vsel %vm3270, %v3940, 0
  %v4071 = vsel %vm3270, %v3941, 0
  %v4074 = vsel %vm3270, %v3942, 0
  %v4077 = vsel %vm3270, %v3943, 0
  %v4080 = vsel %vm3270, %v3944, 0
  %v4083 = vsel %vm3270, %v3945, 0
  %v4086 = vsel %vm3270, %v3946, 0
  %v4089 = vsel %vm3270, %v3947, 0
  %v4092 = vsel %vm3270, %v3948, 0
  %v4095 = vsel %vm3270, %v3949, 0
  %v4098 = vsel %vm3270, %v3950, 0
  %v4101 = vsel %vm3270, %v3951, 0
  %v4104 = vsel %vm3270, %v3952, 0
  %v4107 = vsel %vm3270, %v3953, 0
  %v4110 = vsel %vm3270, %v3954, 0
  %v4113 = vsel %vm3270, %v3955, 0
  %v4116 = vsel %vm3270, %v3956, 0
  %v4119 = vsel %vm3270, %v3957, 0
  %v4122 = vsel %vm3270, %v3958, 0
  %v4125 = vsel %vm3270, %v3959, 0
  %v4128 = vsel %vm3270, %v3960, 0
  %v4131 = vsel %vm3270, %v3961, 0
  %v4134 = vsel %vm3270, %v3962, 0
  %v4137 = vsel %vm3270, %v3963, 0
  %v4140 = vsel %vm3270, %v3964, 0
  %v4143 = vsel %vm3270, %v3965, 0
  %v4146 = vsel %vm3270, %v3966, 0
  %v4149 = vsel %vm3270, %v3967, 0
  %v4152 = vsel %vm3270, %v3968, 0
  %v4155 = vsel %vm3270, %v3969, 0
  %v4158 = vsel %vm3270, %v3970, 0
  %v4161 = vsel %vm3270, %v3971, 0
  %v4164 = vsel %vm3270, %v3972, 0
  %v4167 = vsel %vm3270, %v3973, 0
  %v4170 = vsel %vm3270, %v3974, 0
  %v4173 = vsel %vm3270, %v3975, 0
  %v4176 = vsel %vm3270, %v3976, 0
  %v4179 = vsel %vm3270, %v3977, 0
  %v4182 = vsel %vm3270, %v3978, 0
  %v4185 = vsel %vm3270, %v3979, 0
  %v4188 = vsel %vm3270, %v3980, 0
  %v4191 = vsel %vm3270, %v3981, 0
  %v4194 = vsel %vm3270, %v3982, 0
  %v4197 = vsel %vm3270, %v3983, 0
  %v4200 = vsel %vm3270, %v3984, 0
  %v4203 = vsel %vm3270, %v3985, 0
  %v4206 = vsel %vm3270, %v3986, 0
  %v4209 = vsel %vm3270, %v3987, 0
  %v4212 = vsel %vm3270, %v3988, 0
  %v4215 = vsel %vm3270, %v3989, 0
  %v4218 = vsel %vm3270, %v3990, 0
  %v4221 = vsel %vm3270, %v3991, 0
  %v4224 = vsel %vm3270, %v3992, 0
  %v4227 = vsel %vm3270, %v3993, 0
  %v4230 = vsel %vm3270, %v3994, 0
  %v4233 = vsel %vm3270, %v3995, 0
  %v4236 = vsel %vm3270, %v3996, 0
  %v4239 = vsel %vm3270, %v3997, 0
  %v4242 = vsel %vm3270, %v3998, 0
  %4244 = vmatpush.msra.mxu0 0.0
  %4245 = vmatpush.msra.mxu0 0.0
  %4246 = vmatpush.msra.mxu0 0.0
  %4247 = vmatpush.msra.mxu0 0.0
  %4248 = vmatpush.msra.mxu0 0.0
  %4249 = vmatpush.msra.mxu0 0.0
  %4250 = vmatpush.msra.mxu0 0.0
  %4251 = vmatpush.msra.mxu0 0.0
  %4252 = vmatpush.msra.mxu0 0.0
  %4253 = vmatpush.msra.mxu0 0.0
  %4254 = vmatpush.msra.mxu0 0.0
  %4255 = vmatpush.msra.mxu0 0.0
  %4256 = vmatpush.msra.mxu0 %v4002
  %4257 = vmatpush.msra.mxu0 %v4001
  %4258 = vmatpush.msra.mxu0 %v4000
  %4259 = vmatpush.msra.mxu0 %v3999
  %4260 = vmatmul.f32.gmra.mxu0 %v4008
  %v4261 = vpop.f32.mrf.mxu0
  %v4262 = vadd.f32 %v4005, %v4261
  %4263 = vmatmul.f32.gmra.mxu0 %v4011
  %v4264 = vpop.f32.mrf.mxu0
  %v4265 = vadd.f32 %v4005, %v4264
  %4266 = vmatmul.f32.gmra.mxu0 %v4014
  %v4267 = vpop.f32.mrf.mxu0
  %v4268 = vadd.f32 %v4005, %v4267
  %4269 = vmatmul.f32.gmra.mxu0 %v4017
  %v4270 = vpop.f32.mrf.mxu0
  %v4271 = vadd.f32 %v4005, %v4270
  %4272 = vmatmul.f32.gmra.mxu0 %v4020
  %v4273 = vpop.f32.mrf.mxu0
  %v4274 = vadd.f32 %v4005, %v4273
  %4275 = vmatmul.f32.gmra.mxu0 %v4023
  %v4276 = vpop.f32.mrf.mxu0
  %v4277 = vadd.f32 %v4005, %v4276
  %4278 = vmatmul.f32.gmra.mxu0 %v4026
  %v4279 = vpop.f32.mrf.mxu0
  %v4280 = vadd.f32 %v4005, %v4279
  %4281 = vmatmul.f32.gmra.mxu0 %v4029
  %v4282 = vpop.f32.mrf.mxu0
  %v4283 = vadd.f32 %v4005, %v4282
  %4284 = vmatmul.f32.gmra.mxu0 %v4032
  %v4285 = vpop.f32.mrf.mxu0
  %v4286 = vadd.f32 %v4005, %v4285
  %4287 = vmatmul.f32.gmra.mxu0 %v4035
  %v4288 = vpop.f32.mrf.mxu0
  %v4289 = vadd.f32 %v4005, %v4288
  %4290 = vmatmul.f32.gmra.mxu0 %v4038
  %v4291 = vpop.f32.mrf.mxu0
  %v4292 = vadd.f32 %v4005, %v4291
  %4293 = vmatmul.f32.gmra.mxu0 %v4041
  %v4294 = vpop.f32.mrf.mxu0
  %v4295 = vadd.f32 %v4005, %v4294
  %4296 = vmatmul.f32.gmra.mxu0 %v4044
  %v4297 = vpop.f32.mrf.mxu0
  %v4298 = vadd.f32 %v4005, %v4297
  %4299 = vmatmul.f32.gmra.mxu0 %v4047
  %v4300 = vpop.f32.mrf.mxu0
  %v4301 = vadd.f32 %v4005, %v4300
  %4302 = vmatmul.f32.gmra.mxu0 %v4050
  %v4303 = vpop.f32.mrf.mxu0
  %v4304 = vadd.f32 %v4005, %v4303
  %4305 = vmatmul.f32.gmra.mxu0 %v4053
  %v4306 = vpop.f32.mrf.mxu0
  %v4307 = vadd.f32 %v4005, %v4306
  %4308 = vmatmul.f32.gmra.mxu0 %v4056
  %v4309 = vpop.f32.mrf.mxu0
  %v4310 = vadd.f32 %v4005, %v4309
  %4311 = vmatmul.f32.gmra.mxu0 %v4059
  %v4312 = vpop.f32.mrf.mxu0
  %v4313 = vadd.f32 %v4005, %v4312
  %4314 = vmatmul.f32.gmra.mxu0 %v4062
  %v4315 = vpop.f32.mrf.mxu0
  %v4316 = vadd.f32 %v4005, %v4315
  %4317 = vmatmul.f32.gmra.mxu0 %v4065
  %v4318 = vpop.f32.mrf.mxu0
  %v4319 = vadd.f32 %v4005, %v4318
  %4320 = vmatmul.f32.gmra.mxu0 %v4068
  %v4321 = vpop.f32.mrf.mxu0
  %v4322 = vadd.f32 %v4005, %v4321
  %4323 = vmatmul.f32.gmra.mxu0 %v4071
  %v4324 = vpop.f32.mrf.mxu0
  %v4325 = vadd.f32 %v4005, %v4324
  %4326 = vmatmul.f32.gmra.mxu0 %v4074
  %v4327 = vpop.f32.mrf.mxu0
  %v4328 = vadd.f32 %v4005, %v4327
  %4329 = vmatmul.f32.gmra.mxu0 %v4077
  %v4330 = vpop.f32.mrf.mxu0
  %v4331 = vadd.f32 %v4005, %v4330
  %4332 = vmatmul.f32.gmra.mxu0 %v4080
  %v4333 = vpop.f32.mrf.mxu0
  %v4334 = vadd.f32 %v4005, %v4333
  %4335 = vmatmul.f32.gmra.mxu0 %v4083
  %v4336 = vpop.f32.mrf.mxu0
  %v4337 = vadd.f32 %v4005, %v4336
  %4338 = vmatmul.f32.gmra.mxu0 %v4086
  %v4339 = vpop.f32.mrf.mxu0
  %v4340 = vadd.f32 %v4005, %v4339
  %4341 = vmatmul.f32.gmra.mxu0 %v4089
  %v4342 = vpop.f32.mrf.mxu0
  %v4343 = vadd.f32 %v4005, %v4342
  %4344 = vmatmul.f32.gmra.mxu0 %v4092
  %v4345 = vpop.f32.mrf.mxu0
  %v4346 = vadd.f32 %v4005, %v4345
  %4347 = vmatmul.f32.gmra.mxu0 %v4095
  %v4348 = vpop.f32.mrf.mxu0
  %v4349 = vadd.f32 %v4005, %v4348
  %4350 = vmatmul.f32.gmra.mxu0 %v4098
  %v4351 = vpop.f32.mrf.mxu0
  %v4352 = vadd.f32 %v4005, %v4351
  %4353 = vmatmul.f32.gmra.mxu0 %v4101
  %v4354 = vpop.f32.mrf.mxu0
  %v4355 = vadd.f32 %v4005, %v4354
  %4356 = vmatmul.f32.gmra.mxu0 %v4104
  %v4357 = vpop.f32.mrf.mxu0
  %v4358 = vadd.f32 %v4005, %v4357
  %4359 = vmatmul.f32.gmra.mxu0 %v4107
  %v4360 = vpop.f32.mrf.mxu0
  %v4361 = vadd.f32 %v4005, %v4360
  %4362 = vmatmul.f32.gmra.mxu0 %v4110
  %v4363 = vpop.f32.mrf.mxu0
  %v4364 = vadd.f32 %v4005, %v4363
  %4365 = vmatmul.f32.gmra.mxu0 %v4113
  %v4366 = vpop.f32.mrf.mxu0
  %v4367 = vadd.f32 %v4005, %v4366
  %4368 = vmatmul.f32.gmra.mxu0 %v4116
  %v4369 = vpop.f32.mrf.mxu0
  %v4370 = vadd.f32 %v4005, %v4369
  %4371 = vmatmul.f32.gmra.mxu0 %v4119
  %v4372 = vpop.f32.mrf.mxu0
  %v4373 = vadd.f32 %v4005, %v4372
  %4374 = vmatmul.f32.gmra.mxu0 %v4122
  %v4375 = vpop.f32.mrf.mxu0
  %v4376 = vadd.f32 %v4005, %v4375
  %4377 = vmatmul.f32.gmra.mxu0 %v4125
  %v4378 = vpop.f32.mrf.mxu0
  %v4379 = vadd.f32 %v4005, %v4378
  %4380 = vmatmul.f32.gmra.mxu0 %v4128
  %v4381 = vpop.f32.mrf.mxu0
  %v4382 = vadd.f32 %v4005, %v4381
  %4383 = vmatmul.f32.gmra.mxu0 %v4131
  %v4384 = vpop.f32.mrf.mxu0
  %v4385 = vadd.f32 %v4005, %v4384
  %4386 = vmatmul.f32.gmra.mxu0 %v4134
  %v4387 = vpop.f32.mrf.mxu0
  %v4388 = vadd.f32 %v4005, %v4387
  %4389 = vmatmul.f32.gmra.mxu0 %v4137
  %v4390 = vpop.f32.mrf.mxu0
  %v4391 = vadd.f32 %v4005, %v4390
  %4392 = vmatmul.f32.gmra.mxu0 %v4140
  %v4393 = vpop.f32.mrf.mxu0
  %v4394 = vadd.f32 %v4005, %v4393
  %4395 = vmatmul.f32.gmra.mxu0 %v4143
  %v4396 = vpop.f32.mrf.mxu0
  %v4397 = vadd.f32 %v4005, %v4396
  %4398 = vmatmul.f32.gmra.mxu0 %v4146
  %v4399 = vpop.f32.mrf.mxu0
  %v4400 = vadd.f32 %v4005, %v4399
  %4401 = vmatmul.f32.gmra.mxu0 %v4149
  %v4402 = vpop.f32.mrf.mxu0
  %v4403 = vadd.f32 %v4005, %v4402
  %4404 = vmatmul.f32.gmra.mxu0 %v4152
  %v4405 = vpop.f32.mrf.mxu0
  %v4406 = vadd.f32 %v4005, %v4405
  %4407 = vmatmul.f32.gmra.mxu0 %v4155
  %v4408 = vpop.f32.mrf.mxu0
  %v4409 = vadd.f32 %v4005, %v4408
  %4410 = vmatmul.f32.gmra.mxu0 %v4158
  %v4411 = vpop.f32.mrf.mxu0
  %v4412 = vadd.f32 %v4005, %v4411
  %4413 = vmatmul.f32.gmra.mxu0 %v4161
  %v4414 = vpop.f32.mrf.mxu0
  %v4415 = vadd.f32 %v4005, %v4414
  %4416 = vmatmul.f32.gmra.mxu0 %v4164
  %v4417 = vpop.f32.mrf.mxu0
  %v4418 = vadd.f32 %v4005, %v4417
  %4419 = vmatmul.f32.gmra.mxu0 %v4167
  %v4420 = vpop.f32.mrf.mxu0
  %v4421 = vadd.f32 %v4005, %v4420
  %4422 = vmatmul.f32.gmra.mxu0 %v4170
  %v4423 = vpop.f32.mrf.mxu0
  %v4424 = vadd.f32 %v4005, %v4423
  %4425 = vmatmul.f32.gmra.mxu0 %v4173
  %v4426 = vpop.f32.mrf.mxu0
  %v4427 = vadd.f32 %v4005, %v4426
  %4428 = vmatmul.f32.gmra.mxu0 %v4176
  %v4429 = vpop.f32.mrf.mxu0
  %v4430 = vadd.f32 %v4005, %v4429
  %4431 = vmatmul.f32.gmra.mxu0 %v4179
  %v4432 = vpop.f32.mrf.mxu0
  %v4433 = vadd.f32 %v4005, %v4432
  %4434 = vmatmul.f32.gmra.mxu0 %v4182
  %v4435 = vpop.f32.mrf.mxu0
  %v4436 = vadd.f32 %v4005, %v4435
  %4437 = vmatmul.f32.gmra.mxu0 %v4185
  %v4438 = vpop.f32.mrf.mxu0
  %v4439 = vadd.f32 %v4005, %v4438
  %4440 = vmatmul.f32.gmra.mxu0 %v4188
  %v4441 = vpop.f32.mrf.mxu0
  %v4442 = vadd.f32 %v4005, %v4441
  %4443 = vmatmul.f32.gmra.mxu0 %v4191
  %v4444 = vpop.f32.mrf.mxu0
  %v4445 = vadd.f32 %v4005, %v4444
  %4446 = vmatmul.f32.gmra.mxu0 %v4194
  %v4447 = vpop.f32.mrf.mxu0
  %v4448 = vadd.f32 %v4005, %v4447
  %4449 = vmatmul.f32.gmra.mxu0 %v4197
  %v4450 = vpop.f32.mrf.mxu0
  %v4451 = vadd.f32 %v4005, %v4450
  %4452 = vmatmul.f32.gmra.mxu0 %v4200
  %v4453 = vpop.f32.mrf.mxu0
  %v4454 = vadd.f32 %v4005, %v4453
  %4455 = vmatmul.f32.gmra.mxu0 %v4203
  %v4456 = vpop.f32.mrf.mxu0
  %v4457 = vadd.f32 %v4005, %v4456
  %4458 = vmatmul.f32.gmra.mxu0 %v4206
  %v4459 = vpop.f32.mrf.mxu0
  %v4460 = vadd.f32 %v4005, %v4459
  %4461 = vmatmul.f32.gmra.mxu0 %v4209
  %v4462 = vpop.f32.mrf.mxu0
  %v4463 = vadd.f32 %v4005, %v4462
  %4464 = vmatmul.f32.gmra.mxu0 %v4212
  %v4465 = vpop.f32.mrf.mxu0
  %v4466 = vadd.f32 %v4005, %v4465
  %4467 = vmatmul.f32.gmra.mxu0 %v4215
  %v4468 = vpop.f32.mrf.mxu0
  %v4469 = vadd.f32 %v4005, %v4468
  %4470 = vmatmul.f32.gmra.mxu0 %v4218
  %v4471 = vpop.f32.mrf.mxu0
  %v4472 = vadd.f32 %v4005, %v4471
  %4473 = vmatmul.f32.gmra.mxu0 %v4221
  %v4474 = vpop.f32.mrf.mxu0
  %v4475 = vadd.f32 %v4005, %v4474
  %4476 = vmatmul.f32.gmra.mxu0 %v4224
  %v4477 = vpop.f32.mrf.mxu0
  %v4478 = vadd.f32 %v4005, %v4477
  %4479 = vmatmul.f32.gmra.mxu0 %v4227
  %v4480 = vpop.f32.mrf.mxu0
  %v4481 = vadd.f32 %v4005, %v4480
  %4482 = vmatmul.f32.gmra.mxu0 %v4230
  %v4483 = vpop.f32.mrf.mxu0
  %v4484 = vadd.f32 %v4005, %v4483
  %4485 = vmatmul.f32.gmra.mxu0 %v4233
  %v4486 = vpop.f32.mrf.mxu0
  %v4487 = vadd.f32 %v4005, %v4486
  %4488 = vmatmul.f32.gmra.mxu0 %v4236
  %v4489 = vpop.f32.mrf.mxu0
  %v4490 = vadd.f32 %v4005, %v4489
  %4491 = vmatmul.f32.gmra.mxu0 %v4239
  %v4492 = vpop.f32.mrf.mxu0
  %v4493 = vadd.f32 %v4005, %v4492
  %4494 = vmatmul.f32.gmra.mxu0 %v4242
  %v4495 = vpop.f32.mrf.mxu0
  %v4496 = vadd.f32 %v4005, %v4495
  %4497 = vdwg.mxu0
  %vm4498 = vcmp.ge.f32.partialorder %v4262, 0.0
  %vm4499 = vcmp.ge.f32.partialorder %v4265, 0.0
  %vm4500 = vcmp.ge.f32.partialorder %v4268, 0.0
  %vm4501 = vcmp.ge.f32.partialorder %v4271, 0.0
  %vm4502 = vcmp.ge.f32.partialorder %v4274, 0.0
  %vm4503 = vcmp.ge.f32.partialorder %v4277, 0.0
  %vm4504 = vcmp.ge.f32.partialorder %v4280, 0.0
  %vm4505 = vcmp.ge.f32.partialorder %v4283, 0.0
  %vm4506 = vcmp.ge.f32.partialorder %v4286, 0.0
  %vm4507 = vcmp.ge.f32.partialorder %v4289, 0.0
  %vm4508 = vcmp.ge.f32.partialorder %v4292, 0.0
  %vm4509 = vcmp.ge.f32.partialorder %v4295, 0.0
  %vm4510 = vcmp.ge.f32.partialorder %v4298, 0.0
  %vm4511 = vcmp.ge.f32.partialorder %v4301, 0.0
  %vm4512 = vcmp.ge.f32.partialorder %v4304, 0.0
  %vm4513 = vcmp.ge.f32.partialorder %v4307, 0.0
  %vm4514 = vcmp.ge.f32.partialorder %v4310, 0.0
  %vm4515 = vcmp.ge.f32.partialorder %v4313, 0.0
  %vm4516 = vcmp.ge.f32.partialorder %v4316, 0.0
  %vm4517 = vcmp.ge.f32.partialorder %v4319, 0.0
  %vm4518 = vcmp.ge.f32.partialorder %v4322, 0.0
  %vm4519 = vcmp.ge.f32.partialorder %v4325, 0.0
  %vm4520 = vcmp.ge.f32.partialorder %v4328, 0.0
  %vm4521 = vcmp.ge.f32.partialorder %v4331, 0.0
  %vm4522 = vcmp.ge.f32.partialorder %v4334, 0.0
  %vm4523 = vcmp.ge.f32.partialorder %v4337, 0.0
  %vm4524 = vcmp.ge.f32.partialorder %v4340, 0.0
  %vm4525 = vcmp.ge.f32.partialorder %v4343, 0.0
  %vm4526 = vcmp.ge.f32.partialorder %v4346, 0.0
  %vm4527 = vcmp.ge.f32.partialorder %v4349, 0.0
  %vm4528 = vcmp.ge.f32.partialorder %v4352, 0.0
  %vm4529 = vcmp.ge.f32.partialorder %v4355, 0.0
  %vm4530 = vcmp.ge.f32.partialorder %v4358, 0.0
  %vm4531 = vcmp.ge.f32.partialorder %v4361, 0.0
  %vm4532 = vcmp.ge.f32.partialorder %v4364, 0.0
  %vm4533 = vcmp.ge.f32.partialorder %v4367, 0.0
  %vm4534 = vcmp.ge.f32.partialorder %v4370, 0.0
  %vm4535 = vcmp.ge.f32.partialorder %v4373, 0.0
  %vm4536 = vcmp.ge.f32.partialorder %v4376, 0.0
  %vm4537 = vcmp.ge.f32.partialorder %v4379, 0.0
  %vm4538 = vcmp.ge.f32.partialorder %v4382, 0.0
  %vm4539 = vcmp.ge.f32.partialorder %v4385, 0.0
  %vm4540 = vcmp.ge.f32.partialorder %v4388, 0.0
  %vm4541 = vcmp.ge.f32.partialorder %v4391, 0.0
  %vm4542 = vcmp.ge.f32.partialorder %v4394, 0.0
  %vm4543 = vcmp.ge.f32.partialorder %v4397, 0.0
  %vm4544 = vcmp.ge.f32.partialorder %v4400, 0.0
  %vm4545 = vcmp.ge.f32.partialorder %v4403, 0.0
  %vm4546 = vcmp.ge.f32.partialorder %v4406, 0.0
  %vm4547 = vcmp.ge.f32.partialorder %v4409, 0.0
  %vm4548 = vcmp.ge.f32.partialorder %v4412, 0.0
  %vm4549 = vcmp.ge.f32.partialorder %v4415, 0.0
  %vm4550 = vcmp.ge.f32.partialorder %v4418, 0.0
  %vm4551 = vcmp.ge.f32.partialorder %v4421, 0.0
  %vm4552 = vcmp.ge.f32.partialorder %v4424, 0.0
  %vm4553 = vcmp.ge.f32.partialorder %v4427, 0.0
  %vm4554 = vcmp.ge.f32.partialorder %v4430, 0.0
  %vm4555 = vcmp.ge.f32.partialorder %v4433, 0.0
  %vm4556 = vcmp.ge.f32.partialorder %v4436, 0.0
  %vm4557 = vcmp.ge.f32.partialorder %v4439, 0.0
  %vm4558 = vcmp.ge.f32.partialorder %v4442, 0.0
  %vm4559 = vcmp.ge.f32.partialorder %v4445, 0.0
  %vm4560 = vcmp.ge.f32.partialorder %v4448, 0.0
  %vm4561 = vcmp.ge.f32.partialorder %v4451, 0.0
  %vm4562 = vcmp.ge.f32.partialorder %v4454, 0.0
  %vm4563 = vcmp.ge.f32.partialorder %v4457, 0.0
  %vm4564 = vcmp.ge.f32.partialorder %v4460, 0.0
  %vm4565 = vcmp.ge.f32.partialorder %v4463, 0.0
  %vm4566 = vcmp.ge.f32.partialorder %v4466, 0.0
  %vm4567 = vcmp.ge.f32.partialorder %v4469, 0.0
  %vm4568 = vcmp.ge.f32.partialorder %v4472, 0.0
  %vm4569 = vcmp.ge.f32.partialorder %v4475, 0.0
  %vm4570 = vcmp.ge.f32.partialorder %v4478, 0.0
  %vm4571 = vcmp.ge.f32.partialorder %v4481, 0.0
  %vm4572 = vcmp.ge.f32.partialorder %v4484, 0.0
  %vm4573 = vcmp.ge.f32.partialorder %v4487, 0.0
  %vm4574 = vcmp.ge.f32.partialorder %v4490, 0.0
  %vm4575 = vcmp.ge.f32.partialorder %v4493, 0.0
  %vm4576 = vcmp.ge.f32.partialorder %v4496, 0.0
  %v4577 = vmul.f32 %v4262, 0.01
  %v4578 = vmul.f32 %v4265, 0.01
  %v4579 = vmul.f32 %v4268, 0.01
  %v4580 = vmul.f32 %v4271, 0.01
  %v4581 = vmul.f32 %v4274, 0.01
  %v4582 = vmul.f32 %v4277, 0.01
  %v4583 = vmul.f32 %v4280, 0.01
  %v4584 = vmul.f32 %v4283, 0.01
  %v4585 = vmul.f32 %v4286, 0.01
  %v4586 = vmul.f32 %v4289, 0.01
  %v4587 = vmul.f32 %v4292, 0.01
  %v4588 = vmul.f32 %v4295, 0.01
  %v4589 = vmul.f32 %v4298, 0.01
  %v4590 = vmul.f32 %v4301, 0.01
  %v4591 = vmul.f32 %v4304, 0.01
  %v4592 = vmul.f32 %v4307, 0.01
  %v4593 = vmul.f32 %v4310, 0.01
  %v4594 = vmul.f32 %v4313, 0.01
  %v4595 = vmul.f32 %v4316, 0.01
  %v4596 = vmul.f32 %v4319, 0.01
  %v4597 = vmul.f32 %v4322, 0.01
  %v4598 = vmul.f32 %v4325, 0.01
  %v4599 = vmul.f32 %v4328, 0.01
  %v4600 = vmul.f32 %v4331, 0.01
  %v4601 = vmul.f32 %v4334, 0.01
  %v4602 = vmul.f32 %v4337, 0.01
  %v4603 = vmul.f32 %v4340, 0.01
  %v4604 = vmul.f32 %v4343, 0.01
  %v4605 = vmul.f32 %v4346, 0.01
  %v4606 = vmul.f32 %v4349, 0.01
  %v4607 = vmul.f32 %v4352, 0.01
  %v4608 = vmul.f32 %v4355, 0.01
  %v4609 = vmul.f32 %v4358, 0.01
  %v4610 = vmul.f32 %v4361, 0.01
  %v4611 = vmul.f32 %v4364, 0.01
  %v4612 = vmul.f32 %v4367, 0.01
  %v4613 = vmul.f32 %v4370, 0.01
  %v4614 = vmul.f32 %v4373, 0.01
  %v4615 = vmul.f32 %v4376, 0.01
  %v4616 = vmul.f32 %v4379, 0.01
  %v4617 = vmul.f32 %v4382, 0.01
  %v4618 = vmul.f32 %v4385, 0.01
  %v4619 = vmul.f32 %v4388, 0.01
  %v4620 = vmul.f32 %v4391, 0.01
  %v4621 = vmul.f32 %v4394, 0.01
  %v4622 = vmul.f32 %v4397, 0.01
  %v4623 = vmul.f32 %v4400, 0.01
  %v4624 = vmul.f32 %v4403, 0.01
  %v4625 = vmul.f32 %v4406, 0.01
  %v4626 = vmul.f32 %v4409, 0.01
  %v4627 = vmul.f32 %v4412, 0.01
  %v4628 = vmul.f32 %v4415, 0.01
  %v4629 = vmul.f32 %v4418, 0.01
  %v4630 = vmul.f32 %v4421, 0.01
  %v4631 = vmul.f32 %v4424, 0.01
  %v4632 = vmul.f32 %v4427, 0.01
  %v4633 = vmul.f32 %v4430, 0.01
  %v4634 = vmul.f32 %v4433, 0.01
  %v4635 = vmul.f32 %v4436, 0.01
  %v4636 = vmul.f32 %v4439, 0.01
  %v4637 = vmul.f32 %v4442, 0.01
  %v4638 = vmul.f32 %v4445, 0.01
  %v4639 = vmul.f32 %v4448, 0.01
  %v4640 = vmul.f32 %v4451, 0.01
  %v4641 = vmul.f32 %v4454, 0.01
  %v4642 = vmul.f32 %v4457, 0.01
  %v4643 = vmul.f32 %v4460, 0.01
  %v4644 = vmul.f32 %v4463, 0.01
  %v4645 = vmul.f32 %v4466, 0.01
  %v4646 = vmul.f32 %v4469, 0.01
  %v4647 = vmul.f32 %v4472, 0.01
  %v4648 = vmul.f32 %v4475, 0.01
  %v4649 = vmul.f32 %v4478, 0.01
  %v4650 = vmul.f32 %v4481, 0.01
  %v4651 = vmul.f32 %v4484, 0.01
  %v4652 = vmul.f32 %v4487, 0.01
  %v4653 = vmul.f32 %v4490, 0.01
  %v4654 = vmul.f32 %v4493, 0.01
  %v4655 = vmul.f32 %v4496, 0.01
  %v4656 = vsel %vm4498, %v4262, %v4577
  %v4657 = vsel %vm4499, %v4265, %v4578
  %v4658 = vsel %vm4500, %v4268, %v4579
  %v4659 = vsel %vm4501, %v4271, %v4580
  %v4660 = vsel %vm4502, %v4274, %v4581
  %v4661 = vsel %vm4503, %v4277, %v4582
  %v4662 = vsel %vm4504, %v4280, %v4583
  %v4663 = vsel %vm4505, %v4283, %v4584
  %v4664 = vsel %vm4506, %v4286, %v4585
  %v4665 = vsel %vm4507, %v4289, %v4586
  %v4666 = vsel %vm4508, %v4292, %v4587
  %v4667 = vsel %vm4509, %v4295, %v4588
  %v4668 = vsel %vm4510, %v4298, %v4589
  %v4669 = vsel %vm4511, %v4301, %v4590
  %v4670 = vsel %vm4512, %v4304, %v4591
  %v4671 = vsel %vm4513, %v4307, %v4592
  %v4672 = vsel %vm4514, %v4310, %v4593
  %v4673 = vsel %vm4515, %v4313, %v4594
  %v4674 = vsel %vm4516, %v4316, %v4595
  %v4675 = vsel %vm4517, %v4319, %v4596
  %v4676 = vsel %vm4518, %v4322, %v4597
  %v4677 = vsel %vm4519, %v4325, %v4598
  %v4678 = vsel %vm4520, %v4328, %v4599
  %v4679 = vsel %vm4521, %v4331, %v4600
  %v4680 = vsel %vm4522, %v4334, %v4601
  %v4681 = vsel %vm4523, %v4337, %v4602
  %v4682 = vsel %vm4524, %v4340, %v4603
  %v4683 = vsel %vm4525, %v4343, %v4604
  %v4684 = vsel %vm4526, %v4346, %v4605
  %v4685 = vsel %vm4527, %v4349, %v4606
  %v4686 = vsel %vm4528, %v4352, %v4607
  %v4687 = vsel %vm4529, %v4355, %v4608
  %v4688 = vsel %vm4530, %v4358, %v4609
  %v4689 = vsel %vm4531, %v4361, %v4610
  %v4690 = vsel %vm4532, %v4364, %v4611
  %v4691 = vsel %vm4533, %v4367, %v4612
  %v4692 = vsel %vm4534, %v4370, %v4613
  %v4693 = vsel %vm4535, %v4373, %v4614
  %v4694 = vsel %vm4536, %v4376, %v4615
  %v4695 = vsel %vm4537, %v4379, %v4616
  %v4696 = vsel %vm4538, %v4382, %v4617
  %v4697 = vsel %vm4539, %v4385, %v4618
  %v4698 = vsel %vm4540, %v4388, %v4619
  %v4699 = vsel %vm4541, %v4391, %v4620
  %v4700 = vsel %vm4542, %v4394, %v4621
  %v4701 = vsel %vm4543, %v4397, %v4622
  %v4702 = vsel %vm4544, %v4400, %v4623
  %v4703 = vsel %vm4545, %v4403, %v4624
  %v4704 = vsel %vm4546, %v4406, %v4625
  %v4705 = vsel %vm4547, %v4409, %v4626
  %v4706 = vsel %vm4548, %v4412, %v4627
  %v4707 = vsel %vm4549, %v4415, %v4628
  %v4708 = vsel %vm4550, %v4418, %v4629
  %v4709 = vsel %vm4551, %v4421, %v4630
  %v4710 = vsel %vm4552, %v4424, %v4631
  %v4711 = vsel %vm4553, %v4427, %v4632
  %v4712 = vsel %vm4554, %v4430, %v4633
  %v4713 = vsel %vm4555, %v4433, %v4634
  %v4714 = vsel %vm4556, %v4436, %v4635
  %v4715 = vsel %vm4557, %v4439, %v4636
  %v4716 = vsel %vm4558, %v4442, %v4637
  %v4717 = vsel %vm4559, %v4445, %v4638
  %v4718 = vsel %vm4560, %v4448, %v4639
  %v4719 = vsel %vm4561, %v4451, %v4640
  %v4720 = vsel %vm4562, %v4454, %v4641
  %v4721 = vsel %vm4563, %v4457, %v4642
  %v4722 = vsel %vm4564, %v4460, %v4643
  %v4723 = vsel %vm4565, %v4463, %v4644
  %v4724 = vsel %vm4566, %v4466, %v4645
  %v4725 = vsel %vm4567, %v4469, %v4646
  %v4726 = vsel %vm4568, %v4472, %v4647
  %v4727 = vsel %vm4569, %v4475, %v4648
  %v4728 = vsel %vm4570, %v4478, %v4649
  %v4729 = vsel %vm4571, %v4481, %v4650
  %v4730 = vsel %vm4572, %v4484, %v4651
  %v4731 = vsel %vm4573, %v4487, %v4652
  %v4732 = vsel %vm4574, %v4490, %v4653
  %v4733 = vsel %vm4575, %v4493, %v4654
  %v4734 = vsel %vm4576, %v4496, %v4655
  %v4735 = vld [vmem:[%s7] sm:$0xff]
  %v4736 = vld [vmem:[%s7 + $0x8] sm:$0xff]
  %v4737 = vld [vmem:[%s8] sm:$0x1]
  %v4739 = vperm.slane %v4737, 0
  %vm4741 = vcmask 130048
  %v4743 = vsel %vm4741, %v4656, 0
  %v4746 = vsel %vm4741, %v4657, 0
  %v4749 = vsel %vm4741, %v4658, 0
  %v4752 = vsel %vm4741, %v4659, 0
  %v4755 = vsel %vm4741, %v4660, 0
  %v4758 = vsel %vm4741, %v4661, 0
  %v4761 = vsel %vm4741, %v4662, 0
  %v4764 = vsel %vm4741, %v4663, 0
  %v4767 = vsel %vm4741, %v4664, 0
  %v4770 = vsel %vm4741, %v4665, 0
  %v4773 = vsel %vm4741, %v4666, 0
  %v4776 = vsel %vm4741, %v4667, 0
  %v4779 = vsel %vm4741, %v4668, 0
  %v4782 = vsel %vm4741, %v4669, 0
  %v4785 = vsel %vm4741, %v4670, 0
  %v4788 = vsel %vm4741, %v4671, 0
  %v4791 = vsel %vm4741, %v4672, 0
  %v4794 = vsel %vm4741, %v4673, 0
  %v4797 = vsel %vm4741, %v4674, 0
  %v4800 = vsel %vm4741, %v4675, 0
  %v4803 = vsel %vm4741, %v4676, 0
  %v4806 = vsel %vm4741, %v4677, 0
  %v4809 = vsel %vm4741, %v4678, 0
  %v4812 = vsel %vm4741, %v4679, 0
  %v4815 = vsel %vm4741, %v4680, 0
  %v4818 = vsel %vm4741, %v4681, 0
  %v4821 = vsel %vm4741, %v4682, 0
  %v4824 = vsel %vm4741, %v4683, 0
  %v4827 = vsel %vm4741, %v4684, 0
  %v4830 = vsel %vm4741, %v4685, 0
  %v4833 = vsel %vm4741, %v4686, 0
  %v4836 = vsel %vm4741, %v4687, 0
  %v4839 = vsel %vm4741, %v4688, 0
  %v4842 = vsel %vm4741, %v4689, 0
  %v4845 = vsel %vm4741, %v4690, 0
  %v4848 = vsel %vm4741, %v4691, 0
  %v4851 = vsel %vm4741, %v4692, 0
  %v4854 = vsel %vm4741, %v4693, 0
  %v4857 = vsel %vm4741, %v4694, 0
  %v4860 = vsel %vm4741, %v4695, 0
  %v4863 = vsel %vm4741, %v4696, 0
  %v4866 = vsel %vm4741, %v4697, 0
  %v4869 = vsel %vm4741, %v4698, 0
  %v4872 = vsel %vm4741, %v4699, 0
  %v4875 = vsel %vm4741, %v4700, 0
  %v4878 = vsel %vm4741, %v4701, 0
  %v4881 = vsel %vm4741, %v4702, 0
  %v4884 = vsel %vm4741, %v4703, 0
  %v4887 = vsel %vm4741, %v4704, 0
  %v4890 = vsel %vm4741, %v4705, 0
  %v4893 = vsel %vm4741, %v4706, 0
  %v4896 = vsel %vm4741, %v4707, 0
  %v4899 = vsel %vm4741, %v4708, 0
  %v4902 = vsel %vm4741, %v4709, 0
  %v4905 = vsel %vm4741, %v4710, 0
  %v4908 = vsel %vm4741, %v4711, 0
  %v4911 = vsel %vm4741, %v4712, 0
  %v4914 = vsel %vm4741, %v4713, 0
  %v4917 = vsel %vm4741, %v4714, 0
  %v4920 = vsel %vm4741, %v4715, 0
  %v4923 = vsel %vm4741, %v4716, 0
  %v4926 = vsel %vm4741, %v4717, 0
  %v4929 = vsel %vm4741, %v4718, 0
  %v4932 = vsel %vm4741, %v4719, 0
  %v4935 = vsel %vm4741, %v4720, 0
  %v4938 = vsel %vm4741, %v4721, 0
  %v4941 = vsel %vm4741, %v4722, 0
  %v4944 = vsel %vm4741, %v4723, 0
  %v4947 = vsel %vm4741, %v4724, 0
  %v4950 = vsel %vm4741, %v4725, 0
  %v4953 = vsel %vm4741, %v4726, 0
  %v4956 = vsel %vm4741, %v4727, 0
  %v4959 = vsel %vm4741, %v4728, 0
  %v4962 = vsel %vm4741, %v4729, 0
  %v4965 = vsel %vm4741, %v4730, 0
  %v4968 = vsel %vm4741, %v4731, 0
  %v4971 = vsel %vm4741, %v4732, 0
  %v4974 = vsel %vm4741, %v4733, 0
  %v4977 = vsel %vm4741, %v4734, 0
  %4979 = vmatpush.msra.mxu0 0.0
  %4980 = vmatpush.msra.mxu0 0.0
  %4981 = vmatpush.msra.mxu0 0.0
  %4982 = vmatpush.msra.mxu0 0.0
  %4983 = vmatpush.msra.mxu0 0.0
  %4984 = vmatpush.msra.mxu0 0.0
  %4985 = vmatpush.msra.mxu0 0.0
  %4986 = vmatpush.msra.mxu0 0.0
  %4987 = vmatpush.msra.mxu0 0.0
  %4988 = vmatpush.msra.mxu0 0.0
  %4989 = vmatpush.msra.mxu0 0.0
  %4990 = vmatpush.msra.mxu0 0.0
  %4991 = vmatpush.msra.mxu0 0.0
  %4992 = vmatpush.msra.mxu0 0.0
  %4993 = vmatpush.msra.mxu0 %v4736
  %4994 = vmatpush.msra.mxu0 %v4735
  %4995 = vmatmul.f32.gmra.mxu0 %v4743
  %v4996 = vpop.f32.mrf.mxu0
  %v4997 = vadd.f32 %v4739, %v4996
  %4998 = vmatmul.f32.gmra.mxu0 %v4746
  %v4999 = vpop.f32.mrf.mxu0
  %v5000 = vadd.f32 %v4739, %v4999
  %5001 = vmatmul.f32.gmra.mxu0 %v4749
  %v5002 = vpop.f32.mrf.mxu0
  %v5003 = vadd.f32 %v4739, %v5002
  %5004 = vmatmul.f32.gmra.mxu0 %v4752
  %v5005 = vpop.f32.mrf.mxu0
  %v5006 = vadd.f32 %v4739, %v5005
  %5007 = vmatmul.f32.gmra.mxu0 %v4755
  %v5008 = vpop.f32.mrf.mxu0
  %v5009 = vadd.f32 %v4739, %v5008
  %5010 = vmatmul.f32.gmra.mxu0 %v4758
  %v5011 = vpop.f32.mrf.mxu0
  %v5012 = vadd.f32 %v4739, %v5011
  %5013 = vmatmul.f32.gmra.mxu0 %v4761
  %v5014 = vpop.f32.mrf.mxu0
  %v5015 = vadd.f32 %v4739, %v5014
  %5016 = vmatmul.f32.gmra.mxu0 %v4764
  %v5017 = vpop.f32.mrf.mxu0
  %v5018 = vadd.f32 %v4739, %v5017
  %5019 = vmatmul.f32.gmra.mxu0 %v4767
  %v5020 = vpop.f32.mrf.mxu0
  %v5021 = vadd.f32 %v4739, %v5020
  %5022 = vmatmul.f32.gmra.mxu0 %v4770
  %v5023 = vpop.f32.mrf.mxu0
  %v5024 = vadd.f32 %v4739, %v5023
  %5025 = vmatmul.f32.gmra.mxu0 %v4773
  %v5026 = vpop.f32.mrf.mxu0
  %v5027 = vadd.f32 %v4739, %v5026
  %5028 = vmatmul.f32.gmra.mxu0 %v4776
  %v5029 = vpop.f32.mrf.mxu0
  %v5030 = vadd.f32 %v4739, %v5029
  %5031 = vmatmul.f32.gmra.mxu0 %v4779
  %v5032 = vpop.f32.mrf.mxu0
  %v5033 = vadd.f32 %v4739, %v5032
  %5034 = vmatmul.f32.gmra.mxu0 %v4782
  %v5035 = vpop.f32.mrf.mxu0
  %v5036 = vadd.f32 %v4739, %v5035
  %5037 = vmatmul.f32.gmra.mxu0 %v4785
  %v5038 = vpop.f32.mrf.mxu0
  %v5039 = vadd.f32 %v4739, %v5038
  %5040 = vmatmul.f32.gmra.mxu0 %v4788
  %v5041 = vpop.f32.mrf.mxu0
  %v5042 = vadd.f32 %v4739, %v5041
  %5043 = vmatmul.f32.gmra.mxu0 %v4791
  %v5044 = vpop.f32.mrf.mxu0
  %v5045 = vadd.f32 %v4739, %v5044
  %5046 = vmatmul.f32.gmra.mxu0 %v4794
  %v5047 = vpop.f32.mrf.mxu0
  %v5048 = vadd.f32 %v4739, %v5047
  %5049 = vmatmul.f32.gmra.mxu0 %v4797
  %v5050 = vpop.f32.mrf.mxu0
  %v5051 = vadd.f32 %v4739, %v5050
  %5052 = vmatmul.f32.gmra.mxu0 %v4800
  %v5053 = vpop.f32.mrf.mxu0
  %v5054 = vadd.f32 %v4739, %v5053
  %5055 = vmatmul.f32.gmra.mxu0 %v4803
  %v5056 = vpop.f32.mrf.mxu0
  %v5057 = vadd.f32 %v4739, %v5056
  %5058 = vmatmul.f32.gmra.mxu0 %v4806
  %v5059 = vpop.f32.mrf.mxu0
  %v5060 = vadd.f32 %v4739, %v5059
  %5061 = vmatmul.f32.gmra.mxu0 %v4809
  %v5062 = vpop.f32.mrf.mxu0
  %v5063 = vadd.f32 %v4739, %v5062
  %5064 = vmatmul.f32.gmra.mxu0 %v4812
  %v5065 = vpop.f32.mrf.mxu0
  %v5066 = vadd.f32 %v4739, %v5065
  %5067 = vmatmul.f32.gmra.mxu0 %v4815
  %v5068 = vpop.f32.mrf.mxu0
  %v5069 = vadd.f32 %v4739, %v5068
  %5070 = vmatmul.f32.gmra.mxu0 %v4818
  %v5071 = vpop.f32.mrf.mxu0
  %v5072 = vadd.f32 %v4739, %v5071
  %5073 = vmatmul.f32.gmra.mxu0 %v4821
  %v5074 = vpop.f32.mrf.mxu0
  %v5075 = vadd.f32 %v4739, %v5074
  %5076 = vmatmul.f32.gmra.mxu0 %v4824
  %v5077 = vpop.f32.mrf.mxu0
  %v5078 = vadd.f32 %v4739, %v5077
  %5079 = vmatmul.f32.gmra.mxu0 %v4827
  %v5080 = vpop.f32.mrf.mxu0
  %v5081 = vadd.f32 %v4739, %v5080
  %5082 = vmatmul.f32.gmra.mxu0 %v4830
  %v5083 = vpop.f32.mrf.mxu0
  %v5084 = vadd.f32 %v4739, %v5083
  %5085 = vmatmul.f32.gmra.mxu0 %v4833
  %v5086 = vpop.f32.mrf.mxu0
  %v5087 = vadd.f32 %v4739, %v5086
  %5088 = vmatmul.f32.gmra.mxu0 %v4836
  %v5089 = vpop.f32.mrf.mxu0
  %v5090 = vadd.f32 %v4739, %v5089
  %5091 = vmatmul.f32.gmra.mxu0 %v4839
  %v5092 = vpop.f32.mrf.mxu0
  %v5093 = vadd.f32 %v4739, %v5092
  %5094 = vmatmul.f32.gmra.mxu0 %v4842
  %v5095 = vpop.f32.mrf.mxu0
  %v5096 = vadd.f32 %v4739, %v5095
  %5097 = vmatmul.f32.gmra.mxu0 %v4845
  %v5098 = vpop.f32.mrf.mxu0
  %v5099 = vadd.f32 %v4739, %v5098
  %5100 = vmatmul.f32.gmra.mxu0 %v4848
  %v5101 = vpop.f32.mrf.mxu0
  %v5102 = vadd.f32 %v4739, %v5101
  %5103 = vmatmul.f32.gmra.mxu0 %v4851
  %v5104 = vpop.f32.mrf.mxu0
  %v5105 = vadd.f32 %v4739, %v5104
  %5106 = vmatmul.f32.gmra.mxu0 %v4854
  %v5107 = vpop.f32.mrf.mxu0
  %v5108 = vadd.f32 %v4739, %v5107
  %5109 = vmatmul.f32.gmra.mxu0 %v4857
  %v5110 = vpop.f32.mrf.mxu0
  %v5111 = vadd.f32 %v4739, %v5110
  %5112 = vmatmul.f32.gmra.mxu0 %v4860
  %v5113 = vpop.f32.mrf.mxu0
  %v5114 = vadd.f32 %v4739, %v5113
  %5115 = vmatmul.f32.gmra.mxu0 %v4863
  %v5116 = vpop.f32.mrf.mxu0
  %v5117 = vadd.f32 %v4739, %v5116
  %5118 = vmatmul.f32.gmra.mxu0 %v4866
  %v5119 = vpop.f32.mrf.mxu0
  %v5120 = vadd.f32 %v4739, %v5119
  %5121 = vmatmul.f32.gmra.mxu0 %v4869
  %v5122 = vpop.f32.mrf.mxu0
  %v5123 = vadd.f32 %v4739, %v5122
  %5124 = vmatmul.f32.gmra.mxu0 %v4872
  %v5125 = vpop.f32.mrf.mxu0
  %v5126 = vadd.f32 %v4739, %v5125
  %5127 = vmatmul.f32.gmra.mxu0 %v4875
  %v5128 = vpop.f32.mrf.mxu0
  %v5129 = vadd.f32 %v4739, %v5128
  %5130 = vmatmul.f32.gmra.mxu0 %v4878
  %v5131 = vpop.f32.mrf.mxu0
  %v5132 = vadd.f32 %v4739, %v5131
  %5133 = vmatmul.f32.gmra.mxu0 %v4881
  %v5134 = vpop.f32.mrf.mxu0
  %v5135 = vadd.f32 %v4739, %v5134
  %5136 = vmatmul.f32.gmra.mxu0 %v4884
  %v5137 = vpop.f32.mrf.mxu0
  %v5138 = vadd.f32 %v4739, %v5137
  %5139 = vmatmul.f32.gmra.mxu0 %v4887
  %v5140 = vpop.f32.mrf.mxu0
  %v5141 = vadd.f32 %v4739, %v5140
  %5142 = vmatmul.f32.gmra.mxu0 %v4890
  %v5143 = vpop.f32.mrf.mxu0
  %v5144 = vadd.f32 %v4739, %v5143
  %5145 = vmatmul.f32.gmra.mxu0 %v4893
  %v5146 = vpop.f32.mrf.mxu0
  %v5147 = vadd.f32 %v4739, %v5146
  %5148 = vmatmul.f32.gmra.mxu0 %v4896
  %v5149 = vpop.f32.mrf.mxu0
  %v5150 = vadd.f32 %v4739, %v5149
  %5151 = vmatmul.f32.gmra.mxu0 %v4899
  %v5152 = vpop.f32.mrf.mxu0
  %v5153 = vadd.f32 %v4739, %v5152
  %5154 = vmatmul.f32.gmra.mxu0 %v4902
  %v5155 = vpop.f32.mrf.mxu0
  %v5156 = vadd.f32 %v4739, %v5155
  %5157 = vmatmul.f32.gmra.mxu0 %v4905
  %v5158 = vpop.f32.mrf.mxu0
  %v5159 = vadd.f32 %v4739, %v5158
  %5160 = vmatmul.f32.gmra.mxu0 %v4908
  %v5161 = vpop.f32.mrf.mxu0
  %v5162 = vadd.f32 %v4739, %v5161
  %5163 = vmatmul.f32.gmra.mxu0 %v4911
  %v5164 = vpop.f32.mrf.mxu0
  %v5165 = vadd.f32 %v4739, %v5164
  %5166 = vmatmul.f32.gmra.mxu0 %v4914
  %v5167 = vpop.f32.mrf.mxu0
  %v5168 = vadd.f32 %v4739, %v5167
  %5169 = vmatmul.f32.gmra.mxu0 %v4917
  %v5170 = vpop.f32.mrf.mxu0
  %v5171 = vadd.f32 %v4739, %v5170
  %5172 = vmatmul.f32.gmra.mxu0 %v4920
  %v5173 = vpop.f32.mrf.mxu0
  %v5174 = vadd.f32 %v4739, %v5173
  %5175 = vmatmul.f32.gmra.mxu0 %v4923
  %v5176 = vpop.f32.mrf.mxu0
  %v5177 = vadd.f32 %v4739, %v5176
  %5178 = vmatmul.f32.gmra.mxu0 %v4926
  %v5179 = vpop.f32.mrf.mxu0
  %v5180 = vadd.f32 %v4739, %v5179
  %5181 = vmatmul.f32.gmra.mxu0 %v4929
  %v5182 = vpop.f32.mrf.mxu0
  %v5183 = vadd.f32 %v4739, %v5182
  %5184 = vmatmul.f32.gmra.mxu0 %v4932
  %v5185 = vpop.f32.mrf.mxu0
  %v5186 = vadd.f32 %v4739, %v5185
  %5187 = vmatmul.f32.gmra.mxu0 %v4935
  %v5188 = vpop.f32.mrf.mxu0
  %v5189 = vadd.f32 %v4739, %v5188
  %5190 = vmatmul.f32.gmra.mxu0 %v4938
  %v5191 = vpop.f32.mrf.mxu0
  %v5192 = vadd.f32 %v4739, %v5191
  %5193 = vmatmul.f32.gmra.mxu0 %v4941
  %v5194 = vpop.f32.mrf.mxu0
  %v5195 = vadd.f32 %v4739, %v5194
  %5196 = vmatmul.f32.gmra.mxu0 %v4944
  %v5197 = vpop.f32.mrf.mxu0
  %v5198 = vadd.f32 %v4739, %v5197
  %5199 = vmatmul.f32.gmra.mxu0 %v4947
  %v5200 = vpop.f32.mrf.mxu0
  %v5201 = vadd.f32 %v4739, %v5200
  %5202 = vmatmul.f32.gmra.mxu0 %v4950
  %v5203 = vpop.f32.mrf.mxu0
  %v5204 = vadd.f32 %v4739, %v5203
  %5205 = vmatmul.f32.gmra.mxu0 %v4953
  %v5206 = vpop.f32.mrf.mxu0
  %v5207 = vadd.f32 %v4739, %v5206
  %5208 = vmatmul.f32.gmra.mxu0 %v4956
  %v5209 = vpop.f32.mrf.mxu0
  %v5210 = vadd.f32 %v4739, %v5209
  %5211 = vmatmul.f32.gmra.mxu0 %v4959
  %v5212 = vpop.f32.mrf.mxu0
  %v5213 = vadd.f32 %v4739, %v5212
  %5214 = vmatmul.f32.gmra.mxu0 %v4962
  %v5215 = vpop.f32.mrf.mxu0
  %v5216 = vadd.f32 %v4739, %v5215
  %5217 = vmatmul.f32.gmra.mxu0 %v4965
  %v5218 = vpop.f32.mrf.mxu0
  %v5219 = vadd.f32 %v4739, %v5218
  %5220 = vmatmul.f32.gmra.mxu0 %v4968
  %v5221 = vpop.f32.mrf.mxu0
  %v5222 = vadd.f32 %v4739, %v5221
  %5223 = vmatmul.f32.gmra.mxu0 %v4971
  %v5224 = vpop.f32.mrf.mxu0
  %v5225 = vadd.f32 %v4739, %v5224
  %5226 = vmatmul.f32.gmra.mxu0 %v4974
  %v5227 = vpop.f32.mrf.mxu0
  %v5228 = vadd.f32 %v4739, %v5227
  %5229 = vmatmul.f32.gmra.mxu0 %v4977
  %v5230 = vpop.f32.mrf.mxu0
  %v5231 = vadd.f32 %v4739, %v5230
  %5232 = vdwg.mxu0
  %vm5233 = vcmp.ge.f32.partialorder %v4997, 0.0
  %vm5234 = vcmp.ge.f32.partialorder %v5000, 0.0
  %vm5235 = vcmp.ge.f32.partialorder %v5003, 0.0
  %vm5236 = vcmp.ge.f32.partialorder %v5006, 0.0
  %vm5237 = vcmp.ge.f32.partialorder %v5009, 0.0
  %vm5238 = vcmp.ge.f32.partialorder %v5012, 0.0
  %vm5239 = vcmp.ge.f32.partialorder %v5015, 0.0
  %vm5240 = vcmp.ge.f32.partialorder %v5018, 0.0
  %vm5241 = vcmp.ge.f32.partialorder %v5021, 0.0
  %vm5242 = vcmp.ge.f32.partialorder %v5024, 0.0
  %vm5243 = vcmp.ge.f32.partialorder %v5027, 0.0
  %vm5244 = vcmp.ge.f32.partialorder %v5030, 0.0
  %vm5245 = vcmp.ge.f32.partialorder %v5033, 0.0
  %vm5246 = vcmp.ge.f32.partialorder %v5036, 0.0
  %vm5247 = vcmp.ge.f32.partialorder %v5039, 0.0
  %vm5248 = vcmp.ge.f32.partialorder %v5042, 0.0
  %vm5249 = vcmp.ge.f32.partialorder %v5045, 0.0
  %vm5250 = vcmp.ge.f32.partialorder %v5048, 0.0
  %vm5251 = vcmp.ge.f32.partialorder %v5051, 0.0
  %vm5252 = vcmp.ge.f32.partialorder %v5054, 0.0
  %vm5253 = vcmp.ge.f32.partialorder %v5057, 0.0
  %vm5254 = vcmp.ge.f32.partialorder %v5060, 0.0
  %vm5255 = vcmp.ge.f32.partialorder %v5063, 0.0
  %vm5256 = vcmp.ge.f32.partialorder %v5066, 0.0
  %vm5257 = vcmp.ge.f32.partialorder %v5069, 0.0
  %vm5258 = vcmp.ge.f32.partialorder %v5072, 0.0
  %vm5259 = vcmp.ge.f32.partialorder %v5075, 0.0
  %vm5260 = vcmp.ge.f32.partialorder %v5078, 0.0
  %vm5261 = vcmp.ge.f32.partialorder %v5081, 0.0
  %vm5262 = vcmp.ge.f32.partialorder %v5084, 0.0
  %vm5263 = vcmp.ge.f32.partialorder %v5087, 0.0
  %vm5264 = vcmp.ge.f32.partialorder %v5090, 0.0
  %vm5265 = vcmp.ge.f32.partialorder %v5093, 0.0
  %vm5266 = vcmp.ge.f32.partialorder %v5096, 0.0
  %vm5267 = vcmp.ge.f32.partialorder %v5099, 0.0
  %vm5268 = vcmp.ge.f32.partialorder %v5102, 0.0
  %vm5269 = vcmp.ge.f32.partialorder %v5105, 0.0
  %vm5270 = vcmp.ge.f32.partialorder %v5108, 0.0
  %vm5271 = vcmp.ge.f32.partialorder %v5111, 0.0
  %vm5272 = vcmp.ge.f32.partialorder %v5114, 0.0
  %vm5273 = vcmp.ge.f32.partialorder %v5117, 0.0
  %vm5274 = vcmp.ge.f32.partialorder %v5120, 0.0
  %vm5275 = vcmp.ge.f32.partialorder %v5123, 0.0
  %vm5276 = vcmp.ge.f32.partialorder %v5126, 0.0
  %vm5277 = vcmp.ge.f32.partialorder %v5129, 0.0
  %vm5278 = vcmp.ge.f32.partialorder %v5132, 0.0
  %vm5279 = vcmp.ge.f32.partialorder %v5135, 0.0
  %vm5280 = vcmp.ge.f32.partialorder %v5138, 0.0
  %vm5281 = vcmp.ge.f32.partialorder %v5141, 0.0
  %vm5282 = vcmp.ge.f32.partialorder %v5144, 0.0
  %vm5283 = vcmp.ge.f32.partialorder %v5147, 0.0
  %vm5284 = vcmp.ge.f32.partialorder %v5150, 0.0
  %vm5285 = vcmp.ge.f32.partialorder %v5153, 0.0
  %vm5286 = vcmp.ge.f32.partialorder %v5156, 0.0
  %vm5287 = vcmp.ge.f32.partialorder %v5159, 0.0
  %vm5288 = vcmp.ge.f32.partialorder %v5162, 0.0
  %vm5289 = vcmp.ge.f32.partialorder %v5165, 0.0
  %vm5290 = vcmp.ge.f32.partialorder %v5168, 0.0
  %vm5291 = vcmp.ge.f32.partialorder %v5171, 0.0
  %vm5292 = vcmp.ge.f32.partialorder %v5174, 0.0
  %vm5293 = vcmp.ge.f32.partialorder %v5177, 0.0
  %vm5294 = vcmp.ge.f32.partialorder %v5180, 0.0
  %vm5295 = vcmp.ge.f32.partialorder %v5183, 0.0
  %vm5296 = vcmp.ge.f32.partialorder %v5186, 0.0
  %vm5297 = vcmp.ge.f32.partialorder %v5189, 0.0
  %vm5298 = vcmp.ge.f32.partialorder %v5192, 0.0
  %vm5299 = vcmp.ge.f32.partialorder %v5195, 0.0
  %vm5300 = vcmp.ge.f32.partialorder %v5198, 0.0
  %vm5301 = vcmp.ge.f32.partialorder %v5201, 0.0
  %vm5302 = vcmp.ge.f32.partialorder %v5204, 0.0
  %vm5303 = vcmp.ge.f32.partialorder %v5207, 0.0
  %vm5304 = vcmp.ge.f32.partialorder %v5210, 0.0
  %vm5305 = vcmp.ge.f32.partialorder %v5213, 0.0
  %vm5306 = vcmp.ge.f32.partialorder %v5216, 0.0
  %vm5307 = vcmp.ge.f32.partialorder %v5219, 0.0
  %vm5308 = vcmp.ge.f32.partialorder %v5222, 0.0
  %vm5309 = vcmp.ge.f32.partialorder %v5225, 0.0
  %vm5310 = vcmp.ge.f32.partialorder %v5228, 0.0
  %vm5311 = vcmp.ge.f32.partialorder %v5231, 0.0
  %v5312 = vmul.f32 %v4997, 0.01
  %v5313 = vmul.f32 %v5000, 0.01
  %v5314 = vmul.f32 %v5003, 0.01
  %v5315 = vmul.f32 %v5006, 0.01
  %v5316 = vmul.f32 %v5009, 0.01
  %v5317 = vmul.f32 %v5012, 0.01
  %v5318 = vmul.f32 %v5015, 0.01
  %v5319 = vmul.f32 %v5018, 0.01
  %v5320 = vmul.f32 %v5021, 0.01
  %v5321 = vmul.f32 %v5024, 0.01
  %v5322 = vmul.f32 %v5027, 0.01
  %v5323 = vmul.f32 %v5030, 0.01
  %v5324 = vmul.f32 %v5033, 0.01
  %v5325 = vmul.f32 %v5036, 0.01
  %v5326 = vmul.f32 %v5039, 0.01
  %v5327 = vmul.f32 %v5042, 0.01
  %v5328 = vmul.f32 %v5045, 0.01
  %v5329 = vmul.f32 %v5048, 0.01
  %v5330 = vmul.f32 %v5051, 0.01
  %v5331 = vmul.f32 %v5054, 0.01
  %v5332 = vmul.f32 %v5057, 0.01
  %v5333 = vmul.f32 %v5060, 0.01
  %v5334 = vmul.f32 %v5063, 0.01
  %v5335 = vmul.f32 %v5066, 0.01
  %v5336 = vmul.f32 %v5069, 0.01
  %v5337 = vmul.f32 %v5072, 0.01
  %v5338 = vmul.f32 %v5075, 0.01
  %v5339 = vmul.f32 %v5078, 0.01
  %v5340 = vmul.f32 %v5081, 0.01
  %v5341 = vmul.f32 %v5084, 0.01
  %v5342 = vmul.f32 %v5087, 0.01
  %v5343 = vmul.f32 %v5090, 0.01
  %v5344 = vmul.f32 %v5093, 0.01
  %v5345 = vmul.f32 %v5096, 0.01
  %v5346 = vmul.f32 %v5099, 0.01
  %v5347 = vmul.f32 %v5102, 0.01
  %v5348 = vmul.f32 %v5105, 0.01
  %v5349 = vmul.f32 %v5108, 0.01
  %v5350 = vmul.f32 %v5111, 0.01
  %v5351 = vmul.f32 %v5114, 0.01
  %v5352 = vmul.f32 %v5117, 0.01
  %v5353 = vmul.f32 %v5120, 0.01
  %v5354 = vmul.f32 %v5123, 0.01
  %v5355 = vmul.f32 %v5126, 0.01
  %v5356 = vmul.f32 %v5129, 0.01
  %v5357 = vmul.f32 %v5132, 0.01
  %v5358 = vmul.f32 %v5135, 0.01
  %v5359 = vmul.f32 %v5138, 0.01
  %v5360 = vmul.f32 %v5141, 0.01
  %v5361 = vmul.f32 %v5144, 0.01
  %v5362 = vmul.f32 %v5147, 0.01
  %v5363 = vmul.f32 %v5150, 0.01
  %v5364 = vmul.f32 %v5153, 0.01
  %v5365 = vmul.f32 %v5156, 0.01
  %v5366 = vmul.f32 %v5159, 0.01
  %v5367 = vmul.f32 %v5162, 0.01
  %v5368 = vmul.f32 %v5165, 0.01
  %v5369 = vmul.f32 %v5168, 0.01
  %v5370 = vmul.f32 %v5171, 0.01
  %v5371 = vmul.f32 %v5174, 0.01
  %v5372 = vmul.f32 %v5177, 0.01
  %v5373 = vmul.f32 %v5180, 0.01
  %v5374 = vmul.f32 %v5183, 0.01
  %v5375 = vmul.f32 %v5186, 0.01
  %v5376 = vmul.f32 %v5189, 0.01
  %v5377 = vmul.f32 %v5192, 0.01
  %v5378 = vmul.f32 %v5195, 0.01
  %v5379 = vmul.f32 %v5198, 0.01
  %v5380 = vmul.f32 %v5201, 0.01
  %v5381 = vmul.f32 %v5204, 0.01
  %v5382 = vmul.f32 %v5207, 0.01
  %v5383 = vmul.f32 %v5210, 0.01
  %v5384 = vmul.f32 %v5213, 0.01
  %v5385 = vmul.f32 %v5216, 0.01
  %v5386 = vmul.f32 %v5219, 0.01
  %v5387 = vmul.f32 %v5222, 0.01
  %v5388 = vmul.f32 %v5225, 0.01
  %v5389 = vmul.f32 %v5228, 0.01
  %v5390 = vmul.f32 %v5231, 0.01
  %v5391 = vsel %vm5233, %v4997, %v5312
  %v5392 = vsel %vm5234, %v5000, %v5313
  %v5393 = vsel %vm5235, %v5003, %v5314
  %v5394 = vsel %vm5236, %v5006, %v5315
  %v5395 = vsel %vm5237, %v5009, %v5316
  %v5396 = vsel %vm5238, %v5012, %v5317
  %v5397 = vsel %vm5239, %v5015, %v5318
  %v5398 = vsel %vm5240, %v5018, %v5319
  %v5399 = vsel %vm5241, %v5021, %v5320
  %v5400 = vsel %vm5242, %v5024, %v5321
  %v5401 = vsel %vm5243, %v5027, %v5322
  %v5402 = vsel %vm5244, %v5030, %v5323
  %v5403 = vsel %vm5245, %v5033, %v5324
  %v5404 = vsel %vm5246, %v5036, %v5325
  %v5405 = vsel %vm5247, %v5039, %v5326
  %v5406 = vsel %vm5248, %v5042, %v5327
  %v5407 = vsel %vm5249, %v5045, %v5328
  %v5408 = vsel %vm5250, %v5048, %v5329
  %v5409 = vsel %vm5251, %v5051, %v5330
  %v5410 = vsel %vm5252, %v5054, %v5331
  %v5411 = vsel %vm5253, %v5057, %v5332
  %v5412 = vsel %vm5254, %v5060, %v5333
  %v5413 = vsel %vm5255, %v5063, %v5334
  %v5414 = vsel %vm5256, %v5066, %v5335
  %v5415 = vsel %vm5257, %v5069, %v5336
  %v5416 = vsel %vm5258, %v5072, %v5337
  %v5417 = vsel %vm5259, %v5075, %v5338
  %v5418 = vsel %vm5260, %v5078, %v5339
  %v5419 = vsel %vm5261, %v5081, %v5340
  %v5420 = vsel %vm5262, %v5084, %v5341
  %v5421 = vsel %vm5263, %v5087, %v5342
  %v5422 = vsel %vm5264, %v5090, %v5343
  %v5423 = vsel %vm5265, %v5093, %v5344
  %v5424 = vsel %vm5266, %v5096, %v5345
  %v5425 = vsel %vm5267, %v5099, %v5346
  %v5426 = vsel %vm5268, %v5102, %v5347
  %v5427 = vsel %vm5269, %v5105, %v5348
  %v5428 = vsel %vm5270, %v5108, %v5349
  %v5429 = vsel %vm5271, %v5111, %v5350
  %v5430 = vsel %vm5272, %v5114, %v5351
  %v5431 = vsel %vm5273, %v5117, %v5352
  %v5432 = vsel %vm5274, %v5120, %v5353
  %v5433 = vsel %vm5275, %v5123, %v5354
  %v5434 = vsel %vm5276, %v5126, %v5355
  %v5435 = vsel %vm5277, %v5129, %v5356
  %v5436 = vsel %vm5278, %v5132, %v5357
  %v5437 = vsel %vm5279, %v5135, %v5358
  %v5438 = vsel %vm5280, %v5138, %v5359
  %v5439 = vsel %vm5281, %v5141, %v5360
  %v5440 = vsel %vm5282, %v5144, %v5361
  %v5441 = vsel %vm5283, %v5147, %v5362
  %v5442 = vsel %vm5284, %v5150, %v5363
  %v5443 = vsel %vm5285, %v5153, %v5364
  %v5444 = vsel %vm5286, %v5156, %v5365
  %v5445 = vsel %vm5287, %v5159, %v5366
  %v5446 = vsel %vm5288, %v5162, %v5367
  %v5447 = vsel %vm5289, %v5165, %v5368
  %v5448 = vsel %vm5290, %v5168, %v5369
  %v5449 = vsel %vm5291, %v5171, %v5370
  %v5450 = vsel %vm5292, %v5174, %v5371
  %v5451 = vsel %vm5293, %v5177, %v5372
  %v5452 = vsel %vm5294, %v5180, %v5373
  %v5453 = vsel %vm5295, %v5183, %v5374
  %v5454 = vsel %vm5296, %v5186, %v5375
  %v5455 = vsel %vm5297, %v5189, %v5376
  %v5456 = vsel %vm5298, %v5192, %v5377
  %v5457 = vsel %vm5299, %v5195, %v5378
  %v5458 = vsel %vm5300, %v5198, %v5379
  %v5459 = vsel %vm5301, %v5201, %v5380
  %v5460 = vsel %vm5302, %v5204, %v5381
  %v5461 = vsel %vm5303, %v5207, %v5382
  %v5462 = vsel %vm5304, %v5210, %v5383
  %v5463 = vsel %vm5305, %v5213, %v5384
  %v5464 = vsel %vm5306, %v5216, %v5385
  %v5465 = vsel %vm5307, %v5219, %v5386
  %v5466 = vsel %vm5308, %v5222, %v5387
  %v5467 = vsel %vm5309, %v5225, %v5388
  %v5468 = vsel %vm5310, %v5228, %v5389
  %v5469 = vsel %vm5311, %v5231, %v5390
  %v5470 = vld [vmem:[%s9] sm:$0x1]
  %v5472 = vperm.slane %v5470, 0
  %v5474 = vmul.f32 %v5391, %v5472
  %v5475 = vmul.f32 %v5392, %v5472
  %v5476 = vmul.f32 %v5393, %v5472
  %v5477 = vmul.f32 %v5394, %v5472
  %v5478 = vmul.f32 %v5395, %v5472
  %v5479 = vmul.f32 %v5396, %v5472
  %v5480 = vmul.f32 %v5397, %v5472
  %v5481 = vmul.f32 %v5398, %v5472
  %v5482 = vmul.f32 %v5399, %v5472
  %v5483 = vmul.f32 %v5400, %v5472
  %v5484 = vmul.f32 %v5401, %v5472
  %v5485 = vmul.f32 %v5402, %v5472
  %v5486 = vmul.f32 %v5403, %v5472
  %v5487 = vmul.f32 %v5404, %v5472
  %v5488 = vmul.f32 %v5405, %v5472
  %v5489 = vmul.f32 %v5406, %v5472
  %v5490 = vmul.f32 %v5407, %v5472
  %v5491 = vmul.f32 %v5408, %v5472
  %v5492 = vmul.f32 %v5409, %v5472
  %v5493 = vmul.f32 %v5410, %v5472
  %v5494 = vmul.f32 %v5411, %v5472
  %v5495 = vmul.f32 %v5412, %v5472
  %v5496 = vmul.f32 %v5413, %v5472
  %v5497 = vmul.f32 %v5414, %v5472
  %v5498 = vmul.f32 %v5415, %v5472
  %v5499 = vmul.f32 %v5416, %v5472
  %v5500 = vmul.f32 %v5417, %v5472
  %v5501 = vmul.f32 %v5418, %v5472
  %v5502 = vmul.f32 %v5419, %v5472
  %v5503 = vmul.f32 %v5420, %v5472
  %v5504 = vmul.f32 %v5421, %v5472
  %v5505 = vmul.f32 %v5422, %v5472
  %v5506 = vmul.f32 %v5423, %v5472
  %v5507 = vmul.f32 %v5424, %v5472
  %v5508 = vmul.f32 %v5425, %v5472
  %v5509 = vmul.f32 %v5426, %v5472
  %v5510 = vmul.f32 %v5427, %v5472
  %v5511 = vmul.f32 %v5428, %v5472
  %v5512 = vmul.f32 %v5429, %v5472
  %v5513 = vmul.f32 %v5430, %v5472
  %v5514 = vmul.f32 %v5431, %v5472
  %v5515 = vmul.f32 %v5432, %v5472
  %v5516 = vmul.f32 %v5433, %v5472
  %v5517 = vmul.f32 %v5434, %v5472
  %v5518 = vmul.f32 %v5435, %v5472
  %v5519 = vmul.f32 %v5436, %v5472
  %v5520 = vmul.f32 %v5437, %v5472
  %v5521 = vmul.f32 %v5438, %v5472
  %v5522 = vmul.f32 %v5439, %v5472
  %v5523 = vmul.f32 %v5440, %v5472
  %v5524 = vmul.f32 %v5441, %v5472
  %v5525 = vmul.f32 %v5442, %v5472
  %v5526 = vmul.f32 %v5443, %v5472
  %v5527 = vmul.f32 %v5444, %v5472
  %v5528 = vmul.f32 %v5445, %v5472
  %v5529 = vmul.f32 %v5446, %v5472
  %v5530 = vmul.f32 %v5447, %v5472
  %v5531 = vmul.f32 %v5448, %v5472
  %v5532 = vmul.f32 %v5449, %v5472
  %v5533 = vmul.f32 %v5450, %v5472
  %v5534 = vmul.f32 %v5451, %v5472
  %v5535 = vmul.f32 %v5452, %v5472
  %v5536 = vmul.f32 %v5453, %v5472
  %v5537 = vmul.f32 %v5454, %v5472
  %v5538 = vmul.f32 %v5455, %v5472
  %v5539 = vmul.f32 %v5456, %v5472
  %v5540 = vmul.f32 %v5457, %v5472
  %v5541 = vmul.f32 %v5458, %v5472
  %v5542 = vmul.f32 %v5459, %v5472
  %v5543 = vmul.f32 %v5460, %v5472
  %v5544 = vmul.f32 %v5461, %v5472
  %v5545 = vmul.f32 %v5462, %v5472
  %v5546 = vmul.f32 %v5463, %v5472
  %v5547 = vmul.f32 %v5464, %v5472
  %v5548 = vmul.f32 %v5465, %v5472
  %v5549 = vmul.f32 %v5466, %v5472
  %v5550 = vmul.f32 %v5467, %v5472
  %v5551 = vmul.f32 %v5468, %v5472
  %v5552 = vmul.f32 %v5469, %v5472
  %v5553 = vsel %vm4741, %v5474, 0.0
  %5554 = vadd.xlane.f32.xlu0 %v5553
  %v5555 = vpop.xlane.xlu0 %5554
  %v5556 = vsel %vm4741, %v5475, 0.0
  %5557 = vadd.xlane.f32.xlu0 %v5556
  %v5558 = vpop.xlane.xlu0 %5557
  %v5559 = vsel %vm4741, %v5476, 0.0
  %5560 = vadd.xlane.f32.xlu0 %v5559
  %v5561 = vpop.xlane.xlu0 %5560
  %v5562 = vsel %vm4741, %v5477, 0.0
  %5563 = vadd.xlane.f32.xlu0 %v5562
  %v5564 = vpop.xlane.xlu0 %5563
  %v5565 = vsel %vm4741, %v5478, 0.0
  %5566 = vadd.xlane.f32.xlu0 %v5565
  %v5567 = vpop.xlane.xlu0 %5566
  %v5568 = vsel %vm4741, %v5479, 0.0
  %5569 = vadd.xlane.f32.xlu0 %v5568
  %v5570 = vpop.xlane.xlu0 %5569
  %v5571 = vsel %vm4741, %v5480, 0.0
  %5572 = vadd.xlane.f32.xlu0 %v5571
  %v5573 = vpop.xlane.xlu0 %5572
  %v5574 = vsel %vm4741, %v5481, 0.0
  %5575 = vadd.xlane.f32.xlu0 %v5574
  %v5576 = vpop.xlane.xlu0 %5575
  %v5577 = vsel %vm4741, %v5482, 0.0
  %5578 = vadd.xlane.f32.xlu0 %v5577
  %v5579 = vpop.xlane.xlu0 %5578
  %v5580 = vsel %vm4741, %v5483, 0.0
  %5581 = vadd.xlane.f32.xlu0 %v5580
  %v5582 = vpop.xlane.xlu0 %5581
  %v5583 = vsel %vm4741, %v5484, 0.0
  %5584 = vadd.xlane.f32.xlu0 %v5583
  %v5585 = vpop.xlane.xlu0 %5584
  %v5586 = vsel %vm4741, %v5485, 0.0
  %5587 = vadd.xlane.f32.xlu0 %v5586
  %v5588 = vpop.xlane.xlu0 %5587
  %v5589 = vsel %vm4741, %v5486, 0.0
  %5590 = vadd.xlane.f32.xlu0 %v5589
  %v5591 = vpop.xlane.xlu0 %5590
  %v5592 = vsel %vm4741, %v5487, 0.0
  %5593 = vadd.xlane.f32.xlu0 %v5592
  %v5594 = vpop.xlane.xlu0 %5593
  %v5595 = vsel %vm4741, %v5488, 0.0
  %5596 = vadd.xlane.f32.xlu0 %v5595
  %v5597 = vpop.xlane.xlu0 %5596
  %v5598 = vsel %vm4741, %v5489, 0.0
  %5599 = vadd.xlane.f32.xlu0 %v5598
  %v5600 = vpop.xlane.xlu0 %5599
  %v5601 = vsel %vm4741, %v5490, 0.0
  %5602 = vadd.xlane.f32.xlu0 %v5601
  %v5603 = vpop.xlane.xlu0 %5602
  %v5604 = vsel %vm4741, %v5491, 0.0
  %5605 = vadd.xlane.f32.xlu0 %v5604
  %v5606 = vpop.xlane.xlu0 %5605
  %v5607 = vsel %vm4741, %v5492, 0.0
  %5608 = vadd.xlane.f32.xlu0 %v5607
  %v5609 = vpop.xlane.xlu0 %5608
  %v5610 = vsel %vm4741, %v5493, 0.0
  %5611 = vadd.xlane.f32.xlu0 %v5610
  %v5612 = vpop.xlane.xlu0 %5611
  %v5613 = vsel %vm4741, %v5494, 0.0
  %5614 = vadd.xlane.f32.xlu0 %v5613
  %v5615 = vpop.xlane.xlu0 %5614
  %v5616 = vsel %vm4741, %v5495, 0.0
  %5617 = vadd.xlane.f32.xlu0 %v5616
  %v5618 = vpop.xlane.xlu0 %5617
  %v5619 = vsel %vm4741, %v5496, 0.0
  %5620 = vadd.xlane.f32.xlu0 %v5619
  %v5621 = vpop.xlane.xlu0 %5620
  %v5622 = vsel %vm4741, %v5497, 0.0
  %5623 = vadd.xlane.f32.xlu0 %v5622
  %v5624 = vpop.xlane.xlu0 %5623
  %v5625 = vsel %vm4741, %v5498, 0.0
  %5626 = vadd.xlane.f32.xlu0 %v5625
  %v5627 = vpop.xlane.xlu0 %5626
  %v5628 = vsel %vm4741, %v5499, 0.0
  %5629 = vadd.xlane.f32.xlu0 %v5628
  %v5630 = vpop.xlane.xlu0 %5629
  %v5631 = vsel %vm4741, %v5500, 0.0
  %5632 = vadd.xlane.f32.xlu0 %v5631
  %v5633 = vpop.xlane.xlu0 %5632
  %v5634 = vsel %vm4741, %v5501, 0.0
  %5635 = vadd.xlane.f32.xlu0 %v5634
  %v5636 = vpop.xlane.xlu0 %5635
  %v5637 = vsel %vm4741, %v5502, 0.0
  %5638 = vadd.xlane.f32.xlu0 %v5637
  %v5639 = vpop.xlane.xlu0 %5638
  %v5640 = vsel %vm4741, %v5503, 0.0
  %5641 = vadd.xlane.f32.xlu0 %v5640
  %v5642 = vpop.xlane.xlu0 %5641
  %v5643 = vsel %vm4741, %v5504, 0.0
  %5644 = vadd.xlane.f32.xlu0 %v5643
  %v5645 = vpop.xlane.xlu0 %5644
  %v5646 = vsel %vm4741, %v5505, 0.0
  %5647 = vadd.xlane.f32.xlu0 %v5646
  %v5648 = vpop.xlane.xlu0 %5647
  %v5649 = vsel %vm4741, %v5506, 0.0
  %5650 = vadd.xlane.f32.xlu0 %v5649
  %v5651 = vpop.xlane.xlu0 %5650
  %v5652 = vsel %vm4741, %v5507, 0.0
  %5653 = vadd.xlane.f32.xlu0 %v5652
  %v5654 = vpop.xlane.xlu0 %5653
  %v5655 = vsel %vm4741, %v5508, 0.0
  %5656 = vadd.xlane.f32.xlu0 %v5655
  %v5657 = vpop.xlane.xlu0 %5656
  %v5658 = vsel %vm4741, %v5509, 0.0
  %5659 = vadd.xlane.f32.xlu0 %v5658
  %v5660 = vpop.xlane.xlu0 %5659
  %v5661 = vsel %vm4741, %v5510, 0.0
  %5662 = vadd.xlane.f32.xlu0 %v5661
  %v5663 = vpop.xlane.xlu0 %5662
  %v5664 = vsel %vm4741, %v5511, 0.0
  %5665 = vadd.xlane.f32.xlu0 %v5664
  %v5666 = vpop.xlane.xlu0 %5665
  %v5667 = vsel %vm4741, %v5512, 0.0
  %5668 = vadd.xlane.f32.xlu0 %v5667
  %v5669 = vpop.xlane.xlu0 %5668
  %v5670 = vsel %vm4741, %v5513, 0.0
  %5671 = vadd.xlane.f32.xlu0 %v5670
  %v5672 = vpop.xlane.xlu0 %5671
  %v5673 = vsel %vm4741, %v5514, 0.0
  %5674 = vadd.xlane.f32.xlu0 %v5673
  %v5675 = vpop.xlane.xlu0 %5674
  %v5676 = vsel %vm4741, %v5515, 0.0
  %5677 = vadd.xlane.f32.xlu0 %v5676
  %v5678 = vpop.xlane.xlu0 %5677
  %v5679 = vsel %vm4741, %v5516, 0.0
  %5680 = vadd.xlane.f32.xlu0 %v5679
  %v5681 = vpop.xlane.xlu0 %5680
  %v5682 = vsel %vm4741, %v5517, 0.0
  %5683 = vadd.xlane.f32.xlu0 %v5682
  %v5684 = vpop.xlane.xlu0 %5683
  %v5685 = vsel %vm4741, %v5518, 0.0
  %5686 = vadd.xlane.f32.xlu0 %v5685
  %v5687 = vpop.xlane.xlu0 %5686
  %v5688 = vsel %vm4741, %v5519, 0.0
  %5689 = vadd.xlane.f32.xlu0 %v5688
  %v5690 = vpop.xlane.xlu0 %5689
  %v5691 = vsel %vm4741, %v5520, 0.0
  %5692 = vadd.xlane.f32.xlu0 %v5691
  %v5693 = vpop.xlane.xlu0 %5692
  %v5694 = vsel %vm4741, %v5521, 0.0
  %5695 = vadd.xlane.f32.xlu0 %v5694
  %v5696 = vpop.xlane.xlu0 %5695
  %v5697 = vsel %vm4741, %v5522, 0.0
  %5698 = vadd.xlane.f32.xlu0 %v5697
  %v5699 = vpop.xlane.xlu0 %5698
  %v5700 = vsel %vm4741, %v5523, 0.0
  %5701 = vadd.xlane.f32.xlu0 %v5700
  %v5702 = vpop.xlane.xlu0 %5701
  %v5703 = vsel %vm4741, %v5524, 0.0
  %5704 = vadd.xlane.f32.xlu0 %v5703
  %v5705 = vpop.xlane.xlu0 %5704
  %v5706 = vsel %vm4741, %v5525, 0.0
  %5707 = vadd.xlane.f32.xlu0 %v5706
  %v5708 = vpop.xlane.xlu0 %5707
  %v5709 = vsel %vm4741, %v5526, 0.0
  %5710 = vadd.xlane.f32.xlu0 %v5709
  %v5711 = vpop.xlane.xlu0 %5710
  %v5712 = vsel %vm4741, %v5527, 0.0
  %5713 = vadd.xlane.f32.xlu0 %v5712
  %v5714 = vpop.xlane.xlu0 %5713
  %v5715 = vsel %vm4741, %v5528, 0.0
  %5716 = vadd.xlane.f32.xlu0 %v5715
  %v5717 = vpop.xlane.xlu0 %5716
  %v5718 = vsel %vm4741, %v5529, 0.0
  %5719 = vadd.xlane.f32.xlu0 %v5718
  %v5720 = vpop.xlane.xlu0 %5719
  %v5721 = vsel %vm4741, %v5530, 0.0
  %5722 = vadd.xlane.f32.xlu0 %v5721
  %v5723 = vpop.xlane.xlu0 %5722
  %v5724 = vsel %vm4741, %v5531, 0.0
  %5725 = vadd.xlane.f32.xlu0 %v5724
  %v5726 = vpop.xlane.xlu0 %5725
  %v5727 = vsel %vm4741, %v5532, 0.0
  %5728 = vadd.xlane.f32.xlu0 %v5727
  %v5729 = vpop.xlane.xlu0 %5728
  %v5730 = vsel %vm4741, %v5533, 0.0
  %5731 = vadd.xlane.f32.xlu0 %v5730
  %v5732 = vpop.xlane.xlu0 %5731
  %v5733 = vsel %vm4741, %v5534, 0.0
  %5734 = vadd.xlane.f32.xlu0 %v5733
  %v5735 = vpop.xlane.xlu0 %5734
  %v5736 = vsel %vm4741, %v5535, 0.0
  %5737 = vadd.xlane.f32.xlu0 %v5736
  %v5738 = vpop.xlane.xlu0 %5737
  %v5739 = vsel %vm4741, %v5536, 0.0
  %5740 = vadd.xlane.f32.xlu0 %v5739
  %v5741 = vpop.xlane.xlu0 %5740
  %v5742 = vsel %vm4741, %v5537, 0.0
  %5743 = vadd.xlane.f32.xlu0 %v5742
  %v5744 = vpop.xlane.xlu0 %5743
  %v5745 = vsel %vm4741, %v5538, 0.0
  %5746 = vadd.xlane.f32.xlu0 %v5745
  %v5747 = vpop.xlane.xlu0 %5746
  %v5748 = vsel %vm4741, %v5539, 0.0
  %5749 = vadd.xlane.f32.xlu0 %v5748
  %v5750 = vpop.xlane.xlu0 %5749
  %v5751 = vsel %vm4741, %v5540, 0.0
  %5752 = vadd.xlane.f32.xlu0 %v5751
  %v5753 = vpop.xlane.xlu0 %5752
  %v5754 = vsel %vm4741, %v5541, 0.0
  %5755 = vadd.xlane.f32.xlu0 %v5754
  %v5756 = vpop.xlane.xlu0 %5755
  %v5757 = vsel %vm4741, %v5542, 0.0
  %5758 = vadd.xlane.f32.xlu0 %v5757
  %v5759 = vpop.xlane.xlu0 %5758
  %v5760 = vsel %vm4741, %v5543, 0.0
  %5761 = vadd.xlane.f32.xlu0 %v5760
  %v5762 = vpop.xlane.xlu0 %5761
  %v5763 = vsel %vm4741, %v5544, 0.0
  %5764 = vadd.xlane.f32.xlu0 %v5763
  %v5765 = vpop.xlane.xlu0 %5764
  %v5766 = vsel %vm4741, %v5545, 0.0
  %5767 = vadd.xlane.f32.xlu0 %v5766
  %v5768 = vpop.xlane.xlu0 %5767
  %v5769 = vsel %vm4741, %v5546, 0.0
  %5770 = vadd.xlane.f32.xlu0 %v5769
  %v5771 = vpop.xlane.xlu0 %5770
  %v5772 = vsel %vm4741, %v5547, 0.0
  %5773 = vadd.xlane.f32.xlu0 %v5772
  %v5774 = vpop.xlane.xlu0 %5773
  %v5775 = vsel %vm4741, %v5548, 0.0
  %5776 = vadd.xlane.f32.xlu0 %v5775
  %v5777 = vpop.xlane.xlu0 %5776
  %v5778 = vsel %vm4741, %v5549, 0.0
  %5779 = vadd.xlane.f32.xlu0 %v5778
  %v5780 = vpop.xlane.xlu0 %5779
  %v5781 = vsel %vm4741, %v5550, 0.0
  %5782 = vadd.xlane.f32.xlu0 %v5781
  %v5783 = vpop.xlane.xlu0 %5782
  %v5784 = vsel %vm4741, %v5551, 0.0
  %5785 = vadd.xlane.f32.xlu0 %v5784
  %v5786 = vpop.xlane.xlu0 %5785
  %vm5787 = vcmask 122880
  %v5788 = vsel %vm5787, %v5552, 0.0
  %5789 = vadd.xlane.f32.xlu0 %v5788
  %v5790 = vpop.xlane.xlu0 %5789
  %v5791 = vadd.s32 %v266, 128
  %v5792 = vadd.s32 %v266, 256
  %v5793 = vadd.s32 %v266, 384
  %v5794 = vadd.s32 %v266, 512
  %v5795 = vmul.u32 %v186, 25
  %v5796 = vmul.u32 %v187, 25
  %v5797 = vmul.u32 %v188, 25
  %v5798 = vmul.u32 %v189, 25
  %vm5799 = vcmp.ge.s32.totalorder %v266, %v5795
  %vm5800 = vcmp.ge.s32.totalorder %v5791, %v5795
  %vm5801 = vcmp.ge.s32.totalorder %v5792, %v5795
  %vm5802 = vcmp.ge.s32.totalorder %v5793, %v5795
  %vm5803 = vcmp.ge.s32.totalorder %v5794, %v5795
  %vm5804 = vcmp.ge.s32.totalorder %v266, %v5796
  %vm5805 = vcmp.ge.s32.totalorder %v5791, %v5796
  %vm5806 = vcmp.ge.s32.totalorder %v5792, %v5796
  %vm5807 = vcmp.ge.s32.totalorder %v5793, %v5796
  %vm5808 = vcmp.ge.s32.totalorder %v5794, %v5796
  %vm5809 = vcmp.ge.s32.totalorder %v266, %v5797
  %vm5810 = vcmp.ge.s32.totalorder %v5791, %v5797
  %vm5811 = vcmp.ge.s32.totalorder %v5792, %v5797
  %vm5812 = vcmp.ge.s32.totalorder %v5793, %v5797
  %vm5813 = vcmp.ge.s32.totalorder %v5794, %v5797
  %vm5814 = vcmp.ge.s32.totalorder %v266, %v5798
  %vm5815 = vcmp.ge.s32.totalorder %v5791, %v5798
  %vm5816 = vcmp.ge.s32.totalorder %v5792, %v5798
  %vm5817 = vcmp.ge.s32.totalorder %v5793, %v5798
  %vm5818 = vcmp.ge.s32.totalorder %v5794, %v5798
  %v5819 = vadd.s32 %v5795, 25
  %v5820 = vadd.s32 %v5796, 25
  %v5821 = vadd.s32 %v5797, 25
  %v5822 = vadd.s32 %v5798, 25
  %vm5823 = vcmp.lt.s32.totalorder %v266, %v5819
  %vm5824 = vcmp.lt.s32.totalorder %v5791, %v5819
  %vm5825 = vcmp.lt.s32.totalorder %v5792, %v5819
  %vm5826 = vcmp.lt.s32.totalorder %v5793, %v5819
  %vm5827 = vcmp.lt.s32.totalorder %v5794, %v5819
  %vm5828 = vcmp.lt.s32.totalorder %v266, %v5820
  %vm5829 = vcmp.lt.s32.totalorder %v5791, %v5820
  %vm5830 = vcmp.lt.s32.totalorder %v5792, %v5820
  %vm5831 = vcmp.lt.s32.totalorder %v5793, %v5820
  %vm5832 = vcmp.lt.s32.totalorder %v5794, %v5820
  %vm5833 = vcmp.lt.s32.totalorder %v266, %v5821
  %vm5834 = vcmp.lt.s32.totalorder %v5791, %v5821
  %vm5835 = vcmp.lt.s32.totalorder %v5792, %v5821
  %vm5836 = vcmp.lt.s32.totalorder %v5793, %v5821
  %vm5837 = vcmp.lt.s32.totalorder %v5794, %v5821
  %vm5838 = vcmp.lt.s32.totalorder %v266, %v5822
  %vm5839 = vcmp.lt.s32.totalorder %v5791, %v5822
  %vm5840 = vcmp.lt.s32.totalorder %v5792, %v5822
  %vm5841 = vcmp.lt.s32.totalorder %v5793, %v5822
  %vm5842 = vcmp.lt.s32.totalorder %v5794, %v5822
  %vm5843 = vmand %vm5799, %vm5823
  %vm5844 = vmand %vm5800, %vm5824
  %vm5845 = vmand %vm5801, %vm5825
  %vm5846 = vmand %vm5802, %vm5826
  %vm5847 = vmand %vm5803, %vm5827
  %vm5848 = vmand %vm5804, %vm5828
  %vm5849 = vmand %vm5805, %vm5829
  %vm5850 = vmand %vm5806, %vm5830
  %vm5851 = vmand %vm5807, %vm5831
  %vm5852 = vmand %vm5808, %vm5832
  %vm5853 = vmand %vm5809, %vm5833
  %vm5854 = vmand %vm5810, %vm5834
  %vm5855 = vmand %vm5811, %vm5835
  %vm5856 = vmand %vm5812, %vm5836
  %vm5857 = vmand %vm5813, %vm5837
  %vm5858 = vmand %vm5814, %vm5838
  %vm5859 = vmand %vm5815, %vm5839
  %vm5860 = vmand %vm5816, %vm5840
  %vm5861 = vmand %vm5817, %vm5841
  %vm5862 = vmand %vm5818, %vm5842
  %v5863 = vsel %vm5843, 1, 0
  %v5864 = vsel %vm5844, 1, 0
  %v5865 = vsel %vm5845, 1, 0
  %v5866 = vsel %vm5846, 1, 0
  %v5867 = vsel %vm5847, 1, 0
  %v5868 = vsel %vm5848, 1, 0
  %v5869 = vsel %vm5849, 1, 0
  %v5870 = vsel %vm5850, 1, 0
  %v5871 = vsel %vm5851, 1, 0
  %v5872 = vsel %vm5852, 1, 0
  %v5873 = vsel %vm5853, 1, 0
  %v5874 = vsel %vm5854, 1, 0
  %v5875 = vsel %vm5855, 1, 0
  %v5876 = vsel %vm5856, 1, 0
  %v5877 = vsel %vm5857, 1, 0
  %v5878 = vsel %vm5858, 1, 0
  %v5879 = vsel %vm5859, 1, 0
  %v5880 = vsel %vm5860, 1, 0
  %v5881 = vsel %vm5861, 1, 0
  %v5882 = vsel %vm5862, 1, 0
  %v5883 = vcvt.s32.f32 %v5863
  %v5884 = vcvt.s32.f32 %v5864
  %v5885 = vcvt.s32.f32 %v5865
  %v5886 = vcvt.s32.f32 %v5866
  %v5887 = vcvt.s32.f32 %v5867
  %v5888 = vcvt.s32.f32 %v5868
  %v5889 = vcvt.s32.f32 %v5869
  %v5890 = vcvt.s32.f32 %v5870
  %v5891 = vcvt.s32.f32 %v5871
  %v5892 = vcvt.s32.f32 %v5872
  %v5893 = vcvt.s32.f32 %v5873
  %v5894 = vcvt.s32.f32 %v5874
  %v5895 = vcvt.s32.f32 %v5875
  %v5896 = vcvt.s32.f32 %v5876
  %v5897 = vcvt.s32.f32 %v5877
  %v5898 = vcvt.s32.f32 %v5878
  %v5899 = vcvt.s32.f32 %v5879
  %v5900 = vcvt.s32.f32 %v5880
  %v5901 = vcvt.s32.f32 %v5881
  %v5902 = vcvt.s32.f32 %v5882
  %v5903 = vmul.f32 %v5555, %v1378
  %v5904 = vmul.f32 %v5558, %v1379
  %v5905 = vmul.f32 %v5561, %v1380
  %v5906 = vmul.f32 %v5564, %v1381
  %v5907 = vmul.f32 %v5567, %v1382
  %v5908 = vmul.f32 %v5570, %v1383
  %v5909 = vmul.f32 %v5573, %v1384
  %v5910 = vmul.f32 %v5576, %v1385
  %v5911 = vmul.f32 %v5579, %v1386
  %v5912 = vmul.f32 %v5582, %v1387
  %v5913 = vmul.f32 %v5585, %v1388
  %v5914 = vmul.f32 %v5588, %v1389
  %v5915 = vmul.f32 %v5591, %v1390
  %v5916 = vmul.f32 %v5594, %v1391
  %v5917 = vmul.f32 %v5597, %v1392
  %v5918 = vmul.f32 %v5600, %v1393
  %v5919 = vmul.f32 %v5603, %v1394
  %v5920 = vmul.f32 %v5606, %v1395
  %v5921 = vmul.f32 %v5609, %v1396
  %v5922 = vmul.f32 %v5612, %v1397
  %v5923 = vmul.f32 %v5615, %v1398
  %v5924 = vmul.f32 %v5618, %v1399
  %v5925 = vmul.f32 %v5621, %v1400
  %v5926 = vmul.f32 %v5624, %v1401
  %v5927 = vmul.f32 %v5627, %v1402
  %v5928 = vmul.f32 %v5630, %v1403
  %v5929 = vmul.f32 %v5633, %v1404
  %v5930 = vmul.f32 %v5636, %v1405
  %v5931 = vmul.f32 %v5639, %v1406
  %v5932 = vmul.f32 %v5642, %v1407
  %v5933 = vmul.f32 %v5645, %v1408
  %v5934 = vmul.f32 %v5648, %v1409
  %v5935 = vmul.f32 %v5651, %v1410
  %v5936 = vmul.f32 %v5654, %v1411
  %v5937 = vmul.f32 %v5657, %v1412
  %v5938 = vmul.f32 %v5660, %v1413
  %v5939 = vmul.f32 %v5663, %v1414
  %v5940 = vmul.f32 %v5666, %v1415
  %v5941 = vmul.f32 %v5669, %v1416
  %v5942 = vmul.f32 %v5672, %v1417
  %v5943 = vmul.f32 %v5675, %v1418
  %v5944 = vmul.f32 %v5678, %v1419
  %v5945 = vmul.f32 %v5681, %v1420
  %v5946 = vmul.f32 %v5684, %v1421
  %v5947 = vmul.f32 %v5687, %v1422
  %v5948 = vmul.f32 %v5690, %v1423
  %v5949 = vmul.f32 %v5693, %v1424
  %v5950 = vmul.f32 %v5696, %v1425
  %v5951 = vmul.f32 %v5699, %v1426
  %v5952 = vmul.f32 %v5702, %v1427
  %v5953 = vmul.f32 %v5705, %v1428
  %v5954 = vmul.f32 %v5708, %v1429
  %v5955 = vmul.f32 %v5711, %v1430
  %v5956 = vmul.f32 %v5714, %v1431
  %v5957 = vmul.f32 %v5717, %v1432
  %v5958 = vmul.f32 %v5720, %v1433
  %v5959 = vmul.f32 %v5723, %v1434
  %v5960 = vmul.f32 %v5726, %v1435
  %v5961 = vmul.f32 %v5729, %v1436
  %v5962 = vmul.f32 %v5732, %v1437
  %v5963 = vmul.f32 %v5735, %v1438
  %v5964 = vmul.f32 %v5738, %v1439
  %v5965 = vmul.f32 %v5741, %v1440
  %v5966 = vmul.f32 %v5744, %v1441
  %v5967 = vmul.f32 %v5747, %v1442
  %v5968 = vmul.f32 %v5750, %v1443
  %v5969 = vmul.f32 %v5753, %v1444
  %v5970 = vmul.f32 %v5756, %v1445
  %v5971 = vmul.f32 %v5759, %v1446
  %v5972 = vmul.f32 %v5762, %v1447
  %v5973 = vmul.f32 %v5765, %v1448
  %v5974 = vmul.f32 %v5768, %v1449
  %v5975 = vmul.f32 %v5771, %v1450
  %v5976 = vmul.f32 %v5774, %v1451
  %v5977 = vmul.f32 %v5777, %v1452
  %v5978 = vmul.f32 %v5780, %v1453
  %v5979 = vmul.f32 %v5783, %v1454
  %v5980 = vmul.f32 %v5786, %v1455
  %v5981 = vmul.f32 %v5790, %v1456
  %v5982 = vld [vmem:[#allocation2] sm:$0x1]
  %v5984 = vperm.slane %v5982, 0
  %5985 = vset.pattern.permute.xlu0 0
  %5986 = vperm.xlu0 %5985, %v5984
  %v5987 = vpop.permute.xlu0 %5986
  %vm5989 = vcmask 924672
  %v5991 = vsel %vm5989, %v5887, 0
  %v5994 = vsel %vm5989, %v5892, 0
  %v5997 = vsel %vm5989, %v5897, 0
  %v6000 = vsel %vm5989, %v5902, 0
  %v6003 = vsel %vm1694, %v5981, 0
  %6005 = vmatpush.msra.mxu0 %v5918
  %6006 = vmatpush.msra.mxu0 %v5917
  %6007 = vmatpush.msra.mxu0 %v5916
  %6008 = vmatpush.msra.mxu0 %v5915
  %6009 = vmatpush.msra.mxu0 %v5914
  %6010 = vmatpush.msra.mxu0 %v5913
  %6011 = vmatpush.msra.mxu0 %v5912
  %6012 = vmatpush.msra.mxu0 %v5911
  %6013 = vmatpush.msra.mxu0 %v5910
  %6014 = vmatpush.msra.mxu0 %v5909
  %6015 = vmatpush.msra.mxu0 %v5908
  %6016 = vmatpush.msra.mxu0 %v5907
  %6017 = vmatpush.msra.mxu0 %v5906
  %6018 = vmatpush.msra.mxu0 %v5905
  %6019 = vmatpush.msra.mxu0 %v5904
  %6020 = vmatpush.msra.mxu0 %v5903
  %6021 = vmatmul.f32.gmra.mxu0 %v5883
  %v6022 = vpop.f32.mrf.mxu0
  %v6023 = vadd.f32 %v5987, %v6022
  %6024 = vmatmul.f32.gmra.mxu0 %v5888
  %v6025 = vpop.f32.mrf.mxu0
  %v6026 = vadd.f32 %v5987, %v6025
  %6027 = vmatmul.f32.gmra.mxu0 %v5893
  %v6028 = vpop.f32.mrf.mxu0
  %v6029 = vadd.f32 %v5987, %v6028
  %6030 = vmatmul.f32.gmra.mxu0 %v5898
  %v6031 = vpop.f32.mrf.mxu0
  %v6032 = vadd.f32 %v5987, %v6031
  %6033 = vdwg.mxu0
  %6034 = vmatpush.msra.mxu0 %v5934
  %6035 = vmatpush.msra.mxu0 %v5933
  %6036 = vmatpush.msra.mxu0 %v5932
  %6037 = vmatpush.msra.mxu0 %v5931
  %6038 = vmatpush.msra.mxu0 %v5930
  %6039 = vmatpush.msra.mxu0 %v5929
  %6040 = vmatpush.msra.mxu0 %v5928
  %6041 = vmatpush.msra.mxu0 %v5927
  %6042 = vmatpush.msra.mxu0 %v5926
  %6043 = vmatpush.msra.mxu0 %v5925
  %6044 = vmatpush.msra.mxu0 %v5924
  %6045 = vmatpush.msra.mxu0 %v5923
  %6046 = vmatpush.msra.mxu0 %v5922
  %6047 = vmatpush.msra.mxu0 %v5921
  %6048 = vmatpush.msra.mxu0 %v5920
  %6049 = vmatpush.msra.mxu0 %v5919
  %6050 = vmatmul.f32.gmra.mxu0 %v5884
  %v6051 = vpop.f32.mrf.mxu0
  %v6052 = vadd.f32 %v6023, %v6051
  %6053 = vmatmul.f32.gmra.mxu0 %v5889
  %v6054 = vpop.f32.mrf.mxu0
  %v6055 = vadd.f32 %v6026, %v6054
  %6056 = vmatmul.f32.gmra.mxu0 %v5894
  %v6057 = vpop.f32.mrf.mxu0
  %v6058 = vadd.f32 %v6029, %v6057
  %6059 = vmatmul.f32.gmra.mxu0 %v5899
  %v6060 = vpop.f32.mrf.mxu0
  %v6061 = vadd.f32 %v6032, %v6060
  %6062 = vdwg.mxu0
  %6063 = vmatpush.msra.mxu0 %v5950
  %6064 = vmatpush.msra.mxu0 %v5949
  %6065 = vmatpush.msra.mxu0 %v5948
  %6066 = vmatpush.msra.mxu0 %v5947
  %6067 = vmatpush.msra.mxu0 %v5946
  %6068 = vmatpush.msra.mxu0 %v5945
  %6069 = vmatpush.msra.mxu0 %v5944
  %6070 = vmatpush.msra.mxu0 %v5943
  %6071 = vmatpush.msra.mxu0 %v5942
  %6072 = vmatpush.msra.mxu0 %v5941
  %6073 = vmatpush.msra.mxu0 %v5940
  %6074 = vmatpush.msra.mxu0 %v5939
  %6075 = vmatpush.msra.mxu0 %v5938
  %6076 = vmatpush.msra.mxu0 %v5937
  %6077 = vmatpush.msra.mxu0 %v5936
  %6078 = vmatpush.msra.mxu0 %v5935
  %6079 = vmatmul.f32.gmra.mxu0 %v5885
  %v6080 = vpop.f32.mrf.mxu0
  %v6081 = vadd.f32 %v6052, %v6080
  %6082 = vmatmul.f32.gmra.mxu0 %v5890
  %v6083 = vpop.f32.mrf.mxu0
  %v6084 = vadd.f32 %v6055, %v6083
  %6085 = vmatmul.f32.gmra.mxu0 %v5895
  %v6086 = vpop.f32.mrf.mxu0
  %v6087 = vadd.f32 %v6058, %v6086
  %6088 = vmatmul.f32.gmra.mxu0 %v5900
  %v6089 = vpop.f32.mrf.mxu0
  %v6090 = vadd.f32 %v6061, %v6089
  %6091 = vdwg.mxu0
  %6092 = vmatpush.msra.mxu0 %v5966
  %6093 = vmatpush.msra.mxu0 %v5965
  %6094 = vmatpush.msra.mxu0 %v5964
  %6095 = vmatpush.msra.mxu0 %v5963
  %6096 = vmatpush.msra.mxu0 %v5962
  %6097 = vmatpush.msra.mxu0 %v5961
  %6098 = vmatpush.msra.mxu0 %v5960
  %6099 = vmatpush.msra.mxu0 %v5959
  %6100 = vmatpush.msra.mxu0 %v5958
  %6101 = vmatpush.msra.mxu0 %v5957
  %6102 = vmatpush.msra.mxu0 %v5956
  %6103 = vmatpush.msra.mxu0 %v5955
  %6104 = vmatpush.msra.mxu0 %v5954
  %6105 = vmatpush.msra.mxu0 %v5953
  %6106 = vmatpush.msra.mxu0 %v5952
  %6107 = vmatpush.msra.mxu0 %v5951
  %6108 = vmatmul.f32.gmra.mxu0 %v5886
  %v6109 = vpop.f32.mrf.mxu0
  %v6110 = vadd.f32 %v6081, %v6109
  %6111 = vmatmul.f32.gmra.mxu0 %v5891
  %v6112 = vpop.f32.mrf.mxu0
  %v6113 = vadd.f32 %v6084, %v6112
  %6114 = vmatmul.f32.gmra.mxu0 %v5896
  %v6115 = vpop.f32.mrf.mxu0
  %v6116 = vadd.f32 %v6087, %v6115
  %6117 = vmatmul.f32.gmra.mxu0 %v5901
  %v6118 = vpop.f32.mrf.mxu0
  %v6119 = vadd.f32 %v6090, %v6118
  %6120 = vdwg.mxu0
  %6121 = vmatpush.msra.mxu0 0.0
  %6122 = vmatpush.msra.mxu0 %v6003
  %6123 = vmatpush.msra.mxu0 %v5980
  %6124 = vmatpush.msra.mxu0 %v5979
  %6125 = vmatpush.msra.mxu0 %v5978
  %6126 = vmatpush.msra.mxu0 %v5977
  %6127 = vmatpush.msra.mxu0 %v5976
  %6128 = vmatpush.msra.mxu0 %v5975
  %6129 = vmatpush.msra.mxu0 %v5974
  %6130 = vmatpush.msra.mxu0 %v5973
  %6131 = vmatpush.msra.mxu0 %v5972
  %6132 = vmatpush.msra.mxu0 %v5971
  %6133 = vmatpush.msra.mxu0 %v5970
  %6134 = vmatpush.msra.mxu0 %v5969
  %6135 = vmatpush.msra.mxu0 %v5968
  %6136 = vmatpush.msra.mxu0 %v5967
  %6137 = vmatmul.f32.gmra.mxu0 %v5991
  %v6138 = vpop.f32.mrf.mxu0
  %v6139 = vadd.f32 %v6110, %v6138
  %6140 = vmatmul.f32.gmra.mxu0 %v5994
  %v6141 = vpop.f32.mrf.mxu0
  %v6142 = vadd.f32 %v6113, %v6141
  %6143 = vmatmul.f32.gmra.mxu0 %v5997
  %v6144 = vpop.f32.mrf.mxu0
  %v6145 = vadd.f32 %v6116, %v6144
  %6146 = vmatmul.f32.gmra.mxu0 %v6000
  %v6147 = vpop.f32.mrf.mxu0
  %v6148 = vadd.f32 %v6119, %v6147
  %6149 = vdwg.mxu0
  %vm6150 = vcmp.eq.s32.totalorder %v186, %v266
  %vm6151 = vcmp.eq.s32.totalorder %v187, %v266
  %vm6152 = vcmp.eq.s32.totalorder %v188, %v266
  %vm6153 = vcmp.eq.s32.totalorder %v189, %v266
  %v6154 = vsel %vm6150, 1, 0
  %v6155 = vsel %vm6151, 1, 0
  %v6156 = vsel %vm6152, 1, 0
  %v6157 = vsel %vm6153, 1, 0
  %v6158 = vcvt.s32.f32 %v6154
  %v6159 = vcvt.s32.f32 %v6155
  %v6160 = vcvt.s32.f32 %v6156
  %v6161 = vcvt.s32.f32 %v6157
  %v6162 = vsub.f32 1.0, %v6158
  %v6163 = vsub.f32 1.0, %v6159
  %v6164 = vsub.f32 1.0, %v6160
  %v6165 = vsub.f32 1.0, %v6161
  %v6166 = vmul.f32 %v6139, %v6162
  %v6167 = vmul.f32 %v6142, %v6163
  %v6168 = vmul.f32 %v6145, %v6164
  %v6169 = vmul.f32 %v6148, %v6165
  %v6170 = vsel %vm823, %v6166, -inf
  %6171 = vmax.xlane.f32.xlu0 %v6170
  %v6172 = vpop.xlane.xlu0 %6171
  %v6173 = vsel %vm823, %v6167, -inf
  %6174 = vmax.xlane.f32.xlu0 %v6173
  %v6175 = vpop.xlane.xlu0 %6174
  %v6176 = vsel %vm823, %v6168, -inf
  %6177 = vmax.xlane.f32.xlu0 %v6176
  %v6178 = vpop.xlane.xlu0 %6177
  %v6179 = vsel %vm1058, %v6169, -inf
  %6180 = vmax.xlane.f32.xlu0 %v6179
  %v6181 = vpop.xlane.xlu0 %6180
  %v6182 = vsub.f32 %v6166, %v6172
  %v6183 = vsub.f32 %v6167, %v6175
  %v6184 = vsub.f32 %v6168, %v6178
  %v6185 = vsub.f32 %v6169, %v6181
  %v6186 = vmul.f32 %v6182, 1.442695
  %v6187 = vpow.pop %v6186
  %v6188 = vmul.f32 %v6183, 1.442695
  %v6189 = vpow.pop %v6188
  %v6190 = vmul.f32 %v6184, 1.442695
  %v6191 = vpow.pop %v6190
  %v6192 = vmul.f32 %v6185, 1.442695
  %v6193 = vpow.pop %v6192
  %v6194 = vsel %vm823, %v6187, 0.0
  %6195 = vadd.xlane.f32.xlu0 %v6194
  %v6196 = vpop.xlane.xlu0 %6195
  %v6197 = vsel %vm823, %v6189, 0.0
  %6198 = vadd.xlane.f32.xlu0 %v6197
  %v6199 = vpop.xlane.xlu0 %6198
  %v6200 = vsel %vm823, %v6191, 0.0
  %6201 = vadd.xlane.f32.xlu0 %v6200
  %v6202 = vpop.xlane.xlu0 %6201
  %v6203 = vsel %vm1058, %v6193, 0.0
  %6204 = vadd.xlane.f32.xlu0 %v6203
  %v6205 = vpop.xlane.xlu0 %6204
  %v6206 = vrcp.pop %v6196
  %v6207 = vmul.f32 %v6196, %v6206
  %v6208 = vsub.f32 1.0, %v6207
  %v6209 = vmul.f32 %v6206, %v6208
  %v6210 = vadd.f32 %v6206, %v6209
  %vm6211 = vweird.f32 %v6196
  %vm6212 = vweird.f32 %v6206
  %vm6213 = vmor %vm6211, %vm6212
  %v6214 = vsel %vm6213, %v6206, %v6210
  %v6215 = vand.u32 2147483647, %v6196
  %vm6216 = vcmp.eq.f32.partialorder %v6215, 8.507059e+37
  %v6217 = vand.u32 %v6196, 2147483648
  %v6218 = vor.u32 1.1754944e-38, %v6217
  %v6219 = vsel %vm6216, %v6218, %v6214
  %v6220 = vmul.f32 %v6187, %v6219
  %v6221 = vrcp.pop %v6199
  %v6222 = vmul.f32 %v6199, %v6221
  %v6223 = vsub.f32 1.0, %v6222
  %v6224 = vmul.f32 %v6221, %v6223
  %v6225 = vadd.f32 %v6221, %v6224
  %vm6226 = vweird.f32 %v6199
  %vm6227 = vweird.f32 %v6221
  %vm6228 = vmor %vm6226, %vm6227
  %v6229 = vsel %vm6228, %v6221, %v6225
  %v6230 = vand.u32 2147483647, %v6199
  %vm6231 = vcmp.eq.f32.partialorder %v6230, 8.507059e+37
  %v6232 = vand.u32 %v6199, 2147483648
  %v6233 = vor.u32 1.1754944e-38, %v6232
  %v6234 = vsel %vm6231, %v6233, %v6229
  %v6235 = vmul.f32 %v6189, %v6234
  %v6236 = vrcp.pop %v6202
  %v6237 = vmul.f32 %v6202, %v6236
  %v6238 = vsub.f32 1.0, %v6237
  %v6239 = vmul.f32 %v6236, %v6238
  %v6240 = vadd.f32 %v6236, %v6239
  %vm6241 = vweird.f32 %v6202
  %vm6242 = vweird.f32 %v6236
  %vm6243 = vmor %vm6241, %vm6242
  %v6244 = vsel %vm6243, %v6236, %v6240
  %v6245 = vand.u32 2147483647, %v6202
  %vm6246 = vcmp.eq.f32.partialorder %v6245, 8.507059e+37
  %v6247 = vand.u32 %v6202, 2147483648
  %v6248 = vor.u32 1.1754944e-38, %v6247
  %v6249 = vsel %vm6246, %v6248, %v6244
  %v6250 = vmul.f32 %v6191, %v6249
  %v6251 = vrcp.pop %v6205
  %v6252 = vmul.f32 %v6205, %v6251
  %v6253 = vsub.f32 1.0, %v6252
  %v6254 = vmul.f32 %v6251, %v6253
  %v6255 = vadd.f32 %v6251, %v6254
  %vm6256 = vweird.f32 %v6205
  %vm6257 = vweird.f32 %v6251
  %vm6258 = vmor %vm6256, %vm6257
  %v6259 = vsel %vm6258, %v6251, %v6255
  %v6260 = vand.u32 2147483647, %v6205
  %vm6261 = vcmp.eq.f32.partialorder %v6260, 8.507059e+37
  %v6262 = vand.u32 %v6205, 2147483648
  %v6263 = vor.u32 1.1754944e-38, %v6262
  %v6264 = vsel %vm6261, %v6263, %v6259
  %v6265 = vmul.f32 %v6193, %v6264
  %v6266 = vadd.f32 %v6220, %v6158
  %v6267 = vadd.f32 %v6235, %v6159
  %v6268 = vadd.f32 %v6250, %v6160
  %v6269 = vadd.f32 %v6265, %v6161
  %v6270 = vld [vmem:[%s11] sm:$0xff]
  %v6271 = vld [vmem:[%s11 + $0x8] sm:$0xff]
  %v6272 = vld [vmem:[%s11 + $0x10] sm:$0xff]
  %v6273 = vld [vmem:[%s11 + $0x18] sm:$0xff]
  %v6274 = vld [vmem:[%s11 + $0x20] sm:$0xff]
  %v6275 = vld [vmem:[%s11 + $0x28] sm:$0xff]
  %v6276 = vld [vmem:[%s11 + $0x30] sm:$0xff]
  %v6277 = vld [vmem:[%s11 + $0x38] sm:$0xff]
  %v6279 = vsel %vm59, %v51, 0
  %v6282 = vsel %vm59, %v52, 0
  %v6285 = vsel %vm59, %v53, 0
  %v6288 = vsel %vm59, %v54, 0
  %6290 = vmatpush.msra.mxu0 0.0
  %6291 = vmatpush.msra.mxu0 0.0
  %6292 = vmatpush.msra.mxu0 0.0
  %6293 = vmatpush.msra.mxu0 0.0
  %6294 = vmatpush.msra.mxu0 0.0
  %6295 = vmatpush.msra.mxu0 0.0
  %6296 = vmatpush.msra.mxu0 0.0
  %6297 = vmatpush.msra.mxu0 0.0
  %6298 = vmatpush.msra.mxu0 %v6277
  %6299 = vmatpush.msra.mxu0 %v6276
  %6300 = vmatpush.msra.mxu0 %v6275
  %6301 = vmatpush.msra.mxu0 %v6274
  %6302 = vmatpush.msra.mxu0 %v6273
  %6303 = vmatpush.msra.mxu0 %v6272
  %6304 = vmatpush.msra.mxu0 %v6271
  %6305 = vmatpush.msra.mxu0 %v6270
  %6306 = vmatmul.f32.gmra.mxu0 %v6279
  %v6307 = vpop.f32.mrf.mxu0
  %v6308 = vadd.f32 0.0, %v6307
  %6309 = vmatmul.f32.gmra.mxu0 %v6282
  %v6310 = vpop.f32.mrf.mxu0
  %v6311 = vadd.f32 0.0, %v6310
  %6312 = vmatmul.f32.gmra.mxu0 %v6285
  %v6313 = vpop.f32.mrf.mxu0
  %v6314 = vadd.f32 0.0, %v6313
  %6315 = vmatmul.f32.gmra.mxu0 %v6288
  %v6316 = vpop.f32.mrf.mxu0
  %v6317 = vadd.f32 0.0, %v6316
  %6318 = vdwg.mxu0
  %v6319 = vld [vmem:[%s12] sm:$0x1]
  %v6321 = vperm.slane %v6319, 0
  %v6324 = vsel %vm823, %v6266, 0
  %v6327 = vsel %vm823, %v6267, 0
  %v6330 = vsel %vm823, %v6268, 0
  %v6333 = vsel %vm823, %v6269, 0
  %v6336 = vsel %vm1694, %v6317, 0
  %6338 = vmatpush.msra.mxu0 0.0
  %6339 = vmatpush.msra.mxu0 0.0
  %6340 = vmatpush.msra.mxu0 0.0
  %6341 = vmatpush.msra.mxu0 0.0
  %6342 = vmatpush.msra.mxu0 0.0
  %6343 = vmatpush.msra.mxu0 0.0
  %6344 = vmatpush.msra.mxu0 0.0
  %6345 = vmatpush.msra.mxu0 0.0
  %6346 = vmatpush.msra.mxu0 0.0
  %6347 = vmatpush.msra.mxu0 0.0
  %6348 = vmatpush.msra.mxu0 0.0
  %6349 = vmatpush.msra.mxu0 0.0
  %6350 = vmatpush.msra.mxu0 %v6336
  %6351 = vmatpush.msra.mxu0 %v6314
  %6352 = vmatpush.msra.mxu0 %v6311
  %6353 = vmatpush.msra.mxu0 %v6308
  %6354 = vmatmul.f32.gmra.mxu0 %v6324
  %v6355 = vpop.f32.mrf.mxu0
  %v6356 = vadd.f32 %v6321, %v6355
  %6357 = vmatmul.f32.gmra.mxu0 %v6327
  %v6358 = vpop.f32.mrf.mxu0
  %v6359 = vadd.f32 %v6321, %v6358
  %6360 = vmatmul.f32.gmra.mxu0 %v6330
  %v6361 = vpop.f32.mrf.mxu0
  %v6362 = vadd.f32 %v6321, %v6361
  %6363 = vmatmul.f32.gmra.mxu0 %v6333
  %v6364 = vpop.f32.mrf.mxu0
  %v6365 = vadd.f32 %v6321, %v6364
  %6366 = vdwg.mxu0
  %v6367 = vmax.f32 %v6356, 0.0
  %v6368 = vmax.f32 %v6359, 0.0
  %v6369 = vmax.f32 %v6362, 0.0
  %v6370 = vmax.f32 %v6365, 0.0
  %v6371 = vadd.f32 %v6367, %v51
  %v6372 = vadd.f32 %v6368, %v52
  %v6373 = vadd.f32 %v6369, %v53
  %v6374 = vadd.f32 %v6370, %v54
  %6375 = vst.msk [vmem:[%s14] sm:$0xff] %vm59, %v6371
  %6376 = vst.msk [vmem:[%s14 + $0x8] sm:$0xff] %vm59, %v6372
  %6377 = vst.msk [vmem:[%s14 + $0x10] sm:$0xff] %vm59, %v6373
  %6378 = vst.msk [vmem:[%s14 + $0x18] sm:$0x1] %vm69, %v6374
  %v6379 = vmul.f32 %v6371, %v6371
  %v6380 = vmul.f32 %v6372, %v6372
  %v6381 = vmul.f32 %v6373, %v6373
  %v6382 = vmul.f32 %v6374, %v6374
  %v6383 = vsel %vm59, %v6379, 0.0
  %6384 = vadd.xlane.f32.xlu0 %v6383
  %v6385 = vpop.xlane.xlu0 %6384
  %v6386 = vsel %vm59, %v6380, 0.0
  %6387 = vadd.xlane.f32.xlu0 %v6386
  %v6388 = vpop.xlane.xlu0 %6387
  %v6389 = vsel %vm59, %v6381, 0.0
  %6390 = vadd.xlane.f32.xlu0 %v6389
  %v6391 = vpop.xlane.xlu0 %6390
  %v6392 = vsel %vm69, %v6382, 0.0
  %6393 = vadd.xlane.f32.xlu0 %v6392
  %v6394 = vpop.xlane.xlu0 %6393
  %v6395 = vrsqrt.pop %v6385
  %v6396 = vmul.f32 %v6395, %v6385
  %v6397 = vmul.f32 %v6396, %v6395
  %v6398 = vmul.f32 0.5, %v6397
  %v6399 = vsub.f32 1.5, %v6398
  %v6400 = vmul.f32 %v6395, %v6399
  %v6401 = vmul.f32 %v6385, %v6400
  %vm6402 = vcmp.eq.f32.partialorder %v6385, inf
  %v6403 = vsel %vm6402, %v6385, %v6401
  %vm6404 = vcmp.eq.f32.partialorder %v6385, 0.0
  %v6405 = vand.u32 %v6385, 2147483648
  %v6406 = vsel %vm6404, %v6405, %v6403
  %v6407 = vrsqrt.pop %v6388
  %v6408 = vmul.f32 %v6407, %v6388
  %v6409 = vmul.f32 %v6408, %v6407
  %v6410 = vmul.f32 0.5, %v6409
  %v6411 = vsub.f32 1.5, %v6410
  %v6412 = vmul.f32 %v6407, %v6411
  %v6413 = vmul.f32 %v6388, %v6412
  %vm6414 = vcmp.eq.f32.partialorder %v6388, inf
  %v6415 = vsel %vm6414, %v6388, %v6413
  %vm6416 = vcmp.eq.f32.partialorder %v6388, 0.0
  %v6417 = vand.u32 %v6388, 2147483648
  %v6418 = vsel %vm6416, %v6417, %v6415
  %v6419 = vrsqrt.pop %v6391
  %v6420 = vmul.f32 %v6419, %v6391
  %v6421 = vmul.f32 %v6420, %v6419
  %v6422 = vmul.f32 0.5, %v6421
  %v6423 = vsub.f32 1.5, %v6422
  %v6424 = vmul.f32 %v6419, %v6423
  %v6425 = vmul.f32 %v6391, %v6424
  %vm6426 = vcmp.eq.f32.partialorder %v6391, inf
  %v6427 = vsel %vm6426, %v6391, %v6425
  %vm6428 = vcmp.eq.f32.partialorder %v6391, 0.0
  %v6429 = vand.u32 %v6391, 2147483648
  %v6430 = vsel %vm6428, %v6429, %v6427
  %v6431 = vrsqrt.pop %v6394
  %v6432 = vmul.f32 %v6431, %v6394
  %v6433 = vmul.f32 %v6432, %v6431
  %v6434 = vmul.f32 0.5, %v6433
  %v6435 = vsub.f32 1.5, %v6434
  %v6436 = vmul.f32 %v6431, %v6435
  %v6437 = vmul.f32 %v6394, %v6436
  %vm6438 = vcmp.eq.f32.partialorder %v6394, inf
  %v6439 = vsel %vm6438, %v6394, %v6437
  %vm6440 = vcmp.eq.f32.partialorder %v6394, 0.0
  %v6441 = vand.u32 %v6394, 2147483648
  %v6442 = vsel %vm6440, %v6441, %v6439
  %v6443 = vmax.f32 %v6406, 1e-12
  %v6444 = vmax.f32 %v6418, 1e-12
  %v6445 = vmax.f32 %v6430, 1e-12
  %v6446 = vmax.f32 %v6442, 1e-12
  %v6447 = vrcp.pop %v6443
  %v6448 = vmul.f32 %v6443, %v6447
  %v6449 = vsub.f32 1.0, %v6448
  %v6450 = vmul.f32 %v6447, %v6449
  %v6451 = vadd.f32 %v6447, %v6450
  %vm6452 = vweird.f32 %v6443
  %vm6453 = vweird.f32 %v6447
  %vm6454 = vmor %vm6452, %vm6453
  %v6455 = vsel %vm6454, %v6447, %v6451
  %v6456 = vand.u32 2147483647, %v6443
  %vm6457 = vcmp.eq.f32.partialorder %v6456, 8.507059e+37
  %v6458 = vand.u32 %v6443, 2147483648
  %v6459 = vor.u32 1.1754944e-38, %v6458
  %v6460 = vsel %vm6457, %v6459, %v6455
  %v6461 = vmul.f32 %v6371, %v6460
  %v6462 = vrcp.pop %v6444
  %v6463 = vmul.f32 %v6444, %v6462
  %v6464 = vsub.f32 1.0, %v6463
  %v6465 = vmul.f32 %v6462, %v6464
  %v6466 = vadd.f32 %v6462, %v6465
  %vm6467 = vweird.f32 %v6444
  %vm6468 = vweird.f32 %v6462
  %vm6469 = vmor %vm6467, %vm6468
  %v6470 = vsel %vm6469, %v6462, %v6466
  %v6471 = vand.u32 2147483647, %v6444
  %vm6472 = vcmp.eq.f32.partialorder %v6471, 8.507059e+37
  %v6473 = vand.u32 %v6444, 2147483648
  %v6474 = vor.u32 1.1754944e-38, %v6473
  %v6475 = vsel %vm6472, %v6474, %v6470
  %v6476 = vmul.f32 %v6372, %v6475
  %v6477 = vrcp.pop %v6445
  %v6478 = vmul.f32 %v6445, %v6477
  %v6479 = vsub.f32 1.0, %v6478
  %v6480 = vmul.f32 %v6477, %v6479
  %v6481 = vadd.f32 %v6477, %v6480
  %vm6482 = vweird.f32 %v6445
  %vm6483 = vweird.f32 %v6477
  %vm6484 = vmor %vm6482, %vm6483
  %v6485 = vsel %vm6484, %v6477, %v6481
  %v6486 = vand.u32 2147483647, %v6445
  %vm6487 = vcmp.eq.f32.partialorder %v6486, 8.507059e+37
  %v6488 = vand.u32 %v6445, 2147483648
  %v6489 = vor.u32 1.1754944e-38, %v6488
  %v6490 = vsel %vm6487, %v6489, %v6485
  %v6491 = vmul.f32 %v6373, %v6490
  %v6492 = vrcp.pop %v6446
  %v6493 = vmul.f32 %v6446, %v6492
  %v6494 = vsub.f32 1.0, %v6493
  %v6495 = vmul.f32 %v6492, %v6494
  %v6496 = vadd.f32 %v6492, %v6495
  %vm6497 = vweird.f32 %v6446
  %vm6498 = vweird.f32 %v6492
  %vm6499 = vmor %vm6497, %vm6498
  %v6500 = vsel %vm6499, %v6492, %v6496
  %v6501 = vand.u32 2147483647, %v6446
  %vm6502 = vcmp.eq.f32.partialorder %v6501, 8.507059e+37
  %v6503 = vand.u32 %v6446, 2147483648
  %v6504 = vor.u32 1.1754944e-38, %v6503
  %v6505 = vsel %vm6502, %v6504, %v6500
  %v6506 = vmul.f32 %v6374, %v6505
  %v6507 = vld [vmem:[%s13] sm:$0xff]
  %v6508 = vld [vmem:[%s13 + $0x8] sm:$0xff]
  %v6510 = vsel %vm59, %v6461, 0
  %v6513 = vsel %vm59, %v6476, 0
  %v6516 = vsel %vm59, %v6491, 0
  %v6519 = vsel %vm59, %v6506, 0
  %v6522 = vsel %vm59, %v6507, 0
  %v6525 = vsel %vm59, %v6508, 0
  %6527 = vmatpush.xpose.msra.mxu0 0.0
  %6528 = vmatpush.xpose.msra.mxu0 0.0
  %6529 = vmatpush.xpose.msra.mxu0 0.0
  %6530 = vmatpush.xpose.msra.mxu0 0.0
  %6531 = vmatpush.xpose.msra.mxu0 0.0
  %6532 = vmatpush.xpose.msra.mxu0 0.0
  %6533 = vmatpush.xpose.msra.mxu0 0.0
  %6534 = vmatpush.xpose.msra.mxu0 0.0
  %6535 = vmatpush.xpose.msra.mxu0 0.0
  %6536 = vmatpush.xpose.msra.mxu0 0.0
  %6537 = vmatpush.xpose.msra.mxu0 0.0
  %6538 = vmatpush.xpose.msra.mxu0 0.0
  %6539 = vmatpush.xpose.msra.mxu0 0.0
  %6540 = vmatpush.xpose.msra.mxu0 0.0
  %6541 = vmatpush.xpose.msra.mxu0 %v6525
  %6542 = vmatpush.xpose.msra.mxu0 %v6522
  %6543 = vmatmul.f32.gmra.mxu0 %v6510
  %v6544 = vpop.f32.mrf.mxu0
  %v6545 = vadd.f32 0.0, %v6544
  %6546 = vmatmul.f32.gmra.mxu0 %v6513
  %v6547 = vpop.f32.mrf.mxu0
  %v6548 = vadd.f32 0.0, %v6547
  %6549 = vmatmul.f32.gmra.mxu0 %v6516
  %v6550 = vpop.f32.mrf.mxu0
  %v6551 = vadd.f32 0.0, %v6550
  %6552 = vmatmul.f32.gmra.mxu0 %v6519
  %v6553 = vpop.f32.mrf.mxu0
  %v6554 = vadd.f32 0.0, %v6553
  %6555 = vdwg.mxu0
  %v6556 = vmul.f32 %v6545, 16.0
  %v6557 = vmul.f32 %v6548, 16.0
  %v6558 = vmul.f32 %v6551, 16.0
  %v6559 = vmul.f32 %v6554, 16.0
  %6560 = vst.msk [vmem:[%s15] sm:$0xff] %vm4741, %v6556
  %6561 = vst.msk [vmem:[%s15 + $0x8] sm:$0xff] %vm4741, %v6557
  %6562 = vst.msk [vmem:[%s15 + $0x10] sm:$0xff] %vm4741, %v6558
  %6563 = vst.msk [vmem:[%s15 + $0x18] sm:$0x1] %vm5787, %v6559
  // Predicated region
  $region58: #{mynet_forward.3} parent=0 // pred_check
    _
  $region59: #{mynet_forward.3} parent=0 // pred_check_branch
    %6565 = sbr.rel (0) target = $region61
  $region60: #{mynet_forward.3} parent=0 // pred_region
    _
  $region61: #{mynet_forward.3} parent=0 // pred_fallthru
    _
  // Predicated region
  $region62: #{mynet_forward.3} parent=0 // pred_check
    _
  $region63: #{mynet_forward.3} parent=0 // pred_check_branch
    %6567 = sbr.rel (0) target = $region65
  $region64: #{mynet_forward.3} parent=0 // pred_region
    _
  $region65: #{mynet_forward.3} parent=0 // pred_fallthru
    _
  // Predicated region
  $region66: #{mynet_forward.3} parent=0 // pred_check
    _
  $region67: #{mynet_forward.3} parent=0 // pred_check_branch
    %6569 = sbr.rel (0) target = $region69
  $region68: #{mynet_forward.3} parent=0 // pred_region
    _
  $region69: #{mynet_forward.3} parent=0 // pred_fallthru
    _
  // Predicated region
  $region70: #{mynet_forward.3} parent=0 // pred_check
    _
  $region71: #{mynet_forward.3} parent=0 // pred_check_branch
    %6571 = sbr.rel (0) target = $region73
  $region72: #{mynet_forward.3} parent=0 // pred_region
    _
  $region73: #{mynet_forward.3} parent=0 // pred_fallthru
    _

</llo_original>
